<compile_context>
chip_gen: v5e
topology: v5e:2x2
jax: 0.10.0
libtpu: 0.0.40
codegen_flags: <defaults>
</compile_context>

<pallas_src>
import functools
import itertools

import numpy as np
import jax
import jax.numpy as jnp
from jax import lax
from jax.experimental import pallas as pl
from jax.experimental.pallas import tpu as pltpu


# ---------------------------------------------------------------------------
# Generation-aware sizing (v5e/v6e: 128 MiB VMEM, v7x: 64 MiB per TensorCore)
# ---------------------------------------------------------------------------

def _vmem_capacity_bytes():
    try:
        return int(pltpu.get_tpu_info().vmem_capacity_bytes)
    except Exception:
        return 64 * 1024 * 1024              # conservative (v7x-like) fallback


_VMEM_CAP = _vmem_capacity_bytes()
if _VMEM_CAP >= 100 * 1024 * 1024:           # v5e / v6e (128 MiB VMEM)
    _VMEM_LIMIT = 64 * 1024 * 1024
    _ROW_TARGET = 1024
    _LANE_TARGET = 1024
else:                                        # v7x (64 MiB VMEM per TensorCore)
    _VMEM_LIMIT = 48 * 1024 * 1024
    _ROW_TARGET = 512
    _LANE_TARGET = 512


def _cp(dims):
    return pltpu.CompilerParams(dimension_semantics=dims,
                                vmem_limit_bytes=_VMEM_LIMIT)


def _pick_row_tile(n, target):
    """Largest tile <= target dividing n (sublane dim), else full n."""
    for t in (1024, 512, 256, 128, 64, 32, 16, 8):
        if t <= target and t <= n and n % t == 0:
            return t
    return n


def _pick_lane_tile(n, target):
    """Lane-dim tile: multiple of 128 dividing n (<= target), else full n."""
    for t in (1024, 512, 256, 128):
        if t <= target and t <= n and n % t == 0:
            return t
    return n


def _pinned(shape):
    """BlockSpec for a weight/bias that stays resident (same block every step).
    TODO(synk): still double-buffered by the pipeline; single-buffer via
    pipeline_mode=pl.Buffered(1) once that path is guaranteed for the
    top-level pallas_call grid on all deployed jax versions."""
    nd = len(shape)

    def idx(*_):
        return (0,) * nd

    return pl.BlockSpec(shape, idx)


# ---------------------------------------------------------------------------
# Pallas kernels
# ---------------------------------------------------------------------------

def _pdist_kernel(p_ref, pc_ref, o_ref):
    # p: (1, 3, N) full rows, pc: (1, 3, TN) column block -> neg sq dist (1, N, TN)
    p = p_ref[0]                                      # (3, N)
    pc = pc_ref[0]                                    # (3, TN)
    inner = lax.dot_general(p, pc, (((0,), (0,)), ((), ())),
                            preferred_element_type=jnp.float32)   # (N, TN)
    xx_r = jnp.sum(p * p, axis=0, keepdims=True)      # (1, N)
    xx_c = jnp.sum(pc * pc, axis=0, keepdims=True)    # (1, TN)
    # torch: -xx - (-2 x^T x) - xx^T  ==  2*inner - xx[i] - xx[j]
    o_ref[0] = 2.0 * inner - xx_r.T - xx_c


def pairwise_neg_dist(pts):
    """pts (B,3,N) -> (B,N,N) negative squared distances (as in knn()); kept f32
    so the top-k neighbor ordering matches the reference."""
    B, C, N = pts.shape
    TN = _pick_lane_tile(N, _LANE_TARGET)
    return pl.pallas_call(
        _pdist_kernel,
        out_shape=jax.ShapeDtypeStruct((B, N, N), jnp.float32),
        grid=(B, N // TN),
        in_specs=[pl.BlockSpec((1, C, N), lambda b, jc: (b, 0, 0)),
                  pl.BlockSpec((1, C, TN), lambda b, jc: (b, 0, jc))],
        out_specs=pl.BlockSpec((1, N, TN), lambda b, jc: (b, 0, jc)),
        compiler_params=_cp(("parallel", "parallel")),
    )(pts, pts)


def _mlp1_kernel(x_ref, w0, b0, w1, b1, w2, b2, o_ref):
    h = x_ref[0]                                                        # (TM, 12) f32
    h = jnp.maximum(jnp.dot(h, w0[...], preferred_element_type=jnp.float32) + b0[...], 0.0)
    h = h.astype(jnp.bfloat16)
    h = jnp.maximum(jnp.dot(h, w1[...], preferred_element_type=jnp.float32) + b1[...], 0.0)
    h = h.astype(jnp.bfloat16)
    h = jnp.maximum(jnp.dot(h, w2[...], preferred_element_type=jnp.float32) + b2[...], 0.0)
    o_ref[0] = h.astype(jnp.bfloat16)


def mlp1_forward(x_bnc, params):
    """Fused mlp1: Conv1d 12->64->64->64, ReLU after each (channels-last, bf16 out)."""
    B, N, C = x_bnc.shape
    TM = N if N <= 4096 else _pick_row_tile(N, _ROW_TARGET)   # full-N tile: operands tiny
    args = (x_bnc,
            params['mlp1_w0'], params['mlp1_b0'],
            params['mlp1_w1'], params['mlp1_b1'],
            params['mlp1_w2'], params['mlp1_b2'])
    in_specs = [pl.BlockSpec((1, TM, C), lambda b, j: (b, j, 0))] + \
               [_pinned(a.shape) for a in args[1:]]
    Cout = params['mlp1_w2'].shape[1]
    return pl.pallas_call(
        _mlp1_kernel,
        out_shape=jax.ShapeDtypeStruct((B, N, Cout), jnp.bfloat16),
        grid=(B, N // TM),
        in_specs=in_specs,
        out_specs=pl.BlockSpec((1, TM, Cout), lambda b, j: (b, j, 0)),
        compiler_params=_cp(("parallel", "parallel")),
    )(*args)


def _graph1_kernel(x_ref, w, b, o_ref):
    # folded linear1*conv1 (no nonlinearity between them in the reference) + ReLU
    y = jnp.dot(x_ref[0], w[...], preferred_element_type=jnp.float32) + b[...]
    o_ref[0] = jnp.maximum(y, 0.0).astype(o_ref.dtype)


def graph_block1(pooled, params):
    """(B,N,64) local-max-pooled bf16 -> (linear1*conv1 folded)+ReLU -> (B,N,128) bf16."""
    B, N, C = pooled.shape
    TM = _pick_row_tile(N, _ROW_TARGET)
    args = (pooled, params['g1_w'], params['g1_b'])
    in_specs = [pl.BlockSpec((1, TM, C), lambda b, j: (b, j, 0))] + \
               [_pinned(a.shape) for a in args[1:]]
    Cout = params['g1_w'].shape[1]
    return pl.pallas_call(
        _graph1_kernel,
        out_shape=jax.ShapeDtypeStruct((B, N, Cout), jnp.bfloat16),
        grid=(B, N // TM),
        in_specs=in_specs,
        out_specs=pl.BlockSpec((1, TM, Cout), lambda b, j: (b, j, 0)),
        compiler_params=_cp(("parallel", "parallel")),
    )(*args)


def _graph2_kernel(x_ref, w, b, wm0, bm0, wm1, bm1, feat_ref, acc_ref):
    j = pl.program_id(1)
    # folded linear2*conv2 (no ReLU between/after them in the reference)
    y = jnp.dot(x_ref[0], w[...], preferred_element_type=jnp.float32) + b[...]   # (TM, 1024) f32
    tile_max = jnp.max(y, axis=0, keepdims=True)                                 # (1, 1024)

    # NOTE: the VMEM max-accumulator requires the row-tile axis to stay the
    # innermost grid axis and be marked "arbitrary"; re-init happens at j == 0
    # for every batch. Do not reorder the grid or mark this axis "parallel".
    @pl.when(j == 0)
    def _():
        acc_ref[...] = tile_max

    @pl.when(j > 0)
    def _():
        acc_ref[...] = jnp.maximum(acc_ref[...], tile_max)

    @pl.when(j == pl.num_programs(1) - 1)
    def _():
        # mlp2 fused on the global-max feature while it is still in VMEM
        # (f32 accumulator row x bf16 weights -> promoted f32 dot; a single-row
        # matmul, so throughput is irrelevant and accuracy is preserved).
        f = jnp.dot(acc_ref[...], wm0[...], preferred_element_type=jnp.float32) + bm0[...]
        f = jnp.maximum(f, 0.0)
        feat_ref[0] = jnp.dot(f, wm1[...], preferred_element_type=jnp.float32) + bm1[...]


def graph_block2_and_mlp2(pooled, params):
    """(B,N,128) pooled bf16 -> folded linear2*conv2 -> global max over N -> mlp2 -> (B,1,F) f32."""
    B, N, C = pooled.shape
    TM = _pick_row_tile(N, _ROW_TARGET)     # must divide N: padded rows would corrupt the max
    F = params['mlp2_w1'].shape[1]
    args = (pooled, params['g2_w'], params['g2_b'],
            params['mlp2_w0'], params['mlp2_b0'],
            params['mlp2_w1'], params['mlp2_b1'])
    in_specs = [pl.BlockSpec((1, TM, C), lambda b, j: (b, j, 0))] + \
               [_pinned(a.shape) for a in args[1:]]
    # TODO(synk): on v7x a leading 2-way "parallel" split of the row-tile
    # reduction (per-core partial max + tiny epilogue) would use both cores
    # even at B == 1.
    return pl.pallas_call(
        _graph2_kernel,
        out_shape=jax.ShapeDtypeStruct((B, 1, F), jnp.float32),
        grid=(B, N // TM),
        in_specs=in_specs,
        out_specs=pl.BlockSpec((1, 1, F), lambda b, j: (b, 0, 0)),
        scratch_shapes=[pltpu.VMEM((1, params['g2_w'].shape[1]), jnp.float32)],
        compiler_params=_cp(("parallel", "arbitrary")),
    )(*args)


def _decoder_kernel(fb1_ref, fb2_ref, g_ref,
                    w1g, w11, b11, w12, b12,
                    w2p, w21, b21, w22, b22, o_ref):
    g = g_ref[...]                                                      # (TMD, 2) f32
    # folding1: Conv1d(F+2,F)+ReLU, Conv1d(F,F)+ReLU, Conv1d(F,3)
    # cat([feature, grid]) @ W == grid @ W_grid + (feature @ W_feat + b)  (hoisted)
    h = jnp.dot(g, w1g[...], preferred_element_type=jnp.float32) + fb1_ref[0]
    h = jnp.maximum(h, 0.0).astype(jnp.bfloat16)
    h = jnp.dot(h, w11[...], preferred_element_type=jnp.float32) + b11[...]
    h = jnp.maximum(h, 0.0).astype(jnp.bfloat16)
    p1 = jnp.dot(h, w12[...], preferred_element_type=jnp.float32) + b12[...]     # (TMD, 3)
    # folding2: Conv1d(F+3,F)+ReLU, Conv1d(F,F)+ReLU, Conv1d(F,3)
    h = jnp.dot(p1, w2p[...], preferred_element_type=jnp.float32) + fb2_ref[0]
    h = jnp.maximum(h, 0.0).astype(jnp.bfloat16)
    h = jnp.dot(h, w21[...], preferred_element_type=jnp.float32) + b21[...]
    h = jnp.maximum(h, 0.0).astype(jnp.bfloat16)
    o_ref[0] = jnp.dot(h, w22[...], preferred_element_type=jnp.float32) + b22[...]


def decoder_forward(feature, params, m):
    """feature (B,1,F) -> folded points (B, m, 3). Both folds fused in one kernel;
    the per-batch feature terms of each fold's first layer are hoisted out."""
    B, _, F = feature.shape
    gridp = params['grid_points']                                  # (m, 2) f32
    TMD = 512 if m >= 512 else max(8, ((m + 7) // 8) * 8)
    m_pad = ((m + TMD - 1) // TMD) * TMD
    if m_pad != m:                          # pad grid rows; padded outputs sliced off
        gridp = jnp.pad(gridp, ((0, m_pad - m), (0, 0)))

    f2d = feature[:, 0, :]                                         # (B, F)
    fb1 = (f2d @ params['dec_w1_feat'] + params['dec_b1'])[:, None, :]   # (B,1,F) f32
    fb2 = (f2d @ params['dec_w2_feat'] + params['dec_b2'])[:, None, :]   # (B,1,F) f32

    args = (fb1, fb2, gridp,
            params['dec_w1_grid'], params['dec_w11'], params['dec_b11'],
            params['dec_w12'], params['dec_b12'],
            params['dec_w2_p1'], params['dec_w21'], params['dec_b21'],
            params['dec_w22'], params['dec_b22'])
    in_specs = [pl.BlockSpec((1, 1, F), lambda b, j: (b, 0, 0)),
                pl.BlockSpec((1, 1, F), lambda b, j: (b, 0, 0)),
                pl.BlockSpec((TMD, 2), lambda b, j: (j, 0))] + \
               [_pinned(a.shape) for a in args[3:]]
    out = pl.pallas_call(
        _decoder_kernel,
        out_shape=jax.ShapeDtypeStruct((B, m_pad, 3), jnp.float32),
        grid=(B, m_pad // TMD),
        in_specs=in_specs,
        # TODO(synk): (TMD, 3) output is a 3/128-lane masked store; a lane-dense
        # transposed slab would store faster but the tensor is tiny.
        out_specs=pl.BlockSpec((1, TMD, 3), lambda b, j: (b, j, 0)),
        compiler_params=_cp(("parallel", "parallel")),
    )(*args)
    return out[:, :m, :]


# ---------------------------------------------------------------------------
# XLA-side helpers (data-dependent gather stays in XLA)
# ---------------------------------------------------------------------------

def _local_maxpool(h_bnc, idx_flat, k):
    """local_maxpool: gather each point's k neighbor rows and max over them.
    Left to XLA so the gather fuses into the reduce and only the pooled
    (B,N,C) bf16 tensor feeds the Pallas kernels.
    TODO(synk): a fully in-kernel version needs a scalar-prefetch driven
    per-row DMA gather."""
    B, N, C = h_bnc.shape
    g = jnp.take(h_bnc.reshape(B * N, C), idx_flat, axis=0)
    return jnp.max(g.reshape(B, N, k, C), axis=2)


# ---------------------------------------------------------------------------
# Full forward pass (encoder + decoder)
# ---------------------------------------------------------------------------

def reconstruction_net_forward(pts, params, *, k=16, m=2025):
    """pts: (B, 3, N) float32, params: output of prepare_params().
    Returns (output (B,3,m) f32, feature (B,1,feat_dims) f32)."""
    B, C_in, N = pts.shape

    # ---- knn(pts, k) -------------------------------------------------------
    neg_dist = pairwise_neg_dist(pts)                        # (B, N, N) Pallas
    # TODO(synk): lax.top_k still materializes/reads the (B,N,N) matrix; an
    # in-kernel running top-k over column tiles would remove that round trip.
    _, idx = lax.top_k(neg_dist, k)                          # (B, N, k)
    idx_flat = (idx + (jnp.arange(B) * N)[:, None, None]).reshape(-1)

    # ---- local_cov(pts, idx): uses only neighbors 0 and 1 (outer product),
    # exactly as the FoldNet reference does (intentional, not a truncated cov).
    pts_t = jnp.transpose(pts, (0, 2, 1)).reshape(B * N, C_in)      # (B*N, 3)
    nbrs = jnp.take(pts_t, idx_flat, axis=0).reshape(B, N, k, C_in)
    cov = jnp.einsum('bni,bnj->bnij', nbrs[:, :, 0], nbrs[:, :, 1]).reshape(B, N, 9)
    x = jnp.concatenate([pts_t.reshape(B, N, C_in), cov], axis=-1)   # (B, N, 12)

    # ---- mlp1: 12 -> 64 -> 64 -> 64 (fused, ReLU after each, bf16 out) -------
    h = mlp1_forward(x, params)                                      # (B, N, 64) bf16

    # ---- graph_layer stage 1: maxpool -> folded linear1*conv1 + ReLU ---------
    h = graph_block1(_local_maxpool(h, idx_flat, k), params)         # (B, N, 128) bf16

    # ---- graph_layer stage 2 + global max + mlp2 (fused) ---------------------
    feature = graph_block2_and_mlp2(_local_maxpool(h, idx_flat, k), params)   # (B,1,F)

    # ---- decoder (plane folding, both folds fused) ---------------------------
    folded = decoder_forward(feature, params, m)                     # (B, m, 3)
    output = jnp.transpose(folded, (0, 2, 1))                        # (B, 3, m)
    return output, feature


# ---------------------------------------------------------------------------
# Parameters (shapes follow the nn.Module __init__) + kernel-ready preparation
# ---------------------------------------------------------------------------

def init_linear(key, cin, cout, scale=0.05):
    kw, kb = jax.random.split(key)
    # stored as (Cin, Cout) == torch weight (Cout, Cin) transposed
    w = jax.random.normal(kw, (cin, cout), jnp.float32) * scale
    b = jax.random.normal(kb, (cout,), jnp.float32) * scale
    return w, b


def build_params(key, feat_dims, m):
    keys = jax.random.split(key, 16)
    p = {
        'mlp1_0':  init_linear(keys[0], 12, 64),
        'mlp1_1':  init_linear(keys[1], 64, 64),
        'mlp1_2':  init_linear(keys[2], 64, 64),
        'linear1': init_linear(keys[3], 64, 64),
        'conv1':   init_linear(keys[4], 64, 128),
        'linear2': init_linear(keys[5], 128, 128),
        'conv2':   init_linear(keys[6], 128, 1024),
        'mlp2_0':  init_linear(keys[7], 1024, feat_dims),
        'mlp2_1':  init_linear(keys[8], feat_dims, feat_dims),
        'fold1_0': init_linear(keys[9], feat_dims + 2, feat_dims),
        'fold1_1': init_linear(keys[10], feat_dims, feat_dims),
        'fold1_2': init_linear(keys[11], feat_dims, 3),
        'fold2_0': init_linear(keys[12], feat_dims + 3, feat_dims),
        'fold2_1': init_linear(keys[13], feat_dims, feat_dims),
        'fold2_2': init_linear(keys[14], feat_dims, 3),
    }
    # plane grid: itertools.product of two linspace(-1, 1, sqrt(m))
    n_side = int(np.sqrt(m))
    xs = np.linspace(-1.0, 1.0, n_side)
    ys = np.linspace(-1.0, 1.0, n_side)
    grid_np = np.array(list(itertools.product(xs, ys)), dtype=np.float32)  # (m, 2)
    p['grid_points'] = jnp.asarray(grid_np)
    return p


def prepare_params(p):
    """Fold linear*conv pairs (in f32), split the decoder first-layer weights so
    the feature term can be hoisted, reshape biases, and cast the matmul
    weights to bf16 (accumulation stays f32 inside the kernels)."""
    bf16 = jnp.bfloat16
    F = p['mlp2_1'][0].shape[1]
    q = {}
    for i, name in enumerate(('mlp1_0', 'mlp1_1', 'mlp1_2')):
        w, b = p[name]
        q[f'mlp1_w{i}'] = w.astype(bf16)
        q[f'mlp1_b{i}'] = b.reshape(1, -1)
    wl, bl = p['linear1']
    wc, bc = p['conv1']
    q['g1_w'] = (wl @ wc).astype(bf16)                       # (64, 128)
    q['g1_b'] = (bl @ wc + bc).reshape(1, -1)
    wl, bl = p['linear2']
    wc, bc = p['conv2']
    q['g2_w'] = (wl @ wc).astype(bf16)                       # (128, 1024)
    q['g2_b'] = (bl @ wc + bc).reshape(1, -1)
    w, b = p['mlp2_0']
    q['mlp2_w0'], q['mlp2_b0'] = w.astype(bf16), b.reshape(1, -1)
    w, b = p['mlp2_1']
    q['mlp2_w1'], q['mlp2_b1'] = w.astype(bf16), b.reshape(1, -1)
    # decoder: torch cat order is (feature, grid) / (feature, fold1), so the
    # first F input-rows of each fold's first weight act on the feature and are
    # hoisted to the wrapper; the remaining 2 / 3 rows stay in the kernel (f32,
    # so the grid-coordinate path keeps full precision).
    w10, b10 = p['fold1_0']
    q['dec_w1_feat'], q['dec_w1_grid'], q['dec_b1'] = w10[:F], w10[F:], b10
    w, b = p['fold1_1']
    q['dec_w11'], q['dec_b11'] = w.astype(bf16), b.reshape(1, -1)
    w, b = p['fold1_2']
    q['dec_w12'], q['dec_b12'] = w.astype(bf16), b.reshape(1, -1)
    w20, b20 = p['fold2_0']
    q['dec_w2_feat'], q['dec_w2_p1'], q['dec_b2'] = w20[:F], w20[F:], b20
    w, b = p['fold2_1']
    q['dec_w21'], q['dec_b21'] = w.astype(bf16), b.reshape(1, -1)
    w, b = p['fold2_2']
    q['dec_w22'], q['dec_b22'] = w.astype(bf16), b.reshape(1, -1)
    q['grid_points'] = p['grid_points']
    return q


# ---------------------------------------------------------------------------

if __name__ == "__main__":
    B, N_PTS, K_NBR, FEAT_DIMS = 2, 128, 16, 32
    M_GRID = 2025  # 45 x 45 plane grid, fixed in FoldNet_Decoder

    key = jax.random.PRNGKey(0)
    k_param, k_data = jax.random.split(key)
    params = build_params(k_param, FEAT_DIMS, M_GRID)
    prepared = prepare_params(params)

    pts = jax.random.normal(k_data, (B, 3, N_PTS), jnp.float32)  # NCW point cloud

    fwd = jax.jit(functools.partial(reconstruction_net_forward, k=K_NBR, m=M_GRID))
    output, feature = fwd(pts, prepared)
    jax.block_until_ready(output)
    jax.block_until_ready(feature)

    assert output.shape == (B, 3, M_GRID), output.shape
    assert feature.shape == (B, 1, FEAT_DIMS), feature.shape
    assert bool(jnp.all(jnp.isfinite(output))) and bool(jnp.all(jnp.isfinite(feature)))
    print("KERNEL_OK")
</pallas_src>

<mosaic_0001>
module attributes {stable_mosaic.version = 11 : i64} {
  func.func @_pdist_kernel(%arg0: i32, %arg1: i32, %arg2: memref<1x3x128xf32, #tpu.memory_space<vmem>>, %arg3: memref<1x3x128xf32, #tpu.memory_space<vmem>>, %arg4: memref<1x128x128xf32, #tpu.memory_space<vmem>>) attributes {dimension_semantics = [#tpu.dimension_semantics<parallel>, #tpu.dimension_semantics<parallel>], iteration_bounds = array<i64: 2, 1>, scalar_prefetch = 0 : i64, scratch_operands = 0 : i64, tpu.core_type = #tpu.core_type<tc>, window_params = [{transform_indices = @transform_0, window_bounds = array<i64: 1, 3, 128>}, {transform_indices = @transform_1, window_bounds = array<i64: 1, 3, 128>}, {transform_indices = @transform_2, window_bounds = array<i64: 1, 128, 128>}]} {
    %c0 = arith.constant 0 : index
    %c0_0 = arith.constant 0 : index
    %c0_1 = arith.constant 0 : index
    %0 = vector.load %arg2[%c0, %c0_0, %c0_1] : memref<1x3x128xf32, #tpu.memory_space<vmem>>, vector<1x3x128xf32>
    %1 = vector.shape_cast %0 : vector<1x3x128xf32> to vector<3x128xf32>
    %c0_2 = arith.constant 0 : index
    %c0_3 = arith.constant 0 : index
    %c0_4 = arith.constant 0 : index
    %2 = vector.load %arg3[%c0_2, %c0_3, %c0_4] : memref<1x3x128xf32, #tpu.memory_space<vmem>>, vector<1x3x128xf32>
    %3 = vector.shape_cast %2 : vector<1x3x128xf32> to vector<3x128xf32>
    %cst = arith.constant dense<0.000000e+00> : vector<128x128xf32>
    %4 = tpu.matmul %1, %3, %cst {dimension_numbers = #tpu.dot_dimension_numbers<[0], [0], [1], [1], [0, 1, 1, 1], [], []>} : vector<3x128xf32>, vector<3x128xf32>, vector<128x128xf32> -> vector<128x128xf32>
    %5 = arith.mulf %1, %1 : vector<3x128xf32>
    %cst_5 = arith.constant dense<0.000000e+00> : vector<128xf32>
    %6 = vector.multi_reduction <add>, %5, %cst_5 [0] : vector<3x128xf32> to vector<128xf32>
    %7 = vector.shape_cast %6 : vector<128xf32> to vector<1x128xf32>
    %8 = arith.mulf %3, %3 : vector<3x128xf32>
    %cst_6 = arith.constant dense<0.000000e+00> : vector<128xf32>
    %9 = vector.multi_reduction <add>, %8, %cst_6 [0] : vector<3x128xf32> to vector<128xf32>
    %10 = vector.shape_cast %9 : vector<128xf32> to vector<1x128xf32>
    %cst_7 = arith.constant 2.000000e+00 : f32
    %11 = vector.broadcast %cst_7 : f32 to vector<128x128xf32>
    %12 = arith.mulf %11, %4 : vector<128x128xf32>
    %13 = tpu.transpose %7, [1, 0] : vector<1x128xf32> -> vector<128x1xf32>
    %14 = vector.broadcast %13 : vector<128x1xf32> to vector<128x128xf32>
    %15 = arith.subf %12, %14 : vector<128x128xf32>
    %16 = vector.broadcast %10 : vector<1x128xf32> to vector<128x128xf32>
    %17 = arith.subf %15, %16 : vector<128x128xf32>
    %c0_8 = arith.constant 0 : index
    %c0_9 = arith.constant 0 : index
    %c0_10 = arith.constant 0 : index
    %18 = vector.load %arg4[%c0_8, %c0_9, %c0_10] : memref<1x128x128xf32, #tpu.memory_space<vmem>>, vector<1x128x128xf32>
    %19 = vector.shape_cast %18 : vector<1x128x128xf32> to vector<128x128xf32>
    %20 = vector.shape_cast %17 : vector<128x128xf32> to vector<1x128x128xf32>
    tpu.vector_store %arg4[%c0_8, %c0_9, %c0_10], %20 {strides = array<i32>} : memref<1x128x128xf32, #tpu.memory_space<vmem>>, vector<1x128x128xf32>,
    return
  }
  func.func @transform_0(%arg0: i32, %arg1: i32) -> (i32, i32, i32) {
    %c0_i32 = arith.constant 0 : i32
    %c0_i32_0 = arith.constant 0 : i32
    %c0_i32_1 = arith.constant 0 : i32
    return %arg0, %c0_i32, %c0_i32_0 : i32, i32, i32
  }
  func.func @transform_1(%arg0: i32, %arg1: i32) -> (i32, i32, i32) {
    %c0_i32 = arith.constant 0 : i32
    %c0_i32_0 = arith.constant 0 : i32
    return %arg0, %c0_i32, %arg1 : i32, i32, i32
  }
  func.func @transform_2(%arg0: i32, %arg1: i32) -> (i32, i32, i32) {
    %c0_i32 = arith.constant 0 : i32
    %c0_i32_0 = arith.constant 0 : i32
    return %arg0, %c0_i32, %arg1 : i32, i32, i32
  }
}

module attributes {stable_mosaic.version = 11 : i64} {
  func.func @_mlp1_kernel(%arg0: i32, %arg1: i32, %arg2: memref<1x128x12xf32, #tpu.memory_space<vmem>>, %arg3: memref<12x64xbf16, #tpu.memory_space<vmem>>, %arg4: memref<1x64xf32, #tpu.memory_space<vmem>>, %arg5: memref<64x64xbf16, #tpu.memory_space<vmem>>, %arg6: memref<1x64xf32, #tpu.memory_space<vmem>>, %arg7: memref<64x64xbf16, #tpu.memory_space<vmem>>, %arg8: memref<1x64xf32, #tpu.memory_space<vmem>>, %arg9: memref<1x128x64xbf16, #tpu.memory_space<vmem>>) attributes {dimension_semantics = [#tpu.dimension_semantics<parallel>, #tpu.dimension_semantics<parallel>], iteration_bounds = array<i64: 2, 1>, scalar_prefetch = 0 : i64, scratch_operands = 0 : i64, tpu.core_type = #tpu.core_type<tc>, window_params = [{transform_indices = @transform_0, window_bounds = array<i64: 1, 128, 12>}, {pipeline_mode = #tpu.pipeline_mode<synchronous>, transform_indices = @transform_1, window_bounds = array<i64: 12, 64>}, {pipeline_mode = #tpu.pipeline_mode<synchronous>, transform_indices = @transform_2, window_bounds = array<i64: 1, 64>}, {pipeline_mode = #tpu.pipeline_mode<synchronous>, transform_indices = @transform_3, window_bounds = array<i64: 64, 64>}, {pipeline_mode = #tpu.pipeline_mode<synchronous>, transform_indices = @transform_4, window_bounds = array<i64: 1, 64>}, {pipeline_mode = #tpu.pipeline_mode<synchronous>, transform_indices = @transform_5, window_bounds = array<i64: 64, 64>}, {pipeline_mode = #tpu.pipeline_mode<synchronous>, transform_indices = @transform_6, window_bounds = array<i64: 1, 64>}, {transform_indices = @transform_7, window_bounds = array<i64: 1, 128, 64>}]} {
    %c0 = arith.constant 0 : index
    %c0_0 = arith.constant 0 : index
    %c0_1 = arith.constant 0 : index
    %0 = vector.load %arg2[%c0, %c0_0, %c0_1] : memref<1x128x12xf32, #tpu.memory_space<vmem>>, vector<1x128x12xf32>
    %1 = vector.shape_cast %0 : vector<1x128x12xf32> to vector<128x12xf32>
    %c0_2 = arith.constant 0 : index
    %c0_3 = arith.constant 0 : index
    %2 = vector.load %arg3[%c0_2, %c0_3] : memref<12x64xbf16, #tpu.memory_space<vmem>>, vector<12x64xbf16>
    %cst = arith.constant dense<0.000000e+00> : vector<128x64xf32>
    %3 = tpu.matmul %1, %2, %cst {dimension_numbers = #tpu.dot_dimension_numbers<[1], [0], [0], [1], [0, 0, 1, 1], [], []>} : vector<128x12xf32>, vector<12x64xbf16>, vector<128x64xf32> -> vector<128x64xf32>
    %c0_4 = arith.constant 0 : index
    %c0_5 = arith.constant 0 : index
    %4 = vector.load %arg4[%c0_4, %c0_5] : memref<1x64xf32, #tpu.memory_space<vmem>>, vector<1x64xf32>
    %5 = vector.broadcast %4 : vector<1x64xf32> to vector<128x64xf32>
    %6 = arith.addf %3, %5 : vector<128x64xf32>
    %cst_6 = arith.constant 0.000000e+00 : f32
    %7 = vector.broadcast %cst_6 : f32 to vector<128x64xf32>
    %8 = arith.maximumf %6, %7 : vector<128x64xf32>
    %9 = arith.truncf %8 : vector<128x64xf32> to vector<128x64xbf16>
    %c0_7 = arith.constant 0 : index
    %c0_8 = arith.constant 0 : index
    %10 = vector.load %arg5[%c0_7, %c0_8] : memref<64x64xbf16, #tpu.memory_space<vmem>>, vector<64x64xbf16>
    %cst_9 = arith.constant dense<0.000000e+00> : vector<128x64xf32>
    %11 = tpu.matmul %9, %10, %cst_9 {dimension_numbers = #tpu.dot_dimension_numbers<[1], [0], [0], [1], [0, 0, 1, 1], [], []>} : vector<128x64xbf16>, vector<64x64xbf16>, vector<128x64xf32> -> vector<128x64xf32>
    %c0_10 = arith.constant 0 : index
    %c0_11 = arith.constant 0 : index
    %12 = vector.load %arg6[%c0_10, %c0_11] : memref<1x64xf32, #tpu.memory_space<vmem>>, vector<1x64xf32>
    %13 = vector.broadcast %12 : vector<1x64xf32> to vector<128x64xf32>
    %14 = arith.addf %11, %13 : vector<128x64xf32>
    %cst_12 = arith.constant 0.000000e+00 : f32
    %15 = vector.broadcast %cst_12 : f32 to vector<128x64xf32>
    %16 = arith.maximumf %14, %15 : vector<128x64xf32>
    %17 = arith.truncf %16 : vector<128x64xf32> to vector<128x64xbf16>
    %c0_13 = arith.constant 0 : index
    %c0_14 = arith.constant 0 : index
    %18 = vector.load %arg7[%c0_13, %c0_14] : memref<64x64xbf16, #tpu.memory_space<vmem>>, vector<64x64xbf16>
    %cst_15 = arith.constant dense<0.000000e+00> : vector<128x64xf32>
    %19 = tpu.matmul %17, %18, %cst_15 {dimension_numbers = #tpu.dot_dimension_numbers<[1], [0], [0], [1], [0, 0, 1, 1], [], []>} : vector<128x64xbf16>, vector<64x64xbf16>, vector<128x64xf32> -> vector<128x64xf32>
    %c0_16 = arith.constant 0 : index
    %c0_17 = arith.constant 0 : index
    %20 = vector.load %arg8[%c0_16, %c0_17] : memref<1x64xf32, #tpu.memory_space<vmem>>, vector<1x64xf32>
    %21 = vector.broadcast %20 : vector<1x64xf32> to vector<128x64xf32>
    %22 = arith.addf %19, %21 : vector<128x64xf32>
    %cst_18 = arith.constant 0.000000e+00 : f32
    %23 = vector.broadcast %cst_18 : f32 to vector<128x64xf32>
    %24 = arith.maximumf %22, %23 : vector<128x64xf32>
    %25 = arith.truncf %24 : vector<128x64xf32> to vector<128x64xbf16>
    %c0_19 = arith.constant 0 : index
    %c0_20 = arith.constant 0 : index
    %c0_21 = arith.constant 0 : index
    %26 = vector.load %arg9[%c0_19, %c0_20, %c0_21] : memref<1x128x64xbf16, #tpu.memory_space<vmem>>, vector<1x128x64xbf16>
    %27 = vector.shape_cast %26 : vector<1x128x64xbf16> to vector<128x64xbf16>
    %28 = vector.shape_cast %25 : vector<128x64xbf16> to vector<1x128x64xbf16>
    tpu.vector_store %arg9[%c0_19, %c0_20, %c0_21], %28 {strides = array<i32>} : memref<1x128x64xbf16, #tpu.memory_space<vmem>>, vector<1x128x64xbf16>,
    return
  }
  func.func @transform_0(%arg0: i32, %arg1: i32) -> (i32, i32, i32) {
    %c0_i32 = arith.constant 0 : i32
    %c0_i32_0 = arith.constant 0 : i32
    return %arg0, %arg1, %c0_i32 : i32, i32, i32
  }
  func.func @transform_1(%arg0: i32, %arg1: i32) -> (i32, i32) {
    %c0_i32 = arith.constant 0 : i32
    %c0_i32_0 = arith.constant 0 : i32
    %c0_i32_1 = arith.constant 0 : i32
    return %c0_i32, %c0_i32_0 : i32, i32
  }
  func.func @transform_2(%arg0: i32, %arg1: i32) -> (i32, i32) {
    %c0_i32 = arith.constant 0 : i32
    %c0_i32_0 = arith.constant 0 : i32
    %c0_i32_1 = arith.constant 0 : i32
    return %c0_i32, %c0_i32_0 : i32, i32
  }
  func.func @transform_3(%arg0: i32, %arg1: i32) -> (i32, i32) {
    %c0_i32 = arith.constant 0 : i32
    %c0_i32_0 = arith.constant 0 : i32
    %c0_i32_1 = arith.constant 0 : i32
    return %c0_i32, %c0_i32_0 : i32, i32
  }
  func.func @transform_4(%arg0: i32, %arg1: i32) -> (i32, i32) {
    %c0_i32 = arith.constant 0 : i32
    %c0_i32_0 = arith.constant 0 : i32
    %c0_i32_1 = arith.constant 0 : i32
    return %c0_i32, %c0_i32_0 : i32, i32
  }
  func.func @transform_5(%arg0: i32, %arg1: i32) -> (i32, i32) {
    %c0_i32 = arith.constant 0 : i32
    %c0_i32_0 = arith.constant 0 : i32
    %c0_i32_1 = arith.constant 0 : i32
    return %c0_i32, %c0_i32_0 : i32, i32
  }
  func.func @transform_6(%arg0: i32, %arg1: i32) -> (i32, i32) {
    %c0_i32 = arith.constant 0 : i32
    %c0_i32_0 = arith.constant 0 : i32
    %c0_i32_1 = arith.constant 0 : i32
    return %c0_i32, %c0_i32_0 : i32, i32
  }
  func.func @transform_7(%arg0: i32, %arg1: i32) -> (i32, i32, i32) {
    %c0_i32 = arith.constant 0 : i32
    %c0_i32_0 = arith.constant 0 : i32
    return %arg0, %arg1, %c0_i32 : i32, i32, i32
  }
}

module attributes {stable_mosaic.version = 11 : i64} {
  func.func @_graph1_kernel(%arg0: i32, %arg1: i32, %arg2: memref<1x128x64xbf16, #tpu.memory_space<vmem>>, %arg3: memref<64x128xbf16, #tpu.memory_space<vmem>>, %arg4: memref<1x128xf32, #tpu.memory_space<vmem>>, %arg5: memref<1x128x128xbf16, #tpu.memory_space<vmem>>) attributes {dimension_semantics = [#tpu.dimension_semantics<parallel>, #tpu.dimension_semantics<parallel>], iteration_bounds = array<i64: 2, 1>, scalar_prefetch = 0 : i64, scratch_operands = 0 : i64, tpu.core_type = #tpu.core_type<tc>, window_params = [{transform_indices = @transform_0, window_bounds = array<i64: 1, 128, 64>}, {pipeline_mode = #tpu.pipeline_mode<synchronous>, transform_indices = @transform_1, window_bounds = array<i64: 64, 128>}, {pipeline_mode = #tpu.pipeline_mode<synchronous>, transform_indices = @transform_2, window_bounds = array<i64: 1, 128>}, {transform_indices = @transform_3, window_bounds = array<i64: 1, 128, 128>}]} {
    %c0 = arith.constant 0 : index
    %c0_0 = arith.constant 0 : index
    %c0_1 = arith.constant 0 : index
    %0 = vector.load %arg2[%c0, %c0_0, %c0_1] : memref<1x128x64xbf16, #tpu.memory_space<vmem>>, vector<1x128x64xbf16>
    %1 = vector.shape_cast %0 : vector<1x128x64xbf16> to vector<128x64xbf16>
    %c0_2 = arith.constant 0 : index
    %c0_3 = arith.constant 0 : index
    %2 = vector.load %arg3[%c0_2, %c0_3] : memref<64x128xbf16, #tpu.memory_space<vmem>>, vector<64x128xbf16>
    %cst = arith.constant dense<0.000000e+00> : vector<128x128xf32>
    %3 = tpu.matmul %1, %2, %cst {dimension_numbers = #tpu.dot_dimension_numbers<[1], [0], [0], [1], [0, 0, 1, 1], [], []>} : vector<128x64xbf16>, vector<64x128xbf16>, vector<128x128xf32> -> vector<128x128xf32>
    %c0_4 = arith.constant 0 : index
    %c0_5 = arith.constant 0 : index
    %4 = vector.load %arg4[%c0_4, %c0_5] : memref<1x128xf32, #tpu.memory_space<vmem>>, vector<1x128xf32>
    %5 = vector.broadcast %4 : vector<1x128xf32> to vector<128x128xf32>
    %6 = arith.addf %3, %5 : vector<128x128xf32>
    %cst_6 = arith.constant 0.000000e+00 : f32
    %7 = vector.broadcast %cst_6 : f32 to vector<128x128xf32>
    %8 = arith.maximumf %6, %7 : vector<128x128xf32>
    %9 = arith.truncf %8 : vector<128x128xf32> to vector<128x128xbf16>
    %c0_7 = arith.constant 0 : index
    %c0_8 = arith.constant 0 : index
    %c0_9 = arith.constant 0 : index
    %10 = vector.load %arg5[%c0_7, %c0_8, %c0_9] : memref<1x128x128xbf16, #tpu.memory_space<vmem>>, vector<1x128x128xbf16>
    %11 = vector.shape_cast %10 : vector<1x128x128xbf16> to vector<128x128xbf16>
    %12 = vector.shape_cast %9 : vector<128x128xbf16> to vector<1x128x128xbf16>
    tpu.vector_store %arg5[%c0_7, %c0_8, %c0_9], %12 {strides = array<i32>} : memref<1x128x128xbf16, #tpu.memory_space<vmem>>, vector<1x128x128xbf16>,
    return
  }
  func.func @transform_0(%arg0: i32, %arg1: i32) -> (i32, i32, i32) {
    %c0_i32 = arith.constant 0 : i32
    %c0_i32_0 = arith.constant 0 : i32
    return %arg0, %arg1, %c0_i32 : i32, i32, i32
  }
  func.func @transform_1(%arg0: i32, %arg1: i32) -> (i32, i32) {
    %c0_i32 = arith.constant 0 : i32
    %c0_i32_0 = arith.constant 0 : i32
    %c0_i32_1 = arith.constant 0 : i32
    return %c0_i32, %c0_i32_0 : i32, i32
  }
  func.func @transform_2(%arg0: i32, %arg1: i32) -> (i32, i32) {
    %c0_i32 = arith.constant 0 : i32
    %c0_i32_0 = arith.constant 0 : i32
    %c0_i32_1 = arith.constant 0 : i32
    return %c0_i32, %c0_i32_0 : i32, i32
  }
  func.func @transform_3(%arg0: i32, %arg1: i32) -> (i32, i32, i32) {
    %c0_i32 = arith.constant 0 : i32
    %c0_i32_0 = arith.constant 0 : i32
    return %arg0, %arg1, %c0_i32 : i32, i32, i32
  }
}

module attributes {stable_mosaic.version = 11 : i64} {
  func.func @_graph2_kernel(%arg0: i32, %arg1: i32, %arg2: memref<1x128x128xbf16, #tpu.memory_space<vmem>>, %arg3: memref<128x1024xbf16, #tpu.memory_space<vmem>>, %arg4: memref<1x1024xf32, #tpu.memory_space<vmem>>, %arg5: memref<1024x32xbf16, #tpu.memory_space<vmem>>, %arg6: memref<1x32xf32, #tpu.memory_space<vmem>>, %arg7: memref<32x32xbf16, #tpu.memory_space<vmem>>, %arg8: memref<1x32xf32, #tpu.memory_space<vmem>>, %arg9: memref<1x1x32xf32, #tpu.memory_space<vmem>>, %arg10: memref<1x1024xf32, #tpu.memory_space<vmem>>) attributes {dimension_semantics = [#tpu.dimension_semantics<parallel>, #tpu.dimension_semantics<arbitrary>], iteration_bounds = array<i64: 2, 1>, scalar_prefetch = 0 : i64, scratch_operands = 1 : i64, tpu.core_type = #tpu.core_type<tc>, window_params = [{transform_indices = @transform_0, window_bounds = array<i64: 1, 128, 128>}, {pipeline_mode = #tpu.pipeline_mode<synchronous>, transform_indices = @transform_1, window_bounds = array<i64: 128, 1024>}, {pipeline_mode = #tpu.pipeline_mode<synchronous>, transform_indices = @transform_2, window_bounds = array<i64: 1, 1024>}, {pipeline_mode = #tpu.pipeline_mode<synchronous>, transform_indices = @transform_3, window_bounds = array<i64: 1024, 32>}, {pipeline_mode = #tpu.pipeline_mode<synchronous>, transform_indices = @transform_4, window_bounds = array<i64: 1, 32>}, {pipeline_mode = #tpu.pipeline_mode<synchronous>, transform_indices = @transform_5, window_bounds = array<i64: 32, 32>}, {pipeline_mode = #tpu.pipeline_mode<synchronous>, transform_indices = @transform_6, window_bounds = array<i64: 1, 32>}, {transform_indices = @transform_7, window_bounds = array<i64: 1, 1, 32>}]} {
    %c0 = arith.constant 0 : index
    %c0_0 = arith.constant 0 : index
    %c0_1 = arith.constant 0 : index
    %0 = vector.load %arg2[%c0, %c0_0, %c0_1] : memref<1x128x128xbf16, #tpu.memory_space<vmem>>, vector<1x128x128xbf16>
    %1 = vector.shape_cast %0 : vector<1x128x128xbf16> to vector<128x128xbf16>
    %c0_2 = arith.constant 0 : index
    %c0_3 = arith.constant 0 : index
    %2 = vector.load %arg3[%c0_2, %c0_3] : memref<128x1024xbf16, #tpu.memory_space<vmem>>, vector<128x1024xbf16>
    %cst = arith.constant dense<0.000000e+00> : vector<128x1024xf32>
    %3 = tpu.matmul %1, %2, %cst {dimension_numbers = #tpu.dot_dimension_numbers<[1], [0], [0], [1], [0, 0, 1, 1], [], []>} : vector<128x128xbf16>, vector<128x1024xbf16>, vector<128x1024xf32> -> vector<128x1024xf32>
    %c0_4 = arith.constant 0 : index
    %c0_5 = arith.constant 0 : index
    %4 = vector.load %arg4[%c0_4, %c0_5] : memref<1x1024xf32, #tpu.memory_space<vmem>>, vector<1x1024xf32>
    %5 = vector.broadcast %4 : vector<1x1024xf32> to vector<128x1024xf32>
    %6 = arith.addf %3, %5 : vector<128x1024xf32>
    %cst_6 = arith.constant dense<0xFF800000> : vector<1024xf32>
    %7 = vector.multi_reduction <maximumf>, %6, %cst_6 [0] : vector<128x1024xf32> to vector<1024xf32>
    %8 = vector.shape_cast %7 : vector<1024xf32> to vector<1x1024xf32>
    %c0_i32 = arith.constant 0 : i32
    %9 = arith.cmpi eq, %arg1, %c0_i32 : i32
    %10 = arith.extui %9 : i1 to i32
    %c0_i32_7 = arith.constant 0 : i32
    %11 = arith.cmpi ne, %10, %c0_i32_7 : i32
    scf.if %11 {
      %c0_12 = arith.constant 0 : index
      %c0_13 = arith.constant 0 : index
      %18 = vector.load %arg10[%c0_12, %c0_13] : memref<1x1024xf32, #tpu.memory_space<vmem>>, vector<1x1024xf32>
      tpu.vector_store %arg10[%c0_12, %c0_13], %8 {strides = array<i32>} : memref<1x1024xf32, #tpu.memory_space<vmem>>, vector<1x1024xf32>,
    } else {
    }
    %c0_i32_8 = arith.constant 0 : i32
    %12 = arith.cmpi sgt, %arg1, %c0_i32_8 : i32
    %13 = arith.extui %12 : i1 to i32
    %c0_i32_9 = arith.constant 0 : i32
    %14 = arith.cmpi ne, %13, %c0_i32_9 : i32
    scf.if %14 {
      %c0_12 = arith.constant 0 : index
      %c0_13 = arith.constant 0 : index
      %18 = vector.load %arg10[%c0_12, %c0_13] : memref<1x1024xf32, #tpu.memory_space<vmem>>, vector<1x1024xf32>
      %19 = arith.maximumf %18, %8 : vector<1x1024xf32>
      %c0_14 = arith.constant 0 : index
      %c0_15 = arith.constant 0 : index
      %20 = vector.load %arg10[%c0_14, %c0_15] : memref<1x1024xf32, #tpu.memory_space<vmem>>, vector<1x1024xf32>
      tpu.vector_store %arg10[%c0_14, %c0_15], %19 {strides = array<i32>} : memref<1x1024xf32, #tpu.memory_space<vmem>>, vector<1x1024xf32>,
    } else {
    }
    %c0_i32_10 = arith.constant 0 : i32
    %15 = arith.cmpi eq, %arg1, %c0_i32_10 : i32
    %16 = arith.extui %15 : i1 to i32
    %c0_i32_11 = arith.constant 0 : i32
    %17 = arith.cmpi ne, %16, %c0_i32_11 : i32
    scf.if %17 {
      %c0_12 = arith.constant 0 : index
      %c0_13 = arith.constant 0 : index
      %18 = vector.load %arg10[%c0_12, %c0_13] : memref<1x1024xf32, #tpu.memory_space<vmem>>, vector<1x1024xf32>
      %c0_14 = arith.constant 0 : index
      %c0_15 = arith.constant 0 : index
      %19 = vector.load %arg5[%c0_14, %c0_15] : memref<1024x32xbf16, #tpu.memory_space<vmem>>, vector<1024x32xbf16>
      %cst_16 = arith.constant dense<0.000000e+00> : vector<1x32xf32>
      %20 = tpu.matmul %18, %19, %cst_16 {dimension_numbers = #tpu.dot_dimension_numbers<[1], [0], [0], [1], [0, 0, 1, 1], [], []>} : vector<1x1024xf32>, vector<1024x32xbf16>, vector<1x32xf32> -> vector<1x32xf32>
      %c0_17 = arith.constant 0 : index
      %c0_18 = arith.constant 0 : index
      %21 = vector.load %arg6[%c0_17, %c0_18] : memref<1x32xf32, #tpu.memory_space<vmem>>, vector<1x32xf32>
      %22 = arith.addf %20, %21 : vector<1x32xf32>
      %cst_19 = arith.constant 0.000000e+00 : f32
      %23 = vector.broadcast %cst_19 : f32 to vector<1x32xf32>
      %24 = arith.maximumf %22, %23 : vector<1x32xf32>
      %c0_20 = arith.constant 0 : index
      %c0_21 = arith.constant 0 : index
      %25 = vector.load %arg7[%c0_20, %c0_21] : memref<32x32xbf16, #tpu.memory_space<vmem>>, vector<32x32xbf16>
      %cst_22 = arith.constant dense<0.000000e+00> : vector<1x32xf32>
      %26 = tpu.matmul %24, %25, %cst_22 {dimension_numbers = #tpu.dot_dimension_numbers<[1], [0], [0], [1], [0, 0, 1, 1], [], []>} : vector<1x32xf32>, vector<32x32xbf16>, vector<1x32xf32> -> vector<1x32xf32>
      %c0_23 = arith.constant 0 : index
      %c0_24 = arith.constant 0 : index
      %27 = vector.load %arg8[%c0_23, %c0_24] : memref<1x32xf32, #tpu.memory_space<vmem>>, vector<1x32xf32>
      %28 = arith.addf %26, %27 : vector<1x32xf32>
      %c0_25 = arith.constant 0 : index
      %c0_26 = arith.constant 0 : index
      %c0_27 = arith.constant 0 : index
      %29 = vector.load %arg9[%c0_25, %c0_26, %c0_27] : memref<1x1x32xf32, #tpu.memory_space<vmem>>, vector<1x1x32xf32>
      %30 = vector.shape_cast %29 : vector<1x1x32xf32> to vector<1x32xf32>
      %31 = vector.shape_cast %28 : vector<1x32xf32> to vector<1x1x32xf32>
      tpu.vector_store %arg9[%c0_25, %c0_26, %c0_27], %31 {strides = array<i32>} : memref<1x1x32xf32, #tpu.memory_space<vmem>>, vector<1x1x32xf32>,
    } else {
    }
    return
  }
  func.func @transform_0(%arg0: i32, %arg1: i32) -> (i32, i32, i32) {
    %c0_i32 = arith.constant 0 : i32
    %c0_i32_0 = arith.constant 0 : i32
    return %arg0, %arg1, %c0_i32 : i32, i32, i32
  }
  func.func @transform_1(%arg0: i32, %arg1: i32) -> (i32, i32) {
    %c0_i32 = arith.constant 0 : i32
    %c0_i32_0 = arith.constant 0 : i32
    %c0_i32_1 = arith.constant 0 : i32
    return %c0_i32, %c0_i32_0 : i32, i32
  }
  func.func @transform_2(%arg0: i32, %arg1: i32) -> (i32, i32) {
    %c0_i32 = arith.constant 0 : i32
    %c0_i32_0 = arith.constant 0 : i32
    %c0_i32_1 = arith.constant 0 : i32
    return %c0_i32, %c0_i32_0 : i32, i32
  }
  func.func @transform_3(%arg0: i32, %arg1: i32) -> (i32, i32) {
    %c0_i32 = arith.constant 0 : i32
    %c0_i32_0 = arith.constant 0 : i32
    %c0_i32_1 = arith.constant 0 : i32
    return %c0_i32, %c0_i32_0 : i32, i32
  }
  func.func @transform_4(%arg0: i32, %arg1: i32) -> (i32, i32) {
    %c0_i32 = arith.constant 0 : i32
    %c0_i32_0 = arith.constant 0 : i32
    %c0_i32_1 = arith.constant 0 : i32
    return %c0_i32, %c0_i32_0 : i32, i32
  }
  func.func @transform_5(%arg0: i32, %arg1: i32) -> (i32, i32) {
    %c0_i32 = arith.constant 0 : i32
    %c0_i32_0 = arith.constant 0 : i32
    %c0_i32_1 = arith.constant 0 : i32
    return %c0_i32, %c0_i32_0 : i32, i32
  }
  func.func @transform_6(%arg0: i32, %arg1: i32) -> (i32, i32) {
    %c0_i32 = arith.constant 0 : i32
    %c0_i32_0 = arith.constant 0 : i32
    %c0_i32_1 = arith.constant 0 : i32
    return %c0_i32, %c0_i32_0 : i32, i32
  }
  func.func @transform_7(%arg0: i32, %arg1: i32) -> (i32, i32, i32) {
    %c0_i32 = arith.constant 0 : i32
    %c0_i32_0 = arith.constant 0 : i32
    %c0_i32_1 = arith.constant 0 : i32
    return %arg0, %c0_i32, %c0_i32_0 : i32, i32, i32
  }
}

module attributes {stable_mosaic.version = 11 : i64} {
  func.func @_decoder_kernel(%arg0: i32, %arg1: i32, %arg2: memref<1x1x32xf32, #tpu.memory_space<vmem>>, %arg3: memref<1x1x32xf32, #tpu.memory_space<vmem>>, %arg4: memref<512x2xf32, #tpu.memory_space<vmem>>, %arg5: memref<2x32xf32, #tpu.memory_space<vmem>>, %arg6: memref<32x32xbf16, #tpu.memory_space<vmem>>, %arg7: memref<1x32xf32, #tpu.memory_space<vmem>>, %arg8: memref<32x3xbf16, #tpu.memory_space<vmem>>, %arg9: memref<1x3xf32, #tpu.memory_space<vmem>>, %arg10: memref<3x32xf32, #tpu.memory_space<vmem>>, %arg11: memref<32x32xbf16, #tpu.memory_space<vmem>>, %arg12: memref<1x32xf32, #tpu.memory_space<vmem>>, %arg13: memref<32x3xbf16, #tpu.memory_space<vmem>>, %arg14: memref<1x3xf32, #tpu.memory_space<vmem>>, %arg15: memref<1x512x3xf32, #tpu.memory_space<vmem>>) attributes {dimension_semantics = [#tpu.dimension_semantics<parallel>, #tpu.dimension_semantics<parallel>], iteration_bounds = array<i64: 2, 4>, scalar_prefetch = 0 : i64, scratch_operands = 0 : i64, tpu.core_type = #tpu.core_type<tc>, window_params = [{transform_indices = @transform_0, window_bounds = array<i64: 1, 1, 32>}, {transform_indices = @transform_1, window_bounds = array<i64: 1, 1, 32>}, {transform_indices = @transform_2, window_bounds = array<i64: 512, 2>}, {pipeline_mode = #tpu.pipeline_mode<synchronous>, transform_indices = @transform_3, window_bounds = array<i64: 2, 32>}, {pipeline_mode = #tpu.pipeline_mode<synchronous>, transform_indices = @transform_4, window_bounds = array<i64: 32, 32>}, {pipeline_mode = #tpu.pipeline_mode<synchronous>, transform_indices = @transform_5, window_bounds = array<i64: 1, 32>}, {pipeline_mode = #tpu.pipeline_mode<synchronous>, transform_indices = @transform_6, window_bounds = array<i64: 32, 3>}, {pipeline_mode = #tpu.pipeline_mode<synchronous>, transform_indices = @transform_7, window_bounds = array<i64: 1, 3>}, {pipeline_mode = #tpu.pipeline_mode<synchronous>, transform_indices = @transform_8, window_bounds = array<i64: 3, 32>}, {pipeline_mode = #tpu.pipeline_mode<synchronous>, transform_indices = @transform_9, window_bounds = array<i64: 32, 32>}, {pipeline_mode = #tpu.pipeline_mode<synchronous>, transform_indices = @transform_10, window_bounds = array<i64: 1, 32>}, {pipeline_mode = #tpu.pipeline_mode<synchronous>, transform_indices = @transform_11, window_bounds = array<i64: 32, 3>}, {pipeline_mode = #tpu.pipeline_mode<synchronous>, transform_indices = @transform_12, window_bounds = array<i64: 1, 3>}, {transform_indices = @transform_13, window_bounds = array<i64: 1, 512, 3>}]} {
    %c0 = arith.constant 0 : index
    %c0_0 = arith.constant 0 : index
    %0 = vector.load %arg4[%c0, %c0_0] : memref<512x2xf32, #tpu.memory_space<vmem>>, vector<512x2xf32>
    %c0_1 = arith.constant 0 : index
    %c0_2 = arith.constant 0 : index
    %1 = vector.load %arg5[%c0_1, %c0_2] : memref<2x32xf32, #tpu.memory_space<vmem>>, vector<2x32xf32>
    %cst = arith.constant dense<0.000000e+00> : vector<512x32xf32>
    %2 = tpu.matmul %0, %1, %cst {dimension_numbers = #tpu.dot_dimension_numbers<[1], [0], [0], [1], [0, 0, 1, 1], [], []>} : vector<512x2xf32>, vector<2x32xf32>, vector<512x32xf32> -> vector<512x32xf32>
    %c0_3 = arith.constant 0 : index
    %c0_4 = arith.constant 0 : index
    %c0_5 = arith.constant 0 : index
    %3 = vector.load %arg2[%c0_3, %c0_4, %c0_5] : memref<1x1x32xf32, #tpu.memory_space<vmem>>, vector<1x1x32xf32>
    %4 = vector.shape_cast %3 : vector<1x1x32xf32> to vector<1x32xf32>
    %5 = vector.broadcast %4 : vector<1x32xf32> to vector<512x32xf32>
    %6 = arith.addf %2, %5 : vector<512x32xf32>
    %cst_6 = arith.constant 0.000000e+00 : f32
    %7 = vector.broadcast %cst_6 : f32 to vector<512x32xf32>
    %8 = arith.maximumf %6, %7 : vector<512x32xf32>
    %9 = arith.truncf %8 : vector<512x32xf32> to vector<512x32xbf16>
    %c0_7 = arith.constant 0 : index
    %c0_8 = arith.constant 0 : index
    %10 = vector.load %arg6[%c0_7, %c0_8] : memref<32x32xbf16, #tpu.memory_space<vmem>>, vector<32x32xbf16>
    %cst_9 = arith.constant dense<0.000000e+00> : vector<512x32xf32>
    %11 = tpu.matmul %9, %10, %cst_9 {dimension_numbers = #tpu.dot_dimension_numbers<[1], [0], [0], [1], [0, 0, 1, 1], [], []>} : vector<512x32xbf16>, vector<32x32xbf16>, vector<512x32xf32> -> vector<512x32xf32>
    %c0_10 = arith.constant 0 : index
    %c0_11 = arith.constant 0 : index
    %12 = vector.load %arg7[%c0_10, %c0_11] : memref<1x32xf32, #tpu.memory_space<vmem>>, vector<1x32xf32>
    %13 = vector.broadcast %12 : vector<1x32xf32> to vector<512x32xf32>
    %14 = arith.addf %11, %13 : vector<512x32xf32>
    %cst_12 = arith.constant 0.000000e+00 : f32
    %15 = vector.broadcast %cst_12 : f32 to vector<512x32xf32>
    %16 = arith.maximumf %14, %15 : vector<512x32xf32>
    %17 = arith.truncf %16 : vector<512x32xf32> to vector<512x32xbf16>
    %c0_13 = arith.constant 0 : index
    %c0_14 = arith.constant 0 : index
    %18 = vector.load %arg8[%c0_13, %c0_14] : memref<32x3xbf16, #tpu.memory_space<vmem>>, vector<32x3xbf16>
    %cst_15 = arith.constant dense<0.000000e+00> : vector<512x3xf32>
    %19 = tpu.matmul %17, %18, %cst_15 {dimension_numbers = #tpu.dot_dimension_numbers<[1], [0], [0], [1], [0, 0, 1, 1], [], []>} : vector<512x32xbf16>, vector<32x3xbf16>, vector<512x3xf32> -> vector<512x3xf32>
    %c0_16 = arith.constant 0 : index
    %c0_17 = arith.constant 0 : index
    %20 = vector.load %arg9[%c0_16, %c0_17] : memref<1x3xf32, #tpu.memory_space<vmem>>, vector<1x3xf32>
    %21 = vector.broadcast %20 : vector<1x3xf32> to vector<512x3xf32>
    %22 = arith.addf %19, %21 : vector<512x3xf32>
    %c0_18 = arith.constant 0 : index
    %c0_19 = arith.constant 0 : index
    %23 = vector.load %arg10[%c0_18, %c0_19] : memref<3x32xf32, #tpu.memory_space<vmem>>, vector<3x32xf32>
    %cst_20 = arith.constant dense<0.000000e+00> : vector<512x32xf32>
    %24 = tpu.matmul %22, %23, %cst_20 {dimension_numbers = #tpu.dot_dimension_numbers<[1], [0], [0], [1], [0, 0, 1, 1], [], []>} : vector<512x3xf32>, vector<3x32xf32>, vector<512x32xf32> -> vector<512x32xf32>
    %c0_21 = arith.constant 0 : index
    %c0_22 = arith.constant 0 : index
    %c0_23 = arith.constant 0 : index
    %25 = vector.load %arg3[%c0_21, %c0_22, %c0_23] : memref<1x1x32xf32, #tpu.memory_space<vmem>>, vector<1x1x32xf32>
    %26 = vector.shape_cast %25 : vector<1x1x32xf32> to vector<1x32xf32>
    %27 = vector.broadcast %26 : vector<1x32xf32> to vector<512x32xf32>
    %28 = arith.addf %24, %27 : vector<512x32xf32>
    %cst_24 = arith.constant 0.000000e+00 : f32
    %29 = vector.broadcast %cst_24 : f32 to vector<512x32xf32>
    %30 = arith.maximumf %28, %29 : vector<512x32xf32>
    %31 = arith.truncf %30 : vector<512x32xf32> to vector<512x32xbf16>
    %c0_25 = arith.constant 0 : index
    %c0_26 = arith.constant 0 : index
    %32 = vector.load %arg11[%c0_25, %c0_26] : memref<32x32xbf16, #tpu.memory_space<vmem>>, vector<32x32xbf16>
    %cst_27 = arith.constant dense<0.000000e+00> : vector<512x32xf32>
    %33 = tpu.matmul %31, %32, %cst_27 {dimension_numbers = #tpu.dot_dimension_numbers<[1], [0], [0], [1], [0, 0, 1, 1], [], []>} : vector<512x32xbf16>, vector<32x32xbf16>, vector<512x32xf32> -> vector<512x32xf32>
    %c0_28 = arith.constant 0 : index
    %c0_29 = arith.constant 0 : index
    %34 = vector.load %arg12[%c0_28, %c0_29] : memref<1x32xf32, #tpu.memory_space<vmem>>, vector<1x32xf32>
    %35 = vector.broadcast %34 : vector<1x32xf32> to vector<512x32xf32>
    %36 = arith.addf %33, %35 : vector<512x32xf32>
    %cst_30 = arith.constant 0.000000e+00 : f32
    %37 = vector.broadcast %cst_30 : f32 to vector<512x32xf32>
    %38 = arith.maximumf %36, %37 : vector<512x32xf32>
    %39 = arith.truncf %38 : vector<512x32xf32> to vector<512x32xbf16>
    %c0_31 = arith.constant 0 : index
    %c0_32 = arith.constant 0 : index
    %40 = vector.load %arg13[%c0_31, %c0_32] : memref<32x3xbf16, #tpu.memory_space<vmem>>, vector<32x3xbf16>
    %cst_33 = arith.constant dense<0.000000e+00> : vector<512x3xf32>
    %41 = tpu.matmul %39, %40, %cst_33 {dimension_numbers = #tpu.dot_dimension_numbers<[1], [0], [0], [1], [0, 0, 1, 1], [], []>} : vector<512x32xbf16>, vector<32x3xbf16>, vector<512x3xf32> -> vector<512x3xf32>
    %c0_34 = arith.constant 0 : index
    %c0_35 = arith.constant 0 : index
    %42 = vector.load %arg14[%c0_34, %c0_35] : memref<1x3xf32, #tpu.memory_space<vmem>>, vector<1x3xf32>
    %43 = vector.broadcast %42 : vector<1x3xf32> to vector<512x3xf32>
    %44 = arith.addf %41, %43 : vector<512x3xf32>
    %c0_36 = arith.constant 0 : index
    %c0_37 = arith.constant 0 : index
    %c0_38 = arith.constant 0 : index
    %45 = vector.load %arg15[%c0_36, %c0_37, %c0_38] : memref<1x512x3xf32, #tpu.memory_space<vmem>>, vector<1x512x3xf32>
    %46 = vector.shape_cast %45 : vector<1x512x3xf32> to vector<512x3xf32>
    %47 = vector.shape_cast %44 : vector<512x3xf32> to vector<1x512x3xf32>
    tpu.vector_store %arg15[%c0_36, %c0_37, %c0_38], %47 {strides = array<i32>} : memref<1x512x3xf32, #tpu.memory_space<vmem>>, vector<1x512x3xf32>,
    return
  }
  func.func @transform_0(%arg0: i32, %arg1: i32) -> (i32, i32, i32) {
    %c0_i32 = arith.constant 0 : i32
    %c0_i32_0 = arith.constant 0 : i32
    %c0_i32_1 = arith.constant 0 : i32
    return %arg0, %c0_i32, %c0_i32_0 : i32, i32, i32
  }
  func.func @transform_1(%arg0: i32, %arg1: i32) -> (i32, i32, i32) {
    %c0_i32 = arith.constant 0 : i32
    %c0_i32_0 = arith.constant 0 : i32
    %c0_i32_1 = arith.constant 0 : i32
    return %arg0, %c0_i32, %c0_i32_0 : i32, i32, i32
  }
  func.func @transform_2(%arg0: i32, %arg1: i32) -> (i32, i32) {
    %c0_i32 = arith.constant 0 : i32
    %c0_i32_0 = arith.constant 0 : i32
    return %arg1, %c0_i32 : i32, i32
  }
  func.func @transform_3(%arg0: i32, %arg1: i32) -> (i32, i32) {
    %c0_i32 = arith.constant 0 : i32
    %c0_i32_0 = arith.constant 0 : i32
    %c0_i32_1 = arith.constant 0 : i32
    return %c0_i32, %c0_i32_0 : i32, i32
  }
  func.func @transform_4(%arg0: i32, %arg1: i32) -> (i32, i32) {
    %c0_i32 = arith.constant 0 : i32
    %c0_i32_0 = arith.constant 0 : i32
    %c0_i32_1 = arith.constant 0 : i32
    return %c0_i32, %c0_i32_0 : i32, i32
  }
  func.func @transform_5(%arg0: i32, %arg1: i32) -> (i32, i32) {
    %c0_i32 = arith.constant 0 : i32
    %c0_i32_0 = arith.constant 0 : i32
    %c0_i32_1 = arith.constant 0 : i32
    return %c0_i32, %c0_i32_0 : i32, i32
  }
  func.func @transform_6(%arg0: i32, %arg1: i32) -> (i32, i32) {
    %c0_i32 = arith.constant 0 : i32
    %c0_i32_0 = arith.constant 0 : i32
    %c0_i32_1 = arith.constant 0 : i32
    return %c0_i32, %c0_i32_0 : i32, i32
  }
  func.func @transform_7(%arg0: i32, %arg1: i32) -> (i32, i32) {
    %c0_i32 = arith.constant 0 : i32
    %c0_i32_0 = arith.constant 0 : i32
    %c0_i32_1 = arith.constant 0 : i32
    return %c0_i32, %c0_i32_0 : i32, i32
  }
  func.func @transform_8(%arg0: i32, %arg1: i32) -> (i32, i32) {
    %c0_i32 = arith.constant 0 : i32
    %c0_i32_0 = arith.constant 0 : i32
    %c0_i32_1 = arith.constant 0 : i32
    return %c0_i32, %c0_i32_0 : i32, i32
  }
  func.func @transform_9(%arg0: i32, %arg1: i32) -> (i32, i32) {
    %c0_i32 = arith.constant 0 : i32
    %c0_i32_0 = arith.constant 0 : i32
    %c0_i32_1 = arith.constant 0 : i32
    return %c0_i32, %c0_i32_0 : i32, i32
  }
  func.func @transform_10(%arg0: i32, %arg1: i32) -> (i32, i32) {
    %c0_i32 = arith.constant 0 : i32
    %c0_i32_0 = arith.constant 0 : i32
    %c0_i32_1 = arith.constant 0 : i32
    return %c0_i32, %c0_i32_0 : i32, i32
  }
  func.func @transform_11(%arg0: i32, %arg1: i32) -> (i32, i32) {
    %c0_i32 = arith.constant 0 : i32
    %c0_i32_0 = arith.constant 0 : i32
    %c0_i32_1 = arith.constant 0 : i32
    return %c0_i32, %c0_i32_0 : i32, i32
  }
  func.func @transform_12(%arg0: i32, %arg1: i32) -> (i32, i32) {
    %c0_i32 = arith.constant 0 : i32
    %c0_i32_0 = arith.constant 0 : i32
    %c0_i32_1 = arith.constant 0 : i32
    return %c0_i32, %c0_i32_0 : i32, i32
  }
  func.func @transform_13(%arg0: i32, %arg1: i32) -> (i32, i32, i32) {
    %c0_i32 = arith.constant 0 : i32
    %c0_i32_0 = arith.constant 0 : i32
    return %arg0, %arg1, %c0_i32 : i32, i32, i32
  }
}

</mosaic_0001>

<llo_original>
// kernel: reconstruction_net_forward.5
$region0: #{reconstruction_net_forward.5}
  #allocation0 [shape = 'u32[]', space=smem, size = 0x4, offset = 0x4, fixed_abs, tag = 'smem constant byte address 0x4 - core index']
  #allocation1 [shape = 'u32[72,128]{1,0:T(1,128)}', space=vmem, size = 0x9000, scoped, tag = 'internal scratch']
  %s0 = inlined_call_operand.vmem [shape: f32[2,3,128], index: 0, kind: input, shape index: {}, may-alias: {0,1}]
  %s1 = inlined_call_operand.vmem [shape: f32[2,3,128], index: 1, kind: input, shape index: {}, may-alias: {0,1}]
  %s2 = inlined_call_operand.vmem [shape: f32[2,128,128], index: 2, kind: output, shape index: {}]
  %s3 = sld [smem:[#allocation0]]
  $region41: #{reconstruction_net_forward.5} parent=0
    _
  %s5 = ssub.s32 1, %s3
  %s6 = scalar_select 0, %s5, %s3
  loop: start=0, step=1, limit=4
  $region2: #{reconstruction_net_forward.5} parent=0 // loop_pre_header
    _
  $region3: #{reconstruction_net_forward.5} parent=0 // loop_header
    %s8 = sphi 0, %s12
    %p9 = scmp.ge.s32.totalorder %s8, 4
    %s15 = sphi 0, %s27
    %s16 = sphi 0, %s23
    %s17 = sphi 0, %s15
    %s18 = sphi 0, %s16
    %s19 = sphi 0, %s17
    %s20 = sphi 0, %s18
    %s30 = sphi 0, %s32
    %s33 = sphi 0, %s30
    %s34 = sphi 0, %s33
    %s50 = sphi 0, %s34
    %s58 = sphi 0, %s60
    %s61 = sphi 0, %s58
    %s62 = sphi 0, %s61
    %s78 = sphi 0, %s62
    %s86 = sphi 0, %s88
    %s89 = sphi 0, %s86
    %s90 = sphi 0, %s89
    %s106 = sphi 0, %s90
  $region4: #{reconstruction_net_forward.5} parent=0 // loop_header_branch
    %11 = sbr.rel (%p9) target = $region8
  $region5: #{reconstruction_net_forward.5} parent=0 // loop_body
    %s13 = ssub.s32 %s8, 1
    %s14 = ssub.s32 %s8, 2
    %s21 = sadd.s32 1, %s16
    %p22 = scmp.ge.s32.totalorder %s21, 1
    %s23 = scalar_select %p22, 0, %s21
    %s24 = sadd.s32 1, %s15
    %s25 = scalar_select %p22, %s24, %s15
    %p26 = scmp.ge.s32.totalorder %s25, 2
    %s27 = scalar_select %p26, 0, %s25
    %s28 = ssub.s32 %s15, %s27
    %p29 = scmp.eq.s32.totalorder %s28, 0
    %s31 = sadd.s32 %s30, 1
    %s32 = scalar_select %p29, %s30, %s31
    %p35 = pneg %p29
    %p36 = scmp.eq.s32.totalorder %s8, 1
    %p37 = por %p35, %p36
    %p38 = scmp.ne.s32.totalorder %s30, %s33
    %p39 = scmp.eq.s32.totalorder %s8, 0
    %p40 = por %p38, %p39
    %p41 = scmp.ne.s32.totalorder %s30, %s33
    %p42 = scmp.eq.s32.totalorder %s13, 1
    %p43 = por %p41, %p42
    %p44 = scmp.ne.s32.totalorder %s33, %s34
    %p45 = scmp.eq.s32.totalorder %s13, 0
    %p46 = por %p44, %p45
    %p47 = scmp.ne.s32.totalorder %s33, %s34
    %p48 = scmp.eq.s32.totalorder %s14, 1
    %p49 = por %p47, %p48
    %p51 = scmp.ne.s32.totalorder %s34, %s50
    %p52 = scmp.eq.s32.totalorder %s14, 0
    %p53 = por %p51, %p52
    %s54 = ssub.s32 %s15, %s27
    %s55 = ssub.s32 %s16, %s23
    %s56 = sor.u32 %s54, %s55
    %p57 = scmp.eq.s32.totalorder %s56, 0
    %s59 = sadd.s32 %s58, 1
    %s60 = scalar_select %p57, %s58, %s59
    %p63 = pneg %p57
    %p64 = scmp.eq.s32.totalorder %s8, 1
    %p65 = por %p63, %p64
    %p66 = scmp.ne.s32.totalorder %s58, %s61
    %p67 = scmp.eq.s32.totalorder %s8, 0
    %p68 = por %p66, %p67
    %p69 = scmp.ne.s32.totalorder %s58, %s61
    %p70 = scmp.eq.s32.totalorder %s13, 1
    %p71 = por %p69, %p70
    %p72 = scmp.ne.s32.totalorder %s61, %s62
    %p73 = scmp.eq.s32.totalorder %s13, 0
    %p74 = por %p72, %p73
    %p75 = scmp.ne.s32.totalorder %s61, %s62
    %p76 = scmp.eq.s32.totalorder %s14, 1
    %p77 = por %p75, %p76
    %p79 = scmp.ne.s32.totalorder %s62, %s78
    %p80 = scmp.eq.s32.totalorder %s14, 0
    %p81 = por %p79, %p80
    %s82 = ssub.s32 %s15, %s27
    %s83 = ssub.s32 %s16, %s23
    %s84 = sor.u32 %s82, %s83
    %p85 = scmp.eq.s32.totalorder %s84, 0
    %s87 = sadd.s32 %s86, 1
    %s88 = scalar_select %p85, %s86, %s87
    %p91 = pneg %p85
    %p92 = scmp.eq.s32.totalorder %s8, 1
    %p93 = por %p91, %p92
    %p94 = scmp.ne.s32.totalorder %s86, %s89
    %p95 = scmp.eq.s32.totalorder %s8, 0
    %p96 = por %p94, %p95
    %p97 = scmp.ne.s32.totalorder %s86, %s89
    %p98 = scmp.eq.s32.totalorder %s13, 1
    %p99 = por %p97, %p98
    %p100 = scmp.ne.s32.totalorder %s89, %s90
    %p101 = scmp.eq.s32.totalorder %s13, 0
    %p102 = por %p100, %p101
    %p103 = scmp.ne.s32.totalorder %s89, %s90
    %p104 = scmp.eq.s32.totalorder %s14, 1
    %p105 = por %p103, %p104
    %p107 = scmp.ne.s32.totalorder %s90, %s106
    %p108 = scmp.eq.s32.totalorder %s14, 0
    %p109 = por %p107, %p108
    %p110 = scmp.le.s32.totalorder 1, %s8
    %p111 = scmp.lt.s32.totalorder %s8, 3
    %p112 = pnand %p110, %p111
    %p113 = pneg %p112
    // Predicated region
    $region9: #{reconstruction_net_forward.5} parent=5 // pred_check
      _
    $region10: #{reconstruction_net_forward.5} parent=5 // pred_check_branch
      %115 = sbr.rel (%p112) target = $region12
    $region11: #{reconstruction_net_forward.5} parent=5 // pred_region
      %s116 = ssub.s32 %s8, 1
    $region12: #{reconstruction_net_forward.5} parent=5 // pred_fallthru
      _
    %p117 = scmp.lt.s32.totalorder %s8, 2
    // Predicated region
    $region13: #{reconstruction_net_forward.5} parent=5 // pred_check
      %p118 = pneg %p117
    $region14: #{reconstruction_net_forward.5} parent=5 // pred_check_branch
      %120 = sbr.rel (%p118) target = $region16
    $region15: #{reconstruction_net_forward.5} parent=5 // pred_region
      // Predicated region
      $region17: #{reconstruction_net_forward.5} parent=15 // pred_check
        %p121 = pneg %p40
      $region18: #{reconstruction_net_forward.5} parent=15 // pred_check_branch
        %123 = sbr.rel (%p121) target = $region20
      $region19: #{reconstruction_net_forward.5} parent=15 // pred_region
        %p124 = scmp.lt.s32.totalorder %s15, 1
        %s125 = scalar_select %p124, %s15, 1
        %s126 = smul.addr %s125, 4
        %s127 = scalar_lea.vmem %s0, %s126
      $region20: #{reconstruction_net_forward.5} parent=15 // pred_fallthru
        _
      // Predicated region
      $region21: #{reconstruction_net_forward.5} parent=15 // pred_check
        %p128 = pneg %p68
      $region22: #{reconstruction_net_forward.5} parent=15 // pred_check_branch
        %130 = sbr.rel (%p128) target = $region24
      $region23: #{reconstruction_net_forward.5} parent=15 // pred_region
        %p131 = scmp.lt.s32.totalorder %s15, 1
        %s132 = scalar_select %p131, %s15, 1
        %p133 = scmp.lt.s32.totalorder %s16, 0
        %s134 = scalar_select %p133, %s16, 0
        %s135 = sadd.s32 %s134, %s132
        %s136 = smul.addr %s135, 4
        %s137 = scalar_lea.vmem %s1, %s136
      $region24: #{reconstruction_net_forward.5} parent=15 // pred_fallthru
        _
    $region16: #{reconstruction_net_forward.5} parent=5 // pred_fallthru
      _
    %p138 = scmp.le.s32.totalorder 1, %s8
    %p139 = scmp.lt.s32.totalorder %s8, 3
    %p140 = pnand %p138, %p139
    %p141 = pneg %p140
    // Predicated region
    $region25: #{reconstruction_net_forward.5} parent=5 // pred_check
      _
    $region26: #{reconstruction_net_forward.5} parent=5 // pred_check_branch
      %143 = sbr.rel (%p140) target = $region28
    $region27: #{reconstruction_net_forward.5} parent=5 // pred_region
      %s144 = ssub.s32 %s8, 1
      %p145 = scmp.lt.s32.totalorder %s17, 1
      %s146 = scalar_select %p145, %s17, 1
      %s147 = smul.addr %s146, 4
      %s148 = scalar_lea.vmem %s0, %s147
      %p149 = pneg %p46
      %p150 = pneg %p43
      %p151 = scmp.lt.s32.totalorder %s17, 1
      %s152 = scalar_select %p151, %s17, 1
      %p153 = scmp.lt.s32.totalorder %s18, 0
      %s154 = scalar_select %p153, %s18, 0
      %s155 = sadd.s32 %s154, %s152
      %s156 = smul.addr %s155, 4
      %s157 = scalar_lea.vmem %s1, %s156
      %p158 = pneg %p74
      %p159 = pneg %p71
      %p160 = pneg %p102
      %p161 = pneg %p99
      %p162 = scmp.lt.s32.totalorder %s17, 1
      %s163 = scalar_select %p162, %s17, 1
      %p164 = scmp.lt.s32.totalorder %s18, 0
      %s165 = scalar_select %p164, %s18, 0
      %s166 = smul.addr %s163, 16
      %s167 = sadd.s32 %s165, %s166
      %s168 = smul.addr %s167, 8
      %s169 = scalar_lea.vmem %s2, %s168
      %p170 = scmp.lt.s32.totalorder %s17, 1
      %s171 = scalar_select %p170, %s17, 1
      %s172 = smul.addr %s171, 4
      %s173 = scalar_lea.vmem %s0, %s172
      %p174 = scmp.lt.s32.totalorder %s17, 1
      %s175 = scalar_select %p174, %s17, 1
      %p176 = scmp.lt.s32.totalorder %s18, 0
      %s177 = scalar_select %p176, %s18, 0
      %s178 = sadd.s32 %s177, %s175
      %s179 = smul.addr %s178, 4
      %s180 = scalar_lea.vmem %s1, %s179
      %p181 = scmp.lt.s32.totalorder %s17, 1
      %s182 = scalar_select %p181, %s17, 1
      %p183 = scmp.lt.s32.totalorder %s18, 0
      %s184 = scalar_select %p183, %s18, 0
      %s185 = smul.addr %s182, 16
      %s186 = sadd.s32 %s184, %s185
      %s187 = smul.addr %s186, 8
      %s188 = scalar_lea.vmem %s2, %s187
      %v189 = vld [vmem:[%s173] sm:$0x7]
      %v190 = vld [vmem:[%s180] sm:$0x7]
      %191 = vxpose.xlu0.b32.start [1/16] %v189, 128
      %192 = vxpose.xlu0.b32.cont [2/16] 0.0, 128
      %193 = vxpose.xlu0.b32.cont [3/16] 0.0, 128
      %194 = vxpose.xlu0.b32.cont [4/16] 0.0, 128
      %195 = vxpose.xlu0.b32.cont [5/16] 0.0, 128
      %196 = vxpose.xlu0.b32.cont [6/16] 0.0, 128
      %197 = vxpose.xlu0.b32.cont [7/16] 0.0, 128
      %198 = vxpose.xlu0.b32.cont [8/16] 0.0, 128
      %199 = vxpose.xlu0.b32.cont [9/16] 0.0, 128
      %200 = vxpose.xlu0.b32.cont [10/16] 0.0, 128
      %201 = vxpose.xlu0.b32.cont [11/16] 0.0, 128
      %202 = vxpose.xlu0.b32.cont [12/16] 0.0, 128
      %203 = vxpose.xlu0.b32.cont [13/16] 0.0, 128
      %204 = vxpose.xlu0.b32.cont [14/16] 0.0, 128
      %205 = vxpose.xlu0.b32.cont [15/16] 0.0, 128
      %206 = vxpose.xlu0.b32.end [16/16] 0.0, 128
      %v207 = vpop.trf.xlu0
      %v208 = vpop.trf.xlu0
      %v209 = vpop.trf.xlu0
      %v210 = vpop.trf.xlu0
      %v211 = vpop.trf.xlu0
      %v212 = vpop.trf.xlu0
      %v213 = vpop.trf.xlu0
      %v214 = vpop.trf.xlu0
      %v215 = vpop.trf.xlu0
      %v216 = vpop.trf.xlu0
      %v217 = vpop.trf.xlu0
      %v218 = vpop.trf.xlu0
      %v219 = vpop.trf.xlu0
      %v220 = vpop.trf.xlu0
      %v221 = vpop.trf.xlu0
      %v222 = vpop.trf.xlu0
      %vm223 = vcmask 23552
      %v225 = vsel %vm223, %v207, 0
      %v228 = vsel %vm223, %v208, 0
      %v231 = vsel %vm223, %v209, 0
      %v234 = vsel %vm223, %v210, 0
      %v237 = vsel %vm223, %v211, 0
      %v240 = vsel %vm223, %v212, 0
      %v243 = vsel %vm223, %v213, 0
      %v246 = vsel %vm223, %v214, 0
      %v249 = vsel %vm223, %v215, 0
      %v252 = vsel %vm223, %v216, 0
      %v255 = vsel %vm223, %v217, 0
      %v258 = vsel %vm223, %v218, 0
      %v261 = vsel %vm223, %v219, 0
      %v264 = vsel %vm223, %v220, 0
      %v267 = vsel %vm223, %v221, 0
      %v270 = vsel %vm223, %v222, 0
      %vm272 = vcmask 1042432
      %v274 = vsel %vm272, %v190, 0
      %276 = vmatpush.msra.mxu0 0.0
      %277 = vmatpush.msra.mxu0 0.0
      %278 = vmatpush.msra.mxu0 0.0
      %279 = vmatpush.msra.mxu0 0.0
      %280 = vmatpush.msra.mxu0 0.0
      %281 = vmatpush.msra.mxu0 0.0
      %282 = vmatpush.msra.mxu0 0.0
      %283 = vmatpush.msra.mxu0 0.0
      %284 = vmatpush.msra.mxu0 0.0
      %285 = vmatpush.msra.mxu0 0.0
      %286 = vmatpush.msra.mxu0 0.0
      %287 = vmatpush.msra.mxu0 0.0
      %288 = vmatpush.msra.mxu0 0.0
      %289 = vmatpush.msra.mxu0 0.0
      %290 = vmatpush.msra.mxu0 0.0
      %291 = vmatpush.msra.mxu0 %v274
      %292 = vmatmul.f32.gmra.mxu0 %v225
      %v293 = vpop.f32.mrf.mxu0
      %v294 = vadd.f32 0.0, %v293
      %295 = vmatmul.f32.gmra.mxu0 %v228
      %v296 = vpop.f32.mrf.mxu0
      %v297 = vadd.f32 0.0, %v296
      %298 = vmatmul.f32.gmra.mxu0 %v231
      %v299 = vpop.f32.mrf.mxu0
      %v300 = vadd.f32 0.0, %v299
      %301 = vmatmul.f32.gmra.mxu0 %v234
      %v302 = vpop.f32.mrf.mxu0
      %v303 = vadd.f32 0.0, %v302
      %304 = vmatmul.f32.gmra.mxu0 %v237
      %v305 = vpop.f32.mrf.mxu0
      %v306 = vadd.f32 0.0, %v305
      %307 = vmatmul.f32.gmra.mxu0 %v240
      %v308 = vpop.f32.mrf.mxu0
      %v309 = vadd.f32 0.0, %v308
      %310 = vmatmul.f32.gmra.mxu0 %v243
      %v311 = vpop.f32.mrf.mxu0
      %v312 = vadd.f32 0.0, %v311
      %313 = vmatmul.f32.gmra.mxu0 %v246
      %v314 = vpop.f32.mrf.mxu0
      %v315 = vadd.f32 0.0, %v314
      %316 = vmatmul.f32.gmra.mxu0 %v249
      %v317 = vpop.f32.mrf.mxu0
      %v318 = vadd.f32 0.0, %v317
      %319 = vmatmul.f32.gmra.mxu0 %v252
      %v320 = vpop.f32.mrf.mxu0
      %v321 = vadd.f32 0.0, %v320
      %322 = vmatmul.f32.gmra.mxu0 %v255
      %v323 = vpop.f32.mrf.mxu0
      %v324 = vadd.f32 0.0, %v323
      %325 = vmatmul.f32.gmra.mxu0 %v258
      %v326 = vpop.f32.mrf.mxu0
      %v327 = vadd.f32 0.0, %v326
      %328 = vmatmul.f32.gmra.mxu0 %v261
      %v329 = vpop.f32.mrf.mxu0
      %v330 = vadd.f32 0.0, %v329
      %331 = vmatmul.f32.gmra.mxu0 %v264
      %v332 = vpop.f32.mrf.mxu0
      %v333 = vadd.f32 0.0, %v332
      %334 = vmatmul.f32.gmra.mxu0 %v267
      %v335 = vpop.f32.mrf.mxu0
      %v336 = vadd.f32 0.0, %v335
      %337 = vmatmul.f32.gmra.mxu0 %v270
      %v338 = vpop.f32.mrf.mxu0
      %v339 = vadd.f32 0.0, %v338
      %340 = vdwg.mxu0
      %v341 = vmul.f32 %v189, %v189
      %v342 = vsel %vm272, %v341, 0.0
      %v343 = vrot.slane %v342, 4
      %v344 = vadd.f32 %v342, %v343
      %v345 = vrot.slane %v344, 2
      %v346 = vadd.f32 %v344, %v345
      %v347 = vrot.slane %v346, 1
      %v348 = vadd.f32 %v346, %v347
      %v349 = vmul.f32 %v190, %v190
      %v350 = vsel %vm272, %v349, 0.0
      %v351 = vrot.slane %v350, 4
      %v352 = vadd.f32 %v350, %v351
      %v353 = vrot.slane %v352, 2
      %v354 = vadd.f32 %v352, %v353
      %v355 = vrot.slane %v354, 1
      %v356 = vadd.f32 %v354, %v355
      %v357 = vmul.f32 %v294, 2.0
      %v358 = vmul.f32 %v297, 2.0
      %v359 = vmul.f32 %v300, 2.0
      %v360 = vmul.f32 %v303, 2.0
      %v361 = vmul.f32 %v306, 2.0
      %v362 = vmul.f32 %v309, 2.0
      %v363 = vmul.f32 %v312, 2.0
      %v364 = vmul.f32 %v315, 2.0
      %v365 = vmul.f32 %v318, 2.0
      %v366 = vmul.f32 %v321, 2.0
      %v367 = vmul.f32 %v324, 2.0
      %v368 = vmul.f32 %v327, 2.0
      %v369 = vmul.f32 %v330, 2.0
      %v370 = vmul.f32 %v333, 2.0
      %v371 = vmul.f32 %v336, 2.0
      %v372 = vmul.f32 %v339, 2.0
      %373 = vxpose.xlu0.b32.start [1/16] %v348, 128
      %374 = vxpose.xlu0.b32.cont [2/16] 0.0, 128
      %375 = vxpose.xlu0.b32.cont [3/16] 0.0, 128
      %376 = vxpose.xlu0.b32.cont [4/16] 0.0, 128
      %377 = vxpose.xlu0.b32.cont [5/16] 0.0, 128
      %378 = vxpose.xlu0.b32.cont [6/16] 0.0, 128
      %379 = vxpose.xlu0.b32.cont [7/16] 0.0, 128
      %380 = vxpose.xlu0.b32.cont [8/16] 0.0, 128
      %381 = vxpose.xlu0.b32.cont [9/16] 0.0, 128
      %382 = vxpose.xlu0.b32.cont [10/16] 0.0, 128
      %383 = vxpose.xlu0.b32.cont [11/16] 0.0, 128
      %384 = vxpose.xlu0.b32.cont [12/16] 0.0, 128
      %385 = vxpose.xlu0.b32.cont [13/16] 0.0, 128
      %386 = vxpose.xlu0.b32.cont [14/16] 0.0, 128
      %387 = vxpose.xlu0.b32.cont [15/16] 0.0, 128
      %388 = vxpose.xlu0.b32.end [16/16] 0.0, 128
      %v389 = vpop.trf.xlu0
      %v390 = vpop.trf.xlu0
      %v391 = vpop.trf.xlu0
      %v392 = vpop.trf.xlu0
      %v393 = vpop.trf.xlu0
      %v394 = vpop.trf.xlu0
      %v395 = vpop.trf.xlu0
      %v396 = vpop.trf.xlu0
      %v397 = vpop.trf.xlu0
      %v398 = vpop.trf.xlu0
      %v399 = vpop.trf.xlu0
      %v400 = vpop.trf.xlu0
      %v401 = vpop.trf.xlu0
      %v402 = vpop.trf.xlu0
      %v403 = vpop.trf.xlu0
      %v404 = vpop.trf.xlu0
      %406 = vset.pattern.permute.xlu0 0
      %407 = vperm.xlu0 %406, %v389
      %v408 = vpop.permute.xlu0 %407
      %411 = vset.pattern.permute.xlu0 0
      %412 = vperm.xlu0 %411, %v390
      %v413 = vpop.permute.xlu0 %412
      %416 = vset.pattern.permute.xlu0 0
      %417 = vperm.xlu0 %416, %v391
      %v418 = vpop.permute.xlu0 %417
      %421 = vset.pattern.permute.xlu0 0
      %422 = vperm.xlu0 %421, %v392
      %v423 = vpop.permute.xlu0 %422
      %426 = vset.pattern.permute.xlu0 0
      %427 = vperm.xlu0 %426, %v393
      %v428 = vpop.permute.xlu0 %427
      %431 = vset.pattern.permute.xlu0 0
      %432 = vperm.xlu0 %431, %v394
      %v433 = vpop.permute.xlu0 %432
      %436 = vset.pattern.permute.xlu0 0
      %437 = vperm.xlu0 %436, %v395
      %v438 = vpop.permute.xlu0 %437
      %441 = vset.pattern.permute.xlu0 0
      %442 = vperm.xlu0 %441, %v396
      %v443 = vpop.permute.xlu0 %442
      %446 = vset.pattern.permute.xlu0 0
      %447 = vperm.xlu0 %446, %v397
      %v448 = vpop.permute.xlu0 %447
      %451 = vset.pattern.permute.xlu0 0
      %452 = vperm.xlu0 %451, %v398
      %v453 = vpop.permute.xlu0 %452
      %456 = vset.pattern.permute.xlu0 0
      %457 = vperm.xlu0 %456, %v399
      %v458 = vpop.permute.xlu0 %457
      %461 = vset.pattern.permute.xlu0 0
      %462 = vperm.xlu0 %461, %v400
      %v463 = vpop.permute.xlu0 %462
      %466 = vset.pattern.permute.xlu0 0
      %467 = vperm.xlu0 %466, %v401
      %v468 = vpop.permute.xlu0 %467
      %471 = vset.pattern.permute.xlu0 0
      %472 = vperm.xlu0 %471, %v402
      %v473 = vpop.permute.xlu0 %472
      %476 = vset.pattern.permute.xlu0 0
      %477 = vperm.xlu0 %476, %v403
      %v478 = vpop.permute.xlu0 %477
      %481 = vset.pattern.permute.xlu0 0
      %482 = vperm.xlu0 %481, %v404
      %v483 = vpop.permute.xlu0 %482
      %v485 = vsub.f32 %v357, %v408
      %v486 = vsub.f32 %v358, %v413
      %v487 = vsub.f32 %v359, %v418
      %v488 = vsub.f32 %v360, %v423
      %v489 = vsub.f32 %v361, %v428
      %v490 = vsub.f32 %v362, %v433
      %v491 = vsub.f32 %v363, %v438
      %v492 = vsub.f32 %v364, %v443
      %v493 = vsub.f32 %v365, %v448
      %v494 = vsub.f32 %v366, %v453
      %v495 = vsub.f32 %v367, %v458
      %v496 = vsub.f32 %v368, %v463
      %v497 = vsub.f32 %v369, %v468
      %v498 = vsub.f32 %v370, %v473
      %v499 = vsub.f32 %v371, %v478
      %v500 = vsub.f32 %v372, %v483
      %v501 = vsub.f32 %v485, %v356
      %v502 = vsub.f32 %v486, %v356
      %v503 = vsub.f32 %v487, %v356
      %v504 = vsub.f32 %v488, %v356
      %v505 = vsub.f32 %v489, %v356
      %v506 = vsub.f32 %v490, %v356
      %v507 = vsub.f32 %v491, %v356
      %v508 = vsub.f32 %v492, %v356
      %v509 = vsub.f32 %v493, %v356
      %v510 = vsub.f32 %v494, %v356
      %v511 = vsub.f32 %v495, %v356
      %v512 = vsub.f32 %v496, %v356
      %v513 = vsub.f32 %v497, %v356
      %v514 = vsub.f32 %v498, %v356
      %v515 = vsub.f32 %v499, %v356
      %v516 = vsub.f32 %v500, %v356
      %517 = vst [vmem:[%s188] sm:$0xff] %v501
      %518 = vst [vmem:[%s188 + $0x8] sm:$0xff] %v502
      %519 = vst [vmem:[%s188 + $0x10] sm:$0xff] %v503
      %520 = vst [vmem:[%s188 + $0x18] sm:$0xff] %v504
      %521 = vst [vmem:[%s188 + $0x20] sm:$0xff] %v505
      %522 = vst [vmem:[%s188 + $0x28] sm:$0xff] %v506
      %523 = vst [vmem:[%s188 + $0x30] sm:$0xff] %v507
      %524 = vst [vmem:[%s188 + $0x38] sm:$0xff] %v508
      %525 = vst [vmem:[%s188 + $0x40] sm:$0xff] %v509
      %526 = vst [vmem:[%s188 + $0x48] sm:$0xff] %v510
      %527 = vst [vmem:[%s188 + $0x50] sm:$0xff] %v511
      %528 = vst [vmem:[%s188 + $0x58] sm:$0xff] %v512
      %529 = vst [vmem:[%s188 + $0x60] sm:$0xff] %v513
      %530 = vst [vmem:[%s188 + $0x68] sm:$0xff] %v514
      %531 = vst [vmem:[%s188 + $0x70] sm:$0xff] %v515
      %532 = vst [vmem:[%s188 + $0x78] sm:$0xff] %v516
      %p533 = scmp.lt.s32.totalorder %s17, 1
      %s534 = scalar_select %p533, %s17, 1
      %p535 = scmp.lt.s32.totalorder %s18, 0
      %s536 = scalar_select %p535, %s18, 0
      %s537 = smul.addr %s534, 16
      %s538 = sadd.s32 %s536, %s537
      %s539 = smul.addr %s538, 8
      %s540 = scalar_lea.vmem %s2, %s539
      // Predicated region
      $region29: #{reconstruction_net_forward.5} parent=27 // pred_check
        %p541 = pneg %p99
      $region30: #{reconstruction_net_forward.5} parent=27 // pred_check_branch
        %543 = sbr.rel (%p541) target = $region32
      $region31: #{reconstruction_net_forward.5} parent=27 // pred_region
        _
      $region32: #{reconstruction_net_forward.5} parent=27 // pred_fallthru
        _
    $region28: #{reconstruction_net_forward.5} parent=5 // pred_fallthru
      _
    %p544 = scmp.le.s32.totalorder 2, %s8
    // Predicated region
    $region33: #{reconstruction_net_forward.5} parent=5 // pred_check
      %p545 = pneg %p544
    $region34: #{reconstruction_net_forward.5} parent=5 // pred_check_branch
      %547 = sbr.rel (%p545) target = $region36
    $region35: #{reconstruction_net_forward.5} parent=5 // pred_region
      %s548 = ssub.s32 %s8, 2
      // Predicated region
      $region37: #{reconstruction_net_forward.5} parent=35 // pred_check
        %p549 = pneg %p105
      $region38: #{reconstruction_net_forward.5} parent=35 // pred_check_branch
        %551 = sbr.rel (%p549) target = $region40
      $region39: #{reconstruction_net_forward.5} parent=35 // pred_region
        %p552 = scmp.lt.s32.totalorder %s19, 1
        %s553 = scalar_select %p552, %s19, 1
        %p554 = scmp.lt.s32.totalorder %s20, 0
        %s555 = scalar_select %p554, %s20, 0
        %s556 = smul.addr %s553, 16
        %s557 = sadd.s32 %s555, %s556
        %s558 = smul.addr %s557, 8
        %s559 = scalar_lea.vmem %s2, %s558
      $region40: #{reconstruction_net_forward.5} parent=35 // pred_fallthru
        _
    $region36: #{reconstruction_net_forward.5} parent=5 // pred_fallthru
      _
  $region6: #{reconstruction_net_forward.5} parent=0 // loop_footer
    %s12 = sadd.s32 1, %s8
  $region7: #{reconstruction_net_forward.5} parent=0 // loop_footer_branch
    %7 = sbr.rel target = $region3
  $region8: #{reconstruction_net_forward.5} parent=0 // loop_exit
    _

// kernel: reconstruction_net_forward.6
$region0: #{reconstruction_net_forward.6}
  #allocation0 [shape = 'u32[]', space=smem, size = 0x4, offset = 0x4, fixed_abs, tag = 'smem constant byte address 0x4 - core index']
  #allocation1 [shape = 'u32[72,128]{1,0:T(1,128)}', space=vmem, size = 0x9000, scoped, tag = 'internal scratch']
  %s0 = inlined_call_operand.vmem [shape: f32[2,128,12], index: 0, kind: input, shape index: {}]
  %s1 = inlined_call_operand.vmem [shape: bf16[12,64], index: 1, kind: input, shape index: {}]
  %s2 = inlined_call_operand.vmem [shape: f32[1,64], index: 2, kind: input, shape index: {}]
  %s3 = inlined_call_operand.vmem [shape: bf16[64,64], index: 3, kind: input, shape index: {}]
  %s4 = inlined_call_operand.vmem [shape: f32[1,64], index: 4, kind: input, shape index: {}]
  %s5 = inlined_call_operand.vmem [shape: bf16[64,64], index: 5, kind: input, shape index: {}]
  %s6 = inlined_call_operand.vmem [shape: f32[1,64], index: 6, kind: input, shape index: {}]
  %s7 = inlined_call_operand.vmem [shape: bf16[2,128,64], index: 7, kind: output, shape index: {}]
  %s8 = sld [smem:[#allocation0]]
  $region61: #{reconstruction_net_forward.6} parent=0
    _
  %s10 = ssub.s32 1, %s8
  %s11 = scalar_select 0, %s10, %s8
  loop: start=0, step=1, limit=4
  $region2: #{reconstruction_net_forward.6} parent=0 // loop_pre_header
    _
  $region3: #{reconstruction_net_forward.6} parent=0 // loop_header
    %s13 = sphi 0, %s17
    %p14 = scmp.ge.s32.totalorder %s13, 4
    %s20 = sphi 0, %s32
    %s21 = sphi 0, %s28
    %s22 = sphi 0, %s20
    %s23 = sphi 0, %s21
    %s24 = sphi 0, %s22
    %s25 = sphi 0, %s23
    %s37 = sphi 0, %s39
    %s40 = sphi 0, %s37
    %s41 = sphi 0, %s40
    %s57 = sphi 0, %s41
    %s61 = sphi 0, %s61
    %s63 = sphi 0, %s61
    %s64 = sphi 0, %s63
    %s78 = sphi 0, %s64
    %s82 = sphi 0, %s82
    %s84 = sphi 0, %s82
    %s85 = sphi 0, %s84
    %s99 = sphi 0, %s85
    %s103 = sphi 0, %s103
    %s105 = sphi 0, %s103
    %s106 = sphi 0, %s105
    %s120 = sphi 0, %s106
    %s124 = sphi 0, %s124
    %s126 = sphi 0, %s124
    %s127 = sphi 0, %s126
    %s141 = sphi 0, %s127
    %s145 = sphi 0, %s145
    %s147 = sphi 0, %s145
    %s148 = sphi 0, %s147
    %s162 = sphi 0, %s148
    %s166 = sphi 0, %s166
    %s168 = sphi 0, %s166
    %s169 = sphi 0, %s168
    %s183 = sphi 0, %s169
    %s191 = sphi 0, %s193
    %s194 = sphi 0, %s191
    %s195 = sphi 0, %s194
    %s211 = sphi 0, %s195
  $region4: #{reconstruction_net_forward.6} parent=0 // loop_header_branch
    %16 = sbr.rel (%p14) target = $region8
  $region5: #{reconstruction_net_forward.6} parent=0 // loop_body
    %s18 = ssub.s32 %s13, 1
    %s19 = ssub.s32 %s13, 2
    %s26 = sadd.s32 1, %s21
    %p27 = scmp.ge.s32.totalorder %s26, 1
    %s28 = scalar_select %p27, 0, %s26
    %s29 = sadd.s32 1, %s20
    %s30 = scalar_select %p27, %s29, %s20
    %p31 = scmp.ge.s32.totalorder %s30, 2
    %s32 = scalar_select %p31, 0, %s30
    %s33 = ssub.s32 %s20, %s32
    %s34 = ssub.s32 %s21, %s28
    %s35 = sor.u32 %s33, %s34
    %p36 = scmp.eq.s32.totalorder %s35, 0
    %s38 = sadd.s32 %s37, 1
    %s39 = scalar_select %p36, %s37, %s38
    %p42 = pneg %p36
    %p43 = scmp.eq.s32.totalorder %s13, 1
    %p44 = por %p42, %p43
    %p45 = scmp.ne.s32.totalorder %s37, %s40
    %p46 = scmp.eq.s32.totalorder %s13, 0
    %p47 = por %p45, %p46
    %p48 = scmp.ne.s32.totalorder %s37, %s40
    %p49 = scmp.eq.s32.totalorder %s18, 1
    %p50 = por %p48, %p49
    %p51 = scmp.ne.s32.totalorder %s40, %s41
    %p52 = scmp.eq.s32.totalorder %s18, 0
    %p53 = por %p51, %p52
    %p54 = scmp.ne.s32.totalorder %s40, %s41
    %p55 = scmp.eq.s32.totalorder %s19, 1
    %p56 = por %p54, %p55
    %p58 = scmp.ne.s32.totalorder %s41, %s57
    %p59 = scmp.eq.s32.totalorder %s19, 0
    %p60 = por %p58, %p59
    %s62 = sadd.s32 %s61, 1
    %p65 = scmp.eq.s32.totalorder %s13, 1
    %p66 = scmp.ne.s32.totalorder %s61, %s63
    %p67 = scmp.eq.s32.totalorder %s13, 0
    %p68 = por %p66, %p67
    %p69 = scmp.ne.s32.totalorder %s61, %s63
    %p70 = scmp.eq.s32.totalorder %s18, 1
    %p71 = por %p69, %p70
    %p72 = scmp.ne.s32.totalorder %s63, %s64
    %p73 = scmp.eq.s32.totalorder %s18, 0
    %p74 = por %p72, %p73
    %p75 = scmp.ne.s32.totalorder %s63, %s64
    %p76 = scmp.eq.s32.totalorder %s19, 1
    %p77 = por %p75, %p76
    %p79 = scmp.ne.s32.totalorder %s64, %s78
    %p80 = scmp.eq.s32.totalorder %s19, 0
    %p81 = por %p79, %p80
    %s83 = sadd.s32 %s82, 1
    %p86 = scmp.eq.s32.totalorder %s13, 1
    %p87 = scmp.ne.s32.totalorder %s82, %s84
    %p88 = scmp.eq.s32.totalorder %s13, 0
    %p89 = por %p87, %p88
    %p90 = scmp.ne.s32.totalorder %s82, %s84
    %p91 = scmp.eq.s32.totalorder %s18, 1
    %p92 = por %p90, %p91
    %p93 = scmp.ne.s32.totalorder %s84, %s85
    %p94 = scmp.eq.s32.totalorder %s18, 0
    %p95 = por %p93, %p94
    %p96 = scmp.ne.s32.totalorder %s84, %s85
    %p97 = scmp.eq.s32.totalorder %s19, 1
    %p98 = por %p96, %p97
    %p100 = scmp.ne.s32.totalorder %s85, %s99
    %p101 = scmp.eq.s32.totalorder %s19, 0
    %p102 = por %p100, %p101
    %s104 = sadd.s32 %s103, 1
    %p107 = scmp.eq.s32.totalorder %s13, 1
    %p108 = scmp.ne.s32.totalorder %s103, %s105
    %p109 = scmp.eq.s32.totalorder %s13, 0
    %p110 = por %p108, %p109
    %p111 = scmp.ne.s32.totalorder %s103, %s105
    %p112 = scmp.eq.s32.totalorder %s18, 1
    %p113 = por %p111, %p112
    %p114 = scmp.ne.s32.totalorder %s105, %s106
    %p115 = scmp.eq.s32.totalorder %s18, 0
    %p116 = por %p114, %p115
    %p117 = scmp.ne.s32.totalorder %s105, %s106
    %p118 = scmp.eq.s32.totalorder %s19, 1
    %p119 = por %p117, %p118
    %p121 = scmp.ne.s32.totalorder %s106, %s120
    %p122 = scmp.eq.s32.totalorder %s19, 0
    %p123 = por %p121, %p122
    %s125 = sadd.s32 %s124, 1
    %p128 = scmp.eq.s32.totalorder %s13, 1
    %p129 = scmp.ne.s32.totalorder %s124, %s126
    %p130 = scmp.eq.s32.totalorder %s13, 0
    %p131 = por %p129, %p130
    %p132 = scmp.ne.s32.totalorder %s124, %s126
    %p133 = scmp.eq.s32.totalorder %s18, 1
    %p134 = por %p132, %p133
    %p135 = scmp.ne.s32.totalorder %s126, %s127
    %p136 = scmp.eq.s32.totalorder %s18, 0
    %p137 = por %p135, %p136
    %p138 = scmp.ne.s32.totalorder %s126, %s127
    %p139 = scmp.eq.s32.totalorder %s19, 1
    %p140 = por %p138, %p139
    %p142 = scmp.ne.s32.totalorder %s127, %s141
    %p143 = scmp.eq.s32.totalorder %s19, 0
    %p144 = por %p142, %p143
    %s146 = sadd.s32 %s145, 1
    %p149 = scmp.eq.s32.totalorder %s13, 1
    %p150 = scmp.ne.s32.totalorder %s145, %s147
    %p151 = scmp.eq.s32.totalorder %s13, 0
    %p152 = por %p150, %p151
    %p153 = scmp.ne.s32.totalorder %s145, %s147
    %p154 = scmp.eq.s32.totalorder %s18, 1
    %p155 = por %p153, %p154
    %p156 = scmp.ne.s32.totalorder %s147, %s148
    %p157 = scmp.eq.s32.totalorder %s18, 0
    %p158 = por %p156, %p157
    %p159 = scmp.ne.s32.totalorder %s147, %s148
    %p160 = scmp.eq.s32.totalorder %s19, 1
    %p161 = por %p159, %p160
    %p163 = scmp.ne.s32.totalorder %s148, %s162
    %p164 = scmp.eq.s32.totalorder %s19, 0
    %p165 = por %p163, %p164
    %s167 = sadd.s32 %s166, 1
    %p170 = scmp.eq.s32.totalorder %s13, 1
    %p171 = scmp.ne.s32.totalorder %s166, %s168
    %p172 = scmp.eq.s32.totalorder %s13, 0
    %p173 = por %p171, %p172
    %p174 = scmp.ne.s32.totalorder %s166, %s168
    %p175 = scmp.eq.s32.totalorder %s18, 1
    %p176 = por %p174, %p175
    %p177 = scmp.ne.s32.totalorder %s168, %s169
    %p178 = scmp.eq.s32.totalorder %s18, 0
    %p179 = por %p177, %p178
    %p180 = scmp.ne.s32.totalorder %s168, %s169
    %p181 = scmp.eq.s32.totalorder %s19, 1
    %p182 = por %p180, %p181
    %p184 = scmp.ne.s32.totalorder %s169, %s183
    %p185 = scmp.eq.s32.totalorder %s19, 0
    %p186 = por %p184, %p185
    %s187 = ssub.s32 %s20, %s32
    %s188 = ssub.s32 %s21, %s28
    %s189 = sor.u32 %s187, %s188
    %p190 = scmp.eq.s32.totalorder %s189, 0
    %s192 = sadd.s32 %s191, 1
    %s193 = scalar_select %p190, %s191, %s192
    %p196 = pneg %p190
    %p197 = scmp.eq.s32.totalorder %s13, 1
    %p198 = por %p196, %p197
    %p199 = scmp.ne.s32.totalorder %s191, %s194
    %p200 = scmp.eq.s32.totalorder %s13, 0
    %p201 = por %p199, %p200
    %p202 = scmp.ne.s32.totalorder %s191, %s194
    %p203 = scmp.eq.s32.totalorder %s18, 1
    %p204 = por %p202, %p203
    %p205 = scmp.ne.s32.totalorder %s194, %s195
    %p206 = scmp.eq.s32.totalorder %s18, 0
    %p207 = por %p205, %p206
    %p208 = scmp.ne.s32.totalorder %s194, %s195
    %p209 = scmp.eq.s32.totalorder %s19, 1
    %p210 = por %p208, %p209
    %p212 = scmp.ne.s32.totalorder %s195, %s211
    %p213 = scmp.eq.s32.totalorder %s19, 0
    %p214 = por %p212, %p213
    %p215 = scmp.le.s32.totalorder 1, %s13
    %p216 = scmp.lt.s32.totalorder %s13, 3
    %p217 = pnand %p215, %p216
    %p218 = pneg %p217
    // Predicated region
    $region9: #{reconstruction_net_forward.6} parent=5 // pred_check
      _
    $region10: #{reconstruction_net_forward.6} parent=5 // pred_check_branch
      %220 = sbr.rel (%p217) target = $region12
    $region11: #{reconstruction_net_forward.6} parent=5 // pred_region
      %s221 = ssub.s32 %s13, 1
      // Predicated region
      $region13: #{reconstruction_net_forward.6} parent=11 // pred_check
        %p222 = pneg %p74
      $region14: #{reconstruction_net_forward.6} parent=11 // pred_check_branch
        %224 = sbr.rel (%p222) target = $region16
      $region15: #{reconstruction_net_forward.6} parent=11 // pred_region
        _
      $region16: #{reconstruction_net_forward.6} parent=11 // pred_fallthru
        _
      // Predicated region
      $region17: #{reconstruction_net_forward.6} parent=11 // pred_check
        %p225 = pneg %p95
      $region18: #{reconstruction_net_forward.6} parent=11 // pred_check_branch
        %227 = sbr.rel (%p225) target = $region20
      $region19: #{reconstruction_net_forward.6} parent=11 // pred_region
        _
      $region20: #{reconstruction_net_forward.6} parent=11 // pred_fallthru
        _
      // Predicated region
      $region21: #{reconstruction_net_forward.6} parent=11 // pred_check
        %p228 = pneg %p116
      $region22: #{reconstruction_net_forward.6} parent=11 // pred_check_branch
        %230 = sbr.rel (%p228) target = $region24
      $region23: #{reconstruction_net_forward.6} parent=11 // pred_region
        _
      $region24: #{reconstruction_net_forward.6} parent=11 // pred_fallthru
        _
      // Predicated region
      $region25: #{reconstruction_net_forward.6} parent=11 // pred_check
        %p231 = pneg %p137
      $region26: #{reconstruction_net_forward.6} parent=11 // pred_check_branch
        %233 = sbr.rel (%p231) target = $region28
      $region27: #{reconstruction_net_forward.6} parent=11 // pred_region
        _
      $region28: #{reconstruction_net_forward.6} parent=11 // pred_fallthru
        _
      // Predicated region
      $region29: #{reconstruction_net_forward.6} parent=11 // pred_check
        %p234 = pneg %p158
      $region30: #{reconstruction_net_forward.6} parent=11 // pred_check_branch
        %236 = sbr.rel (%p234) target = $region32
      $region31: #{reconstruction_net_forward.6} parent=11 // pred_region
        _
      $region32: #{reconstruction_net_forward.6} parent=11 // pred_fallthru
        _
      // Predicated region
      $region33: #{reconstruction_net_forward.6} parent=11 // pred_check
        %p237 = pneg %p179
      $region34: #{reconstruction_net_forward.6} parent=11 // pred_check_branch
        %239 = sbr.rel (%p237) target = $region36
      $region35: #{reconstruction_net_forward.6} parent=11 // pred_region
        _
      $region36: #{reconstruction_net_forward.6} parent=11 // pred_fallthru
        _
    $region12: #{reconstruction_net_forward.6} parent=5 // pred_fallthru
      _
    %p240 = scmp.lt.s32.totalorder %s13, 2
    // Predicated region
    $region37: #{reconstruction_net_forward.6} parent=5 // pred_check
      %p241 = pneg %p240
    $region38: #{reconstruction_net_forward.6} parent=5 // pred_check_branch
      %243 = sbr.rel (%p241) target = $region40
    $region39: #{reconstruction_net_forward.6} parent=5 // pred_region
      // Predicated region
      $region41: #{reconstruction_net_forward.6} parent=39 // pred_check
        %p244 = pneg %p47
      $region42: #{reconstruction_net_forward.6} parent=39 // pred_check_branch
        %246 = sbr.rel (%p244) target = $region44
      $region43: #{reconstruction_net_forward.6} parent=39 // pred_region
        %s247 = smul.u32 16, %s21
        %p248 = scmp.lt.s32.totalorder %s20, 1
        %s249 = scalar_select %p248, %s20, 1
        %p250 = scmp.lt.s32.totalorder %s247, 15
        %s251 = scalar_select %p250, %s247, 15
        %s252 = smul.addr %s249, 16
        %s253 = sadd.s32 %s251, %s252
        %s254 = smul.addr %s253, 8
        %s255 = scalar_lea.vmem %s0, %s254
        %s256 = smul.u32 16, %s21
      $region44: #{reconstruction_net_forward.6} parent=39 // pred_fallthru
        _
    $region40: #{reconstruction_net_forward.6} parent=5 // pred_fallthru
      _
    %p257 = scmp.le.s32.totalorder 1, %s13
    %p258 = scmp.lt.s32.totalorder %s13, 3
    %p259 = pnand %p257, %p258
    %p260 = pneg %p259
    // Predicated region
    $region45: #{reconstruction_net_forward.6} parent=5 // pred_check
      _
    $region46: #{reconstruction_net_forward.6} parent=5 // pred_check_branch
      %262 = sbr.rel (%p259) target = $region48
    $region47: #{reconstruction_net_forward.6} parent=5 // pred_region
      %s263 = ssub.s32 %s13, 1
      %s264 = smul.u32 16, %s23
      %p265 = scmp.lt.s32.totalorder %s22, 1
      %s266 = scalar_select %p265, %s22, 1
      %p267 = scmp.lt.s32.totalorder %s264, 15
      %s268 = scalar_select %p267, %s264, 15
      %s269 = smul.addr %s266, 16
      %s270 = sadd.s32 %s268, %s269
      %s271 = smul.addr %s270, 8
      %s272 = scalar_lea.vmem %s0, %s271
      %p273 = pneg %p53
      %p274 = pneg %p50
      %p275 = pneg %p74
      %p276 = pneg %p71
      %p277 = pneg %p95
      %p278 = pneg %p92
      %p279 = pneg %p116
      %p280 = pneg %p113
      %p281 = pneg %p137
      %p282 = pneg %p134
      %p283 = pneg %p158
      %p284 = pneg %p155
      %p285 = pneg %p179
      %p286 = pneg %p176
      %p287 = pneg %p207
      %p288 = pneg %p204
      %s289 = smul.u32 16, %s23
      %p290 = scmp.lt.s32.totalorder %s22, 1
      %s291 = scalar_select %p290, %s22, 1
      %p292 = scmp.lt.s32.totalorder %s289, 15
      %s293 = scalar_select %p292, %s289, 15
      %s294 = smul.addr %s291, 16
      %s295 = sadd.s32 %s293, %s294
      %s296 = smul.addr %s295, 4
      %s297 = scalar_lea.vmem %s7, %s296
      %s298 = smul.u32 16, %s23
      %p299 = scmp.lt.s32.totalorder %s22, 1
      %s300 = scalar_select %p299, %s22, 1
      %p301 = scmp.lt.s32.totalorder %s298, 15
      %s302 = scalar_select %p301, %s298, 15
      %s303 = smul.addr %s300, 16
      %s304 = sadd.s32 %s302, %s303
      %s305 = smul.addr %s304, 8
      %s306 = scalar_lea.vmem %s0, %s305
      %s307 = smul.u32 16, %s23
      %s308 = smul.u32 16, %s23
      %p309 = scmp.lt.s32.totalorder %s22, 1
      %s310 = scalar_select %p309, %s22, 1
      %p311 = scmp.lt.s32.totalorder %s308, 15
      %s312 = scalar_select %p311, %s308, 15
      %s313 = smul.addr %s310, 16
      %s314 = sadd.s32 %s312, %s313
      %s315 = smul.addr %s314, 4
      %s316 = scalar_lea.vmem %s7, %s315
      %s317 = smul.u32 16, %s23
      %v319 = vld [vmem:[%s306] sm:$0xff]
      %v320 = vld [vmem:[%s306 + $0x8] sm:$0xff]
      %v321 = vld [vmem:[%s306 + $0x10] sm:$0xff]
      %v322 = vld [vmem:[%s306 + $0x18] sm:$0xff]
      %v323 = vld [vmem:[%s306 + $0x20] sm:$0xff]
      %v324 = vld [vmem:[%s306 + $0x28] sm:$0xff]
      %v325 = vld [vmem:[%s306 + $0x30] sm:$0xff]
      %v326 = vld [vmem:[%s306 + $0x38] sm:$0xff]
      %v327 = vld [vmem:[%s306 + $0x40] sm:$0xff]
      %v328 = vld [vmem:[%s306 + $0x48] sm:$0xff]
      %v329 = vld [vmem:[%s306 + $0x50] sm:$0xff]
      %v330 = vld [vmem:[%s306 + $0x58] sm:$0xff]
      %v331 = vld [vmem:[%s306 + $0x60] sm:$0xff]
      %v332 = vld [vmem:[%s306 + $0x68] sm:$0xff]
      %v333 = vld [vmem:[%s306 + $0x70] sm:$0xff]
      %v334 = vld [vmem:[%s306 + $0x78] sm:$0xff]
      %v335 = vld [vmem:[%s1] sm:$0xf]
      %v336 = vld [vmem:[%s1 + $0x4] sm:$0x3]
      %v337 = vld [vmem:[%s2] sm:$0x1]
      %v339 = vperm.slane %v337, 0
      %v343 = vunpack.c.l.b16 %v335
      %v344 = vunpack.c.l.b16 %v336
      %v345 = vpack.c.b16 %v344, %v343
      %vm346 = vcmask 97280
      %v348 = vsel %vm346, %v319, 0
      %v351 = vsel %vm346, %v320, 0
      %v354 = vsel %vm346, %v321, 0
      %v357 = vsel %vm346, %v322, 0
      %v360 = vsel %vm346, %v323, 0
      %v363 = vsel %vm346, %v324, 0
      %v366 = vsel %vm346, %v325, 0
      %v369 = vsel %vm346, %v326, 0
      %v372 = vsel %vm346, %v327, 0
      %v375 = vsel %vm346, %v328, 0
      %v378 = vsel %vm346, %v329, 0
      %v381 = vsel %vm346, %v330, 0
      %v384 = vsel %vm346, %v331, 0
      %v387 = vsel %vm346, %v332, 0
      %v390 = vsel %vm346, %v333, 0
      %v393 = vsel %vm346, %v334, 0
      %vm395 = vcmask 1045504
      %v397 = vsel %vm395, %v345, 0
      %399 = vmatpush.bf16.msra.mxu0 0
      %400 = vmatpush.bf16.msra.mxu0 0
      %401 = vmatpush.bf16.msra.mxu0 0
      %402 = vmatpush.bf16.msra.mxu0 0
      %403 = vmatpush.bf16.msra.mxu0 0
      %404 = vmatpush.bf16.msra.mxu0 0
      %405 = vmatpush.bf16.msra.mxu0 0
      %406 = vmatpush.bf16.msra.mxu0 %v397
      %407 = vmatmul.f32.gmra.mxu0 %v348
      %v408 = vpop.f32.mrf.mxu0
      %v409 = vadd.f32 %v339, %v408
      %410 = vmatmul.f32.gmra.mxu0 %v351
      %v411 = vpop.f32.mrf.mxu0
      %v412 = vadd.f32 %v339, %v411
      %413 = vmatmul.f32.gmra.mxu0 %v354
      %v414 = vpop.f32.mrf.mxu0
      %v415 = vadd.f32 %v339, %v414
      %416 = vmatmul.f32.gmra.mxu0 %v357
      %v417 = vpop.f32.mrf.mxu0
      %v418 = vadd.f32 %v339, %v417
      %419 = vmatmul.f32.gmra.mxu0 %v360
      %v420 = vpop.f32.mrf.mxu0
      %v421 = vadd.f32 %v339, %v420
      %422 = vmatmul.f32.gmra.mxu0 %v363
      %v423 = vpop.f32.mrf.mxu0
      %v424 = vadd.f32 %v339, %v423
      %425 = vmatmul.f32.gmra.mxu0 %v366
      %v426 = vpop.f32.mrf.mxu0
      %v427 = vadd.f32 %v339, %v426
      %428 = vmatmul.f32.gmra.mxu0 %v369
      %v429 = vpop.f32.mrf.mxu0
      %v430 = vadd.f32 %v339, %v429
      %431 = vmatmul.f32.gmra.mxu0 %v372
      %v432 = vpop.f32.mrf.mxu0
      %v433 = vadd.f32 %v339, %v432
      %434 = vmatmul.f32.gmra.mxu0 %v375
      %v435 = vpop.f32.mrf.mxu0
      %v436 = vadd.f32 %v339, %v435
      %437 = vmatmul.f32.gmra.mxu0 %v378
      %v438 = vpop.f32.mrf.mxu0
      %v439 = vadd.f32 %v339, %v438
      %440 = vmatmul.f32.gmra.mxu0 %v381
      %v441 = vpop.f32.mrf.mxu0
      %v442 = vadd.f32 %v339, %v441
      %443 = vmatmul.f32.gmra.mxu0 %v384
      %v444 = vpop.f32.mrf.mxu0
      %v445 = vadd.f32 %v339, %v444
      %446 = vmatmul.f32.gmra.mxu0 %v387
      %v447 = vpop.f32.mrf.mxu0
      %v448 = vadd.f32 %v339, %v447
      %449 = vmatmul.f32.gmra.mxu0 %v390
      %v450 = vpop.f32.mrf.mxu0
      %v451 = vadd.f32 %v339, %v450
      %452 = vmatmul.f32.gmra.mxu0 %v393
      %v453 = vpop.f32.mrf.mxu0
      %v454 = vadd.f32 %v339, %v453
      %455 = vdwg.mxu0
      %v456 = vmax.f32 %v409, 0.0
      %v457 = vmax.f32 %v412, 0.0
      %v458 = vmax.f32 %v415, 0.0
      %v459 = vmax.f32 %v418, 0.0
      %v460 = vmax.f32 %v421, 0.0
      %v461 = vmax.f32 %v424, 0.0
      %v462 = vmax.f32 %v427, 0.0
      %v463 = vmax.f32 %v430, 0.0
      %v464 = vmax.f32 %v433, 0.0
      %v465 = vmax.f32 %v436, 0.0
      %v466 = vmax.f32 %v439, 0.0
      %v467 = vmax.f32 %v442, 0.0
      %v468 = vmax.f32 %v445, 0.0
      %v469 = vmax.f32 %v448, 0.0
      %v470 = vmax.f32 %v451, 0.0
      %v471 = vmax.f32 %v454, 0.0
      %v472 = vpack.c.bf16 %v457, %v456
      %v473 = vpack.c.bf16 %v459, %v458
      %v474 = vpack.c.bf16 %v461, %v460
      %v475 = vpack.c.bf16 %v463, %v462
      %v476 = vpack.c.bf16 %v465, %v464
      %v477 = vpack.c.bf16 %v467, %v466
      %v478 = vpack.c.bf16 %v469, %v468
      %v479 = vpack.c.bf16 %v471, %v470
      %v480 = vld [vmem:[%s3] sm:$0xf]
      %v481 = vld [vmem:[%s3 + $0x4] sm:$0xf]
      %v482 = vld [vmem:[%s3 + $0x8] sm:$0xf]
      %v483 = vld [vmem:[%s3 + $0xc] sm:$0xf]
      %v484 = vld [vmem:[%s3 + $0x10] sm:$0xf]
      %v485 = vld [vmem:[%s3 + $0x14] sm:$0xf]
      %v486 = vld [vmem:[%s3 + $0x18] sm:$0xf]
      %v487 = vld [vmem:[%s3 + $0x1c] sm:$0xf]
      %v488 = vld [vmem:[%s4] sm:$0x1]
      %v490 = vperm.slane %v488, 0
      %v500 = vunpack.c.l.b16 %v480
      %v501 = vunpack.c.l.b16 %v481
      %v502 = vunpack.c.l.b16 %v482
      %v503 = vunpack.c.l.b16 %v483
      %v504 = vunpack.c.l.b16 %v484
      %v505 = vunpack.c.l.b16 %v485
      %v506 = vunpack.c.l.b16 %v486
      %v507 = vunpack.c.l.b16 %v487
      %v508 = vpack.c.b16 %v501, %v500
      %v509 = vpack.c.b16 %v503, %v502
      %v510 = vpack.c.b16 %v505, %v504
      %v511 = vpack.c.b16 %v507, %v506
      %vm516 = vcmask 523264
      %v518 = vsel %vm516, %v472, 0
      %v521 = vsel %vm516, %v473, 0
      %v524 = vsel %vm516, %v474, 0
      %v527 = vsel %vm516, %v475, 0
      %v530 = vsel %vm516, %v476, 0
      %v533 = vsel %vm516, %v477, 0
      %v536 = vsel %vm516, %v478, 0
      %v539 = vsel %vm516, %v479, 0
      %541 = vmatpush.bf16.msra.mxu0 0
      %542 = vmatpush.bf16.msra.mxu0 0
      %543 = vmatpush.bf16.msra.mxu0 0
      %544 = vmatpush.bf16.msra.mxu0 0
      %545 = vmatpush.bf16.msra.mxu0 %v511
      %546 = vmatpush.bf16.msra.mxu0 %v510
      %547 = vmatpush.bf16.msra.mxu0 %v509
      %548 = vmatpush.bf16.msra.mxu0 %v508
      %549 = vmatmul.bf16.gmra.mxu0 %v518
      %v550 = vpop.f32.mrf.mxu0
      %v551 = vadd.f32 %v490, %v550
      %v552 = vpop.f32.mrf.mxu0
      %v553 = vadd.f32 %v490, %v552
      %554 = vmatmul.bf16.gmra.mxu0 %v521
      %v555 = vpop.f32.mrf.mxu0
      %v556 = vadd.f32 %v490, %v555
      %v557 = vpop.f32.mrf.mxu0
      %v558 = vadd.f32 %v490, %v557
      %559 = vmatmul.bf16.gmra.mxu0 %v524
      %v560 = vpop.f32.mrf.mxu0
      %v561 = vadd.f32 %v490, %v560
      %v562 = vpop.f32.mrf.mxu0
      %v563 = vadd.f32 %v490, %v562
      %564 = vmatmul.bf16.gmra.mxu0 %v527
      %v565 = vpop.f32.mrf.mxu0
      %v566 = vadd.f32 %v490, %v565
      %v567 = vpop.f32.mrf.mxu0
      %v568 = vadd.f32 %v490, %v567
      %569 = vmatmul.bf16.gmra.mxu0 %v530
      %v570 = vpop.f32.mrf.mxu0
      %v571 = vadd.f32 %v490, %v570
      %v572 = vpop.f32.mrf.mxu0
      %v573 = vadd.f32 %v490, %v572
      %574 = vmatmul.bf16.gmra.mxu0 %v533
      %v575 = vpop.f32.mrf.mxu0
      %v576 = vadd.f32 %v490, %v575
      %v577 = vpop.f32.mrf.mxu0
      %v578 = vadd.f32 %v490, %v577
      %579 = vmatmul.bf16.gmra.mxu0 %v536
      %v580 = vpop.f32.mrf.mxu0
      %v581 = vadd.f32 %v490, %v580
      %v582 = vpop.f32.mrf.mxu0
      %v583 = vadd.f32 %v490, %v582
      %584 = vmatmul.bf16.gmra.mxu0 %v539
      %v585 = vpop.f32.mrf.mxu0
      %v586 = vadd.f32 %v490, %v585
      %v587 = vpop.f32.mrf.mxu0
      %v588 = vadd.f32 %v490, %v587
      %589 = vdwg.mxu0
      %v590 = vmax.f32 %v551, 0.0
      %v591 = vmax.f32 %v553, 0.0
      %v592 = vmax.f32 %v556, 0.0
      %v593 = vmax.f32 %v558, 0.0
      %v594 = vmax.f32 %v561, 0.0
      %v595 = vmax.f32 %v563, 0.0
      %v596 = vmax.f32 %v566, 0.0
      %v597 = vmax.f32 %v568, 0.0
      %v598 = vmax.f32 %v571, 0.0
      %v599 = vmax.f32 %v573, 0.0
      %v600 = vmax.f32 %v576, 0.0
      %v601 = vmax.f32 %v578, 0.0
      %v602 = vmax.f32 %v581, 0.0
      %v603 = vmax.f32 %v583, 0.0
      %v604 = vmax.f32 %v586, 0.0
      %v605 = vmax.f32 %v588, 0.0
      %v606 = vpack.c.bf16 %v591, %v590
      %v607 = vpack.c.bf16 %v593, %v592
      %v608 = vpack.c.bf16 %v595, %v594
      %v609 = vpack.c.bf16 %v597, %v596
      %v610 = vpack.c.bf16 %v599, %v598
      %v611 = vpack.c.bf16 %v601, %v600
      %v612 = vpack.c.bf16 %v603, %v602
      %v613 = vpack.c.bf16 %v605, %v604
      %v614 = vld [vmem:[%s5] sm:$0xf]
      %v615 = vld [vmem:[%s5 + $0x4] sm:$0xf]
      %v616 = vld [vmem:[%s5 + $0x8] sm:$0xf]
      %v617 = vld [vmem:[%s5 + $0xc] sm:$0xf]
      %v618 = vld [vmem:[%s5 + $0x10] sm:$0xf]
      %v619 = vld [vmem:[%s5 + $0x14] sm:$0xf]
      %v620 = vld [vmem:[%s5 + $0x18] sm:$0xf]
      %v621 = vld [vmem:[%s5 + $0x1c] sm:$0xf]
      %v622 = vld [vmem:[%s6] sm:$0x1]
      %v624 = vperm.slane %v622, 0
      %v634 = vunpack.c.l.b16 %v614
      %v635 = vunpack.c.l.b16 %v615
      %v636 = vunpack.c.l.b16 %v616
      %v637 = vunpack.c.l.b16 %v617
      %v638 = vunpack.c.l.b16 %v618
      %v639 = vunpack.c.l.b16 %v619
      %v640 = vunpack.c.l.b16 %v620
      %v641 = vunpack.c.l.b16 %v621
      %v642 = vpack.c.b16 %v635, %v634
      %v643 = vpack.c.b16 %v637, %v636
      %v644 = vpack.c.b16 %v639, %v638
      %v645 = vpack.c.b16 %v641, %v640
      %v651 = vsel %vm516, %v606, 0
      %v654 = vsel %vm516, %v607, 0
      %v657 = vsel %vm516, %v608, 0
      %v660 = vsel %vm516, %v609, 0
      %v663 = vsel %vm516, %v610, 0
      %v666 = vsel %vm516, %v611, 0
      %v669 = vsel %vm516, %v612, 0
      %v672 = vsel %vm516, %v613, 0
      %674 = vmatpush.bf16.msra.mxu0 0
      %675 = vmatpush.bf16.msra.mxu0 0
      %676 = vmatpush.bf16.msra.mxu0 0
      %677 = vmatpush.bf16.msra.mxu0 0
      %678 = vmatpush.bf16.msra.mxu0 %v645
      %679 = vmatpush.bf16.msra.mxu0 %v644
      %680 = vmatpush.bf16.msra.mxu0 %v643
      %681 = vmatpush.bf16.msra.mxu0 %v642
      %682 = vmatmul.bf16.gmra.mxu0 %v651
      %v683 = vpop.f32.mrf.mxu0
      %v684 = vadd.f32 %v624, %v683
      %v685 = vpop.f32.mrf.mxu0
      %v686 = vadd.f32 %v624, %v685
      %687 = vmatmul.bf16.gmra.mxu0 %v654
      %v688 = vpop.f32.mrf.mxu0
      %v689 = vadd.f32 %v624, %v688
      %v690 = vpop.f32.mrf.mxu0
      %v691 = vadd.f32 %v624, %v690
      %692 = vmatmul.bf16.gmra.mxu0 %v657
      %v693 = vpop.f32.mrf.mxu0
      %v694 = vadd.f32 %v624, %v693
      %v695 = vpop.f32.mrf.mxu0
      %v696 = vadd.f32 %v624, %v695
      %697 = vmatmul.bf16.gmra.mxu0 %v660
      %v698 = vpop.f32.mrf.mxu0
      %v699 = vadd.f32 %v624, %v698
      %v700 = vpop.f32.mrf.mxu0
      %v701 = vadd.f32 %v624, %v700
      %702 = vmatmul.bf16.gmra.mxu0 %v663
      %v703 = vpop.f32.mrf.mxu0
      %v704 = vadd.f32 %v624, %v703
      %v705 = vpop.f32.mrf.mxu0
      %v706 = vadd.f32 %v624, %v705
      %707 = vmatmul.bf16.gmra.mxu0 %v666
      %v708 = vpop.f32.mrf.mxu0
      %v709 = vadd.f32 %v624, %v708
      %v710 = vpop.f32.mrf.mxu0
      %v711 = vadd.f32 %v624, %v710
      %712 = vmatmul.bf16.gmra.mxu0 %v669
      %v713 = vpop.f32.mrf.mxu0
      %v714 = vadd.f32 %v624, %v713
      %v715 = vpop.f32.mrf.mxu0
      %v716 = vadd.f32 %v624, %v715
      %717 = vmatmul.bf16.gmra.mxu0 %v672
      %v718 = vpop.f32.mrf.mxu0
      %v719 = vadd.f32 %v624, %v718
      %v720 = vpop.f32.mrf.mxu0
      %v721 = vadd.f32 %v624, %v720
      %722 = vdwg.mxu0
      %v723 = vmax.f32 %v684, 0.0
      %v724 = vmax.f32 %v686, 0.0
      %v725 = vmax.f32 %v689, 0.0
      %v726 = vmax.f32 %v691, 0.0
      %v727 = vmax.f32 %v694, 0.0
      %v728 = vmax.f32 %v696, 0.0
      %v729 = vmax.f32 %v699, 0.0
      %v730 = vmax.f32 %v701, 0.0
      %v731 = vmax.f32 %v704, 0.0
      %v732 = vmax.f32 %v706, 0.0
      %v733 = vmax.f32 %v709, 0.0
      %v734 = vmax.f32 %v711, 0.0
      %v735 = vmax.f32 %v714, 0.0
      %v736 = vmax.f32 %v716, 0.0
      %v737 = vmax.f32 %v719, 0.0
      %v738 = vmax.f32 %v721, 0.0
      %v739 = vpack.c.bf16 %v723, %v723
      %v740 = vpack.c.bf16 %v724, %v724
      %v741 = vpack.c.bf16 %v725, %v725
      %v742 = vpack.c.bf16 %v726, %v726
      %v743 = vpack.c.bf16 %v727, %v727
      %v744 = vpack.c.bf16 %v728, %v728
      %v745 = vpack.c.bf16 %v729, %v729
      %v746 = vpack.c.bf16 %v730, %v730
      %v747 = vpack.c.bf16 %v731, %v731
      %v748 = vpack.c.bf16 %v732, %v732
      %v749 = vpack.c.bf16 %v733, %v733
      %v750 = vpack.c.bf16 %v734, %v734
      %v751 = vpack.c.bf16 %v735, %v735
      %v752 = vpack.c.bf16 %v736, %v736
      %v753 = vpack.c.bf16 %v737, %v737
      %v754 = vpack.c.bf16 %v738, %v738
      %vm755 = vcmask 519168
      %756 = vst.msk [vmem:[%s316] sm:$0xf] %vm755, %v739
      %757 = vst.msk [vmem:[%s316 + $0x4] sm:$0xf] %vm755, %v740
      %758 = vst.msk [vmem:[%s316 + $0x8] sm:$0xf] %vm755, %v741
      %759 = vst.msk [vmem:[%s316 + $0xc] sm:$0xf] %vm755, %v742
      %760 = vst.msk [vmem:[%s316 + $0x10] sm:$0xf] %vm755, %v743
      %761 = vst.msk [vmem:[%s316 + $0x14] sm:$0xf] %vm755, %v744
      %762 = vst.msk [vmem:[%s316 + $0x18] sm:$0xf] %vm755, %v745
      %763 = vst.msk [vmem:[%s316 + $0x1c] sm:$0xf] %vm755, %v746
      %764 = vst.msk [vmem:[%s316 + $0x20] sm:$0xf] %vm755, %v747
      %765 = vst.msk [vmem:[%s316 + $0x24] sm:$0xf] %vm755, %v748
      %766 = vst.msk [vmem:[%s316 + $0x28] sm:$0xf] %vm755, %v749
      %767 = vst.msk [vmem:[%s316 + $0x2c] sm:$0xf] %vm755, %v750
      %768 = vst.msk [vmem:[%s316 + $0x30] sm:$0xf] %vm755, %v751
      %769 = vst.msk [vmem:[%s316 + $0x34] sm:$0xf] %vm755, %v752
      %770 = vst.msk [vmem:[%s316 + $0x38] sm:$0xf] %vm755, %v753
      %771 = vst.msk [vmem:[%s316 + $0x3c] sm:$0xf] %vm755, %v754
      %s772 = smul.u32 16, %s23
      %p773 = scmp.lt.s32.totalorder %s22, 1
      %s774 = scalar_select %p773, %s22, 1
      %p775 = scmp.lt.s32.totalorder %s772, 15
      %s776 = scalar_select %p775, %s772, 15
      %s777 = smul.addr %s774, 16
      %s778 = sadd.s32 %s776, %s777
      %s779 = smul.addr %s778, 4
      %s780 = scalar_lea.vmem %s7, %s779
      // Predicated region
      $region49: #{reconstruction_net_forward.6} parent=47 // pred_check
        %p781 = pneg %p204
      $region50: #{reconstruction_net_forward.6} parent=47 // pred_check_branch
        %783 = sbr.rel (%p781) target = $region52
      $region51: #{reconstruction_net_forward.6} parent=47 // pred_region
        %s784 = smul.u32 16, %s23
      $region52: #{reconstruction_net_forward.6} parent=47 // pred_fallthru
        _
    $region48: #{reconstruction_net_forward.6} parent=5 // pred_fallthru
      _
    %p785 = scmp.le.s32.totalorder 2, %s13
    // Predicated region
    $region53: #{reconstruction_net_forward.6} parent=5 // pred_check
      %p786 = pneg %p785
    $region54: #{reconstruction_net_forward.6} parent=5 // pred_check_branch
      %788 = sbr.rel (%p786) target = $region56
    $region55: #{reconstruction_net_forward.6} parent=5 // pred_region
      %s789 = ssub.s32 %s13, 2
      // Predicated region
      $region57: #{reconstruction_net_forward.6} parent=55 // pred_check
        %p790 = pneg %p210
      $region58: #{reconstruction_net_forward.6} parent=55 // pred_check_branch
        %792 = sbr.rel (%p790) target = $region60
      $region59: #{reconstruction_net_forward.6} parent=55 // pred_region
        %s793 = smul.u32 16, %s25
        %p794 = scmp.lt.s32.totalorder %s24, 1
        %s795 = scalar_select %p794, %s24, 1
        %p796 = scmp.lt.s32.totalorder %s793, 15
        %s797 = scalar_select %p796, %s793, 15
        %s798 = smul.addr %s795, 16
        %s799 = sadd.s32 %s797, %s798
        %s800 = smul.addr %s799, 4
        %s801 = scalar_lea.vmem %s7, %s800
      $region60: #{reconstruction_net_forward.6} parent=55 // pred_fallthru
        _
    $region56: #{reconstruction_net_forward.6} parent=5 // pred_fallthru
      _
  $region6: #{reconstruction_net_forward.6} parent=0 // loop_footer
    %s17 = sadd.s32 1, %s13
  $region7: #{reconstruction_net_forward.6} parent=0 // loop_footer_branch
    %12 = sbr.rel target = $region3
  $region8: #{reconstruction_net_forward.6} parent=0 // loop_exit
    _

// kernel: reconstruction_net_forward.7
$region0: #{reconstruction_net_forward.7}
  #allocation0 [shape = 'u32[]', space=smem, size = 0x4, offset = 0x4, fixed_abs, tag = 'smem constant byte address 0x4 - core index']
  #allocation1 [shape = 'u32[72,128]{1,0:T(1,128)}', space=vmem, size = 0x9000, scoped, tag = 'internal scratch']
  %s0 = inlined_call_operand.vmem [shape: bf16[2,128,64], index: 0, kind: input, shape index: {}]
  %s1 = inlined_call_operand.vmem [shape: bf16[64,128], index: 1, kind: input, shape index: {}]
  %s2 = inlined_call_operand.vmem [shape: f32[1,128], index: 2, kind: input, shape index: {}]
  %s3 = inlined_call_operand.vmem [shape: bf16[2,128,128], index: 3, kind: output, shape index: {}]
  %s4 = sld [smem:[#allocation0]]
  $region45: #{reconstruction_net_forward.7} parent=0
    _
  %s6 = ssub.s32 1, %s4
  %s7 = scalar_select 0, %s6, %s4
  loop: start=0, step=1, limit=4
  $region2: #{reconstruction_net_forward.7} parent=0 // loop_pre_header
    _
  $region3: #{reconstruction_net_forward.7} parent=0 // loop_header
    %s9 = sphi 0, %s13
    %p10 = scmp.ge.s32.totalorder %s9, 4
    %s16 = sphi 0, %s28
    %s17 = sphi 0, %s24
    %s18 = sphi 0, %s16
    %s19 = sphi 0, %s17
    %s20 = sphi 0, %s18
    %s21 = sphi 0, %s19
    %s33 = sphi 0, %s35
    %s36 = sphi 0, %s33
    %s37 = sphi 0, %s36
    %s53 = sphi 0, %s37
    %s57 = sphi 0, %s57
    %s59 = sphi 0, %s57
    %s60 = sphi 0, %s59
    %s74 = sphi 0, %s60
    %s78 = sphi 0, %s78
    %s80 = sphi 0, %s78
    %s81 = sphi 0, %s80
    %s95 = sphi 0, %s81
    %s103 = sphi 0, %s105
    %s106 = sphi 0, %s103
    %s107 = sphi 0, %s106
    %s123 = sphi 0, %s107
  $region4: #{reconstruction_net_forward.7} parent=0 // loop_header_branch
    %12 = sbr.rel (%p10) target = $region8
  $region5: #{reconstruction_net_forward.7} parent=0 // loop_body
    %s14 = ssub.s32 %s9, 1
    %s15 = ssub.s32 %s9, 2
    %s22 = sadd.s32 1, %s17
    %p23 = scmp.ge.s32.totalorder %s22, 1
    %s24 = scalar_select %p23, 0, %s22
    %s25 = sadd.s32 1, %s16
    %s26 = scalar_select %p23, %s25, %s16
    %p27 = scmp.ge.s32.totalorder %s26, 2
    %s28 = scalar_select %p27, 0, %s26
    %s29 = ssub.s32 %s16, %s28
    %s30 = ssub.s32 %s17, %s24
    %s31 = sor.u32 %s29, %s30
    %p32 = scmp.eq.s32.totalorder %s31, 0
    %s34 = sadd.s32 %s33, 1
    %s35 = scalar_select %p32, %s33, %s34
    %p38 = pneg %p32
    %p39 = scmp.eq.s32.totalorder %s9, 1
    %p40 = por %p38, %p39
    %p41 = scmp.ne.s32.totalorder %s33, %s36
    %p42 = scmp.eq.s32.totalorder %s9, 0
    %p43 = por %p41, %p42
    %p44 = scmp.ne.s32.totalorder %s33, %s36
    %p45 = scmp.eq.s32.totalorder %s14, 1
    %p46 = por %p44, %p45
    %p47 = scmp.ne.s32.totalorder %s36, %s37
    %p48 = scmp.eq.s32.totalorder %s14, 0
    %p49 = por %p47, %p48
    %p50 = scmp.ne.s32.totalorder %s36, %s37
    %p51 = scmp.eq.s32.totalorder %s15, 1
    %p52 = por %p50, %p51
    %p54 = scmp.ne.s32.totalorder %s37, %s53
    %p55 = scmp.eq.s32.totalorder %s15, 0
    %p56 = por %p54, %p55
    %s58 = sadd.s32 %s57, 1
    %p61 = scmp.eq.s32.totalorder %s9, 1
    %p62 = scmp.ne.s32.totalorder %s57, %s59
    %p63 = scmp.eq.s32.totalorder %s9, 0
    %p64 = por %p62, %p63
    %p65 = scmp.ne.s32.totalorder %s57, %s59
    %p66 = scmp.eq.s32.totalorder %s14, 1
    %p67 = por %p65, %p66
    %p68 = scmp.ne.s32.totalorder %s59, %s60
    %p69 = scmp.eq.s32.totalorder %s14, 0
    %p70 = por %p68, %p69
    %p71 = scmp.ne.s32.totalorder %s59, %s60
    %p72 = scmp.eq.s32.totalorder %s15, 1
    %p73 = por %p71, %p72
    %p75 = scmp.ne.s32.totalorder %s60, %s74
    %p76 = scmp.eq.s32.totalorder %s15, 0
    %p77 = por %p75, %p76
    %s79 = sadd.s32 %s78, 1
    %p82 = scmp.eq.s32.totalorder %s9, 1
    %p83 = scmp.ne.s32.totalorder %s78, %s80
    %p84 = scmp.eq.s32.totalorder %s9, 0
    %p85 = por %p83, %p84
    %p86 = scmp.ne.s32.totalorder %s78, %s80
    %p87 = scmp.eq.s32.totalorder %s14, 1
    %p88 = por %p86, %p87
    %p89 = scmp.ne.s32.totalorder %s80, %s81
    %p90 = scmp.eq.s32.totalorder %s14, 0
    %p91 = por %p89, %p90
    %p92 = scmp.ne.s32.totalorder %s80, %s81
    %p93 = scmp.eq.s32.totalorder %s15, 1
    %p94 = por %p92, %p93
    %p96 = scmp.ne.s32.totalorder %s81, %s95
    %p97 = scmp.eq.s32.totalorder %s15, 0
    %p98 = por %p96, %p97
    %s99 = ssub.s32 %s16, %s28
    %s100 = ssub.s32 %s17, %s24
    %s101 = sor.u32 %s99, %s100
    %p102 = scmp.eq.s32.totalorder %s101, 0
    %s104 = sadd.s32 %s103, 1
    %s105 = scalar_select %p102, %s103, %s104
    %p108 = pneg %p102
    %p109 = scmp.eq.s32.totalorder %s9, 1
    %p110 = por %p108, %p109
    %p111 = scmp.ne.s32.totalorder %s103, %s106
    %p112 = scmp.eq.s32.totalorder %s9, 0
    %p113 = por %p111, %p112
    %p114 = scmp.ne.s32.totalorder %s103, %s106
    %p115 = scmp.eq.s32.totalorder %s14, 1
    %p116 = por %p114, %p115
    %p117 = scmp.ne.s32.totalorder %s106, %s107
    %p118 = scmp.eq.s32.totalorder %s14, 0
    %p119 = por %p117, %p118
    %p120 = scmp.ne.s32.totalorder %s106, %s107
    %p121 = scmp.eq.s32.totalorder %s15, 1
    %p122 = por %p120, %p121
    %p124 = scmp.ne.s32.totalorder %s107, %s123
    %p125 = scmp.eq.s32.totalorder %s15, 0
    %p126 = por %p124, %p125
    %p127 = scmp.le.s32.totalorder 1, %s9
    %p128 = scmp.lt.s32.totalorder %s9, 3
    %p129 = pnand %p127, %p128
    %p130 = pneg %p129
    // Predicated region
    $region9: #{reconstruction_net_forward.7} parent=5 // pred_check
      _
    $region10: #{reconstruction_net_forward.7} parent=5 // pred_check_branch
      %132 = sbr.rel (%p129) target = $region12
    $region11: #{reconstruction_net_forward.7} parent=5 // pred_region
      %s133 = ssub.s32 %s9, 1
      // Predicated region
      $region13: #{reconstruction_net_forward.7} parent=11 // pred_check
        %p134 = pneg %p70
      $region14: #{reconstruction_net_forward.7} parent=11 // pred_check_branch
        %136 = sbr.rel (%p134) target = $region16
      $region15: #{reconstruction_net_forward.7} parent=11 // pred_region
        _
      $region16: #{reconstruction_net_forward.7} parent=11 // pred_fallthru
        _
      // Predicated region
      $region17: #{reconstruction_net_forward.7} parent=11 // pred_check
        %p137 = pneg %p91
      $region18: #{reconstruction_net_forward.7} parent=11 // pred_check_branch
        %139 = sbr.rel (%p137) target = $region20
      $region19: #{reconstruction_net_forward.7} parent=11 // pred_region
        _
      $region20: #{reconstruction_net_forward.7} parent=11 // pred_fallthru
        _
    $region12: #{reconstruction_net_forward.7} parent=5 // pred_fallthru
      _
    %p140 = scmp.lt.s32.totalorder %s9, 2
    // Predicated region
    $region21: #{reconstruction_net_forward.7} parent=5 // pred_check
      %p141 = pneg %p140
    $region22: #{reconstruction_net_forward.7} parent=5 // pred_check_branch
      %143 = sbr.rel (%p141) target = $region24
    $region23: #{reconstruction_net_forward.7} parent=5 // pred_region
      // Predicated region
      $region25: #{reconstruction_net_forward.7} parent=23 // pred_check
        %p144 = pneg %p43
      $region26: #{reconstruction_net_forward.7} parent=23 // pred_check_branch
        %146 = sbr.rel (%p144) target = $region28
      $region27: #{reconstruction_net_forward.7} parent=23 // pred_region
        %s147 = smul.u32 16, %s17
        %p148 = scmp.lt.s32.totalorder %s16, 1
        %s149 = scalar_select %p148, %s16, 1
        %p150 = scmp.lt.s32.totalorder %s147, 15
        %s151 = scalar_select %p150, %s147, 15
        %s152 = smul.addr %s149, 16
        %s153 = sadd.s32 %s151, %s152
        %s154 = smul.addr %s153, 4
        %s155 = scalar_lea.vmem %s0, %s154
        %s156 = smul.u32 16, %s17
      $region28: #{reconstruction_net_forward.7} parent=23 // pred_fallthru
        _
    $region24: #{reconstruction_net_forward.7} parent=5 // pred_fallthru
      _
    %p157 = scmp.le.s32.totalorder 1, %s9
    %p158 = scmp.lt.s32.totalorder %s9, 3
    %p159 = pnand %p157, %p158
    %p160 = pneg %p159
    // Predicated region
    $region29: #{reconstruction_net_forward.7} parent=5 // pred_check
      _
    $region30: #{reconstruction_net_forward.7} parent=5 // pred_check_branch
      %162 = sbr.rel (%p159) target = $region32
    $region31: #{reconstruction_net_forward.7} parent=5 // pred_region
      %s163 = ssub.s32 %s9, 1
      %s164 = smul.u32 16, %s19
      %p165 = scmp.lt.s32.totalorder %s18, 1
      %s166 = scalar_select %p165, %s18, 1
      %p167 = scmp.lt.s32.totalorder %s164, 15
      %s168 = scalar_select %p167, %s164, 15
      %s169 = smul.addr %s166, 16
      %s170 = sadd.s32 %s168, %s169
      %s171 = smul.addr %s170, 4
      %s172 = scalar_lea.vmem %s0, %s171
      %p173 = pneg %p49
      %p174 = pneg %p46
      %p175 = pneg %p70
      %p176 = pneg %p67
      %p177 = pneg %p91
      %p178 = pneg %p88
      %p179 = pneg %p119
      %p180 = pneg %p116
      %s181 = smul.u32 16, %s19
      %p182 = scmp.lt.s32.totalorder %s18, 1
      %s183 = scalar_select %p182, %s18, 1
      %p184 = scmp.lt.s32.totalorder %s181, 15
      %s185 = scalar_select %p184, %s181, 15
      %s186 = smul.addr %s183, 16
      %s187 = sadd.s32 %s185, %s186
      %s188 = smul.addr %s187, 4
      %s189 = scalar_lea.vmem %s3, %s188
      %s190 = smul.u32 16, %s19
      %p191 = scmp.lt.s32.totalorder %s18, 1
      %s192 = scalar_select %p191, %s18, 1
      %p193 = scmp.lt.s32.totalorder %s190, 15
      %s194 = scalar_select %p193, %s190, 15
      %s195 = smul.addr %s192, 16
      %s196 = sadd.s32 %s194, %s195
      %s197 = smul.addr %s196, 4
      %s198 = scalar_lea.vmem %s0, %s197
      %s199 = smul.u32 16, %s19
      %s200 = smul.u32 16, %s19
      %p201 = scmp.lt.s32.totalorder %s18, 1
      %s202 = scalar_select %p201, %s18, 1
      %p203 = scmp.lt.s32.totalorder %s200, 15
      %s204 = scalar_select %p203, %s200, 15
      %s205 = smul.addr %s202, 16
      %s206 = sadd.s32 %s204, %s205
      %s207 = smul.addr %s206, 4
      %s208 = scalar_lea.vmem %s3, %s207
      %s209 = smul.u32 16, %s19
      %v211 = vld [vmem:[%s198] sm:$0xf]
      %v212 = vld [vmem:[%s198 + $0x4] sm:$0xf]
      %v213 = vld [vmem:[%s198 + $0x8] sm:$0xf]
      %v214 = vld [vmem:[%s198 + $0xc] sm:$0xf]
      %v215 = vld [vmem:[%s198 + $0x10] sm:$0xf]
      %v216 = vld [vmem:[%s198 + $0x14] sm:$0xf]
      %v217 = vld [vmem:[%s198 + $0x18] sm:$0xf]
      %v218 = vld [vmem:[%s198 + $0x1c] sm:$0xf]
      %v219 = vld [vmem:[%s198 + $0x20] sm:$0xf]
      %v220 = vld [vmem:[%s198 + $0x24] sm:$0xf]
      %v221 = vld [vmem:[%s198 + $0x28] sm:$0xf]
      %v222 = vld [vmem:[%s198 + $0x2c] sm:$0xf]
      %v223 = vld [vmem:[%s198 + $0x30] sm:$0xf]
      %v224 = vld [vmem:[%s198 + $0x34] sm:$0xf]
      %v225 = vld [vmem:[%s198 + $0x38] sm:$0xf]
      %v226 = vld [vmem:[%s198 + $0x3c] sm:$0xf]
      %v227 = vld [vmem:[%s1] sm:$0xf]
      %v228 = vld [vmem:[%s1 + $0x4] sm:$0xf]
      %v229 = vld [vmem:[%s1 + $0x8] sm:$0xf]
      %v230 = vld [vmem:[%s1 + $0xc] sm:$0xf]
      %v231 = vld [vmem:[%s1 + $0x10] sm:$0xf]
      %v232 = vld [vmem:[%s1 + $0x14] sm:$0xf]
      %v233 = vld [vmem:[%s1 + $0x18] sm:$0xf]
      %v234 = vld [vmem:[%s1 + $0x1c] sm:$0xf]
      %v235 = vld [vmem:[%s2] sm:$0x1]
      %v237 = vperm.slane %v235, 0
      %v255 = vunpack.c.l.b16 %v211
      %v256 = vunpack.c.l.b16 %v212
      %v257 = vunpack.c.l.b16 %v213
      %v258 = vunpack.c.l.b16 %v214
      %v259 = vunpack.c.l.b16 %v215
      %v260 = vunpack.c.l.b16 %v216
      %v261 = vunpack.c.l.b16 %v217
      %v262 = vunpack.c.l.b16 %v218
      %v263 = vunpack.c.l.b16 %v219
      %v264 = vunpack.c.l.b16 %v220
      %v265 = vunpack.c.l.b16 %v221
      %v266 = vunpack.c.l.b16 %v222
      %v267 = vunpack.c.l.b16 %v223
      %v268 = vunpack.c.l.b16 %v224
      %v269 = vunpack.c.l.b16 %v225
      %v270 = vunpack.c.l.b16 %v226
      %v271 = vpack.c.b16 %v256, %v255
      %v272 = vpack.c.b16 %v258, %v257
      %v273 = vpack.c.b16 %v260, %v259
      %v274 = vpack.c.b16 %v262, %v261
      %v275 = vpack.c.b16 %v264, %v263
      %v276 = vpack.c.b16 %v266, %v265
      %v277 = vpack.c.b16 %v268, %v267
      %v278 = vpack.c.b16 %v270, %v269
      %v287 = vunpack.c.l.b16 %v227
      %v288 = vunpack.c.l.b16 %v228
      %v289 = vunpack.c.l.b16 %v229
      %v290 = vunpack.c.l.b16 %v230
      %v291 = vunpack.c.l.b16 %v231
      %v292 = vunpack.c.l.b16 %v232
      %v293 = vunpack.c.l.b16 %v233
      %v294 = vunpack.c.l.b16 %v234
      %v295 = vpack.c.b16 %v288, %v287
      %v296 = vpack.c.b16 %v290, %v289
      %v297 = vpack.c.b16 %v292, %v291
      %v298 = vpack.c.b16 %v294, %v293
      %vm303 = vcmask 523264
      %v305 = vsel %vm303, %v271, 0
      %v308 = vsel %vm303, %v272, 0
      %v311 = vsel %vm303, %v273, 0
      %v314 = vsel %vm303, %v274, 0
      %v317 = vsel %vm303, %v275, 0
      %v320 = vsel %vm303, %v276, 0
      %v323 = vsel %vm303, %v277, 0
      %v326 = vsel %vm303, %v278, 0
      %328 = vmatpush.bf16.msra.mxu0 0
      %329 = vmatpush.bf16.msra.mxu0 0
      %330 = vmatpush.bf16.msra.mxu0 0
      %331 = vmatpush.bf16.msra.mxu0 0
      %332 = vmatpush.bf16.msra.mxu0 %v298
      %333 = vmatpush.bf16.msra.mxu0 %v297
      %334 = vmatpush.bf16.msra.mxu0 %v296
      %335 = vmatpush.bf16.msra.mxu0 %v295
      %336 = vmatmul.bf16.gmra.mxu0 %v305
      %v337 = vpop.f32.mrf.mxu0
      %v338 = vadd.f32 %v237, %v337
      %v339 = vpop.f32.mrf.mxu0
      %v340 = vadd.f32 %v237, %v339
      %341 = vmatmul.bf16.gmra.mxu0 %v308
      %v342 = vpop.f32.mrf.mxu0
      %v343 = vadd.f32 %v237, %v342
      %v344 = vpop.f32.mrf.mxu0
      %v345 = vadd.f32 %v237, %v344
      %346 = vmatmul.bf16.gmra.mxu0 %v311
      %v347 = vpop.f32.mrf.mxu0
      %v348 = vadd.f32 %v237, %v347
      %v349 = vpop.f32.mrf.mxu0
      %v350 = vadd.f32 %v237, %v349
      %351 = vmatmul.bf16.gmra.mxu0 %v314
      %v352 = vpop.f32.mrf.mxu0
      %v353 = vadd.f32 %v237, %v352
      %v354 = vpop.f32.mrf.mxu0
      %v355 = vadd.f32 %v237, %v354
      %356 = vmatmul.bf16.gmra.mxu0 %v317
      %v357 = vpop.f32.mrf.mxu0
      %v358 = vadd.f32 %v237, %v357
      %v359 = vpop.f32.mrf.mxu0
      %v360 = vadd.f32 %v237, %v359
      %361 = vmatmul.bf16.gmra.mxu0 %v320
      %v362 = vpop.f32.mrf.mxu0
      %v363 = vadd.f32 %v237, %v362
      %v364 = vpop.f32.mrf.mxu0
      %v365 = vadd.f32 %v237, %v364
      %366 = vmatmul.bf16.gmra.mxu0 %v323
      %v367 = vpop.f32.mrf.mxu0
      %v368 = vadd.f32 %v237, %v367
      %v369 = vpop.f32.mrf.mxu0
      %v370 = vadd.f32 %v237, %v369
      %371 = vmatmul.bf16.gmra.mxu0 %v326
      %v372 = vpop.f32.mrf.mxu0
      %v373 = vadd.f32 %v237, %v372
      %v374 = vpop.f32.mrf.mxu0
      %v375 = vadd.f32 %v237, %v374
      %376 = vdwg.mxu0
      %v377 = vmax.f32 %v338, 0.0
      %v378 = vmax.f32 %v340, 0.0
      %v379 = vmax.f32 %v343, 0.0
      %v380 = vmax.f32 %v345, 0.0
      %v381 = vmax.f32 %v348, 0.0
      %v382 = vmax.f32 %v350, 0.0
      %v383 = vmax.f32 %v353, 0.0
      %v384 = vmax.f32 %v355, 0.0
      %v385 = vmax.f32 %v358, 0.0
      %v386 = vmax.f32 %v360, 0.0
      %v387 = vmax.f32 %v363, 0.0
      %v388 = vmax.f32 %v365, 0.0
      %v389 = vmax.f32 %v368, 0.0
      %v390 = vmax.f32 %v370, 0.0
      %v391 = vmax.f32 %v373, 0.0
      %v392 = vmax.f32 %v375, 0.0
      %v393 = vpack.c.bf16 %v377, %v377
      %v394 = vpack.c.bf16 %v378, %v378
      %v395 = vpack.c.bf16 %v379, %v379
      %v396 = vpack.c.bf16 %v380, %v380
      %v397 = vpack.c.bf16 %v381, %v381
      %v398 = vpack.c.bf16 %v382, %v382
      %v399 = vpack.c.bf16 %v383, %v383
      %v400 = vpack.c.bf16 %v384, %v384
      %v401 = vpack.c.bf16 %v385, %v385
      %v402 = vpack.c.bf16 %v386, %v386
      %v403 = vpack.c.bf16 %v387, %v387
      %v404 = vpack.c.bf16 %v388, %v388
      %v405 = vpack.c.bf16 %v389, %v389
      %v406 = vpack.c.bf16 %v390, %v390
      %v407 = vpack.c.bf16 %v391, %v391
      %v408 = vpack.c.bf16 %v392, %v392
      %409 = vst [vmem:[%s208] sm:$0xf] %v393
      %410 = vst [vmem:[%s208 + $0x4] sm:$0xf] %v394
      %411 = vst [vmem:[%s208 + $0x8] sm:$0xf] %v395
      %412 = vst [vmem:[%s208 + $0xc] sm:$0xf] %v396
      %413 = vst [vmem:[%s208 + $0x10] sm:$0xf] %v397
      %414 = vst [vmem:[%s208 + $0x14] sm:$0xf] %v398
      %415 = vst [vmem:[%s208 + $0x18] sm:$0xf] %v399
      %416 = vst [vmem:[%s208 + $0x1c] sm:$0xf] %v400
      %417 = vst [vmem:[%s208 + $0x20] sm:$0xf] %v401
      %418 = vst [vmem:[%s208 + $0x24] sm:$0xf] %v402
      %419 = vst [vmem:[%s208 + $0x28] sm:$0xf] %v403
      %420 = vst [vmem:[%s208 + $0x2c] sm:$0xf] %v404
      %421 = vst [vmem:[%s208 + $0x30] sm:$0xf] %v405
      %422 = vst [vmem:[%s208 + $0x34] sm:$0xf] %v406
      %423 = vst [vmem:[%s208 + $0x38] sm:$0xf] %v407
      %424 = vst [vmem:[%s208 + $0x3c] sm:$0xf] %v408
      %s425 = smul.u32 16, %s19
      %p426 = scmp.lt.s32.totalorder %s18, 1
      %s427 = scalar_select %p426, %s18, 1
      %p428 = scmp.lt.s32.totalorder %s425, 15
      %s429 = scalar_select %p428, %s425, 15
      %s430 = smul.addr %s427, 16
      %s431 = sadd.s32 %s429, %s430
      %s432 = smul.addr %s431, 4
      %s433 = scalar_lea.vmem %s3, %s432
      // Predicated region
      $region33: #{reconstruction_net_forward.7} parent=31 // pred_check
        %p434 = pneg %p116
      $region34: #{reconstruction_net_forward.7} parent=31 // pred_check_branch
        %436 = sbr.rel (%p434) target = $region36
      $region35: #{reconstruction_net_forward.7} parent=31 // pred_region
        %s437 = smul.u32 16, %s19
      $region36: #{reconstruction_net_forward.7} parent=31 // pred_fallthru
        _
    $region32: #{reconstruction_net_forward.7} parent=5 // pred_fallthru
      _
    %p438 = scmp.le.s32.totalorder 2, %s9
    // Predicated region
    $region37: #{reconstruction_net_forward.7} parent=5 // pred_check
      %p439 = pneg %p438
    $region38: #{reconstruction_net_forward.7} parent=5 // pred_check_branch
      %441 = sbr.rel (%p439) target = $region40
    $region39: #{reconstruction_net_forward.7} parent=5 // pred_region
      %s442 = ssub.s32 %s9, 2
      // Predicated region
      $region41: #{reconstruction_net_forward.7} parent=39 // pred_check
        %p443 = pneg %p122
      $region42: #{reconstruction_net_forward.7} parent=39 // pred_check_branch
        %445 = sbr.rel (%p443) target = $region44
      $region43: #{reconstruction_net_forward.7} parent=39 // pred_region
        %s446 = smul.u32 16, %s21
        %p447 = scmp.lt.s32.totalorder %s20, 1
        %s448 = scalar_select %p447, %s20, 1
        %p449 = scmp.lt.s32.totalorder %s446, 15
        %s450 = scalar_select %p449, %s446, 15
        %s451 = smul.addr %s448, 16
        %s452 = sadd.s32 %s450, %s451
        %s453 = smul.addr %s452, 4
        %s454 = scalar_lea.vmem %s3, %s453
      $region44: #{reconstruction_net_forward.7} parent=39 // pred_fallthru
        _
    $region40: #{reconstruction_net_forward.7} parent=5 // pred_fallthru
      _
  $region6: #{reconstruction_net_forward.7} parent=0 // loop_footer
    %s13 = sadd.s32 1, %s9
  $region7: #{reconstruction_net_forward.7} parent=0 // loop_footer_branch
    %8 = sbr.rel target = $region3
  $region8: #{reconstruction_net_forward.7} parent=0 // loop_exit
    _

// kernel: reconstruction_net_forward.8
$region0: #{reconstruction_net_forward.8}
  #allocation0 [shape = 'u32[]', space=smem, size = 0x4, offset = 0x4, fixed_abs, tag = 'smem constant byte address 0x4 - core index']
  #allocation1 [shape = 'u32[72,128]{1,0:T(1,128)}', space=vmem, size = 0x9000, scoped, tag = 'internal scratch']
  #allocation2 [shape = 'f32[1,1024]{1,0:T(1,128)}', space=vmem, size = 0x1000, scoped, tag = 'scratch operand']
  %s0 = inlined_call_operand.vmem [shape: bf16[2,128,128], index: 0, kind: input, shape index: {}]
  %s1 = inlined_call_operand.vmem [shape: bf16[128,1024], index: 1, kind: input, shape index: {}]
  %s2 = inlined_call_operand.vmem [shape: f32[1,1024], index: 2, kind: input, shape index: {}]
  %s3 = inlined_call_operand.vmem [shape: bf16[1024,32], index: 3, kind: input, shape index: {}]
  %s4 = inlined_call_operand.vmem [shape: f32[1,32], index: 4, kind: input, shape index: {}]
  %s5 = inlined_call_operand.vmem [shape: bf16[32,32], index: 5, kind: input, shape index: {}]
  %s6 = inlined_call_operand.vmem [shape: f32[1,32], index: 6, kind: input, shape index: {}]
  %s7 = inlined_call_operand.vmem [shape: f32[2,1,32], index: 7, kind: output, shape index: {}]
  %s8 = sld [smem:[#allocation0]]
  $region73: #{reconstruction_net_forward.8} parent=0
    _
  %s10 = ssub.s32 1, %s8
  %s11 = scalar_select 0, %s10, %s8
  loop: start=0, step=1, limit=4
  $region2: #{reconstruction_net_forward.8} parent=0 // loop_pre_header
    _
  $region3: #{reconstruction_net_forward.8} parent=0 // loop_header
    %s13 = sphi 0, %s17
    %p14 = scmp.ge.s32.totalorder %s13, 4
    %s20 = sphi 0, %s32
    %s21 = sphi 0, %s28
    %s22 = sphi 0, %s20
    %s23 = sphi 0, %s21
    %s24 = sphi 0, %s22
    %s25 = sphi 0, %s23
    %s37 = sphi 0, %s39
    %s40 = sphi 0, %s37
    %s41 = sphi 0, %s40
    %s57 = sphi 0, %s41
    %s61 = sphi 0, %s61
    %s63 = sphi 0, %s61
    %s64 = sphi 0, %s63
    %s78 = sphi 0, %s64
    %s82 = sphi 0, %s82
    %s84 = sphi 0, %s82
    %s85 = sphi 0, %s84
    %s99 = sphi 0, %s85
    %s103 = sphi 0, %s103
    %s105 = sphi 0, %s103
    %s106 = sphi 0, %s105
    %s120 = sphi 0, %s106
    %s124 = sphi 0, %s124
    %s126 = sphi 0, %s124
    %s127 = sphi 0, %s126
    %s141 = sphi 0, %s127
    %s145 = sphi 0, %s145
    %s147 = sphi 0, %s145
    %s148 = sphi 0, %s147
    %s162 = sphi 0, %s148
    %s166 = sphi 0, %s166
    %s168 = sphi 0, %s166
    %s169 = sphi 0, %s168
    %s183 = sphi 0, %s169
    %s189 = sphi 0, %s191
    %s192 = sphi 0, %s189
    %s193 = sphi 0, %s192
    %s209 = sphi 0, %s193
  $region4: #{reconstruction_net_forward.8} parent=0 // loop_header_branch
    %16 = sbr.rel (%p14) target = $region8
  $region5: #{reconstruction_net_forward.8} parent=0 // loop_body
    %s18 = ssub.s32 %s13, 1
    %s19 = ssub.s32 %s13, 2
    %s26 = sadd.s32 1, %s21
    %p27 = scmp.ge.s32.totalorder %s26, 1
    %s28 = scalar_select %p27, 0, %s26
    %s29 = sadd.s32 1, %s20
    %s30 = scalar_select %p27, %s29, %s20
    %p31 = scmp.ge.s32.totalorder %s30, 2
    %s32 = scalar_select %p31, 0, %s30
    %s33 = ssub.s32 %s20, %s32
    %s34 = ssub.s32 %s21, %s28
    %s35 = sor.u32 %s33, %s34
    %p36 = scmp.eq.s32.totalorder %s35, 0
    %s38 = sadd.s32 %s37, 1
    %s39 = scalar_select %p36, %s37, %s38
    %p42 = pneg %p36
    %p43 = scmp.eq.s32.totalorder %s13, 1
    %p44 = por %p42, %p43
    %p45 = scmp.ne.s32.totalorder %s37, %s40
    %p46 = scmp.eq.s32.totalorder %s13, 0
    %p47 = por %p45, %p46
    %p48 = scmp.ne.s32.totalorder %s37, %s40
    %p49 = scmp.eq.s32.totalorder %s18, 1
    %p50 = por %p48, %p49
    %p51 = scmp.ne.s32.totalorder %s40, %s41
    %p52 = scmp.eq.s32.totalorder %s18, 0
    %p53 = por %p51, %p52
    %p54 = scmp.ne.s32.totalorder %s40, %s41
    %p55 = scmp.eq.s32.totalorder %s19, 1
    %p56 = por %p54, %p55
    %p58 = scmp.ne.s32.totalorder %s41, %s57
    %p59 = scmp.eq.s32.totalorder %s19, 0
    %p60 = por %p58, %p59
    %s62 = sadd.s32 %s61, 1
    %p65 = scmp.eq.s32.totalorder %s13, 1
    %p66 = scmp.ne.s32.totalorder %s61, %s63
    %p67 = scmp.eq.s32.totalorder %s13, 0
    %p68 = por %p66, %p67
    %p69 = scmp.ne.s32.totalorder %s61, %s63
    %p70 = scmp.eq.s32.totalorder %s18, 1
    %p71 = por %p69, %p70
    %p72 = scmp.ne.s32.totalorder %s63, %s64
    %p73 = scmp.eq.s32.totalorder %s18, 0
    %p74 = por %p72, %p73
    %p75 = scmp.ne.s32.totalorder %s63, %s64
    %p76 = scmp.eq.s32.totalorder %s19, 1
    %p77 = por %p75, %p76
    %p79 = scmp.ne.s32.totalorder %s64, %s78
    %p80 = scmp.eq.s32.totalorder %s19, 0
    %p81 = por %p79, %p80
    %s83 = sadd.s32 %s82, 1
    %p86 = scmp.eq.s32.totalorder %s13, 1
    %p87 = scmp.ne.s32.totalorder %s82, %s84
    %p88 = scmp.eq.s32.totalorder %s13, 0
    %p89 = por %p87, %p88
    %p90 = scmp.ne.s32.totalorder %s82, %s84
    %p91 = scmp.eq.s32.totalorder %s18, 1
    %p92 = por %p90, %p91
    %p93 = scmp.ne.s32.totalorder %s84, %s85
    %p94 = scmp.eq.s32.totalorder %s18, 0
    %p95 = por %p93, %p94
    %p96 = scmp.ne.s32.totalorder %s84, %s85
    %p97 = scmp.eq.s32.totalorder %s19, 1
    %p98 = por %p96, %p97
    %p100 = scmp.ne.s32.totalorder %s85, %s99
    %p101 = scmp.eq.s32.totalorder %s19, 0
    %p102 = por %p100, %p101
    %s104 = sadd.s32 %s103, 1
    %p107 = scmp.eq.s32.totalorder %s13, 1
    %p108 = scmp.ne.s32.totalorder %s103, %s105
    %p109 = scmp.eq.s32.totalorder %s13, 0
    %p110 = por %p108, %p109
    %p111 = scmp.ne.s32.totalorder %s103, %s105
    %p112 = scmp.eq.s32.totalorder %s18, 1
    %p113 = por %p111, %p112
    %p114 = scmp.ne.s32.totalorder %s105, %s106
    %p115 = scmp.eq.s32.totalorder %s18, 0
    %p116 = por %p114, %p115
    %p117 = scmp.ne.s32.totalorder %s105, %s106
    %p118 = scmp.eq.s32.totalorder %s19, 1
    %p119 = por %p117, %p118
    %p121 = scmp.ne.s32.totalorder %s106, %s120
    %p122 = scmp.eq.s32.totalorder %s19, 0
    %p123 = por %p121, %p122
    %s125 = sadd.s32 %s124, 1
    %p128 = scmp.eq.s32.totalorder %s13, 1
    %p129 = scmp.ne.s32.totalorder %s124, %s126
    %p130 = scmp.eq.s32.totalorder %s13, 0
    %p131 = por %p129, %p130
    %p132 = scmp.ne.s32.totalorder %s124, %s126
    %p133 = scmp.eq.s32.totalorder %s18, 1
    %p134 = por %p132, %p133
    %p135 = scmp.ne.s32.totalorder %s126, %s127
    %p136 = scmp.eq.s32.totalorder %s18, 0
    %p137 = por %p135, %p136
    %p138 = scmp.ne.s32.totalorder %s126, %s127
    %p139 = scmp.eq.s32.totalorder %s19, 1
    %p140 = por %p138, %p139
    %p142 = scmp.ne.s32.totalorder %s127, %s141
    %p143 = scmp.eq.s32.totalorder %s19, 0
    %p144 = por %p142, %p143
    %s146 = sadd.s32 %s145, 1
    %p149 = scmp.eq.s32.totalorder %s13, 1
    %p150 = scmp.ne.s32.totalorder %s145, %s147
    %p151 = scmp.eq.s32.totalorder %s13, 0
    %p152 = por %p150, %p151
    %p153 = scmp.ne.s32.totalorder %s145, %s147
    %p154 = scmp.eq.s32.totalorder %s18, 1
    %p155 = por %p153, %p154
    %p156 = scmp.ne.s32.totalorder %s147, %s148
    %p157 = scmp.eq.s32.totalorder %s18, 0
    %p158 = por %p156, %p157
    %p159 = scmp.ne.s32.totalorder %s147, %s148
    %p160 = scmp.eq.s32.totalorder %s19, 1
    %p161 = por %p159, %p160
    %p163 = scmp.ne.s32.totalorder %s148, %s162
    %p164 = scmp.eq.s32.totalorder %s19, 0
    %p165 = por %p163, %p164
    %s167 = sadd.s32 %s166, 1
    %p170 = scmp.eq.s32.totalorder %s13, 1
    %p171 = scmp.ne.s32.totalorder %s166, %s168
    %p172 = scmp.eq.s32.totalorder %s13, 0
    %p173 = por %p171, %p172
    %p174 = scmp.ne.s32.totalorder %s166, %s168
    %p175 = scmp.eq.s32.totalorder %s18, 1
    %p176 = por %p174, %p175
    %p177 = scmp.ne.s32.totalorder %s168, %s169
    %p178 = scmp.eq.s32.totalorder %s18, 0
    %p179 = por %p177, %p178
    %p180 = scmp.ne.s32.totalorder %s168, %s169
    %p181 = scmp.eq.s32.totalorder %s19, 1
    %p182 = por %p180, %p181
    %p184 = scmp.ne.s32.totalorder %s169, %s183
    %p185 = scmp.eq.s32.totalorder %s19, 0
    %p186 = por %p184, %p185
    %s187 = ssub.s32 %s20, %s32
    %p188 = scmp.eq.s32.totalorder %s187, 0
    %s190 = sadd.s32 %s189, 1
    %s191 = scalar_select %p188, %s189, %s190
    %p194 = pneg %p188
    %p195 = scmp.eq.s32.totalorder %s13, 1
    %p196 = por %p194, %p195
    %p197 = scmp.ne.s32.totalorder %s189, %s192
    %p198 = scmp.eq.s32.totalorder %s13, 0
    %p199 = por %p197, %p198
    %p200 = scmp.ne.s32.totalorder %s189, %s192
    %p201 = scmp.eq.s32.totalorder %s18, 1
    %p202 = por %p200, %p201
    %p203 = scmp.ne.s32.totalorder %s192, %s193
    %p204 = scmp.eq.s32.totalorder %s18, 0
    %p205 = por %p203, %p204
    %p206 = scmp.ne.s32.totalorder %s192, %s193
    %p207 = scmp.eq.s32.totalorder %s19, 1
    %p208 = por %p206, %p207
    %p210 = scmp.ne.s32.totalorder %s193, %s209
    %p211 = scmp.eq.s32.totalorder %s19, 0
    %p212 = por %p210, %p211
    %p213 = scmp.le.s32.totalorder 1, %s13
    %p214 = scmp.lt.s32.totalorder %s13, 3
    %p215 = pnand %p213, %p214
    %p216 = pneg %p215
    // Predicated region
    $region9: #{reconstruction_net_forward.8} parent=5 // pred_check
      _
    $region10: #{reconstruction_net_forward.8} parent=5 // pred_check_branch
      %218 = sbr.rel (%p215) target = $region12
    $region11: #{reconstruction_net_forward.8} parent=5 // pred_region
      %s219 = ssub.s32 %s13, 1
      // Predicated region
      $region13: #{reconstruction_net_forward.8} parent=11 // pred_check
        %p220 = pneg %p74
      $region14: #{reconstruction_net_forward.8} parent=11 // pred_check_branch
        %222 = sbr.rel (%p220) target = $region16
      $region15: #{reconstruction_net_forward.8} parent=11 // pred_region
        _
      $region16: #{reconstruction_net_forward.8} parent=11 // pred_fallthru
        _
      // Predicated region
      $region17: #{reconstruction_net_forward.8} parent=11 // pred_check
        %p223 = pneg %p95
      $region18: #{reconstruction_net_forward.8} parent=11 // pred_check_branch
        %225 = sbr.rel (%p223) target = $region20
      $region19: #{reconstruction_net_forward.8} parent=11 // pred_region
        _
      $region20: #{reconstruction_net_forward.8} parent=11 // pred_fallthru
        _
      // Predicated region
      $region21: #{reconstruction_net_forward.8} parent=11 // pred_check
        %p226 = pneg %p116
      $region22: #{reconstruction_net_forward.8} parent=11 // pred_check_branch
        %228 = sbr.rel (%p226) target = $region24
      $region23: #{reconstruction_net_forward.8} parent=11 // pred_region
        _
      $region24: #{reconstruction_net_forward.8} parent=11 // pred_fallthru
        _
      // Predicated region
      $region25: #{reconstruction_net_forward.8} parent=11 // pred_check
        %p229 = pneg %p137
      $region26: #{reconstruction_net_forward.8} parent=11 // pred_check_branch
        %231 = sbr.rel (%p229) target = $region28
      $region27: #{reconstruction_net_forward.8} parent=11 // pred_region
        _
      $region28: #{reconstruction_net_forward.8} parent=11 // pred_fallthru
        _
      // Predicated region
      $region29: #{reconstruction_net_forward.8} parent=11 // pred_check
        %p232 = pneg %p158
      $region30: #{reconstruction_net_forward.8} parent=11 // pred_check_branch
        %234 = sbr.rel (%p232) target = $region32
      $region31: #{reconstruction_net_forward.8} parent=11 // pred_region
        _
      $region32: #{reconstruction_net_forward.8} parent=11 // pred_fallthru
        _
      // Predicated region
      $region33: #{reconstruction_net_forward.8} parent=11 // pred_check
        %p235 = pneg %p179
      $region34: #{reconstruction_net_forward.8} parent=11 // pred_check_branch
        %237 = sbr.rel (%p235) target = $region36
      $region35: #{reconstruction_net_forward.8} parent=11 // pred_region
        _
      $region36: #{reconstruction_net_forward.8} parent=11 // pred_fallthru
        _
    $region12: #{reconstruction_net_forward.8} parent=5 // pred_fallthru
      _
    %p238 = scmp.lt.s32.totalorder %s13, 2
    // Predicated region
    $region37: #{reconstruction_net_forward.8} parent=5 // pred_check
      %p239 = pneg %p238
    $region38: #{reconstruction_net_forward.8} parent=5 // pred_check_branch
      %241 = sbr.rel (%p239) target = $region40
    $region39: #{reconstruction_net_forward.8} parent=5 // pred_region
      // Predicated region
      $region41: #{reconstruction_net_forward.8} parent=39 // pred_check
        %p242 = pneg %p47
      $region42: #{reconstruction_net_forward.8} parent=39 // pred_check_branch
        %244 = sbr.rel (%p242) target = $region44
      $region43: #{reconstruction_net_forward.8} parent=39 // pred_region
        %s245 = smul.u32 16, %s21
        %p246 = scmp.lt.s32.totalorder %s20, 1
        %s247 = scalar_select %p246, %s20, 1
        %p248 = scmp.lt.s32.totalorder %s245, 15
        %s249 = scalar_select %p248, %s245, 15
        %s250 = smul.addr %s247, 16
        %s251 = sadd.s32 %s249, %s250
        %s252 = smul.addr %s251, 4
        %s253 = scalar_lea.vmem %s0, %s252
        %s254 = smul.u32 16, %s21
      $region44: #{reconstruction_net_forward.8} parent=39 // pred_fallthru
        _
    $region40: #{reconstruction_net_forward.8} parent=5 // pred_fallthru
      _
    %p255 = scmp.le.s32.totalorder 1, %s13
    %p256 = scmp.lt.s32.totalorder %s13, 3
    %p257 = pnand %p255, %p256
    %p258 = pneg %p257
    // Predicated region
    $region45: #{reconstruction_net_forward.8} parent=5 // pred_check
      _
    $region46: #{reconstruction_net_forward.8} parent=5 // pred_check_branch
      %260 = sbr.rel (%p257) target = $region48
    $region47: #{reconstruction_net_forward.8} parent=5 // pred_region
      %s261 = ssub.s32 %s13, 1
      %s262 = smul.u32 16, %s23
      %p263 = scmp.lt.s32.totalorder %s22, 1
      %s264 = scalar_select %p263, %s22, 1
      %p265 = scmp.lt.s32.totalorder %s262, 15
      %s266 = scalar_select %p265, %s262, 15
      %s267 = smul.addr %s264, 16
      %s268 = sadd.s32 %s266, %s267
      %s269 = smul.addr %s268, 4
      %s270 = scalar_lea.vmem %s0, %s269
      %p271 = pneg %p53
      %p272 = pneg %p50
      %p273 = pneg %p74
      %p274 = pneg %p71
      %p275 = pneg %p95
      %p276 = pneg %p92
      %p277 = pneg %p116
      %p278 = pneg %p113
      %p279 = pneg %p137
      %p280 = pneg %p134
      %p281 = pneg %p158
      %p282 = pneg %p155
      %p283 = pneg %p179
      %p284 = pneg %p176
      %p285 = pneg %p205
      %p286 = pneg %p202
      %p287 = scmp.lt.s32.totalorder %s22, 1
      %s288 = scalar_select %p287, %s22, 1
      %s289 = scalar_lea.vmem %s7, %s288
      %s290 = smul.u32 16, %s23
      %p291 = scmp.lt.s32.totalorder %s22, 1
      %s292 = scalar_select %p291, %s22, 1
      %p293 = scmp.lt.s32.totalorder %s290, 15
      %s294 = scalar_select %p293, %s290, 15
      %s295 = smul.addr %s292, 16
      %s296 = sadd.s32 %s294, %s295
      %s297 = smul.addr %s296, 4
      %s298 = scalar_lea.vmem %s0, %s297
      %s299 = smul.u32 16, %s23
      %p300 = scmp.lt.s32.totalorder %s22, 1
      %s301 = scalar_select %p300, %s22, 1
      %s302 = scalar_lea.vmem %s7, %s301
      %v304 = vld [vmem:[%s298] sm:$0xf]
      %v305 = vld [vmem:[%s298 + $0x4] sm:$0xf]
      %v306 = vld [vmem:[%s298 + $0x8] sm:$0xf]
      %v307 = vld [vmem:[%s298 + $0xc] sm:$0xf]
      %v308 = vld [vmem:[%s298 + $0x10] sm:$0xf]
      %v309 = vld [vmem:[%s298 + $0x14] sm:$0xf]
      %v310 = vld [vmem:[%s298 + $0x18] sm:$0xf]
      %v311 = vld [vmem:[%s298 + $0x1c] sm:$0xf]
      %v312 = vld [vmem:[%s298 + $0x20] sm:$0xf]
      %v313 = vld [vmem:[%s298 + $0x24] sm:$0xf]
      %v314 = vld [vmem:[%s298 + $0x28] sm:$0xf]
      %v315 = vld [vmem:[%s298 + $0x2c] sm:$0xf]
      %v316 = vld [vmem:[%s298 + $0x30] sm:$0xf]
      %v317 = vld [vmem:[%s298 + $0x34] sm:$0xf]
      %v318 = vld [vmem:[%s298 + $0x38] sm:$0xf]
      %v319 = vld [vmem:[%s298 + $0x3c] sm:$0xf]
      %v320 = vld [vmem:[%s1] sm:$0xff]
      %v321 = vld [vmem:[%s1 + $0x8] sm:$0xff]
      %v322 = vld [vmem:[%s1 + $0x10] sm:$0xff]
      %v323 = vld [vmem:[%s1 + $0x18] sm:$0xff]
      %v324 = vld [vmem:[%s1 + $0x20] sm:$0xff]
      %v325 = vld [vmem:[%s1 + $0x28] sm:$0xff]
      %v326 = vld [vmem:[%s1 + $0x30] sm:$0xff]
      %v327 = vld [vmem:[%s1 + $0x38] sm:$0xff]
      %v328 = vld [vmem:[%s1 + $0x40] sm:$0xff]
      %v329 = vld [vmem:[%s1 + $0x48] sm:$0xff]
      %v330 = vld [vmem:[%s1 + $0x50] sm:$0xff]
      %v331 = vld [vmem:[%s1 + $0x58] sm:$0xff]
      %v332 = vld [vmem:[%s1 + $0x60] sm:$0xff]
      %v333 = vld [vmem:[%s1 + $0x68] sm:$0xff]
      %v334 = vld [vmem:[%s1 + $0x70] sm:$0xff]
      %v335 = vld [vmem:[%s1 + $0x78] sm:$0xff]
      %v336 = vld [vmem:[%s1 + $0x80] sm:$0xff]
      %v337 = vld [vmem:[%s1 + $0x88] sm:$0xff]
      %v338 = vld [vmem:[%s1 + $0x90] sm:$0xff]
      %v339 = vld [vmem:[%s1 + $0x98] sm:$0xff]
      %v340 = vld [vmem:[%s1 + $0xa0] sm:$0xff]
      %v341 = vld [vmem:[%s1 + $0xa8] sm:$0xff]
      %v342 = vld [vmem:[%s1 + $0xb0] sm:$0xff]
      %v343 = vld [vmem:[%s1 + $0xb8] sm:$0xff]
      %v344 = vld [vmem:[%s1 + $0xc0] sm:$0xff]
      %v345 = vld [vmem:[%s1 + $0xc8] sm:$0xff]
      %v346 = vld [vmem:[%s1 + $0xd0] sm:$0xff]
      %v347 = vld [vmem:[%s1 + $0xd8] sm:$0xff]
      %v348 = vld [vmem:[%s1 + $0xe0] sm:$0xff]
      %v349 = vld [vmem:[%s1 + $0xe8] sm:$0xff]
      %v350 = vld [vmem:[%s1 + $0xf0] sm:$0xff]
      %v351 = vld [vmem:[%s1 + $0xf8] sm:$0xff]
      %v352 = vld [vmem:[%s1 + $0x100] sm:$0xff]
      %v353 = vld [vmem:[%s1 + $0x108] sm:$0xff]
      %v354 = vld [vmem:[%s1 + $0x110] sm:$0xff]
      %v355 = vld [vmem:[%s1 + $0x118] sm:$0xff]
      %v356 = vld [vmem:[%s1 + $0x120] sm:$0xff]
      %v357 = vld [vmem:[%s1 + $0x128] sm:$0xff]
      %v358 = vld [vmem:[%s1 + $0x130] sm:$0xff]
      %v359 = vld [vmem:[%s1 + $0x138] sm:$0xff]
      %v360 = vld [vmem:[%s1 + $0x140] sm:$0xff]
      %v361 = vld [vmem:[%s1 + $0x148] sm:$0xff]
      %v362 = vld [vmem:[%s1 + $0x150] sm:$0xff]
      %v363 = vld [vmem:[%s1 + $0x158] sm:$0xff]
      %v364 = vld [vmem:[%s1 + $0x160] sm:$0xff]
      %v365 = vld [vmem:[%s1 + $0x168] sm:$0xff]
      %v366 = vld [vmem:[%s1 + $0x170] sm:$0xff]
      %v367 = vld [vmem:[%s1 + $0x178] sm:$0xff]
      %v368 = vld [vmem:[%s1 + $0x180] sm:$0xff]
      %v369 = vld [vmem:[%s1 + $0x188] sm:$0xff]
      %v370 = vld [vmem:[%s1 + $0x190] sm:$0xff]
      %v371 = vld [vmem:[%s1 + $0x198] sm:$0xff]
      %v372 = vld [vmem:[%s1 + $0x1a0] sm:$0xff]
      %v373 = vld [vmem:[%s1 + $0x1a8] sm:$0xff]
      %v374 = vld [vmem:[%s1 + $0x1b0] sm:$0xff]
      %v375 = vld [vmem:[%s1 + $0x1b8] sm:$0xff]
      %v376 = vld [vmem:[%s1 + $0x1c0] sm:$0xff]
      %v377 = vld [vmem:[%s1 + $0x1c8] sm:$0xff]
      %v378 = vld [vmem:[%s1 + $0x1d0] sm:$0xff]
      %v379 = vld [vmem:[%s1 + $0x1d8] sm:$0xff]
      %v380 = vld [vmem:[%s1 + $0x1e0] sm:$0xff]
      %v381 = vld [vmem:[%s1 + $0x1e8] sm:$0xff]
      %v382 = vld [vmem:[%s1 + $0x1f0] sm:$0xff]
      %v383 = vld [vmem:[%s1 + $0x1f8] sm:$0xff]
      %v384 = vld [vmem:[%s2] sm:$0xff]
      %v386 = vperm.slane %v384, 0
      %v387 = vperm.slane %v384, 1
      %v388 = vperm.slane %v384, 2
      %v389 = vperm.slane %v384, 3
      %v390 = vperm.slane %v384, 4
      %v391 = vperm.slane %v384, 5
      %v392 = vperm.slane %v384, 6
      %v393 = vperm.slane %v384, 7
      %v418 = vunpack.c.l.b16 %v304
      %v419 = vunpack.c.l.b16 %v305
      %v420 = vunpack.c.l.b16 %v306
      %v421 = vunpack.c.l.b16 %v307
      %v422 = vunpack.c.l.b16 %v308
      %v423 = vunpack.c.l.b16 %v309
      %v424 = vunpack.c.l.b16 %v310
      %v425 = vunpack.c.l.b16 %v311
      %v426 = vunpack.c.l.b16 %v312
      %v427 = vunpack.c.l.b16 %v313
      %v428 = vunpack.c.l.b16 %v314
      %v429 = vunpack.c.l.b16 %v315
      %v430 = vunpack.c.l.b16 %v316
      %v431 = vunpack.c.l.b16 %v317
      %v432 = vunpack.c.l.b16 %v318
      %v433 = vunpack.c.l.b16 %v319
      %v434 = vpack.c.b16 %v419, %v418
      %v435 = vpack.c.b16 %v421, %v420
      %v436 = vpack.c.b16 %v423, %v422
      %v437 = vpack.c.b16 %v425, %v424
      %v438 = vpack.c.b16 %v427, %v426
      %v439 = vpack.c.b16 %v429, %v428
      %v440 = vpack.c.b16 %v431, %v430
      %v441 = vpack.c.b16 %v433, %v432
      %v514 = vunpack.c.l.b16 %v320
      %v515 = vunpack.c.h.b16 %v320
      %v516 = vunpack.c.l.b16 %v321
      %v517 = vunpack.c.h.b16 %v321
      %v518 = vunpack.c.l.b16 %v322
      %v519 = vunpack.c.h.b16 %v322
      %v520 = vunpack.c.l.b16 %v323
      %v521 = vunpack.c.h.b16 %v323
      %v522 = vunpack.c.l.b16 %v324
      %v523 = vunpack.c.h.b16 %v324
      %v524 = vunpack.c.l.b16 %v325
      %v525 = vunpack.c.h.b16 %v325
      %v526 = vunpack.c.l.b16 %v326
      %v527 = vunpack.c.h.b16 %v326
      %v528 = vunpack.c.l.b16 %v327
      %v529 = vunpack.c.h.b16 %v327
      %v530 = vunpack.c.l.b16 %v328
      %v531 = vunpack.c.h.b16 %v328
      %v532 = vunpack.c.l.b16 %v329
      %v533 = vunpack.c.h.b16 %v329
      %v534 = vunpack.c.l.b16 %v330
      %v535 = vunpack.c.h.b16 %v330
      %v536 = vunpack.c.l.b16 %v331
      %v537 = vunpack.c.h.b16 %v331
      %v538 = vunpack.c.l.b16 %v332
      %v539 = vunpack.c.h.b16 %v332
      %v540 = vunpack.c.l.b16 %v333
      %v541 = vunpack.c.h.b16 %v333
      %v542 = vunpack.c.l.b16 %v334
      %v543 = vunpack.c.h.b16 %v334
      %v544 = vunpack.c.l.b16 %v335
      %v545 = vunpack.c.h.b16 %v335
      %v546 = vunpack.c.l.b16 %v336
      %v547 = vunpack.c.h.b16 %v336
      %v548 = vunpack.c.l.b16 %v337
      %v549 = vunpack.c.h.b16 %v337
      %v550 = vunpack.c.l.b16 %v338
      %v551 = vunpack.c.h.b16 %v338
      %v552 = vunpack.c.l.b16 %v339
      %v553 = vunpack.c.h.b16 %v339
      %v554 = vunpack.c.l.b16 %v340
      %v555 = vunpack.c.h.b16 %v340
      %v556 = vunpack.c.l.b16 %v341
      %v557 = vunpack.c.h.b16 %v341
      %v558 = vunpack.c.l.b16 %v342
      %v559 = vunpack.c.h.b16 %v342
      %v560 = vunpack.c.l.b16 %v343
      %v561 = vunpack.c.h.b16 %v343
      %v562 = vunpack.c.l.b16 %v344
      %v563 = vunpack.c.h.b16 %v344
      %v564 = vunpack.c.l.b16 %v345
      %v565 = vunpack.c.h.b16 %v345
      %v566 = vunpack.c.l.b16 %v346
      %v567 = vunpack.c.h.b16 %v346
      %v568 = vunpack.c.l.b16 %v347
      %v569 = vunpack.c.h.b16 %v347
      %v570 = vunpack.c.l.b16 %v348
      %v571 = vunpack.c.h.b16 %v348
      %v572 = vunpack.c.l.b16 %v349
      %v573 = vunpack.c.h.b16 %v349
      %v574 = vunpack.c.l.b16 %v350
      %v575 = vunpack.c.h.b16 %v350
      %v576 = vunpack.c.l.b16 %v351
      %v577 = vunpack.c.h.b16 %v351
      %v578 = vunpack.c.l.b16 %v352
      %v579 = vunpack.c.h.b16 %v352
      %v580 = vunpack.c.l.b16 %v353
      %v581 = vunpack.c.h.b16 %v353
      %v582 = vunpack.c.l.b16 %v354
      %v583 = vunpack.c.h.b16 %v354
      %v584 = vunpack.c.l.b16 %v355
      %v585 = vunpack.c.h.b16 %v355
      %v586 = vunpack.c.l.b16 %v356
      %v587 = vunpack.c.h.b16 %v356
      %v588 = vunpack.c.l.b16 %v357
      %v589 = vunpack.c.h.b16 %v357
      %v590 = vunpack.c.l.b16 %v358
      %v591 = vunpack.c.h.b16 %v358
      %v592 = vunpack.c.l.b16 %v359
      %v593 = vunpack.c.h.b16 %v359
      %v594 = vunpack.c.l.b16 %v360
      %v595 = vunpack.c.h.b16 %v360
      %v596 = vunpack.c.l.b16 %v361
      %v597 = vunpack.c.h.b16 %v361
      %v598 = vunpack.c.l.b16 %v362
      %v599 = vunpack.c.h.b16 %v362
      %v600 = vunpack.c.l.b16 %v363
      %v601 = vunpack.c.h.b16 %v363
      %v602 = vunpack.c.l.b16 %v364
      %v603 = vunpack.c.h.b16 %v364
      %v604 = vunpack.c.l.b16 %v365
      %v605 = vunpack.c.h.b16 %v365
      %v606 = vunpack.c.l.b16 %v366
      %v607 = vunpack.c.h.b16 %v366
      %v608 = vunpack.c.l.b16 %v367
      %v609 = vunpack.c.h.b16 %v367
      %v610 = vunpack.c.l.b16 %v368
      %v611 = vunpack.c.h.b16 %v368
      %v612 = vunpack.c.l.b16 %v369
      %v613 = vunpack.c.h.b16 %v369
      %v614 = vunpack.c.l.b16 %v370
      %v615 = vunpack.c.h.b16 %v370
      %v616 = vunpack.c.l.b16 %v371
      %v617 = vunpack.c.h.b16 %v371
      %v618 = vunpack.c.l.b16 %v372
      %v619 = vunpack.c.h.b16 %v372
      %v620 = vunpack.c.l.b16 %v373
      %v621 = vunpack.c.h.b16 %v373
      %v622 = vunpack.c.l.b16 %v374
      %v623 = vunpack.c.h.b16 %v374
      %v624 = vunpack.c.l.b16 %v375
      %v625 = vunpack.c.h.b16 %v375
      %v626 = vunpack.c.l.b16 %v376
      %v627 = vunpack.c.h.b16 %v376
      %v628 = vunpack.c.l.b16 %v377
      %v629 = vunpack.c.h.b16 %v377
      %v630 = vunpack.c.l.b16 %v378
      %v631 = vunpack.c.h.b16 %v378
      %v632 = vunpack.c.l.b16 %v379
      %v633 = vunpack.c.h.b16 %v379
      %v634 = vunpack.c.l.b16 %v380
      %v635 = vunpack.c.h.b16 %v380
      %v636 = vunpack.c.l.b16 %v381
      %v637 = vunpack.c.h.b16 %v381
      %v638 = vunpack.c.l.b16 %v382
      %v639 = vunpack.c.h.b16 %v382
      %v640 = vunpack.c.l.b16 %v383
      %v641 = vunpack.c.h.b16 %v383
      %v642 = vpack.c.b16 %v522, %v514
      %v643 = vpack.c.b16 %v523, %v515
      %v644 = vpack.c.b16 %v524, %v516
      %v645 = vpack.c.b16 %v525, %v517
      %v646 = vpack.c.b16 %v526, %v518
      %v647 = vpack.c.b16 %v527, %v519
      %v648 = vpack.c.b16 %v528, %v520
      %v649 = vpack.c.b16 %v529, %v521
      %v650 = vpack.c.b16 %v538, %v530
      %v651 = vpack.c.b16 %v539, %v531
      %v652 = vpack.c.b16 %v540, %v532
      %v653 = vpack.c.b16 %v541, %v533
      %v654 = vpack.c.b16 %v542, %v534
      %v655 = vpack.c.b16 %v543, %v535
      %v656 = vpack.c.b16 %v544, %v536
      %v657 = vpack.c.b16 %v545, %v537
      %v658 = vpack.c.b16 %v554, %v546
      %v659 = vpack.c.b16 %v555, %v547
      %v660 = vpack.c.b16 %v556, %v548
      %v661 = vpack.c.b16 %v557, %v549
      %v662 = vpack.c.b16 %v558, %v550
      %v663 = vpack.c.b16 %v559, %v551
      %v664 = vpack.c.b16 %v560, %v552
      %v665 = vpack.c.b16 %v561, %v553
      %v666 = vpack.c.b16 %v570, %v562
      %v667 = vpack.c.b16 %v571, %v563
      %v668 = vpack.c.b16 %v572, %v564
      %v669 = vpack.c.b16 %v573, %v565
      %v670 = vpack.c.b16 %v574, %v566
      %v671 = vpack.c.b16 %v575, %v567
      %v672 = vpack.c.b16 %v576, %v568
      %v673 = vpack.c.b16 %v577, %v569
      %v674 = vpack.c.b16 %v586, %v578
      %v675 = vpack.c.b16 %v587, %v579
      %v676 = vpack.c.b16 %v588, %v580
      %v677 = vpack.c.b16 %v589, %v581
      %v678 = vpack.c.b16 %v590, %v582
      %v679 = vpack.c.b16 %v591, %v583
      %v680 = vpack.c.b16 %v592, %v584
      %v681 = vpack.c.b16 %v593, %v585
      %v682 = vpack.c.b16 %v602, %v594
      %v683 = vpack.c.b16 %v603, %v595
      %v684 = vpack.c.b16 %v604, %v596
      %v685 = vpack.c.b16 %v605, %v597
      %v686 = vpack.c.b16 %v606, %v598
      %v687 = vpack.c.b16 %v607, %v599
      %v688 = vpack.c.b16 %v608, %v600
      %v689 = vpack.c.b16 %v609, %v601
      %v690 = vpack.c.b16 %v618, %v610
      %v691 = vpack.c.b16 %v619, %v611
      %v692 = vpack.c.b16 %v620, %v612
      %v693 = vpack.c.b16 %v621, %v613
      %v694 = vpack.c.b16 %v622, %v614
      %v695 = vpack.c.b16 %v623, %v615
      %v696 = vpack.c.b16 %v624, %v616
      %v697 = vpack.c.b16 %v625, %v617
      %v698 = vpack.c.b16 %v634, %v626
      %v699 = vpack.c.b16 %v635, %v627
      %v700 = vpack.c.b16 %v636, %v628
      %v701 = vpack.c.b16 %v637, %v629
      %v702 = vpack.c.b16 %v638, %v630
      %v703 = vpack.c.b16 %v639, %v631
      %v704 = vpack.c.b16 %v640, %v632
      %v705 = vpack.c.b16 %v641, %v633
      %770 = vmatpush.bf16.msra.mxu0 %v698
      %771 = vmatpush.bf16.msra.mxu0 %v690
      %772 = vmatpush.bf16.msra.mxu0 %v682
      %773 = vmatpush.bf16.msra.mxu0 %v674
      %774 = vmatpush.bf16.msra.mxu0 %v666
      %775 = vmatpush.bf16.msra.mxu0 %v658
      %776 = vmatpush.bf16.msra.mxu0 %v650
      %777 = vmatpush.bf16.msra.mxu0 %v642
      %778 = vmatmul.bf16.gmra.mxu0 %v434
      %v779 = vpop.f32.mrf.mxu0
      %v780 = vadd.f32 %v386, %v779
      %v781 = vpop.f32.mrf.mxu0
      %v782 = vadd.f32 %v386, %v781
      %783 = vmatmul.bf16.gmra.mxu0 %v435
      %v784 = vpop.f32.mrf.mxu0
      %v785 = vadd.f32 %v386, %v784
      %v786 = vpop.f32.mrf.mxu0
      %v787 = vadd.f32 %v386, %v786
      %788 = vmatmul.bf16.gmra.mxu0 %v436
      %v789 = vpop.f32.mrf.mxu0
      %v790 = vadd.f32 %v386, %v789
      %v791 = vpop.f32.mrf.mxu0
      %v792 = vadd.f32 %v386, %v791
      %793 = vmatmul.bf16.gmra.mxu0 %v437
      %v794 = vpop.f32.mrf.mxu0
      %v795 = vadd.f32 %v386, %v794
      %v796 = vpop.f32.mrf.mxu0
      %v797 = vadd.f32 %v386, %v796
      %798 = vmatmul.bf16.gmra.mxu0 %v438
      %v799 = vpop.f32.mrf.mxu0
      %v800 = vadd.f32 %v386, %v799
      %v801 = vpop.f32.mrf.mxu0
      %v802 = vadd.f32 %v386, %v801
      %803 = vmatmul.bf16.gmra.mxu0 %v439
      %v804 = vpop.f32.mrf.mxu0
      %v805 = vadd.f32 %v386, %v804
      %v806 = vpop.f32.mrf.mxu0
      %v807 = vadd.f32 %v386, %v806
      %808 = vmatmul.bf16.gmra.mxu0 %v440
      %v809 = vpop.f32.mrf.mxu0
      %v810 = vadd.f32 %v386, %v809
      %v811 = vpop.f32.mrf.mxu0
      %v812 = vadd.f32 %v386, %v811
      %813 = vmatmul.bf16.gmra.mxu0 %v441
      %v814 = vpop.f32.mrf.mxu0
      %v815 = vadd.f32 %v386, %v814
      %v816 = vpop.f32.mrf.mxu0
      %v817 = vadd.f32 %v386, %v816
      %818 = vdwg.mxu0
      %819 = vmatpush.bf16.msra.mxu0 %v699
      %820 = vmatpush.bf16.msra.mxu0 %v691
      %821 = vmatpush.bf16.msra.mxu0 %v683
      %822 = vmatpush.bf16.msra.mxu0 %v675
      %823 = vmatpush.bf16.msra.mxu0 %v667
      %824 = vmatpush.bf16.msra.mxu0 %v659
      %825 = vmatpush.bf16.msra.mxu0 %v651
      %826 = vmatpush.bf16.msra.mxu0 %v643
      %827 = vmatmul.bf16.gmra.mxu0 %v434
      %v828 = vpop.f32.mrf.mxu0
      %v829 = vadd.f32 %v387, %v828
      %v830 = vpop.f32.mrf.mxu0
      %v831 = vadd.f32 %v387, %v830
      %832 = vmatmul.bf16.gmra.mxu0 %v435
      %v833 = vpop.f32.mrf.mxu0
      %v834 = vadd.f32 %v387, %v833
      %v835 = vpop.f32.mrf.mxu0
      %v836 = vadd.f32 %v387, %v835
      %837 = vmatmul.bf16.gmra.mxu0 %v436
      %v838 = vpop.f32.mrf.mxu0
      %v839 = vadd.f32 %v387, %v838
      %v840 = vpop.f32.mrf.mxu0
      %v841 = vadd.f32 %v387, %v840
      %842 = vmatmul.bf16.gmra.mxu0 %v437
      %v843 = vpop.f32.mrf.mxu0
      %v844 = vadd.f32 %v387, %v843
      %v845 = vpop.f32.mrf.mxu0
      %v846 = vadd.f32 %v387, %v845
      %847 = vmatmul.bf16.gmra.mxu0 %v438
      %v848 = vpop.f32.mrf.mxu0
      %v849 = vadd.f32 %v387, %v848
      %v850 = vpop.f32.mrf.mxu0
      %v851 = vadd.f32 %v387, %v850
      %852 = vmatmul.bf16.gmra.mxu0 %v439
      %v853 = vpop.f32.mrf.mxu0
      %v854 = vadd.f32 %v387, %v853
      %v855 = vpop.f32.mrf.mxu0
      %v856 = vadd.f32 %v387, %v855
      %857 = vmatmul.bf16.gmra.mxu0 %v440
      %v858 = vpop.f32.mrf.mxu0
      %v859 = vadd.f32 %v387, %v858
      %v860 = vpop.f32.mrf.mxu0
      %v861 = vadd.f32 %v387, %v860
      %862 = vmatmul.bf16.gmra.mxu0 %v441
      %v863 = vpop.f32.mrf.mxu0
      %v864 = vadd.f32 %v387, %v863
      %v865 = vpop.f32.mrf.mxu0
      %v866 = vadd.f32 %v387, %v865
      %867 = vdwg.mxu0
      %868 = vmatpush.bf16.msra.mxu0 %v700
      %869 = vmatpush.bf16.msra.mxu0 %v692
      %870 = vmatpush.bf16.msra.mxu0 %v684
      %871 = vmatpush.bf16.msra.mxu0 %v676
      %872 = vmatpush.bf16.msra.mxu0 %v668
      %873 = vmatpush.bf16.msra.mxu0 %v660
      %874 = vmatpush.bf16.msra.mxu0 %v652
      %875 = vmatpush.bf16.msra.mxu0 %v644
      %876 = vmatmul.bf16.gmra.mxu0 %v434
      %v877 = vpop.f32.mrf.mxu0
      %v878 = vadd.f32 %v388, %v877
      %v879 = vpop.f32.mrf.mxu0
      %v880 = vadd.f32 %v388, %v879
      %881 = vmatmul.bf16.gmra.mxu0 %v435
      %v882 = vpop.f32.mrf.mxu0
      %v883 = vadd.f32 %v388, %v882
      %v884 = vpop.f32.mrf.mxu0
      %v885 = vadd.f32 %v388, %v884
      %886 = vmatmul.bf16.gmra.mxu0 %v436
      %v887 = vpop.f32.mrf.mxu0
      %v888 = vadd.f32 %v388, %v887
      %v889 = vpop.f32.mrf.mxu0
      %v890 = vadd.f32 %v388, %v889
      %891 = vmatmul.bf16.gmra.mxu0 %v437
      %v892 = vpop.f32.mrf.mxu0
      %v893 = vadd.f32 %v388, %v892
      %v894 = vpop.f32.mrf.mxu0
      %v895 = vadd.f32 %v388, %v894
      %896 = vmatmul.bf16.gmra.mxu0 %v438
      %v897 = vpop.f32.mrf.mxu0
      %v898 = vadd.f32 %v388, %v897
      %v899 = vpop.f32.mrf.mxu0
      %v900 = vadd.f32 %v388, %v899
      %901 = vmatmul.bf16.gmra.mxu0 %v439
      %v902 = vpop.f32.mrf.mxu0
      %v903 = vadd.f32 %v388, %v902
      %v904 = vpop.f32.mrf.mxu0
      %v905 = vadd.f32 %v388, %v904
      %906 = vmatmul.bf16.gmra.mxu0 %v440
      %v907 = vpop.f32.mrf.mxu0
      %v908 = vadd.f32 %v388, %v907
      %v909 = vpop.f32.mrf.mxu0
      %v910 = vadd.f32 %v388, %v909
      %911 = vmatmul.bf16.gmra.mxu0 %v441
      %v912 = vpop.f32.mrf.mxu0
      %v913 = vadd.f32 %v388, %v912
      %v914 = vpop.f32.mrf.mxu0
      %v915 = vadd.f32 %v388, %v914
      %916 = vdwg.mxu0
      %917 = vmatpush.bf16.msra.mxu0 %v701
      %918 = vmatpush.bf16.msra.mxu0 %v693
      %919 = vmatpush.bf16.msra.mxu0 %v685
      %920 = vmatpush.bf16.msra.mxu0 %v677
      %921 = vmatpush.bf16.msra.mxu0 %v669
      %922 = vmatpush.bf16.msra.mxu0 %v661
      %923 = vmatpush.bf16.msra.mxu0 %v653
      %924 = vmatpush.bf16.msra.mxu0 %v645
      %925 = vmatmul.bf16.gmra.mxu0 %v434
      %v926 = vpop.f32.mrf.mxu0
      %v927 = vadd.f32 %v389, %v926
      %v928 = vpop.f32.mrf.mxu0
      %v929 = vadd.f32 %v389, %v928
      %930 = vmatmul.bf16.gmra.mxu0 %v435
      %v931 = vpop.f32.mrf.mxu0
      %v932 = vadd.f32 %v389, %v931
      %v933 = vpop.f32.mrf.mxu0
      %v934 = vadd.f32 %v389, %v933
      %935 = vmatmul.bf16.gmra.mxu0 %v436
      %v936 = vpop.f32.mrf.mxu0
      %v937 = vadd.f32 %v389, %v936
      %v938 = vpop.f32.mrf.mxu0
      %v939 = vadd.f32 %v389, %v938
      %940 = vmatmul.bf16.gmra.mxu0 %v437
      %v941 = vpop.f32.mrf.mxu0
      %v942 = vadd.f32 %v389, %v941
      %v943 = vpop.f32.mrf.mxu0
      %v944 = vadd.f32 %v389, %v943
      %945 = vmatmul.bf16.gmra.mxu0 %v438
      %v946 = vpop.f32.mrf.mxu0
      %v947 = vadd.f32 %v389, %v946
      %v948 = vpop.f32.mrf.mxu0
      %v949 = vadd.f32 %v389, %v948
      %950 = vmatmul.bf16.gmra.mxu0 %v439
      %v951 = vpop.f32.mrf.mxu0
      %v952 = vadd.f32 %v389, %v951
      %v953 = vpop.f32.mrf.mxu0
      %v954 = vadd.f32 %v389, %v953
      %955 = vmatmul.bf16.gmra.mxu0 %v440
      %v956 = vpop.f32.mrf.mxu0
      %v957 = vadd.f32 %v389, %v956
      %v958 = vpop.f32.mrf.mxu0
      %v959 = vadd.f32 %v389, %v958
      %960 = vmatmul.bf16.gmra.mxu0 %v441
      %v961 = vpop.f32.mrf.mxu0
      %v962 = vadd.f32 %v389, %v961
      %v963 = vpop.f32.mrf.mxu0
      %v964 = vadd.f32 %v389, %v963
      %965 = vdwg.mxu0
      %966 = vmatpush.bf16.msra.mxu0 %v702
      %967 = vmatpush.bf16.msra.mxu0 %v694
      %968 = vmatpush.bf16.msra.mxu0 %v686
      %969 = vmatpush.bf16.msra.mxu0 %v678
      %970 = vmatpush.bf16.msra.mxu0 %v670
      %971 = vmatpush.bf16.msra.mxu0 %v662
      %972 = vmatpush.bf16.msra.mxu0 %v654
      %973 = vmatpush.bf16.msra.mxu0 %v646
      %974 = vmatmul.bf16.gmra.mxu0 %v434
      %v975 = vpop.f32.mrf.mxu0
      %v976 = vadd.f32 %v390, %v975
      %v977 = vpop.f32.mrf.mxu0
      %v978 = vadd.f32 %v390, %v977
      %979 = vmatmul.bf16.gmra.mxu0 %v435
      %v980 = vpop.f32.mrf.mxu0
      %v981 = vadd.f32 %v390, %v980
      %v982 = vpop.f32.mrf.mxu0
      %v983 = vadd.f32 %v390, %v982
      %984 = vmatmul.bf16.gmra.mxu0 %v436
      %v985 = vpop.f32.mrf.mxu0
      %v986 = vadd.f32 %v390, %v985
      %v987 = vpop.f32.mrf.mxu0
      %v988 = vadd.f32 %v390, %v987
      %989 = vmatmul.bf16.gmra.mxu0 %v437
      %v990 = vpop.f32.mrf.mxu0
      %v991 = vadd.f32 %v390, %v990
      %v992 = vpop.f32.mrf.mxu0
      %v993 = vadd.f32 %v390, %v992
      %994 = vmatmul.bf16.gmra.mxu0 %v438
      %v995 = vpop.f32.mrf.mxu0
      %v996 = vadd.f32 %v390, %v995
      %v997 = vpop.f32.mrf.mxu0
      %v998 = vadd.f32 %v390, %v997
      %999 = vmatmul.bf16.gmra.mxu0 %v439
      %v1000 = vpop.f32.mrf.mxu0
      %v1001 = vadd.f32 %v390, %v1000
      %v1002 = vpop.f32.mrf.mxu0
      %v1003 = vadd.f32 %v390, %v1002
      %1004 = vmatmul.bf16.gmra.mxu0 %v440
      %v1005 = vpop.f32.mrf.mxu0
      %v1006 = vadd.f32 %v390, %v1005
      %v1007 = vpop.f32.mrf.mxu0
      %v1008 = vadd.f32 %v390, %v1007
      %1009 = vmatmul.bf16.gmra.mxu0 %v441
      %v1010 = vpop.f32.mrf.mxu0
      %v1011 = vadd.f32 %v390, %v1010
      %v1012 = vpop.f32.mrf.mxu0
      %v1013 = vadd.f32 %v390, %v1012
      %1014 = vdwg.mxu0
      %1015 = vmatpush.bf16.msra.mxu0 %v703
      %1016 = vmatpush.bf16.msra.mxu0 %v695
      %1017 = vmatpush.bf16.msra.mxu0 %v687
      %1018 = vmatpush.bf16.msra.mxu0 %v679
      %1019 = vmatpush.bf16.msra.mxu0 %v671
      %1020 = vmatpush.bf16.msra.mxu0 %v663
      %1021 = vmatpush.bf16.msra.mxu0 %v655
      %1022 = vmatpush.bf16.msra.mxu0 %v647
      %1023 = vmatmul.bf16.gmra.mxu0 %v434
      %v1024 = vpop.f32.mrf.mxu0
      %v1025 = vadd.f32 %v391, %v1024
      %v1026 = vpop.f32.mrf.mxu0
      %v1027 = vadd.f32 %v391, %v1026
      %1028 = vmatmul.bf16.gmra.mxu0 %v435
      %v1029 = vpop.f32.mrf.mxu0
      %v1030 = vadd.f32 %v391, %v1029
      %v1031 = vpop.f32.mrf.mxu0
      %v1032 = vadd.f32 %v391, %v1031
      %1033 = vmatmul.bf16.gmra.mxu0 %v436
      %v1034 = vpop.f32.mrf.mxu0
      %v1035 = vadd.f32 %v391, %v1034
      %v1036 = vpop.f32.mrf.mxu0
      %v1037 = vadd.f32 %v391, %v1036
      %1038 = vmatmul.bf16.gmra.mxu0 %v437
      %v1039 = vpop.f32.mrf.mxu0
      %v1040 = vadd.f32 %v391, %v1039
      %v1041 = vpop.f32.mrf.mxu0
      %v1042 = vadd.f32 %v391, %v1041
      %1043 = vmatmul.bf16.gmra.mxu0 %v438
      %v1044 = vpop.f32.mrf.mxu0
      %v1045 = vadd.f32 %v391, %v1044
      %v1046 = vpop.f32.mrf.mxu0
      %v1047 = vadd.f32 %v391, %v1046
      %1048 = vmatmul.bf16.gmra.mxu0 %v439
      %v1049 = vpop.f32.mrf.mxu0
      %v1050 = vadd.f32 %v391, %v1049
      %v1051 = vpop.f32.mrf.mxu0
      %v1052 = vadd.f32 %v391, %v1051
      %1053 = vmatmul.bf16.gmra.mxu0 %v440
      %v1054 = vpop.f32.mrf.mxu0
      %v1055 = vadd.f32 %v391, %v1054
      %v1056 = vpop.f32.mrf.mxu0
      %v1057 = vadd.f32 %v391, %v1056
      %1058 = vmatmul.bf16.gmra.mxu0 %v441
      %v1059 = vpop.f32.mrf.mxu0
      %v1060 = vadd.f32 %v391, %v1059
      %v1061 = vpop.f32.mrf.mxu0
      %v1062 = vadd.f32 %v391, %v1061
      %1063 = vdwg.mxu0
      %1064 = vmatpush.bf16.msra.mxu0 %v704
      %1065 = vmatpush.bf16.msra.mxu0 %v696
      %1066 = vmatpush.bf16.msra.mxu0 %v688
      %1067 = vmatpush.bf16.msra.mxu0 %v680
      %1068 = vmatpush.bf16.msra.mxu0 %v672
      %1069 = vmatpush.bf16.msra.mxu0 %v664
      %1070 = vmatpush.bf16.msra.mxu0 %v656
      %1071 = vmatpush.bf16.msra.mxu0 %v648
      %1072 = vmatmul.bf16.gmra.mxu0 %v434
      %v1073 = vpop.f32.mrf.mxu0
      %v1074 = vadd.f32 %v392, %v1073
      %v1075 = vpop.f32.mrf.mxu0
      %v1076 = vadd.f32 %v392, %v1075
      %1077 = vmatmul.bf16.gmra.mxu0 %v435
      %v1078 = vpop.f32.mrf.mxu0
      %v1079 = vadd.f32 %v392, %v1078
      %v1080 = vpop.f32.mrf.mxu0
      %v1081 = vadd.f32 %v392, %v1080
      %1082 = vmatmul.bf16.gmra.mxu0 %v436
      %v1083 = vpop.f32.mrf.mxu0
      %v1084 = vadd.f32 %v392, %v1083
      %v1085 = vpop.f32.mrf.mxu0
      %v1086 = vadd.f32 %v392, %v1085
      %1087 = vmatmul.bf16.gmra.mxu0 %v437
      %v1088 = vpop.f32.mrf.mxu0
      %v1089 = vadd.f32 %v392, %v1088
      %v1090 = vpop.f32.mrf.mxu0
      %v1091 = vadd.f32 %v392, %v1090
      %1092 = vmatmul.bf16.gmra.mxu0 %v438
      %v1093 = vpop.f32.mrf.mxu0
      %v1094 = vadd.f32 %v392, %v1093
      %v1095 = vpop.f32.mrf.mxu0
      %v1096 = vadd.f32 %v392, %v1095
      %1097 = vmatmul.bf16.gmra.mxu0 %v439
      %v1098 = vpop.f32.mrf.mxu0
      %v1099 = vadd.f32 %v392, %v1098
      %v1100 = vpop.f32.mrf.mxu0
      %v1101 = vadd.f32 %v392, %v1100
      %1102 = vmatmul.bf16.gmra.mxu0 %v440
      %v1103 = vpop.f32.mrf.mxu0
      %v1104 = vadd.f32 %v392, %v1103
      %v1105 = vpop.f32.mrf.mxu0
      %v1106 = vadd.f32 %v392, %v1105
      %1107 = vmatmul.bf16.gmra.mxu0 %v441
      %v1108 = vpop.f32.mrf.mxu0
      %v1109 = vadd.f32 %v392, %v1108
      %v1110 = vpop.f32.mrf.mxu0
      %v1111 = vadd.f32 %v392, %v1110
      %1112 = vdwg.mxu0
      %1113 = vmatpush.bf16.msra.mxu0 %v705
      %1114 = vmatpush.bf16.msra.mxu0 %v697
      %1115 = vmatpush.bf16.msra.mxu0 %v689
      %1116 = vmatpush.bf16.msra.mxu0 %v681
      %1117 = vmatpush.bf16.msra.mxu0 %v673
      %1118 = vmatpush.bf16.msra.mxu0 %v665
      %1119 = vmatpush.bf16.msra.mxu0 %v657
      %1120 = vmatpush.bf16.msra.mxu0 %v649
      %1121 = vmatmul.bf16.gmra.mxu0 %v434
      %v1122 = vpop.f32.mrf.mxu0
      %v1123 = vadd.f32 %v393, %v1122
      %v1124 = vpop.f32.mrf.mxu0
      %v1125 = vadd.f32 %v393, %v1124
      %1126 = vmatmul.bf16.gmra.mxu0 %v435
      %v1127 = vpop.f32.mrf.mxu0
      %v1128 = vadd.f32 %v393, %v1127
      %v1129 = vpop.f32.mrf.mxu0
      %v1130 = vadd.f32 %v393, %v1129
      %1131 = vmatmul.bf16.gmra.mxu0 %v436
      %v1132 = vpop.f32.mrf.mxu0
      %v1133 = vadd.f32 %v393, %v1132
      %v1134 = vpop.f32.mrf.mxu0
      %v1135 = vadd.f32 %v393, %v1134
      %1136 = vmatmul.bf16.gmra.mxu0 %v437
      %v1137 = vpop.f32.mrf.mxu0
      %v1138 = vadd.f32 %v393, %v1137
      %v1139 = vpop.f32.mrf.mxu0
      %v1140 = vadd.f32 %v393, %v1139
      %1141 = vmatmul.bf16.gmra.mxu0 %v438
      %v1142 = vpop.f32.mrf.mxu0
      %v1143 = vadd.f32 %v393, %v1142
      %v1144 = vpop.f32.mrf.mxu0
      %v1145 = vadd.f32 %v393, %v1144
      %1146 = vmatmul.bf16.gmra.mxu0 %v439
      %v1147 = vpop.f32.mrf.mxu0
      %v1148 = vadd.f32 %v393, %v1147
      %v1149 = vpop.f32.mrf.mxu0
      %v1150 = vadd.f32 %v393, %v1149
      %1151 = vmatmul.bf16.gmra.mxu0 %v440
      %v1152 = vpop.f32.mrf.mxu0
      %v1153 = vadd.f32 %v393, %v1152
      %v1154 = vpop.f32.mrf.mxu0
      %v1155 = vadd.f32 %v393, %v1154
      %1156 = vmatmul.bf16.gmra.mxu0 %v441
      %v1157 = vpop.f32.mrf.mxu0
      %v1158 = vadd.f32 %v393, %v1157
      %v1159 = vpop.f32.mrf.mxu0
      %v1160 = vadd.f32 %v393, %v1159
      %1161 = vdwg.mxu0
      %v1162 = vmax.f32 %v780, %v782
      %v1163 = vmax.f32 %v1162, %v785
      %v1164 = vmax.f32 %v1163, %v787
      %v1165 = vmax.f32 %v1164, %v790
      %v1166 = vmax.f32 %v1165, %v792
      %v1167 = vmax.f32 %v1166, %v795
      %v1168 = vmax.f32 %v1167, %v797
      %v1169 = vmax.f32 %v1168, %v800
      %v1170 = vmax.f32 %v1169, %v802
      %v1171 = vmax.f32 %v1170, %v805
      %v1172 = vmax.f32 %v1171, %v807
      %v1173 = vmax.f32 %v1172, %v810
      %v1174 = vmax.f32 %v1173, %v812
      %v1175 = vmax.f32 %v1174, %v815
      %v1176 = vmax.f32 %v1175, %v817
      %v1177 = vrot.slane %v1176, 4
      %v1178 = vmax.f32 %v1176, %v1177
      %v1179 = vrot.slane %v1178, 2
      %v1180 = vmax.f32 %v1178, %v1179
      %v1181 = vrot.slane %v1180, 1
      %v1182 = vmax.f32 %v1180, %v1181
      %v1183 = vmax.f32 %v829, %v831
      %v1184 = vmax.f32 %v1183, %v834
      %v1185 = vmax.f32 %v1184, %v836
      %v1186 = vmax.f32 %v1185, %v839
      %v1187 = vmax.f32 %v1186, %v841
      %v1188 = vmax.f32 %v1187, %v844
      %v1189 = vmax.f32 %v1188, %v846
      %v1190 = vmax.f32 %v1189, %v849
      %v1191 = vmax.f32 %v1190, %v851
      %v1192 = vmax.f32 %v1191, %v854
      %v1193 = vmax.f32 %v1192, %v856
      %v1194 = vmax.f32 %v1193, %v859
      %v1195 = vmax.f32 %v1194, %v861
      %v1196 = vmax.f32 %v1195, %v864
      %v1197 = vmax.f32 %v1196, %v866
      %v1198 = vrot.slane %v1197, 4
      %v1199 = vmax.f32 %v1197, %v1198
      %v1200 = vrot.slane %v1199, 2
      %v1201 = vmax.f32 %v1199, %v1200
      %v1202 = vrot.slane %v1201, 1
      %v1203 = vmax.f32 %v1201, %v1202
      %v1204 = vmax.f32 %v878, %v880
      %v1205 = vmax.f32 %v1204, %v883
      %v1206 = vmax.f32 %v1205, %v885
      %v1207 = vmax.f32 %v1206, %v888
      %v1208 = vmax.f32 %v1207, %v890
      %v1209 = vmax.f32 %v1208, %v893
      %v1210 = vmax.f32 %v1209, %v895
      %v1211 = vmax.f32 %v1210, %v898
      %v1212 = vmax.f32 %v1211, %v900
      %v1213 = vmax.f32 %v1212, %v903
      %v1214 = vmax.f32 %v1213, %v905
      %v1215 = vmax.f32 %v1214, %v908
      %v1216 = vmax.f32 %v1215, %v910
      %v1217 = vmax.f32 %v1216, %v913
      %v1218 = vmax.f32 %v1217, %v915
      %v1219 = vrot.slane %v1218, 4
      %v1220 = vmax.f32 %v1218, %v1219
      %v1221 = vrot.slane %v1220, 2
      %v1222 = vmax.f32 %v1220, %v1221
      %v1223 = vrot.slane %v1222, 1
      %v1224 = vmax.f32 %v1222, %v1223
      %v1225 = vmax.f32 %v927, %v929
      %v1226 = vmax.f32 %v1225, %v932
      %v1227 = vmax.f32 %v1226, %v934
      %v1228 = vmax.f32 %v1227, %v937
      %v1229 = vmax.f32 %v1228, %v939
      %v1230 = vmax.f32 %v1229, %v942
      %v1231 = vmax.f32 %v1230, %v944
      %v1232 = vmax.f32 %v1231, %v947
      %v1233 = vmax.f32 %v1232, %v949
      %v1234 = vmax.f32 %v1233, %v952
      %v1235 = vmax.f32 %v1234, %v954
      %v1236 = vmax.f32 %v1235, %v957
      %v1237 = vmax.f32 %v1236, %v959
      %v1238 = vmax.f32 %v1237, %v962
      %v1239 = vmax.f32 %v1238, %v964
      %v1240 = vrot.slane %v1239, 4
      %v1241 = vmax.f32 %v1239, %v1240
      %v1242 = vrot.slane %v1241, 2
      %v1243 = vmax.f32 %v1241, %v1242
      %v1244 = vrot.slane %v1243, 1
      %v1245 = vmax.f32 %v1243, %v1244
      %v1246 = vmax.f32 %v976, %v978
      %v1247 = vmax.f32 %v1246, %v981
      %v1248 = vmax.f32 %v1247, %v983
      %v1249 = vmax.f32 %v1248, %v986
      %v1250 = vmax.f32 %v1249, %v988
      %v1251 = vmax.f32 %v1250, %v991
      %v1252 = vmax.f32 %v1251, %v993
      %v1253 = vmax.f32 %v1252, %v996
      %v1254 = vmax.f32 %v1253, %v998
      %v1255 = vmax.f32 %v1254, %v1001
      %v1256 = vmax.f32 %v1255, %v1003
      %v1257 = vmax.f32 %v1256, %v1006
      %v1258 = vmax.f32 %v1257, %v1008
      %v1259 = vmax.f32 %v1258, %v1011
      %v1260 = vmax.f32 %v1259, %v1013
      %v1261 = vrot.slane %v1260, 4
      %v1262 = vmax.f32 %v1260, %v1261
      %v1263 = vrot.slane %v1262, 2
      %v1264 = vmax.f32 %v1262, %v1263
      %v1265 = vrot.slane %v1264, 1
      %v1266 = vmax.f32 %v1264, %v1265
      %v1267 = vmax.f32 %v1025, %v1027
      %v1268 = vmax.f32 %v1267, %v1030
      %v1269 = vmax.f32 %v1268, %v1032
      %v1270 = vmax.f32 %v1269, %v1035
      %v1271 = vmax.f32 %v1270, %v1037
      %v1272 = vmax.f32 %v1271, %v1040
      %v1273 = vmax.f32 %v1272, %v1042
      %v1274 = vmax.f32 %v1273, %v1045
      %v1275 = vmax.f32 %v1274, %v1047
      %v1276 = vmax.f32 %v1275, %v1050
      %v1277 = vmax.f32 %v1276, %v1052
      %v1278 = vmax.f32 %v1277, %v1055
      %v1279 = vmax.f32 %v1278, %v1057
      %v1280 = vmax.f32 %v1279, %v1060
      %v1281 = vmax.f32 %v1280, %v1062
      %v1282 = vrot.slane %v1281, 4
      %v1283 = vmax.f32 %v1281, %v1282
      %v1284 = vrot.slane %v1283, 2
      %v1285 = vmax.f32 %v1283, %v1284
      %v1286 = vrot.slane %v1285, 1
      %v1287 = vmax.f32 %v1285, %v1286
      %v1288 = vmax.f32 %v1074, %v1076
      %v1289 = vmax.f32 %v1288, %v1079
      %v1290 = vmax.f32 %v1289, %v1081
      %v1291 = vmax.f32 %v1290, %v1084
      %v1292 = vmax.f32 %v1291, %v1086
      %v1293 = vmax.f32 %v1292, %v1089
      %v1294 = vmax.f32 %v1293, %v1091
      %v1295 = vmax.f32 %v1294, %v1094
      %v1296 = vmax.f32 %v1295, %v1096
      %v1297 = vmax.f32 %v1296, %v1099
      %v1298 = vmax.f32 %v1297, %v1101
      %v1299 = vmax.f32 %v1298, %v1104
      %v1300 = vmax.f32 %v1299, %v1106
      %v1301 = vmax.f32 %v1300, %v1109
      %v1302 = vmax.f32 %v1301, %v1111
      %v1303 = vrot.slane %v1302, 4
      %v1304 = vmax.f32 %v1302, %v1303
      %v1305 = vrot.slane %v1304, 2
      %v1306 = vmax.f32 %v1304, %v1305
      %v1307 = vrot.slane %v1306, 1
      %v1308 = vmax.f32 %v1306, %v1307
      %v1309 = vmax.f32 %v1123, %v1125
      %v1310 = vmax.f32 %v1309, %v1128
      %v1311 = vmax.f32 %v1310, %v1130
      %v1312 = vmax.f32 %v1311, %v1133
      %v1313 = vmax.f32 %v1312, %v1135
      %v1314 = vmax.f32 %v1313, %v1138
      %v1315 = vmax.f32 %v1314, %v1140
      %v1316 = vmax.f32 %v1315, %v1143
      %v1317 = vmax.f32 %v1316, %v1145
      %v1318 = vmax.f32 %v1317, %v1148
      %v1319 = vmax.f32 %v1318, %v1150
      %v1320 = vmax.f32 %v1319, %v1153
      %v1321 = vmax.f32 %v1320, %v1155
      %v1322 = vmax.f32 %v1321, %v1158
      %v1323 = vmax.f32 %v1322, %v1160
      %v1324 = vrot.slane %v1323, 4
      %v1325 = vmax.f32 %v1323, %v1324
      %v1326 = vrot.slane %v1325, 2
      %v1327 = vmax.f32 %v1325, %v1326
      %v1328 = vrot.slane %v1327, 1
      %v1329 = vmax.f32 %v1327, %v1328
      %p1330 = scmp.eq.s32.totalorder %s23, 0
      // Predicated region
      $region49: #{reconstruction_net_forward.8} parent=47 // pred_check
        %p1331 = pneg %p1330
      $region50: #{reconstruction_net_forward.8} parent=47 // pred_check_branch
        %1333 = sbr.rel (%p1331) target = $region52
      $region51: #{reconstruction_net_forward.8} parent=47 // pred_region
        %v1342 = vrot.slane %v1203, 7
        %v1343 = vrot.slane %v1224, 6
        %v1344 = vrot.slane %v1245, 5
        %v1345 = vrot.slane %v1266, 4
        %v1346 = vrot.slane %v1287, 3
        %v1347 = vrot.slane %v1308, 2
        %v1348 = vrot.slane %v1329, 1
        %vm1349 = vcmask 1040384
        %v1350 = vsel %vm1349, %v1182, %v1342
        %vm1351 = vcmask 1042434
        %v1352 = vsel %vm1351, %v1343, %v1344
        %vm1353 = vcmask 1041408
        %v1354 = vsel %vm1353, %v1350, %v1352
        %vm1355 = vcmask 1044484
        %v1356 = vsel %vm1355, %v1345, %v1346
        %vm1357 = vcmask 1046534
        %v1358 = vsel %vm1357, %v1347, %v1348
        %vm1359 = vcmask 1045508
        %v1360 = vsel %vm1359, %v1356, %v1358
        %vm1361 = vcmask 1043456
        %v1362 = vsel %vm1361, %v1354, %v1360
        %1364 = vst [vmem:[#allocation2] sm:$0xff] %v1362
      $region52: #{reconstruction_net_forward.8} parent=47 // pred_fallthru
        _
      %p1365 = scmp.gt.s32.totalorder %s23, 0
      // Predicated region
      $region53: #{reconstruction_net_forward.8} parent=47 // pred_check
        %p1366 = pneg %p1365
      $region54: #{reconstruction_net_forward.8} parent=47 // pred_check_branch
        %1368 = sbr.rel (%p1366) target = $region56
      $region55: #{reconstruction_net_forward.8} parent=47 // pred_region
        %v1369 = vld [vmem:[#allocation2] sm:$0xff]
        %v1378 = vrot.slane %v1203, 7
        %v1379 = vrot.slane %v1224, 6
        %v1380 = vrot.slane %v1245, 5
        %v1381 = vrot.slane %v1266, 4
        %v1382 = vrot.slane %v1287, 3
        %v1383 = vrot.slane %v1308, 2
        %v1384 = vrot.slane %v1329, 1
        %vm1385 = vcmask 1040384
        %v1386 = vsel %vm1385, %v1182, %v1378
        %vm1387 = vcmask 1042434
        %v1388 = vsel %vm1387, %v1379, %v1380
        %vm1389 = vcmask 1041408
        %v1390 = vsel %vm1389, %v1386, %v1388
        %vm1391 = vcmask 1044484
        %v1392 = vsel %vm1391, %v1381, %v1382
        %vm1393 = vcmask 1046534
        %v1394 = vsel %vm1393, %v1383, %v1384
        %vm1395 = vcmask 1045508
        %v1396 = vsel %vm1395, %v1392, %v1394
        %vm1397 = vcmask 1043456
        %v1398 = vsel %vm1397, %v1390, %v1396
        %v1400 = vmax.f32 %v1369, %v1398
        %1401 = vst [vmem:[#allocation2] sm:$0xff] %v1400
      $region56: #{reconstruction_net_forward.8} parent=47 // pred_fallthru
        _
      // Predicated region
      $region57: #{reconstruction_net_forward.8} parent=47 // pred_check
        %p1402 = pneg %p1330
      $region58: #{reconstruction_net_forward.8} parent=47 // pred_check_branch
        %1404 = sbr.rel (%p1402) target = $region60
      $region59: #{reconstruction_net_forward.8} parent=47 // pred_region
        %v1405 = vld [vmem:[#allocation2] sm:$0xff]
        %v1406 = vld [vmem:[%s3] sm:$0xf]
        %v1407 = vld [vmem:[%s3 + $0x4] sm:$0xf]
        %v1408 = vld [vmem:[%s3 + $0x8] sm:$0xf]
        %v1409 = vld [vmem:[%s3 + $0xc] sm:$0xf]
        %v1410 = vld [vmem:[%s3 + $0x10] sm:$0xf]
        %v1411 = vld [vmem:[%s3 + $0x14] sm:$0xf]
        %v1412 = vld [vmem:[%s3 + $0x18] sm:$0xf]
        %v1413 = vld [vmem:[%s3 + $0x1c] sm:$0xf]
        %v1414 = vld [vmem:[%s3 + $0x20] sm:$0xf]
        %v1415 = vld [vmem:[%s3 + $0x24] sm:$0xf]
        %v1416 = vld [vmem:[%s3 + $0x28] sm:$0xf]
        %v1417 = vld [vmem:[%s3 + $0x2c] sm:$0xf]
        %v1418 = vld [vmem:[%s3 + $0x30] sm:$0xf]
        %v1419 = vld [vmem:[%s3 + $0x34] sm:$0xf]
        %v1420 = vld [vmem:[%s3 + $0x38] sm:$0xf]
        %v1421 = vld [vmem:[%s3 + $0x3c] sm:$0xf]
        %v1422 = vld [vmem:[%s3 + $0x40] sm:$0xf]
        %v1423 = vld [vmem:[%s3 + $0x44] sm:$0xf]
        %v1424 = vld [vmem:[%s3 + $0x48] sm:$0xf]
        %v1425 = vld [vmem:[%s3 + $0x4c] sm:$0xf]
        %v1426 = vld [vmem:[%s3 + $0x50] sm:$0xf]
        %v1427 = vld [vmem:[%s3 + $0x54] sm:$0xf]
        %v1428 = vld [vmem:[%s3 + $0x58] sm:$0xf]
        %v1429 = vld [vmem:[%s3 + $0x5c] sm:$0xf]
        %v1430 = vld [vmem:[%s3 + $0x60] sm:$0xf]
        %v1431 = vld [vmem:[%s3 + $0x64] sm:$0xf]
        %v1432 = vld [vmem:[%s3 + $0x68] sm:$0xf]
        %v1433 = vld [vmem:[%s3 + $0x6c] sm:$0xf]
        %v1434 = vld [vmem:[%s3 + $0x70] sm:$0xf]
        %v1435 = vld [vmem:[%s3 + $0x74] sm:$0xf]
        %v1436 = vld [vmem:[%s3 + $0x78] sm:$0xf]
        %v1437 = vld [vmem:[%s3 + $0x7c] sm:$0xf]
        %v1438 = vld [vmem:[%s3 + $0x80] sm:$0xf]
        %v1439 = vld [vmem:[%s3 + $0x84] sm:$0xf]
        %v1440 = vld [vmem:[%s3 + $0x88] sm:$0xf]
        %v1441 = vld [vmem:[%s3 + $0x8c] sm:$0xf]
        %v1442 = vld [vmem:[%s3 + $0x90] sm:$0xf]
        %v1443 = vld [vmem:[%s3 + $0x94] sm:$0xf]
        %v1444 = vld [vmem:[%s3 + $0x98] sm:$0xf]
        %v1445 = vld [vmem:[%s3 + $0x9c] sm:$0xf]
        %v1446 = vld [vmem:[%s3 + $0xa0] sm:$0xf]
        %v1447 = vld [vmem:[%s3 + $0xa4] sm:$0xf]
        %v1448 = vld [vmem:[%s3 + $0xa8] sm:$0xf]
        %v1449 = vld [vmem:[%s3 + $0xac] sm:$0xf]
        %v1450 = vld [vmem:[%s3 + $0xb0] sm:$0xf]
        %v1451 = vld [vmem:[%s3 + $0xb4] sm:$0xf]
        %v1452 = vld [vmem:[%s3 + $0xb8] sm:$0xf]
        %v1453 = vld [vmem:[%s3 + $0xbc] sm:$0xf]
        %v1454 = vld [vmem:[%s3 + $0xc0] sm:$0xf]
        %v1455 = vld [vmem:[%s3 + $0xc4] sm:$0xf]
        %v1456 = vld [vmem:[%s3 + $0xc8] sm:$0xf]
        %v1457 = vld [vmem:[%s3 + $0xcc] sm:$0xf]
        %v1458 = vld [vmem:[%s3 + $0xd0] sm:$0xf]
        %v1459 = vld [vmem:[%s3 + $0xd4] sm:$0xf]
        %v1460 = vld [vmem:[%s3 + $0xd8] sm:$0xf]
        %v1461 = vld [vmem:[%s3 + $0xdc] sm:$0xf]
        %v1462 = vld [vmem:[%s3 + $0xe0] sm:$0xf]
        %v1463 = vld [vmem:[%s3 + $0xe4] sm:$0xf]
        %v1464 = vld [vmem:[%s3 + $0xe8] sm:$0xf]
        %v1465 = vld [vmem:[%s3 + $0xec] sm:$0xf]
        %v1466 = vld [vmem:[%s3 + $0xf0] sm:$0xf]
        %v1467 = vld [vmem:[%s3 + $0xf4] sm:$0xf]
        %v1468 = vld [vmem:[%s3 + $0xf8] sm:$0xf]
        %v1469 = vld [vmem:[%s3 + $0xfc] sm:$0xf]
        %v1470 = vld [vmem:[%s3 + $0x100] sm:$0xf]
        %v1471 = vld [vmem:[%s3 + $0x104] sm:$0xf]
        %v1472 = vld [vmem:[%s3 + $0x108] sm:$0xf]
        %v1473 = vld [vmem:[%s3 + $0x10c] sm:$0xf]
        %v1474 = vld [vmem:[%s3 + $0x110] sm:$0xf]
        %v1475 = vld [vmem:[%s3 + $0x114] sm:$0xf]
        %v1476 = vld [vmem:[%s3 + $0x118] sm:$0xf]
        %v1477 = vld [vmem:[%s3 + $0x11c] sm:$0xf]
        %v1478 = vld [vmem:[%s3 + $0x120] sm:$0xf]
        %v1479 = vld [vmem:[%s3 + $0x124] sm:$0xf]
        %v1480 = vld [vmem:[%s3 + $0x128] sm:$0xf]
        %v1481 = vld [vmem:[%s3 + $0x12c] sm:$0xf]
        %v1482 = vld [vmem:[%s3 + $0x130] sm:$0xf]
        %v1483 = vld [vmem:[%s3 + $0x134] sm:$0xf]
        %v1484 = vld [vmem:[%s3 + $0x138] sm:$0xf]
        %v1485 = vld [vmem:[%s3 + $0x13c] sm:$0xf]
        %v1486 = vld [vmem:[%s3 + $0x140] sm:$0xf]
        %v1487 = vld [vmem:[%s3 + $0x144] sm:$0xf]
        %v1488 = vld [vmem:[%s3 + $0x148] sm:$0xf]
        %v1489 = vld [vmem:[%s3 + $0x14c] sm:$0xf]
        %v1490 = vld [vmem:[%s3 + $0x150] sm:$0xf]
        %v1491 = vld [vmem:[%s3 + $0x154] sm:$0xf]
        %v1492 = vld [vmem:[%s3 + $0x158] sm:$0xf]
        %v1493 = vld [vmem:[%s3 + $0x15c] sm:$0xf]
        %v1494 = vld [vmem:[%s3 + $0x160] sm:$0xf]
        %v1495 = vld [vmem:[%s3 + $0x164] sm:$0xf]
        %v1496 = vld [vmem:[%s3 + $0x168] sm:$0xf]
        %v1497 = vld [vmem:[%s3 + $0x16c] sm:$0xf]
        %v1498 = vld [vmem:[%s3 + $0x170] sm:$0xf]
        %v1499 = vld [vmem:[%s3 + $0x174] sm:$0xf]
        %v1500 = vld [vmem:[%s3 + $0x178] sm:$0xf]
        %v1501 = vld [vmem:[%s3 + $0x17c] sm:$0xf]
        %v1502 = vld [vmem:[%s3 + $0x180] sm:$0xf]
        %v1503 = vld [vmem:[%s3 + $0x184] sm:$0xf]
        %v1504 = vld [vmem:[%s3 + $0x188] sm:$0xf]
        %v1505 = vld [vmem:[%s3 + $0x18c] sm:$0xf]
        %v1506 = vld [vmem:[%s3 + $0x190] sm:$0xf]
        %v1507 = vld [vmem:[%s3 + $0x194] sm:$0xf]
        %v1508 = vld [vmem:[%s3 + $0x198] sm:$0xf]
        %v1509 = vld [vmem:[%s3 + $0x19c] sm:$0xf]
        %v1510 = vld [vmem:[%s3 + $0x1a0] sm:$0xf]
        %v1511 = vld [vmem:[%s3 + $0x1a4] sm:$0xf]
        %v1512 = vld [vmem:[%s3 + $0x1a8] sm:$0xf]
        %v1513 = vld [vmem:[%s3 + $0x1ac] sm:$0xf]
        %v1514 = vld [vmem:[%s3 + $0x1b0] sm:$0xf]
        %v1515 = vld [vmem:[%s3 + $0x1b4] sm:$0xf]
        %v1516 = vld [vmem:[%s3 + $0x1b8] sm:$0xf]
        %v1517 = vld [vmem:[%s3 + $0x1bc] sm:$0xf]
        %v1518 = vld [vmem:[%s3 + $0x1c0] sm:$0xf]
        %v1519 = vld [vmem:[%s3 + $0x1c4] sm:$0xf]
        %v1520 = vld [vmem:[%s3 + $0x1c8] sm:$0xf]
        %v1521 = vld [vmem:[%s3 + $0x1cc] sm:$0xf]
        %v1522 = vld [vmem:[%s3 + $0x1d0] sm:$0xf]
        %v1523 = vld [vmem:[%s3 + $0x1d4] sm:$0xf]
        %v1524 = vld [vmem:[%s3 + $0x1d8] sm:$0xf]
        %v1525 = vld [vmem:[%s3 + $0x1dc] sm:$0xf]
        %v1526 = vld [vmem:[%s3 + $0x1e0] sm:$0xf]
        %v1527 = vld [vmem:[%s3 + $0x1e4] sm:$0xf]
        %v1528 = vld [vmem:[%s3 + $0x1e8] sm:$0xf]
        %v1529 = vld [vmem:[%s3 + $0x1ec] sm:$0xf]
        %v1530 = vld [vmem:[%s3 + $0x1f0] sm:$0xf]
        %v1531 = vld [vmem:[%s3 + $0x1f4] sm:$0xf]
        %v1532 = vld [vmem:[%s3 + $0x1f8] sm:$0xf]
        %v1533 = vld [vmem:[%s3 + $0x1fc] sm:$0xf]
        %v1534 = vld [vmem:[%s4] sm:$0x1]
        %v1536 = vperm.slane %v1405, 0
        %v1537 = vperm.slane %v1405, 1
        %v1538 = vperm.slane %v1405, 2
        %v1539 = vperm.slane %v1405, 3
        %v1540 = vperm.slane %v1405, 4
        %v1541 = vperm.slane %v1405, 5
        %v1542 = vperm.slane %v1405, 6
        %v1543 = vperm.slane %v1405, 7
        %v1680 = vunpack.c.l.b16 %v1406
        %v1681 = vunpack.c.l.b16 %v1407
        %v1682 = vunpack.c.l.b16 %v1408
        %v1683 = vunpack.c.l.b16 %v1409
        %v1684 = vunpack.c.l.b16 %v1410
        %v1685 = vunpack.c.l.b16 %v1411
        %v1686 = vunpack.c.l.b16 %v1412
        %v1687 = vunpack.c.l.b16 %v1413
        %v1688 = vunpack.c.l.b16 %v1414
        %v1689 = vunpack.c.l.b16 %v1415
        %v1690 = vunpack.c.l.b16 %v1416
        %v1691 = vunpack.c.l.b16 %v1417
        %v1692 = vunpack.c.l.b16 %v1418
        %v1693 = vunpack.c.l.b16 %v1419
        %v1694 = vunpack.c.l.b16 %v1420
        %v1695 = vunpack.c.l.b16 %v1421
        %v1696 = vunpack.c.l.b16 %v1422
        %v1697 = vunpack.c.l.b16 %v1423
        %v1698 = vunpack.c.l.b16 %v1424
        %v1699 = vunpack.c.l.b16 %v1425
        %v1700 = vunpack.c.l.b16 %v1426
        %v1701 = vunpack.c.l.b16 %v1427
        %v1702 = vunpack.c.l.b16 %v1428
        %v1703 = vunpack.c.l.b16 %v1429
        %v1704 = vunpack.c.l.b16 %v1430
        %v1705 = vunpack.c.l.b16 %v1431
        %v1706 = vunpack.c.l.b16 %v1432
        %v1707 = vunpack.c.l.b16 %v1433
        %v1708 = vunpack.c.l.b16 %v1434
        %v1709 = vunpack.c.l.b16 %v1435
        %v1710 = vunpack.c.l.b16 %v1436
        %v1711 = vunpack.c.l.b16 %v1437
        %v1712 = vunpack.c.l.b16 %v1438
        %v1713 = vunpack.c.l.b16 %v1439
        %v1714 = vunpack.c.l.b16 %v1440
        %v1715 = vunpack.c.l.b16 %v1441
        %v1716 = vunpack.c.l.b16 %v1442
        %v1717 = vunpack.c.l.b16 %v1443
        %v1718 = vunpack.c.l.b16 %v1444
        %v1719 = vunpack.c.l.b16 %v1445
        %v1720 = vunpack.c.l.b16 %v1446
        %v1721 = vunpack.c.l.b16 %v1447
        %v1722 = vunpack.c.l.b16 %v1448
        %v1723 = vunpack.c.l.b16 %v1449
        %v1724 = vunpack.c.l.b16 %v1450
        %v1725 = vunpack.c.l.b16 %v1451
        %v1726 = vunpack.c.l.b16 %v1452
        %v1727 = vunpack.c.l.b16 %v1453
        %v1728 = vunpack.c.l.b16 %v1454
        %v1729 = vunpack.c.l.b16 %v1455
        %v1730 = vunpack.c.l.b16 %v1456
        %v1731 = vunpack.c.l.b16 %v1457
        %v1732 = vunpack.c.l.b16 %v1458
        %v1733 = vunpack.c.l.b16 %v1459
        %v1734 = vunpack.c.l.b16 %v1460
        %v1735 = vunpack.c.l.b16 %v1461
        %v1736 = vunpack.c.l.b16 %v1462
        %v1737 = vunpack.c.l.b16 %v1463
        %v1738 = vunpack.c.l.b16 %v1464
        %v1739 = vunpack.c.l.b16 %v1465
        %v1740 = vunpack.c.l.b16 %v1466
        %v1741 = vunpack.c.l.b16 %v1467
        %v1742 = vunpack.c.l.b16 %v1468
        %v1743 = vunpack.c.l.b16 %v1469
        %v1744 = vunpack.c.l.b16 %v1470
        %v1745 = vunpack.c.l.b16 %v1471
        %v1746 = vunpack.c.l.b16 %v1472
        %v1747 = vunpack.c.l.b16 %v1473
        %v1748 = vunpack.c.l.b16 %v1474
        %v1749 = vunpack.c.l.b16 %v1475
        %v1750 = vunpack.c.l.b16 %v1476
        %v1751 = vunpack.c.l.b16 %v1477
        %v1752 = vunpack.c.l.b16 %v1478
        %v1753 = vunpack.c.l.b16 %v1479
        %v1754 = vunpack.c.l.b16 %v1480
        %v1755 = vunpack.c.l.b16 %v1481
        %v1756 = vunpack.c.l.b16 %v1482
        %v1757 = vunpack.c.l.b16 %v1483
        %v1758 = vunpack.c.l.b16 %v1484
        %v1759 = vunpack.c.l.b16 %v1485
        %v1760 = vunpack.c.l.b16 %v1486
        %v1761 = vunpack.c.l.b16 %v1487
        %v1762 = vunpack.c.l.b16 %v1488
        %v1763 = vunpack.c.l.b16 %v1489
        %v1764 = vunpack.c.l.b16 %v1490
        %v1765 = vunpack.c.l.b16 %v1491
        %v1766 = vunpack.c.l.b16 %v1492
        %v1767 = vunpack.c.l.b16 %v1493
        %v1768 = vunpack.c.l.b16 %v1494
        %v1769 = vunpack.c.l.b16 %v1495
        %v1770 = vunpack.c.l.b16 %v1496
        %v1771 = vunpack.c.l.b16 %v1497
        %v1772 = vunpack.c.l.b16 %v1498
        %v1773 = vunpack.c.l.b16 %v1499
        %v1774 = vunpack.c.l.b16 %v1500
        %v1775 = vunpack.c.l.b16 %v1501
        %v1776 = vunpack.c.l.b16 %v1502
        %v1777 = vunpack.c.l.b16 %v1503
        %v1778 = vunpack.c.l.b16 %v1504
        %v1779 = vunpack.c.l.b16 %v1505
        %v1780 = vunpack.c.l.b16 %v1506
        %v1781 = vunpack.c.l.b16 %v1507
        %v1782 = vunpack.c.l.b16 %v1508
        %v1783 = vunpack.c.l.b16 %v1509
        %v1784 = vunpack.c.l.b16 %v1510
        %v1785 = vunpack.c.l.b16 %v1511
        %v1786 = vunpack.c.l.b16 %v1512
        %v1787 = vunpack.c.l.b16 %v1513
        %v1788 = vunpack.c.l.b16 %v1514
        %v1789 = vunpack.c.l.b16 %v1515
        %v1790 = vunpack.c.l.b16 %v1516
        %v1791 = vunpack.c.l.b16 %v1517
        %v1792 = vunpack.c.l.b16 %v1518
        %v1793 = vunpack.c.l.b16 %v1519
        %v1794 = vunpack.c.l.b16 %v1520
        %v1795 = vunpack.c.l.b16 %v1521
        %v1796 = vunpack.c.l.b16 %v1522
        %v1797 = vunpack.c.l.b16 %v1523
        %v1798 = vunpack.c.l.b16 %v1524
        %v1799 = vunpack.c.l.b16 %v1525
        %v1800 = vunpack.c.l.b16 %v1526
        %v1801 = vunpack.c.l.b16 %v1527
        %v1802 = vunpack.c.l.b16 %v1528
        %v1803 = vunpack.c.l.b16 %v1529
        %v1804 = vunpack.c.l.b16 %v1530
        %v1805 = vunpack.c.l.b16 %v1531
        %v1806 = vunpack.c.l.b16 %v1532
        %v1807 = vunpack.c.l.b16 %v1533
        %v1808 = vpack.c.b16 %v1681, %v1680
        %v1809 = vpack.c.b16 %v1683, %v1682
        %v1810 = vpack.c.b16 %v1685, %v1684
        %v1811 = vpack.c.b16 %v1687, %v1686
        %v1812 = vpack.c.b16 %v1689, %v1688
        %v1813 = vpack.c.b16 %v1691, %v1690
        %v1814 = vpack.c.b16 %v1693, %v1692
        %v1815 = vpack.c.b16 %v1695, %v1694
        %v1816 = vpack.c.b16 %v1697, %v1696
        %v1817 = vpack.c.b16 %v1699, %v1698
        %v1818 = vpack.c.b16 %v1701, %v1700
        %v1819 = vpack.c.b16 %v1703, %v1702
        %v1820 = vpack.c.b16 %v1705, %v1704
        %v1821 = vpack.c.b16 %v1707, %v1706
        %v1822 = vpack.c.b16 %v1709, %v1708
        %v1823 = vpack.c.b16 %v1711, %v1710
        %v1824 = vpack.c.b16 %v1713, %v1712
        %v1825 = vpack.c.b16 %v1715, %v1714
        %v1826 = vpack.c.b16 %v1717, %v1716
        %v1827 = vpack.c.b16 %v1719, %v1718
        %v1828 = vpack.c.b16 %v1721, %v1720
        %v1829 = vpack.c.b16 %v1723, %v1722
        %v1830 = vpack.c.b16 %v1725, %v1724
        %v1831 = vpack.c.b16 %v1727, %v1726
        %v1832 = vpack.c.b16 %v1729, %v1728
        %v1833 = vpack.c.b16 %v1731, %v1730
        %v1834 = vpack.c.b16 %v1733, %v1732
        %v1835 = vpack.c.b16 %v1735, %v1734
        %v1836 = vpack.c.b16 %v1737, %v1736
        %v1837 = vpack.c.b16 %v1739, %v1738
        %v1838 = vpack.c.b16 %v1741, %v1740
        %v1839 = vpack.c.b16 %v1743, %v1742
        %v1840 = vpack.c.b16 %v1745, %v1744
        %v1841 = vpack.c.b16 %v1747, %v1746
        %v1842 = vpack.c.b16 %v1749, %v1748
        %v1843 = vpack.c.b16 %v1751, %v1750
        %v1844 = vpack.c.b16 %v1753, %v1752
        %v1845 = vpack.c.b16 %v1755, %v1754
        %v1846 = vpack.c.b16 %v1757, %v1756
        %v1847 = vpack.c.b16 %v1759, %v1758
        %v1848 = vpack.c.b16 %v1761, %v1760
        %v1849 = vpack.c.b16 %v1763, %v1762
        %v1850 = vpack.c.b16 %v1765, %v1764
        %v1851 = vpack.c.b16 %v1767, %v1766
        %v1852 = vpack.c.b16 %v1769, %v1768
        %v1853 = vpack.c.b16 %v1771, %v1770
        %v1854 = vpack.c.b16 %v1773, %v1772
        %v1855 = vpack.c.b16 %v1775, %v1774
        %v1856 = vpack.c.b16 %v1777, %v1776
        %v1857 = vpack.c.b16 %v1779, %v1778
        %v1858 = vpack.c.b16 %v1781, %v1780
        %v1859 = vpack.c.b16 %v1783, %v1782
        %v1860 = vpack.c.b16 %v1785, %v1784
        %v1861 = vpack.c.b16 %v1787, %v1786
        %v1862 = vpack.c.b16 %v1789, %v1788
        %v1863 = vpack.c.b16 %v1791, %v1790
        %v1864 = vpack.c.b16 %v1793, %v1792
        %v1865 = vpack.c.b16 %v1795, %v1794
        %v1866 = vpack.c.b16 %v1797, %v1796
        %v1867 = vpack.c.b16 %v1799, %v1798
        %v1868 = vpack.c.b16 %v1801, %v1800
        %v1869 = vpack.c.b16 %v1803, %v1802
        %v1870 = vpack.c.b16 %v1805, %v1804
        %v1871 = vpack.c.b16 %v1807, %v1806
        %1936 = vmatpush.bf16.msra.mxu0 %v1815
        %1937 = vmatpush.bf16.msra.mxu0 %v1814
        %1938 = vmatpush.bf16.msra.mxu0 %v1813
        %1939 = vmatpush.bf16.msra.mxu0 %v1812
        %1940 = vmatpush.bf16.msra.mxu0 %v1811
        %1941 = vmatpush.bf16.msra.mxu0 %v1810
        %1942 = vmatpush.bf16.msra.mxu0 %v1809
        %1943 = vmatpush.bf16.msra.mxu0 %v1808
        %1944 = vmatmul.f32.gmra.mxu0 %v1536
        %v1945 = vpop.f32.mrf.mxu0
        %v1946 = vadd.f32 %v1534, %v1945
        %1947 = vdwg.mxu0
        %1948 = vmatpush.bf16.msra.mxu0 %v1823
        %1949 = vmatpush.bf16.msra.mxu0 %v1822
        %1950 = vmatpush.bf16.msra.mxu0 %v1821
        %1951 = vmatpush.bf16.msra.mxu0 %v1820
        %1952 = vmatpush.bf16.msra.mxu0 %v1819
        %1953 = vmatpush.bf16.msra.mxu0 %v1818
        %1954 = vmatpush.bf16.msra.mxu0 %v1817
        %1955 = vmatpush.bf16.msra.mxu0 %v1816
        %1956 = vmatmul.f32.gmra.mxu0 %v1537
        %v1957 = vpop.f32.mrf.mxu0
        %v1958 = vadd.f32 %v1946, %v1957
        %1959 = vdwg.mxu0
        %1960 = vmatpush.bf16.msra.mxu0 %v1831
        %1961 = vmatpush.bf16.msra.mxu0 %v1830
        %1962 = vmatpush.bf16.msra.mxu0 %v1829
        %1963 = vmatpush.bf16.msra.mxu0 %v1828
        %1964 = vmatpush.bf16.msra.mxu0 %v1827
        %1965 = vmatpush.bf16.msra.mxu0 %v1826
        %1966 = vmatpush.bf16.msra.mxu0 %v1825
        %1967 = vmatpush.bf16.msra.mxu0 %v1824
        %1968 = vmatmul.f32.gmra.mxu0 %v1538
        %v1969 = vpop.f32.mrf.mxu0
        %v1970 = vadd.f32 %v1958, %v1969
        %1971 = vdwg.mxu0
        %1972 = vmatpush.bf16.msra.mxu0 %v1839
        %1973 = vmatpush.bf16.msra.mxu0 %v1838
        %1974 = vmatpush.bf16.msra.mxu0 %v1837
        %1975 = vmatpush.bf16.msra.mxu0 %v1836
        %1976 = vmatpush.bf16.msra.mxu0 %v1835
        %1977 = vmatpush.bf16.msra.mxu0 %v1834
        %1978 = vmatpush.bf16.msra.mxu0 %v1833
        %1979 = vmatpush.bf16.msra.mxu0 %v1832
        %1980 = vmatmul.f32.gmra.mxu0 %v1539
        %v1981 = vpop.f32.mrf.mxu0
        %v1982 = vadd.f32 %v1970, %v1981
        %1983 = vdwg.mxu0
        %1984 = vmatpush.bf16.msra.mxu0 %v1847
        %1985 = vmatpush.bf16.msra.mxu0 %v1846
        %1986 = vmatpush.bf16.msra.mxu0 %v1845
        %1987 = vmatpush.bf16.msra.mxu0 %v1844
        %1988 = vmatpush.bf16.msra.mxu0 %v1843
        %1989 = vmatpush.bf16.msra.mxu0 %v1842
        %1990 = vmatpush.bf16.msra.mxu0 %v1841
        %1991 = vmatpush.bf16.msra.mxu0 %v1840
        %1992 = vmatmul.f32.gmra.mxu0 %v1540
        %v1993 = vpop.f32.mrf.mxu0
        %v1994 = vadd.f32 %v1982, %v1993
        %1995 = vdwg.mxu0
        %1996 = vmatpush.bf16.msra.mxu0 %v1855
        %1997 = vmatpush.bf16.msra.mxu0 %v1854
        %1998 = vmatpush.bf16.msra.mxu0 %v1853
        %1999 = vmatpush.bf16.msra.mxu0 %v1852
        %2000 = vmatpush.bf16.msra.mxu0 %v1851
        %2001 = vmatpush.bf16.msra.mxu0 %v1850
        %2002 = vmatpush.bf16.msra.mxu0 %v1849
        %2003 = vmatpush.bf16.msra.mxu0 %v1848
        %2004 = vmatmul.f32.gmra.mxu0 %v1541
        %v2005 = vpop.f32.mrf.mxu0
        %v2006 = vadd.f32 %v1994, %v2005
        %2007 = vdwg.mxu0
        %2008 = vmatpush.bf16.msra.mxu0 %v1863
        %2009 = vmatpush.bf16.msra.mxu0 %v1862
        %2010 = vmatpush.bf16.msra.mxu0 %v1861
        %2011 = vmatpush.bf16.msra.mxu0 %v1860
        %2012 = vmatpush.bf16.msra.mxu0 %v1859
        %2013 = vmatpush.bf16.msra.mxu0 %v1858
        %2014 = vmatpush.bf16.msra.mxu0 %v1857
        %2015 = vmatpush.bf16.msra.mxu0 %v1856
        %2016 = vmatmul.f32.gmra.mxu0 %v1542
        %v2017 = vpop.f32.mrf.mxu0
        %v2018 = vadd.f32 %v2006, %v2017
        %2019 = vdwg.mxu0
        %2020 = vmatpush.bf16.msra.mxu0 %v1871
        %2021 = vmatpush.bf16.msra.mxu0 %v1870
        %2022 = vmatpush.bf16.msra.mxu0 %v1869
        %2023 = vmatpush.bf16.msra.mxu0 %v1868
        %2024 = vmatpush.bf16.msra.mxu0 %v1867
        %2025 = vmatpush.bf16.msra.mxu0 %v1866
        %2026 = vmatpush.bf16.msra.mxu0 %v1865
        %2027 = vmatpush.bf16.msra.mxu0 %v1864
        %2028 = vmatmul.f32.gmra.mxu0 %v1543
        %v2029 = vpop.f32.mrf.mxu0
        %v2030 = vadd.f32 %v2018, %v2029
        %2031 = vdwg.mxu0
        %v2032 = vmax.f32 %v2030, 0.0
        %v2033 = vld [vmem:[%s5] sm:$0xf]
        %v2034 = vld [vmem:[%s5 + $0x4] sm:$0xf]
        %v2035 = vld [vmem:[%s5 + $0x8] sm:$0xf]
        %v2036 = vld [vmem:[%s5 + $0xc] sm:$0xf]
        %v2037 = vld [vmem:[%s6] sm:$0x1]
        %v2042 = vunpack.c.l.b16 %v2033
        %v2043 = vunpack.c.l.b16 %v2034
        %v2044 = vunpack.c.l.b16 %v2035
        %v2045 = vunpack.c.l.b16 %v2036
        %v2046 = vpack.c.b16 %v2043, %v2042
        %v2047 = vpack.c.b16 %v2045, %v2044
        %vm2050 = vcmask 261120
        %v2052 = vsel %vm2050, %v2032, 0
        %2054 = vmatpush.bf16.msra.mxu0 0
        %2055 = vmatpush.bf16.msra.mxu0 0
        %2056 = vmatpush.bf16.msra.mxu0 0
        %2057 = vmatpush.bf16.msra.mxu0 0
        %2058 = vmatpush.bf16.msra.mxu0 0
        %2059 = vmatpush.bf16.msra.mxu0 0
        %2060 = vmatpush.bf16.msra.mxu0 %v2047
        %2061 = vmatpush.bf16.msra.mxu0 %v2046
        %2062 = vmatmul.f32.gmra.mxu0 %v2052
        %v2063 = vpop.f32.mrf.mxu0
        %v2064 = vadd.f32 %v2037, %v2063
        %2065 = vdwg.mxu0
        %vm2066 = vcmask 253952
        %2067 = vst.msk [vmem:[%s302] sm:$0x1] %vm2066, %v2064
      $region60: #{reconstruction_net_forward.8} parent=47 // pred_fallthru
        _
      %p2068 = scmp.lt.s32.totalorder %s22, 1
      %s2069 = scalar_select %p2068, %s22, 1
      %s2070 = scalar_lea.vmem %s7, %s2069
      // Predicated region
      $region61: #{reconstruction_net_forward.8} parent=47 // pred_check
        %p2071 = pneg %p202
      $region62: #{reconstruction_net_forward.8} parent=47 // pred_check_branch
        %2073 = sbr.rel (%p2071) target = $region64
      $region63: #{reconstruction_net_forward.8} parent=47 // pred_region
        _
      $region64: #{reconstruction_net_forward.8} parent=47 // pred_fallthru
        _
    $region48: #{reconstruction_net_forward.8} parent=5 // pred_fallthru
      _
    %p2074 = scmp.le.s32.totalorder 2, %s13
    // Predicated region
    $region65: #{reconstruction_net_forward.8} parent=5 // pred_check
      %p2075 = pneg %p2074
    $region66: #{reconstruction_net_forward.8} parent=5 // pred_check_branch
      %2077 = sbr.rel (%p2075) target = $region68
    $region67: #{reconstruction_net_forward.8} parent=5 // pred_region
      %s2078 = ssub.s32 %s13, 2
      // Predicated region
      $region69: #{reconstruction_net_forward.8} parent=67 // pred_check
        %p2079 = pneg %p208
      $region70: #{reconstruction_net_forward.8} parent=67 // pred_check_branch
        %2081 = sbr.rel (%p2079) target = $region72
      $region71: #{reconstruction_net_forward.8} parent=67 // pred_region
        %p2082 = scmp.lt.s32.totalorder %s24, 1
        %s2083 = scalar_select %p2082, %s24, 1
        %s2084 = scalar_lea.vmem %s7, %s2083
      $region72: #{reconstruction_net_forward.8} parent=67 // pred_fallthru
        _
    $region68: #{reconstruction_net_forward.8} parent=5 // pred_fallthru
      _
  $region6: #{reconstruction_net_forward.8} parent=0 // loop_footer
    %s17 = sadd.s32 1, %s13
  $region7: #{reconstruction_net_forward.8} parent=0 // loop_footer_branch
    %12 = sbr.rel target = $region3
  $region8: #{reconstruction_net_forward.8} parent=0 // loop_exit
    _

// kernel: reconstruction_net_forward.9
$region0: #{reconstruction_net_forward.9}
  #allocation0 [shape = 'u32[]', space=smem, size = 0x4, offset = 0x4, fixed_abs, tag = 'smem constant byte address 0x4 - core index']
  #allocation1 [shape = 'u32[72,128]{1,0:T(1,128)}', space=vmem, size = 0x9000, scoped, tag = 'internal scratch']
  %s0 = inlined_call_operand.vmem [shape: f32[2,1,32], index: 0, kind: input, shape index: {}]
  %s1 = inlined_call_operand.vmem [shape: f32[2,1,32], index: 1, kind: input, shape index: {}]
  %s2 = inlined_call_operand.vmem [shape: f32[2048,2], index: 2, kind: input, shape index: {}]
  %s3 = inlined_call_operand.vmem [shape: f32[2,32], index: 3, kind: input, shape index: {}]
  %s4 = inlined_call_operand.vmem [shape: bf16[32,32], index: 4, kind: input, shape index: {}]
  %s5 = inlined_call_operand.vmem [shape: f32[1,32], index: 5, kind: input, shape index: {}]
  %s6 = inlined_call_operand.vmem [shape: bf16[32,3], index: 6, kind: input, shape index: {}]
  %s7 = inlined_call_operand.vmem [shape: f32[1,3], index: 7, kind: input, shape index: {}]
  %s8 = inlined_call_operand.vmem [shape: f32[3,32], index: 8, kind: input, shape index: {}]
  %s9 = inlined_call_operand.vmem [shape: bf16[32,32], index: 9, kind: input, shape index: {}]
  %s10 = inlined_call_operand.vmem [shape: f32[1,32], index: 10, kind: input, shape index: {}]
  %s11 = inlined_call_operand.vmem [shape: bf16[32,3], index: 11, kind: input, shape index: {}]
  %s12 = inlined_call_operand.vmem [shape: f32[1,3], index: 12, kind: input, shape index: {}]
  %s13 = inlined_call_operand.vmem [shape: f32[2,2048,3], index: 13, kind: output, shape index: {}]
  %s14 = sld [smem:[#allocation0]]
  $region85: #{reconstruction_net_forward.9} parent=0
    _
  %s16 = ssub.s32 1, %s14
  %s17 = scalar_select 0, %s16, %s14
  loop: start=0, step=1, limit=10
  $region2: #{reconstruction_net_forward.9} parent=0 // loop_pre_header
    _
  $region3: #{reconstruction_net_forward.9} parent=0 // loop_header
    %s19 = sphi 0, %s23
    %p20 = scmp.ge.s32.totalorder %s19, 10
    %s26 = sphi 0, %s38
    %s27 = sphi 0, %s34
    %s28 = sphi 0, %s26
    %s29 = sphi 0, %s27
    %s30 = sphi 0, %s28
    %s31 = sphi 0, %s29
    %s41 = sphi 0, %s43
    %s44 = sphi 0, %s41
    %s45 = sphi 0, %s44
    %s61 = sphi 0, %s45
    %s67 = sphi 0, %s69
    %s70 = sphi 0, %s67
    %s71 = sphi 0, %s70
    %s87 = sphi 0, %s71
    %s93 = sphi 0, %s95
    %s96 = sphi 0, %s93
    %s97 = sphi 0, %s96
    %s113 = sphi 0, %s97
    %s117 = sphi 0, %s117
    %s119 = sphi 0, %s117
    %s120 = sphi 0, %s119
    %s134 = sphi 0, %s120
    %s138 = sphi 0, %s138
    %s140 = sphi 0, %s138
    %s141 = sphi 0, %s140
    %s155 = sphi 0, %s141
    %s159 = sphi 0, %s159
    %s161 = sphi 0, %s159
    %s162 = sphi 0, %s161
    %s176 = sphi 0, %s162
    %s180 = sphi 0, %s180
    %s182 = sphi 0, %s180
    %s183 = sphi 0, %s182
    %s197 = sphi 0, %s183
    %s201 = sphi 0, %s201
    %s203 = sphi 0, %s201
    %s204 = sphi 0, %s203
    %s218 = sphi 0, %s204
    %s222 = sphi 0, %s222
    %s224 = sphi 0, %s222
    %s225 = sphi 0, %s224
    %s239 = sphi 0, %s225
    %s243 = sphi 0, %s243
    %s245 = sphi 0, %s243
    %s246 = sphi 0, %s245
    %s260 = sphi 0, %s246
    %s264 = sphi 0, %s264
    %s266 = sphi 0, %s264
    %s267 = sphi 0, %s266
    %s281 = sphi 0, %s267
    %s285 = sphi 0, %s285
    %s287 = sphi 0, %s285
    %s288 = sphi 0, %s287
    %s302 = sphi 0, %s288
    %s306 = sphi 0, %s306
    %s308 = sphi 0, %s306
    %s309 = sphi 0, %s308
    %s323 = sphi 0, %s309
    %s331 = sphi 0, %s333
    %s334 = sphi 0, %s331
    %s335 = sphi 0, %s334
    %s351 = sphi 0, %s335
  $region4: #{reconstruction_net_forward.9} parent=0 // loop_header_branch
    %22 = sbr.rel (%p20) target = $region8
  $region5: #{reconstruction_net_forward.9} parent=0 // loop_body
    %s24 = ssub.s32 %s19, 1
    %s25 = ssub.s32 %s19, 2
    %s32 = sadd.s32 1, %s27
    %p33 = scmp.ge.s32.totalorder %s32, 4
    %s34 = scalar_select %p33, 0, %s32
    %s35 = sadd.s32 1, %s26
    %s36 = scalar_select %p33, %s35, %s26
    %p37 = scmp.ge.s32.totalorder %s36, 2
    %s38 = scalar_select %p37, 0, %s36
    %s39 = ssub.s32 %s26, %s38
    %p40 = scmp.eq.s32.totalorder %s39, 0
    %s42 = sadd.s32 %s41, 1
    %s43 = scalar_select %p40, %s41, %s42
    %p46 = pneg %p40
    %p47 = scmp.eq.s32.totalorder %s19, 7
    %p48 = por %p46, %p47
    %p49 = scmp.ne.s32.totalorder %s41, %s44
    %p50 = scmp.eq.s32.totalorder %s19, 0
    %p51 = por %p49, %p50
    %p52 = scmp.ne.s32.totalorder %s41, %s44
    %p53 = scmp.eq.s32.totalorder %s24, 7
    %p54 = por %p52, %p53
    %p55 = scmp.ne.s32.totalorder %s44, %s45
    %p56 = scmp.eq.s32.totalorder %s24, 0
    %p57 = por %p55, %p56
    %p58 = scmp.ne.s32.totalorder %s44, %s45
    %p59 = scmp.eq.s32.totalorder %s25, 7
    %p60 = por %p58, %p59
    %p62 = scmp.ne.s32.totalorder %s45, %s61
    %p63 = scmp.eq.s32.totalorder %s25, 0
    %p64 = por %p62, %p63
    %s65 = ssub.s32 %s26, %s38
    %p66 = scmp.eq.s32.totalorder %s65, 0
    %s68 = sadd.s32 %s67, 1
    %s69 = scalar_select %p66, %s67, %s68
    %p72 = pneg %p66
    %p73 = scmp.eq.s32.totalorder %s19, 7
    %p74 = por %p72, %p73
    %p75 = scmp.ne.s32.totalorder %s67, %s70
    %p76 = scmp.eq.s32.totalorder %s19, 0
    %p77 = por %p75, %p76
    %p78 = scmp.ne.s32.totalorder %s67, %s70
    %p79 = scmp.eq.s32.totalorder %s24, 7
    %p80 = por %p78, %p79
    %p81 = scmp.ne.s32.totalorder %s70, %s71
    %p82 = scmp.eq.s32.totalorder %s24, 0
    %p83 = por %p81, %p82
    %p84 = scmp.ne.s32.totalorder %s70, %s71
    %p85 = scmp.eq.s32.totalorder %s25, 7
    %p86 = por %p84, %p85
    %p88 = scmp.ne.s32.totalorder %s71, %s87
    %p89 = scmp.eq.s32.totalorder %s25, 0
    %p90 = por %p88, %p89
    %s91 = ssub.s32 %s27, %s34
    %p92 = scmp.eq.s32.totalorder %s91, 0
    %s94 = sadd.s32 %s93, 1
    %s95 = scalar_select %p92, %s93, %s94
    %p98 = pneg %p92
    %p99 = scmp.eq.s32.totalorder %s19, 7
    %p100 = por %p98, %p99
    %p101 = scmp.ne.s32.totalorder %s93, %s96
    %p102 = scmp.eq.s32.totalorder %s19, 0
    %p103 = por %p101, %p102
    %p104 = scmp.ne.s32.totalorder %s93, %s96
    %p105 = scmp.eq.s32.totalorder %s24, 7
    %p106 = por %p104, %p105
    %p107 = scmp.ne.s32.totalorder %s96, %s97
    %p108 = scmp.eq.s32.totalorder %s24, 0
    %p109 = por %p107, %p108
    %p110 = scmp.ne.s32.totalorder %s96, %s97
    %p111 = scmp.eq.s32.totalorder %s25, 7
    %p112 = por %p110, %p111
    %p114 = scmp.ne.s32.totalorder %s97, %s113
    %p115 = scmp.eq.s32.totalorder %s25, 0
    %p116 = por %p114, %p115
    %s118 = sadd.s32 %s117, 1
    %p121 = scmp.eq.s32.totalorder %s19, 7
    %p122 = scmp.ne.s32.totalorder %s117, %s119
    %p123 = scmp.eq.s32.totalorder %s19, 0
    %p124 = por %p122, %p123
    %p125 = scmp.ne.s32.totalorder %s117, %s119
    %p126 = scmp.eq.s32.totalorder %s24, 7
    %p127 = por %p125, %p126
    %p128 = scmp.ne.s32.totalorder %s119, %s120
    %p129 = scmp.eq.s32.totalorder %s24, 0
    %p130 = por %p128, %p129
    %p131 = scmp.ne.s32.totalorder %s119, %s120
    %p132 = scmp.eq.s32.totalorder %s25, 7
    %p133 = por %p131, %p132
    %p135 = scmp.ne.s32.totalorder %s120, %s134
    %p136 = scmp.eq.s32.totalorder %s25, 0
    %p137 = por %p135, %p136
    %s139 = sadd.s32 %s138, 1
    %p142 = scmp.eq.s32.totalorder %s19, 7
    %p143 = scmp.ne.s32.totalorder %s138, %s140
    %p144 = scmp.eq.s32.totalorder %s19, 0
    %p145 = por %p143, %p144
    %p146 = scmp.ne.s32.totalorder %s138, %s140
    %p147 = scmp.eq.s32.totalorder %s24, 7
    %p148 = por %p146, %p147
    %p149 = scmp.ne.s32.totalorder %s140, %s141
    %p150 = scmp.eq.s32.totalorder %s24, 0
    %p151 = por %p149, %p150
    %p152 = scmp.ne.s32.totalorder %s140, %s141
    %p153 = scmp.eq.s32.totalorder %s25, 7
    %p154 = por %p152, %p153
    %p156 = scmp.ne.s32.totalorder %s141, %s155
    %p157 = scmp.eq.s32.totalorder %s25, 0
    %p158 = por %p156, %p157
    %s160 = sadd.s32 %s159, 1
    %p163 = scmp.eq.s32.totalorder %s19, 7
    %p164 = scmp.ne.s32.totalorder %s159, %s161
    %p165 = scmp.eq.s32.totalorder %s19, 0
    %p166 = por %p164, %p165
    %p167 = scmp.ne.s32.totalorder %s159, %s161
    %p168 = scmp.eq.s32.totalorder %s24, 7
    %p169 = por %p167, %p168
    %p170 = scmp.ne.s32.totalorder %s161, %s162
    %p171 = scmp.eq.s32.totalorder %s24, 0
    %p172 = por %p170, %p171
    %p173 = scmp.ne.s32.totalorder %s161, %s162
    %p174 = scmp.eq.s32.totalorder %s25, 7
    %p175 = por %p173, %p174
    %p177 = scmp.ne.s32.totalorder %s162, %s176
    %p178 = scmp.eq.s32.totalorder %s25, 0
    %p179 = por %p177, %p178
    %s181 = sadd.s32 %s180, 1
    %p184 = scmp.eq.s32.totalorder %s19, 7
    %p185 = scmp.ne.s32.totalorder %s180, %s182
    %p186 = scmp.eq.s32.totalorder %s19, 0
    %p187 = por %p185, %p186
    %p188 = scmp.ne.s32.totalorder %s180, %s182
    %p189 = scmp.eq.s32.totalorder %s24, 7
    %p190 = por %p188, %p189
    %p191 = scmp.ne.s32.totalorder %s182, %s183
    %p192 = scmp.eq.s32.totalorder %s24, 0
    %p193 = por %p191, %p192
    %p194 = scmp.ne.s32.totalorder %s182, %s183
    %p195 = scmp.eq.s32.totalorder %s25, 7
    %p196 = por %p194, %p195
    %p198 = scmp.ne.s32.totalorder %s183, %s197
    %p199 = scmp.eq.s32.totalorder %s25, 0
    %p200 = por %p198, %p199
    %s202 = sadd.s32 %s201, 1
    %p205 = scmp.eq.s32.totalorder %s19, 7
    %p206 = scmp.ne.s32.totalorder %s201, %s203
    %p207 = scmp.eq.s32.totalorder %s19, 0
    %p208 = por %p206, %p207
    %p209 = scmp.ne.s32.totalorder %s201, %s203
    %p210 = scmp.eq.s32.totalorder %s24, 7
    %p211 = por %p209, %p210
    %p212 = scmp.ne.s32.totalorder %s203, %s204
    %p213 = scmp.eq.s32.totalorder %s24, 0
    %p214 = por %p212, %p213
    %p215 = scmp.ne.s32.totalorder %s203, %s204
    %p216 = scmp.eq.s32.totalorder %s25, 7
    %p217 = por %p215, %p216
    %p219 = scmp.ne.s32.totalorder %s204, %s218
    %p220 = scmp.eq.s32.totalorder %s25, 0
    %p221 = por %p219, %p220
    %s223 = sadd.s32 %s222, 1
    %p226 = scmp.eq.s32.totalorder %s19, 7
    %p227 = scmp.ne.s32.totalorder %s222, %s224
    %p228 = scmp.eq.s32.totalorder %s19, 0
    %p229 = por %p227, %p228
    %p230 = scmp.ne.s32.totalorder %s222, %s224
    %p231 = scmp.eq.s32.totalorder %s24, 7
    %p232 = por %p230, %p231
    %p233 = scmp.ne.s32.totalorder %s224, %s225
    %p234 = scmp.eq.s32.totalorder %s24, 0
    %p235 = por %p233, %p234
    %p236 = scmp.ne.s32.totalorder %s224, %s225
    %p237 = scmp.eq.s32.totalorder %s25, 7
    %p238 = por %p236, %p237
    %p240 = scmp.ne.s32.totalorder %s225, %s239
    %p241 = scmp.eq.s32.totalorder %s25, 0
    %p242 = por %p240, %p241
    %s244 = sadd.s32 %s243, 1
    %p247 = scmp.eq.s32.totalorder %s19, 7
    %p248 = scmp.ne.s32.totalorder %s243, %s245
    %p249 = scmp.eq.s32.totalorder %s19, 0
    %p250 = por %p248, %p249
    %p251 = scmp.ne.s32.totalorder %s243, %s245
    %p252 = scmp.eq.s32.totalorder %s24, 7
    %p253 = por %p251, %p252
    %p254 = scmp.ne.s32.totalorder %s245, %s246
    %p255 = scmp.eq.s32.totalorder %s24, 0
    %p256 = por %p254, %p255
    %p257 = scmp.ne.s32.totalorder %s245, %s246
    %p258 = scmp.eq.s32.totalorder %s25, 7
    %p259 = por %p257, %p258
    %p261 = scmp.ne.s32.totalorder %s246, %s260
    %p262 = scmp.eq.s32.totalorder %s25, 0
    %p263 = por %p261, %p262
    %s265 = sadd.s32 %s264, 1
    %p268 = scmp.eq.s32.totalorder %s19, 7
    %p269 = scmp.ne.s32.totalorder %s264, %s266
    %p270 = scmp.eq.s32.totalorder %s19, 0
    %p271 = por %p269, %p270
    %p272 = scmp.ne.s32.totalorder %s264, %s266
    %p273 = scmp.eq.s32.totalorder %s24, 7
    %p274 = por %p272, %p273
    %p275 = scmp.ne.s32.totalorder %s266, %s267
    %p276 = scmp.eq.s32.totalorder %s24, 0
    %p277 = por %p275, %p276
    %p278 = scmp.ne.s32.totalorder %s266, %s267
    %p279 = scmp.eq.s32.totalorder %s25, 7
    %p280 = por %p278, %p279
    %p282 = scmp.ne.s32.totalorder %s267, %s281
    %p283 = scmp.eq.s32.totalorder %s25, 0
    %p284 = por %p282, %p283
    %s286 = sadd.s32 %s285, 1
    %p289 = scmp.eq.s32.totalorder %s19, 7
    %p290 = scmp.ne.s32.totalorder %s285, %s287
    %p291 = scmp.eq.s32.totalorder %s19, 0
    %p292 = por %p290, %p291
    %p293 = scmp.ne.s32.totalorder %s285, %s287
    %p294 = scmp.eq.s32.totalorder %s24, 7
    %p295 = por %p293, %p294
    %p296 = scmp.ne.s32.totalorder %s287, %s288
    %p297 = scmp.eq.s32.totalorder %s24, 0
    %p298 = por %p296, %p297
    %p299 = scmp.ne.s32.totalorder %s287, %s288
    %p300 = scmp.eq.s32.totalorder %s25, 7
    %p301 = por %p299, %p300
    %p303 = scmp.ne.s32.totalorder %s288, %s302
    %p304 = scmp.eq.s32.totalorder %s25, 0
    %p305 = por %p303, %p304
    %s307 = sadd.s32 %s306, 1
    %p310 = scmp.eq.s32.totalorder %s19, 7
    %p311 = scmp.ne.s32.totalorder %s306, %s308
    %p312 = scmp.eq.s32.totalorder %s19, 0
    %p313 = por %p311, %p312
    %p314 = scmp.ne.s32.totalorder %s306, %s308
    %p315 = scmp.eq.s32.totalorder %s24, 7
    %p316 = por %p314, %p315
    %p317 = scmp.ne.s32.totalorder %s308, %s309
    %p318 = scmp.eq.s32.totalorder %s24, 0
    %p319 = por %p317, %p318
    %p320 = scmp.ne.s32.totalorder %s308, %s309
    %p321 = scmp.eq.s32.totalorder %s25, 7
    %p322 = por %p320, %p321
    %p324 = scmp.ne.s32.totalorder %s309, %s323
    %p325 = scmp.eq.s32.totalorder %s25, 0
    %p326 = por %p324, %p325
    %s327 = ssub.s32 %s26, %s38
    %s328 = ssub.s32 %s27, %s34
    %s329 = sor.u32 %s327, %s328
    %p330 = scmp.eq.s32.totalorder %s329, 0
    %s332 = sadd.s32 %s331, 1
    %s333 = scalar_select %p330, %s331, %s332
    %p336 = pneg %p330
    %p337 = scmp.eq.s32.totalorder %s19, 7
    %p338 = por %p336, %p337
    %p339 = scmp.ne.s32.totalorder %s331, %s334
    %p340 = scmp.eq.s32.totalorder %s19, 0
    %p341 = por %p339, %p340
    %p342 = scmp.ne.s32.totalorder %s331, %s334
    %p343 = scmp.eq.s32.totalorder %s24, 7
    %p344 = por %p342, %p343
    %p345 = scmp.ne.s32.totalorder %s334, %s335
    %p346 = scmp.eq.s32.totalorder %s24, 0
    %p347 = por %p345, %p346
    %p348 = scmp.ne.s32.totalorder %s334, %s335
    %p349 = scmp.eq.s32.totalorder %s25, 7
    %p350 = por %p348, %p349
    %p352 = scmp.ne.s32.totalorder %s335, %s351
    %p353 = scmp.eq.s32.totalorder %s25, 0
    %p354 = por %p352, %p353
    %p355 = scmp.le.s32.totalorder 1, %s19
    %p356 = scmp.lt.s32.totalorder %s19, 9
    %p357 = pnand %p355, %p356
    %p358 = pneg %p357
    // Predicated region
    $region9: #{reconstruction_net_forward.9} parent=5 // pred_check
      _
    $region10: #{reconstruction_net_forward.9} parent=5 // pred_check_branch
      %360 = sbr.rel (%p357) target = $region12
    $region11: #{reconstruction_net_forward.9} parent=5 // pred_region
      %s361 = ssub.s32 %s19, 1
      // Predicated region
      $region13: #{reconstruction_net_forward.9} parent=11 // pred_check
        %p362 = pneg %p130
      $region14: #{reconstruction_net_forward.9} parent=11 // pred_check_branch
        %364 = sbr.rel (%p362) target = $region16
      $region15: #{reconstruction_net_forward.9} parent=11 // pred_region
        _
      $region16: #{reconstruction_net_forward.9} parent=11 // pred_fallthru
        _
      // Predicated region
      $region17: #{reconstruction_net_forward.9} parent=11 // pred_check
        %p365 = pneg %p151
      $region18: #{reconstruction_net_forward.9} parent=11 // pred_check_branch
        %367 = sbr.rel (%p365) target = $region20
      $region19: #{reconstruction_net_forward.9} parent=11 // pred_region
        _
      $region20: #{reconstruction_net_forward.9} parent=11 // pred_fallthru
        _
      // Predicated region
      $region21: #{reconstruction_net_forward.9} parent=11 // pred_check
        %p368 = pneg %p172
      $region22: #{reconstruction_net_forward.9} parent=11 // pred_check_branch
        %370 = sbr.rel (%p368) target = $region24
      $region23: #{reconstruction_net_forward.9} parent=11 // pred_region
        _
      $region24: #{reconstruction_net_forward.9} parent=11 // pred_fallthru
        _
      // Predicated region
      $region25: #{reconstruction_net_forward.9} parent=11 // pred_check
        %p371 = pneg %p193
      $region26: #{reconstruction_net_forward.9} parent=11 // pred_check_branch
        %373 = sbr.rel (%p371) target = $region28
      $region27: #{reconstruction_net_forward.9} parent=11 // pred_region
        _
      $region28: #{reconstruction_net_forward.9} parent=11 // pred_fallthru
        _
      // Predicated region
      $region29: #{reconstruction_net_forward.9} parent=11 // pred_check
        %p374 = pneg %p214
      $region30: #{reconstruction_net_forward.9} parent=11 // pred_check_branch
        %376 = sbr.rel (%p374) target = $region32
      $region31: #{reconstruction_net_forward.9} parent=11 // pred_region
        _
      $region32: #{reconstruction_net_forward.9} parent=11 // pred_fallthru
        _
      // Predicated region
      $region33: #{reconstruction_net_forward.9} parent=11 // pred_check
        %p377 = pneg %p235
      $region34: #{reconstruction_net_forward.9} parent=11 // pred_check_branch
        %379 = sbr.rel (%p377) target = $region36
      $region35: #{reconstruction_net_forward.9} parent=11 // pred_region
        _
      $region36: #{reconstruction_net_forward.9} parent=11 // pred_fallthru
        _
      // Predicated region
      $region37: #{reconstruction_net_forward.9} parent=11 // pred_check
        %p380 = pneg %p256
      $region38: #{reconstruction_net_forward.9} parent=11 // pred_check_branch
        %382 = sbr.rel (%p380) target = $region40
      $region39: #{reconstruction_net_forward.9} parent=11 // pred_region
        _
      $region40: #{reconstruction_net_forward.9} parent=11 // pred_fallthru
        _
      // Predicated region
      $region41: #{reconstruction_net_forward.9} parent=11 // pred_check
        %p383 = pneg %p277
      $region42: #{reconstruction_net_forward.9} parent=11 // pred_check_branch
        %385 = sbr.rel (%p383) target = $region44
      $region43: #{reconstruction_net_forward.9} parent=11 // pred_region
        _
      $region44: #{reconstruction_net_forward.9} parent=11 // pred_fallthru
        _
      // Predicated region
      $region45: #{reconstruction_net_forward.9} parent=11 // pred_check
        %p386 = pneg %p298
      $region46: #{reconstruction_net_forward.9} parent=11 // pred_check_branch
        %388 = sbr.rel (%p386) target = $region48
      $region47: #{reconstruction_net_forward.9} parent=11 // pred_region
        _
      $region48: #{reconstruction_net_forward.9} parent=11 // pred_fallthru
        _
      // Predicated region
      $region49: #{reconstruction_net_forward.9} parent=11 // pred_check
        %p389 = pneg %p319
      $region50: #{reconstruction_net_forward.9} parent=11 // pred_check_branch
        %391 = sbr.rel (%p389) target = $region52
      $region51: #{reconstruction_net_forward.9} parent=11 // pred_region
        _
      $region52: #{reconstruction_net_forward.9} parent=11 // pred_fallthru
        _
    $region12: #{reconstruction_net_forward.9} parent=5 // pred_fallthru
      _
    %p392 = scmp.lt.s32.totalorder %s19, 8
    // Predicated region
    $region53: #{reconstruction_net_forward.9} parent=5 // pred_check
      %p393 = pneg %p392
    $region54: #{reconstruction_net_forward.9} parent=5 // pred_check_branch
      %395 = sbr.rel (%p393) target = $region56
    $region55: #{reconstruction_net_forward.9} parent=5 // pred_region
      // Predicated region
      $region57: #{reconstruction_net_forward.9} parent=55 // pred_check
        %p396 = pneg %p51
      $region58: #{reconstruction_net_forward.9} parent=55 // pred_check_branch
        %398 = sbr.rel (%p396) target = $region60
      $region59: #{reconstruction_net_forward.9} parent=55 // pred_region
        %p399 = scmp.lt.s32.totalorder %s26, 1
        %s400 = scalar_select %p399, %s26, 1
        %s401 = scalar_lea.vmem %s0, %s400
      $region60: #{reconstruction_net_forward.9} parent=55 // pred_fallthru
        _
      // Predicated region
      $region61: #{reconstruction_net_forward.9} parent=55 // pred_check
        %p402 = pneg %p77
      $region62: #{reconstruction_net_forward.9} parent=55 // pred_check_branch
        %404 = sbr.rel (%p402) target = $region64
      $region63: #{reconstruction_net_forward.9} parent=55 // pred_region
        %p405 = scmp.lt.s32.totalorder %s26, 1
        %s406 = scalar_select %p405, %s26, 1
        %s407 = scalar_lea.vmem %s1, %s406
      $region64: #{reconstruction_net_forward.9} parent=55 // pred_fallthru
        _
      // Predicated region
      $region65: #{reconstruction_net_forward.9} parent=55 // pred_check
        %p408 = pneg %p103
      $region66: #{reconstruction_net_forward.9} parent=55 // pred_check_branch
        %410 = sbr.rel (%p408) target = $region68
      $region67: #{reconstruction_net_forward.9} parent=55 // pred_region
        %s411 = smul.u32 64, %s27
        %p412 = scmp.lt.s32.totalorder %s411, 255
        %s413 = scalar_select %p412, %s411, 255
        %s414 = smul.addr %s413, 8
        %s415 = scalar_lea.vmem %s2, %s414
        %s416 = smul.u32 64, %s27
      $region68: #{reconstruction_net_forward.9} parent=55 // pred_fallthru
        _
    $region56: #{reconstruction_net_forward.9} parent=5 // pred_fallthru
      _
    %p417 = scmp.le.s32.totalorder 1, %s19
    %p418 = scmp.lt.s32.totalorder %s19, 9
    %p419 = pnand %p417, %p418
    %p420 = pneg %p419
    // Predicated region
    $region69: #{reconstruction_net_forward.9} parent=5 // pred_check
      _
    $region70: #{reconstruction_net_forward.9} parent=5 // pred_check_branch
      %422 = sbr.rel (%p419) target = $region72
    $region71: #{reconstruction_net_forward.9} parent=5 // pred_region
      %s423 = ssub.s32 %s19, 1
      %p424 = scmp.lt.s32.totalorder %s28, 1
      %s425 = scalar_select %p424, %s28, 1
      %s426 = scalar_lea.vmem %s0, %s425
      %p427 = pneg %p57
      %p428 = pneg %p54
      %p429 = scmp.lt.s32.totalorder %s28, 1
      %s430 = scalar_select %p429, %s28, 1
      %s431 = scalar_lea.vmem %s1, %s430
      %p432 = pneg %p83
      %p433 = pneg %p80
      %s434 = smul.u32 64, %s29
      %p435 = scmp.lt.s32.totalorder %s434, 255
      %s436 = scalar_select %p435, %s434, 255
      %s437 = smul.addr %s436, 8
      %s438 = scalar_lea.vmem %s2, %s437
      %p439 = pneg %p109
      %p440 = pneg %p106
      %p441 = pneg %p130
      %p442 = pneg %p127
      %p443 = pneg %p151
      %p444 = pneg %p148
      %p445 = pneg %p172
      %p446 = pneg %p169
      %p447 = pneg %p193
      %p448 = pneg %p190
      %p449 = pneg %p214
      %p450 = pneg %p211
      %p451 = pneg %p235
      %p452 = pneg %p232
      %p453 = pneg %p256
      %p454 = pneg %p253
      %p455 = pneg %p277
      %p456 = pneg %p274
      %p457 = pneg %p298
      %p458 = pneg %p295
      %p459 = pneg %p319
      %p460 = pneg %p316
      %p461 = pneg %p347
      %p462 = pneg %p344
      %s463 = smul.u32 64, %s29
      %p464 = scmp.lt.s32.totalorder %s28, 1
      %s465 = scalar_select %p464, %s28, 1
      %p466 = scmp.lt.s32.totalorder %s463, 255
      %s467 = scalar_select %p466, %s463, 255
      %s468 = smul.addr %s465, 256
      %s469 = sadd.s32 %s467, %s468
      %s470 = smul.addr %s469, 8
      %s471 = scalar_lea.vmem %s13, %s470
      %p472 = scmp.lt.s32.totalorder %s28, 1
      %s473 = scalar_select %p472, %s28, 1
      %s474 = scalar_lea.vmem %s0, %s473
      %p475 = scmp.lt.s32.totalorder %s28, 1
      %s476 = scalar_select %p475, %s28, 1
      %s477 = scalar_lea.vmem %s1, %s476
      %s478 = smul.u32 64, %s29
      %p479 = scmp.lt.s32.totalorder %s478, 255
      %s480 = scalar_select %p479, %s478, 255
      %s481 = smul.addr %s480, 8
      %s482 = scalar_lea.vmem %s2, %s481
      %s483 = smul.u32 64, %s29
      %s484 = smul.u32 64, %s29
      %p485 = scmp.lt.s32.totalorder %s28, 1
      %s486 = scalar_select %p485, %s28, 1
      %p487 = scmp.lt.s32.totalorder %s484, 255
      %s488 = scalar_select %p487, %s484, 255
      %s489 = smul.addr %s486, 256
      %s490 = sadd.s32 %s488, %s489
      %s491 = smul.addr %s490, 8
      %s492 = scalar_lea.vmem %s13, %s491
      %s493 = smul.u32 64, %s29
      %v495 = vld [vmem:[%s482] sm:$0xff]
      %v496 = vld [vmem:[%s482 + $0x8] sm:$0xff]
      %v497 = vld [vmem:[%s482 + $0x10] sm:$0xff]
      %v498 = vld [vmem:[%s482 + $0x18] sm:$0xff]
      %v499 = vld [vmem:[%s482 + $0x20] sm:$0xff]
      %v500 = vld [vmem:[%s482 + $0x28] sm:$0xff]
      %v501 = vld [vmem:[%s482 + $0x30] sm:$0xff]
      %v502 = vld [vmem:[%s482 + $0x38] sm:$0xff]
      %v503 = vld [vmem:[%s482 + $0x40] sm:$0xff]
      %v504 = vld [vmem:[%s482 + $0x48] sm:$0xff]
      %v505 = vld [vmem:[%s482 + $0x50] sm:$0xff]
      %v506 = vld [vmem:[%s482 + $0x58] sm:$0xff]
      %v507 = vld [vmem:[%s482 + $0x60] sm:$0xff]
      %v508 = vld [vmem:[%s482 + $0x68] sm:$0xff]
      %v509 = vld [vmem:[%s482 + $0x70] sm:$0xff]
      %v510 = vld [vmem:[%s482 + $0x78] sm:$0xff]
      %v511 = vld [vmem:[%s482 + $0x80] sm:$0xff]
      %v512 = vld [vmem:[%s482 + $0x88] sm:$0xff]
      %v513 = vld [vmem:[%s482 + $0x90] sm:$0xff]
      %v514 = vld [vmem:[%s482 + $0x98] sm:$0xff]
      %v515 = vld [vmem:[%s482 + $0xa0] sm:$0xff]
      %v516 = vld [vmem:[%s482 + $0xa8] sm:$0xff]
      %v517 = vld [vmem:[%s482 + $0xb0] sm:$0xff]
      %v518 = vld [vmem:[%s482 + $0xb8] sm:$0xff]
      %v519 = vld [vmem:[%s482 + $0xc0] sm:$0xff]
      %v520 = vld [vmem:[%s482 + $0xc8] sm:$0xff]
      %v521 = vld [vmem:[%s482 + $0xd0] sm:$0xff]
      %v522 = vld [vmem:[%s482 + $0xd8] sm:$0xff]
      %v523 = vld [vmem:[%s482 + $0xe0] sm:$0xff]
      %v524 = vld [vmem:[%s482 + $0xe8] sm:$0xff]
      %v525 = vld [vmem:[%s482 + $0xf0] sm:$0xff]
      %v526 = vld [vmem:[%s482 + $0xf8] sm:$0xff]
      %v527 = vld [vmem:[%s482 + $0x100] sm:$0xff]
      %v528 = vld [vmem:[%s482 + $0x108] sm:$0xff]
      %v529 = vld [vmem:[%s482 + $0x110] sm:$0xff]
      %v530 = vld [vmem:[%s482 + $0x118] sm:$0xff]
      %v531 = vld [vmem:[%s482 + $0x120] sm:$0xff]
      %v532 = vld [vmem:[%s482 + $0x128] sm:$0xff]
      %v533 = vld [vmem:[%s482 + $0x130] sm:$0xff]
      %v534 = vld [vmem:[%s482 + $0x138] sm:$0xff]
      %v535 = vld [vmem:[%s482 + $0x140] sm:$0xff]
      %v536 = vld [vmem:[%s482 + $0x148] sm:$0xff]
      %v537 = vld [vmem:[%s482 + $0x150] sm:$0xff]
      %v538 = vld [vmem:[%s482 + $0x158] sm:$0xff]
      %v539 = vld [vmem:[%s482 + $0x160] sm:$0xff]
      %v540 = vld [vmem:[%s482 + $0x168] sm:$0xff]
      %v541 = vld [vmem:[%s482 + $0x170] sm:$0xff]
      %v542 = vld [vmem:[%s482 + $0x178] sm:$0xff]
      %v543 = vld [vmem:[%s482 + $0x180] sm:$0xff]
      %v544 = vld [vmem:[%s482 + $0x188] sm:$0xff]
      %v545 = vld [vmem:[%s482 + $0x190] sm:$0xff]
      %v546 = vld [vmem:[%s482 + $0x198] sm:$0xff]
      %v547 = vld [vmem:[%s482 + $0x1a0] sm:$0xff]
      %v548 = vld [vmem:[%s482 + $0x1a8] sm:$0xff]
      %v549 = vld [vmem:[%s482 + $0x1b0] sm:$0xff]
      %v550 = vld [vmem:[%s482 + $0x1b8] sm:$0xff]
      %v551 = vld [vmem:[%s482 + $0x1c0] sm:$0xff]
      %v552 = vld [vmem:[%s482 + $0x1c8] sm:$0xff]
      %v553 = vld [vmem:[%s482 + $0x1d0] sm:$0xff]
      %v554 = vld [vmem:[%s482 + $0x1d8] sm:$0xff]
      %v555 = vld [vmem:[%s482 + $0x1e0] sm:$0xff]
      %v556 = vld [vmem:[%s482 + $0x1e8] sm:$0xff]
      %v557 = vld [vmem:[%s482 + $0x1f0] sm:$0xff]
      %v558 = vld [vmem:[%s482 + $0x1f8] sm:$0xff]
      %v559 = vld [vmem:[%s3] sm:$0x3]
      %v560 = vld [vmem:[%s474] sm:$0x1]
      %v562 = vperm.slane %v560, 0
      %vm564 = vcmask 15360
      %v566 = vsel %vm564, %v495, 0
      %v569 = vsel %vm564, %v496, 0
      %v572 = vsel %vm564, %v497, 0
      %v575 = vsel %vm564, %v498, 0
      %v578 = vsel %vm564, %v499, 0
      %v581 = vsel %vm564, %v500, 0
      %v584 = vsel %vm564, %v501, 0
      %v587 = vsel %vm564, %v502, 0
      %v590 = vsel %vm564, %v503, 0
      %v593 = vsel %vm564, %v504, 0
      %v596 = vsel %vm564, %v505, 0
      %v599 = vsel %vm564, %v506, 0
      %v602 = vsel %vm564, %v507, 0
      %v605 = vsel %vm564, %v508, 0
      %v608 = vsel %vm564, %v509, 0
      %v611 = vsel %vm564, %v510, 0
      %v614 = vsel %vm564, %v511, 0
      %v617 = vsel %vm564, %v512, 0
      %v620 = vsel %vm564, %v513, 0
      %v623 = vsel %vm564, %v514, 0
      %v626 = vsel %vm564, %v515, 0
      %v629 = vsel %vm564, %v516, 0
      %v632 = vsel %vm564, %v517, 0
      %v635 = vsel %vm564, %v518, 0
      %v638 = vsel %vm564, %v519, 0
      %v641 = vsel %vm564, %v520, 0
      %v644 = vsel %vm564, %v521, 0
      %v647 = vsel %vm564, %v522, 0
      %v650 = vsel %vm564, %v523, 0
      %v653 = vsel %vm564, %v524, 0
      %v656 = vsel %vm564, %v525, 0
      %v659 = vsel %vm564, %v526, 0
      %v662 = vsel %vm564, %v527, 0
      %v665 = vsel %vm564, %v528, 0
      %v668 = vsel %vm564, %v529, 0
      %v671 = vsel %vm564, %v530, 0
      %v674 = vsel %vm564, %v531, 0
      %v677 = vsel %vm564, %v532, 0
      %v680 = vsel %vm564, %v533, 0
      %v683 = vsel %vm564, %v534, 0
      %v686 = vsel %vm564, %v535, 0
      %v689 = vsel %vm564, %v536, 0
      %v692 = vsel %vm564, %v537, 0
      %v695 = vsel %vm564, %v538, 0
      %v698 = vsel %vm564, %v539, 0
      %v701 = vsel %vm564, %v540, 0
      %v704 = vsel %vm564, %v541, 0
      %v707 = vsel %vm564, %v542, 0
      %v710 = vsel %vm564, %v543, 0
      %v713 = vsel %vm564, %v544, 0
      %v716 = vsel %vm564, %v545, 0
      %v719 = vsel %vm564, %v546, 0
      %v722 = vsel %vm564, %v547, 0
      %v725 = vsel %vm564, %v548, 0
      %v728 = vsel %vm564, %v549, 0
      %v731 = vsel %vm564, %v550, 0
      %v734 = vsel %vm564, %v551, 0
      %v737 = vsel %vm564, %v552, 0
      %v740 = vsel %vm564, %v553, 0
      %v743 = vsel %vm564, %v554, 0
      %v746 = vsel %vm564, %v555, 0
      %v749 = vsel %vm564, %v556, 0
      %v752 = vsel %vm564, %v557, 0
      %v755 = vsel %vm564, %v558, 0
      %vm757 = vcmask 1041408
      %v759 = vsel %vm757, %v559, 0
      %761 = vmatpush.msra.mxu0 0.0
      %762 = vmatpush.msra.mxu0 0.0
      %763 = vmatpush.msra.mxu0 0.0
      %764 = vmatpush.msra.mxu0 0.0
      %765 = vmatpush.msra.mxu0 0.0
      %766 = vmatpush.msra.mxu0 0.0
      %767 = vmatpush.msra.mxu0 0.0
      %768 = vmatpush.msra.mxu0 0.0
      %769 = vmatpush.msra.mxu0 0.0
      %770 = vmatpush.msra.mxu0 0.0
      %771 = vmatpush.msra.mxu0 0.0
      %772 = vmatpush.msra.mxu0 0.0
      %773 = vmatpush.msra.mxu0 0.0
      %774 = vmatpush.msra.mxu0 0.0
      %775 = vmatpush.msra.mxu0 0.0
      %776 = vmatpush.msra.mxu0 %v759
      %777 = vmatmul.f32.gmra.mxu0 %v566
      %v778 = vpop.f32.mrf.mxu0
      %v779 = vadd.f32 %v562, %v778
      %780 = vmatmul.f32.gmra.mxu0 %v569
      %v781 = vpop.f32.mrf.mxu0
      %v782 = vadd.f32 %v562, %v781
      %783 = vmatmul.f32.gmra.mxu0 %v572
      %v784 = vpop.f32.mrf.mxu0
      %v785 = vadd.f32 %v562, %v784
      %786 = vmatmul.f32.gmra.mxu0 %v575
      %v787 = vpop.f32.mrf.mxu0
      %v788 = vadd.f32 %v562, %v787
      %789 = vmatmul.f32.gmra.mxu0 %v578
      %v790 = vpop.f32.mrf.mxu0
      %v791 = vadd.f32 %v562, %v790
      %792 = vmatmul.f32.gmra.mxu0 %v581
      %v793 = vpop.f32.mrf.mxu0
      %v794 = vadd.f32 %v562, %v793
      %795 = vmatmul.f32.gmra.mxu0 %v584
      %v796 = vpop.f32.mrf.mxu0
      %v797 = vadd.f32 %v562, %v796
      %798 = vmatmul.f32.gmra.mxu0 %v587
      %v799 = vpop.f32.mrf.mxu0
      %v800 = vadd.f32 %v562, %v799
      %801 = vmatmul.f32.gmra.mxu0 %v590
      %v802 = vpop.f32.mrf.mxu0
      %v803 = vadd.f32 %v562, %v802
      %804 = vmatmul.f32.gmra.mxu0 %v593
      %v805 = vpop.f32.mrf.mxu0
      %v806 = vadd.f32 %v562, %v805
      %807 = vmatmul.f32.gmra.mxu0 %v596
      %v808 = vpop.f32.mrf.mxu0
      %v809 = vadd.f32 %v562, %v808
      %810 = vmatmul.f32.gmra.mxu0 %v599
      %v811 = vpop.f32.mrf.mxu0
      %v812 = vadd.f32 %v562, %v811
      %813 = vmatmul.f32.gmra.mxu0 %v602
      %v814 = vpop.f32.mrf.mxu0
      %v815 = vadd.f32 %v562, %v814
      %816 = vmatmul.f32.gmra.mxu0 %v605
      %v817 = vpop.f32.mrf.mxu0
      %v818 = vadd.f32 %v562, %v817
      %819 = vmatmul.f32.gmra.mxu0 %v608
      %v820 = vpop.f32.mrf.mxu0
      %v821 = vadd.f32 %v562, %v820
      %822 = vmatmul.f32.gmra.mxu0 %v611
      %v823 = vpop.f32.mrf.mxu0
      %v824 = vadd.f32 %v562, %v823
      %825 = vmatmul.f32.gmra.mxu0 %v614
      %v826 = vpop.f32.mrf.mxu0
      %v827 = vadd.f32 %v562, %v826
      %828 = vmatmul.f32.gmra.mxu0 %v617
      %v829 = vpop.f32.mrf.mxu0
      %v830 = vadd.f32 %v562, %v829
      %831 = vmatmul.f32.gmra.mxu0 %v620
      %v832 = vpop.f32.mrf.mxu0
      %v833 = vadd.f32 %v562, %v832
      %834 = vmatmul.f32.gmra.mxu0 %v623
      %v835 = vpop.f32.mrf.mxu0
      %v836 = vadd.f32 %v562, %v835
      %837 = vmatmul.f32.gmra.mxu0 %v626
      %v838 = vpop.f32.mrf.mxu0
      %v839 = vadd.f32 %v562, %v838
      %840 = vmatmul.f32.gmra.mxu0 %v629
      %v841 = vpop.f32.mrf.mxu0
      %v842 = vadd.f32 %v562, %v841
      %843 = vmatmul.f32.gmra.mxu0 %v632
      %v844 = vpop.f32.mrf.mxu0
      %v845 = vadd.f32 %v562, %v844
      %846 = vmatmul.f32.gmra.mxu0 %v635
      %v847 = vpop.f32.mrf.mxu0
      %v848 = vadd.f32 %v562, %v847
      %849 = vmatmul.f32.gmra.mxu0 %v638
      %v850 = vpop.f32.mrf.mxu0
      %v851 = vadd.f32 %v562, %v850
      %852 = vmatmul.f32.gmra.mxu0 %v641
      %v853 = vpop.f32.mrf.mxu0
      %v854 = vadd.f32 %v562, %v853
      %855 = vmatmul.f32.gmra.mxu0 %v644
      %v856 = vpop.f32.mrf.mxu0
      %v857 = vadd.f32 %v562, %v856
      %858 = vmatmul.f32.gmra.mxu0 %v647
      %v859 = vpop.f32.mrf.mxu0
      %v860 = vadd.f32 %v562, %v859
      %861 = vmatmul.f32.gmra.mxu0 %v650
      %v862 = vpop.f32.mrf.mxu0
      %v863 = vadd.f32 %v562, %v862
      %864 = vmatmul.f32.gmra.mxu0 %v653
      %v865 = vpop.f32.mrf.mxu0
      %v866 = vadd.f32 %v562, %v865
      %867 = vmatmul.f32.gmra.mxu0 %v656
      %v868 = vpop.f32.mrf.mxu0
      %v869 = vadd.f32 %v562, %v868
      %870 = vmatmul.f32.gmra.mxu0 %v659
      %v871 = vpop.f32.mrf.mxu0
      %v872 = vadd.f32 %v562, %v871
      %873 = vmatmul.f32.gmra.mxu0 %v662
      %v874 = vpop.f32.mrf.mxu0
      %v875 = vadd.f32 %v562, %v874
      %876 = vmatmul.f32.gmra.mxu0 %v665
      %v877 = vpop.f32.mrf.mxu0
      %v878 = vadd.f32 %v562, %v877
      %879 = vmatmul.f32.gmra.mxu0 %v668
      %v880 = vpop.f32.mrf.mxu0
      %v881 = vadd.f32 %v562, %v880
      %882 = vmatmul.f32.gmra.mxu0 %v671
      %v883 = vpop.f32.mrf.mxu0
      %v884 = vadd.f32 %v562, %v883
      %885 = vmatmul.f32.gmra.mxu0 %v674
      %v886 = vpop.f32.mrf.mxu0
      %v887 = vadd.f32 %v562, %v886
      %888 = vmatmul.f32.gmra.mxu0 %v677
      %v889 = vpop.f32.mrf.mxu0
      %v890 = vadd.f32 %v562, %v889
      %891 = vmatmul.f32.gmra.mxu0 %v680
      %v892 = vpop.f32.mrf.mxu0
      %v893 = vadd.f32 %v562, %v892
      %894 = vmatmul.f32.gmra.mxu0 %v683
      %v895 = vpop.f32.mrf.mxu0
      %v896 = vadd.f32 %v562, %v895
      %897 = vmatmul.f32.gmra.mxu0 %v686
      %v898 = vpop.f32.mrf.mxu0
      %v899 = vadd.f32 %v562, %v898
      %900 = vmatmul.f32.gmra.mxu0 %v689
      %v901 = vpop.f32.mrf.mxu0
      %v902 = vadd.f32 %v562, %v901
      %903 = vmatmul.f32.gmra.mxu0 %v692
      %v904 = vpop.f32.mrf.mxu0
      %v905 = vadd.f32 %v562, %v904
      %906 = vmatmul.f32.gmra.mxu0 %v695
      %v907 = vpop.f32.mrf.mxu0
      %v908 = vadd.f32 %v562, %v907
      %909 = vmatmul.f32.gmra.mxu0 %v698
      %v910 = vpop.f32.mrf.mxu0
      %v911 = vadd.f32 %v562, %v910
      %912 = vmatmul.f32.gmra.mxu0 %v701
      %v913 = vpop.f32.mrf.mxu0
      %v914 = vadd.f32 %v562, %v913
      %915 = vmatmul.f32.gmra.mxu0 %v704
      %v916 = vpop.f32.mrf.mxu0
      %v917 = vadd.f32 %v562, %v916
      %918 = vmatmul.f32.gmra.mxu0 %v707
      %v919 = vpop.f32.mrf.mxu0
      %v920 = vadd.f32 %v562, %v919
      %921 = vmatmul.f32.gmra.mxu0 %v710
      %v922 = vpop.f32.mrf.mxu0
      %v923 = vadd.f32 %v562, %v922
      %924 = vmatmul.f32.gmra.mxu0 %v713
      %v925 = vpop.f32.mrf.mxu0
      %v926 = vadd.f32 %v562, %v925
      %927 = vmatmul.f32.gmra.mxu0 %v716
      %v928 = vpop.f32.mrf.mxu0
      %v929 = vadd.f32 %v562, %v928
      %930 = vmatmul.f32.gmra.mxu0 %v719
      %v931 = vpop.f32.mrf.mxu0
      %v932 = vadd.f32 %v562, %v931
      %933 = vmatmul.f32.gmra.mxu0 %v722
      %v934 = vpop.f32.mrf.mxu0
      %v935 = vadd.f32 %v562, %v934
      %936 = vmatmul.f32.gmra.mxu0 %v725
      %v937 = vpop.f32.mrf.mxu0
      %v938 = vadd.f32 %v562, %v937
      %939 = vmatmul.f32.gmra.mxu0 %v728
      %v940 = vpop.f32.mrf.mxu0
      %v941 = vadd.f32 %v562, %v940
      %942 = vmatmul.f32.gmra.mxu0 %v731
      %v943 = vpop.f32.mrf.mxu0
      %v944 = vadd.f32 %v562, %v943
      %945 = vmatmul.f32.gmra.mxu0 %v734
      %v946 = vpop.f32.mrf.mxu0
      %v947 = vadd.f32 %v562, %v946
      %948 = vmatmul.f32.gmra.mxu0 %v737
      %v949 = vpop.f32.mrf.mxu0
      %v950 = vadd.f32 %v562, %v949
      %951 = vmatmul.f32.gmra.mxu0 %v740
      %v952 = vpop.f32.mrf.mxu0
      %v953 = vadd.f32 %v562, %v952
      %954 = vmatmul.f32.gmra.mxu0 %v743
      %v955 = vpop.f32.mrf.mxu0
      %v956 = vadd.f32 %v562, %v955
      %957 = vmatmul.f32.gmra.mxu0 %v746
      %v958 = vpop.f32.mrf.mxu0
      %v959 = vadd.f32 %v562, %v958
      %960 = vmatmul.f32.gmra.mxu0 %v749
      %v961 = vpop.f32.mrf.mxu0
      %v962 = vadd.f32 %v562, %v961
      %963 = vmatmul.f32.gmra.mxu0 %v752
      %v964 = vpop.f32.mrf.mxu0
      %v965 = vadd.f32 %v562, %v964
      %966 = vmatmul.f32.gmra.mxu0 %v755
      %v967 = vpop.f32.mrf.mxu0
      %v968 = vadd.f32 %v562, %v967
      %969 = vdwg.mxu0
      %v970 = vmax.f32 %v779, 0.0
      %v971 = vmax.f32 %v782, 0.0
      %v972 = vmax.f32 %v785, 0.0
      %v973 = vmax.f32 %v788, 0.0
      %v974 = vmax.f32 %v791, 0.0
      %v975 = vmax.f32 %v794, 0.0
      %v976 = vmax.f32 %v797, 0.0
      %v977 = vmax.f32 %v800, 0.0
      %v978 = vmax.f32 %v803, 0.0
      %v979 = vmax.f32 %v806, 0.0
      %v980 = vmax.f32 %v809, 0.0
      %v981 = vmax.f32 %v812, 0.0
      %v982 = vmax.f32 %v815, 0.0
      %v983 = vmax.f32 %v818, 0.0
      %v984 = vmax.f32 %v821, 0.0
      %v985 = vmax.f32 %v824, 0.0
      %v986 = vmax.f32 %v827, 0.0
      %v987 = vmax.f32 %v830, 0.0
      %v988 = vmax.f32 %v833, 0.0
      %v989 = vmax.f32 %v836, 0.0
      %v990 = vmax.f32 %v839, 0.0
      %v991 = vmax.f32 %v842, 0.0
      %v992 = vmax.f32 %v845, 0.0
      %v993 = vmax.f32 %v848, 0.0
      %v994 = vmax.f32 %v851, 0.0
      %v995 = vmax.f32 %v854, 0.0
      %v996 = vmax.f32 %v857, 0.0
      %v997 = vmax.f32 %v860, 0.0
      %v998 = vmax.f32 %v863, 0.0
      %v999 = vmax.f32 %v866, 0.0
      %v1000 = vmax.f32 %v869, 0.0
      %v1001 = vmax.f32 %v872, 0.0
      %v1002 = vmax.f32 %v875, 0.0
      %v1003 = vmax.f32 %v878, 0.0
      %v1004 = vmax.f32 %v881, 0.0
      %v1005 = vmax.f32 %v884, 0.0
      %v1006 = vmax.f32 %v887, 0.0
      %v1007 = vmax.f32 %v890, 0.0
      %v1008 = vmax.f32 %v893, 0.0
      %v1009 = vmax.f32 %v896, 0.0
      %v1010 = vmax.f32 %v899, 0.0
      %v1011 = vmax.f32 %v902, 0.0
      %v1012 = vmax.f32 %v905, 0.0
      %v1013 = vmax.f32 %v908, 0.0
      %v1014 = vmax.f32 %v911, 0.0
      %v1015 = vmax.f32 %v914, 0.0
      %v1016 = vmax.f32 %v917, 0.0
      %v1017 = vmax.f32 %v920, 0.0
      %v1018 = vmax.f32 %v923, 0.0
      %v1019 = vmax.f32 %v926, 0.0
      %v1020 = vmax.f32 %v929, 0.0
      %v1021 = vmax.f32 %v932, 0.0
      %v1022 = vmax.f32 %v935, 0.0
      %v1023 = vmax.f32 %v938, 0.0
      %v1024 = vmax.f32 %v941, 0.0
      %v1025 = vmax.f32 %v944, 0.0
      %v1026 = vmax.f32 %v947, 0.0
      %v1027 = vmax.f32 %v950, 0.0
      %v1028 = vmax.f32 %v953, 0.0
      %v1029 = vmax.f32 %v956, 0.0
      %v1030 = vmax.f32 %v959, 0.0
      %v1031 = vmax.f32 %v962, 0.0
      %v1032 = vmax.f32 %v965, 0.0
      %v1033 = vmax.f32 %v968, 0.0
      %v1034 = vpack.c.bf16 %v971, %v970
      %v1035 = vpack.c.bf16 %v973, %v972
      %v1036 = vpack.c.bf16 %v975, %v974
      %v1037 = vpack.c.bf16 %v977, %v976
      %v1038 = vpack.c.bf16 %v979, %v978
      %v1039 = vpack.c.bf16 %v981, %v980
      %v1040 = vpack.c.bf16 %v983, %v982
      %v1041 = vpack.c.bf16 %v985, %v984
      %v1042 = vpack.c.bf16 %v987, %v986
      %v1043 = vpack.c.bf16 %v989, %v988
      %v1044 = vpack.c.bf16 %v991, %v990
      %v1045 = vpack.c.bf16 %v993, %v992
      %v1046 = vpack.c.bf16 %v995, %v994
      %v1047 = vpack.c.bf16 %v997, %v996
      %v1048 = vpack.c.bf16 %v999, %v998
      %v1049 = vpack.c.bf16 %v1001, %v1000
      %v1050 = vpack.c.bf16 %v1003, %v1002
      %v1051 = vpack.c.bf16 %v1005, %v1004
      %v1052 = vpack.c.bf16 %v1007, %v1006
      %v1053 = vpack.c.bf16 %v1009, %v1008
      %v1054 = vpack.c.bf16 %v1011, %v1010
      %v1055 = vpack.c.bf16 %v1013, %v1012
      %v1056 = vpack.c.bf16 %v1015, %v1014
      %v1057 = vpack.c.bf16 %v1017, %v1016
      %v1058 = vpack.c.bf16 %v1019, %v1018
      %v1059 = vpack.c.bf16 %v1021, %v1020
      %v1060 = vpack.c.bf16 %v1023, %v1022
      %v1061 = vpack.c.bf16 %v1025, %v1024
      %v1062 = vpack.c.bf16 %v1027, %v1026
      %v1063 = vpack.c.bf16 %v1029, %v1028
      %v1064 = vpack.c.bf16 %v1031, %v1030
      %v1065 = vpack.c.bf16 %v1033, %v1032
      %v1066 = vld [vmem:[%s4] sm:$0xf]
      %v1067 = vld [vmem:[%s4 + $0x4] sm:$0xf]
      %v1068 = vld [vmem:[%s4 + $0x8] sm:$0xf]
      %v1069 = vld [vmem:[%s4 + $0xc] sm:$0xf]
      %v1070 = vld [vmem:[%s5] sm:$0x1]
      %v1072 = vperm.slane %v1070, 0
      %v1078 = vunpack.c.l.b16 %v1066
      %v1079 = vunpack.c.l.b16 %v1067
      %v1080 = vunpack.c.l.b16 %v1068
      %v1081 = vunpack.c.l.b16 %v1069
      %v1082 = vpack.c.b16 %v1079, %v1078
      %v1083 = vpack.c.b16 %v1081, %v1080
      %vm1086 = vcmask 261120
      %v1088 = vsel %vm1086, %v1034, 0
      %v1091 = vsel %vm1086, %v1035, 0
      %v1094 = vsel %vm1086, %v1036, 0
      %v1097 = vsel %vm1086, %v1037, 0
      %v1100 = vsel %vm1086, %v1038, 0
      %v1103 = vsel %vm1086, %v1039, 0
      %v1106 = vsel %vm1086, %v1040, 0
      %v1109 = vsel %vm1086, %v1041, 0
      %v1112 = vsel %vm1086, %v1042, 0
      %v1115 = vsel %vm1086, %v1043, 0
      %v1118 = vsel %vm1086, %v1044, 0
      %v1121 = vsel %vm1086, %v1045, 0
      %v1124 = vsel %vm1086, %v1046, 0
      %v1127 = vsel %vm1086, %v1047, 0
      %v1130 = vsel %vm1086, %v1048, 0
      %v1133 = vsel %vm1086, %v1049, 0
      %v1136 = vsel %vm1086, %v1050, 0
      %v1139 = vsel %vm1086, %v1051, 0
      %v1142 = vsel %vm1086, %v1052, 0
      %v1145 = vsel %vm1086, %v1053, 0
      %v1148 = vsel %vm1086, %v1054, 0
      %v1151 = vsel %vm1086, %v1055, 0
      %v1154 = vsel %vm1086, %v1056, 0
      %v1157 = vsel %vm1086, %v1057, 0
      %v1160 = vsel %vm1086, %v1058, 0
      %v1163 = vsel %vm1086, %v1059, 0
      %v1166 = vsel %vm1086, %v1060, 0
      %v1169 = vsel %vm1086, %v1061, 0
      %v1172 = vsel %vm1086, %v1062, 0
      %v1175 = vsel %vm1086, %v1063, 0
      %v1178 = vsel %vm1086, %v1064, 0
      %v1181 = vsel %vm1086, %v1065, 0
      %1183 = vmatpush.bf16.msra.mxu0 0
      %1184 = vmatpush.bf16.msra.mxu0 0
      %1185 = vmatpush.bf16.msra.mxu0 0
      %1186 = vmatpush.bf16.msra.mxu0 0
      %1187 = vmatpush.bf16.msra.mxu0 0
      %1188 = vmatpush.bf16.msra.mxu0 0
      %1189 = vmatpush.bf16.msra.mxu0 %v1083
      %1190 = vmatpush.bf16.msra.mxu0 %v1082
      %1191 = vmatmul.bf16.gmra.mxu0 %v1088
      %v1192 = vpop.f32.mrf.mxu0
      %v1193 = vadd.f32 %v1072, %v1192
      %v1194 = vpop.f32.mrf.mxu0
      %v1195 = vadd.f32 %v1072, %v1194
      %1196 = vmatmul.bf16.gmra.mxu0 %v1091
      %v1197 = vpop.f32.mrf.mxu0
      %v1198 = vadd.f32 %v1072, %v1197
      %v1199 = vpop.f32.mrf.mxu0
      %v1200 = vadd.f32 %v1072, %v1199
      %1201 = vmatmul.bf16.gmra.mxu0 %v1094
      %v1202 = vpop.f32.mrf.mxu0
      %v1203 = vadd.f32 %v1072, %v1202
      %v1204 = vpop.f32.mrf.mxu0
      %v1205 = vadd.f32 %v1072, %v1204
      %1206 = vmatmul.bf16.gmra.mxu0 %v1097
      %v1207 = vpop.f32.mrf.mxu0
      %v1208 = vadd.f32 %v1072, %v1207
      %v1209 = vpop.f32.mrf.mxu0
      %v1210 = vadd.f32 %v1072, %v1209
      %1211 = vmatmul.bf16.gmra.mxu0 %v1100
      %v1212 = vpop.f32.mrf.mxu0
      %v1213 = vadd.f32 %v1072, %v1212
      %v1214 = vpop.f32.mrf.mxu0
      %v1215 = vadd.f32 %v1072, %v1214
      %1216 = vmatmul.bf16.gmra.mxu0 %v1103
      %v1217 = vpop.f32.mrf.mxu0
      %v1218 = vadd.f32 %v1072, %v1217
      %v1219 = vpop.f32.mrf.mxu0
      %v1220 = vadd.f32 %v1072, %v1219
      %1221 = vmatmul.bf16.gmra.mxu0 %v1106
      %v1222 = vpop.f32.mrf.mxu0
      %v1223 = vadd.f32 %v1072, %v1222
      %v1224 = vpop.f32.mrf.mxu0
      %v1225 = vadd.f32 %v1072, %v1224
      %1226 = vmatmul.bf16.gmra.mxu0 %v1109
      %v1227 = vpop.f32.mrf.mxu0
      %v1228 = vadd.f32 %v1072, %v1227
      %v1229 = vpop.f32.mrf.mxu0
      %v1230 = vadd.f32 %v1072, %v1229
      %1231 = vmatmul.bf16.gmra.mxu0 %v1112
      %v1232 = vpop.f32.mrf.mxu0
      %v1233 = vadd.f32 %v1072, %v1232
      %v1234 = vpop.f32.mrf.mxu0
      %v1235 = vadd.f32 %v1072, %v1234
      %1236 = vmatmul.bf16.gmra.mxu0 %v1115
      %v1237 = vpop.f32.mrf.mxu0
      %v1238 = vadd.f32 %v1072, %v1237
      %v1239 = vpop.f32.mrf.mxu0
      %v1240 = vadd.f32 %v1072, %v1239
      %1241 = vmatmul.bf16.gmra.mxu0 %v1118
      %v1242 = vpop.f32.mrf.mxu0
      %v1243 = vadd.f32 %v1072, %v1242
      %v1244 = vpop.f32.mrf.mxu0
      %v1245 = vadd.f32 %v1072, %v1244
      %1246 = vmatmul.bf16.gmra.mxu0 %v1121
      %v1247 = vpop.f32.mrf.mxu0
      %v1248 = vadd.f32 %v1072, %v1247
      %v1249 = vpop.f32.mrf.mxu0
      %v1250 = vadd.f32 %v1072, %v1249
      %1251 = vmatmul.bf16.gmra.mxu0 %v1124
      %v1252 = vpop.f32.mrf.mxu0
      %v1253 = vadd.f32 %v1072, %v1252
      %v1254 = vpop.f32.mrf.mxu0
      %v1255 = vadd.f32 %v1072, %v1254
      %1256 = vmatmul.bf16.gmra.mxu0 %v1127
      %v1257 = vpop.f32.mrf.mxu0
      %v1258 = vadd.f32 %v1072, %v1257
      %v1259 = vpop.f32.mrf.mxu0
      %v1260 = vadd.f32 %v1072, %v1259
      %1261 = vmatmul.bf16.gmra.mxu0 %v1130
      %v1262 = vpop.f32.mrf.mxu0
      %v1263 = vadd.f32 %v1072, %v1262
      %v1264 = vpop.f32.mrf.mxu0
      %v1265 = vadd.f32 %v1072, %v1264
      %1266 = vmatmul.bf16.gmra.mxu0 %v1133
      %v1267 = vpop.f32.mrf.mxu0
      %v1268 = vadd.f32 %v1072, %v1267
      %v1269 = vpop.f32.mrf.mxu0
      %v1270 = vadd.f32 %v1072, %v1269
      %1271 = vmatmul.bf16.gmra.mxu0 %v1136
      %v1272 = vpop.f32.mrf.mxu0
      %v1273 = vadd.f32 %v1072, %v1272
      %v1274 = vpop.f32.mrf.mxu0
      %v1275 = vadd.f32 %v1072, %v1274
      %1276 = vmatmul.bf16.gmra.mxu0 %v1139
      %v1277 = vpop.f32.mrf.mxu0
      %v1278 = vadd.f32 %v1072, %v1277
      %v1279 = vpop.f32.mrf.mxu0
      %v1280 = vadd.f32 %v1072, %v1279
      %1281 = vmatmul.bf16.gmra.mxu0 %v1142
      %v1282 = vpop.f32.mrf.mxu0
      %v1283 = vadd.f32 %v1072, %v1282
      %v1284 = vpop.f32.mrf.mxu0
      %v1285 = vadd.f32 %v1072, %v1284
      %1286 = vmatmul.bf16.gmra.mxu0 %v1145
      %v1287 = vpop.f32.mrf.mxu0
      %v1288 = vadd.f32 %v1072, %v1287
      %v1289 = vpop.f32.mrf.mxu0
      %v1290 = vadd.f32 %v1072, %v1289
      %1291 = vmatmul.bf16.gmra.mxu0 %v1148
      %v1292 = vpop.f32.mrf.mxu0
      %v1293 = vadd.f32 %v1072, %v1292
      %v1294 = vpop.f32.mrf.mxu0
      %v1295 = vadd.f32 %v1072, %v1294
      %1296 = vmatmul.bf16.gmra.mxu0 %v1151
      %v1297 = vpop.f32.mrf.mxu0
      %v1298 = vadd.f32 %v1072, %v1297
      %v1299 = vpop.f32.mrf.mxu0
      %v1300 = vadd.f32 %v1072, %v1299
      %1301 = vmatmul.bf16.gmra.mxu0 %v1154
      %v1302 = vpop.f32.mrf.mxu0
      %v1303 = vadd.f32 %v1072, %v1302
      %v1304 = vpop.f32.mrf.mxu0
      %v1305 = vadd.f32 %v1072, %v1304
      %1306 = vmatmul.bf16.gmra.mxu0 %v1157
      %v1307 = vpop.f32.mrf.mxu0
      %v1308 = vadd.f32 %v1072, %v1307
      %v1309 = vpop.f32.mrf.mxu0
      %v1310 = vadd.f32 %v1072, %v1309
      %1311 = vmatmul.bf16.gmra.mxu0 %v1160
      %v1312 = vpop.f32.mrf.mxu0
      %v1313 = vadd.f32 %v1072, %v1312
      %v1314 = vpop.f32.mrf.mxu0
      %v1315 = vadd.f32 %v1072, %v1314
      %1316 = vmatmul.bf16.gmra.mxu0 %v1163
      %v1317 = vpop.f32.mrf.mxu0
      %v1318 = vadd.f32 %v1072, %v1317
      %v1319 = vpop.f32.mrf.mxu0
      %v1320 = vadd.f32 %v1072, %v1319
      %1321 = vmatmul.bf16.gmra.mxu0 %v1166
      %v1322 = vpop.f32.mrf.mxu0
      %v1323 = vadd.f32 %v1072, %v1322
      %v1324 = vpop.f32.mrf.mxu0
      %v1325 = vadd.f32 %v1072, %v1324
      %1326 = vmatmul.bf16.gmra.mxu0 %v1169
      %v1327 = vpop.f32.mrf.mxu0
      %v1328 = vadd.f32 %v1072, %v1327
      %v1329 = vpop.f32.mrf.mxu0
      %v1330 = vadd.f32 %v1072, %v1329
      %1331 = vmatmul.bf16.gmra.mxu0 %v1172
      %v1332 = vpop.f32.mrf.mxu0
      %v1333 = vadd.f32 %v1072, %v1332
      %v1334 = vpop.f32.mrf.mxu0
      %v1335 = vadd.f32 %v1072, %v1334
      %1336 = vmatmul.bf16.gmra.mxu0 %v1175
      %v1337 = vpop.f32.mrf.mxu0
      %v1338 = vadd.f32 %v1072, %v1337
      %v1339 = vpop.f32.mrf.mxu0
      %v1340 = vadd.f32 %v1072, %v1339
      %1341 = vmatmul.bf16.gmra.mxu0 %v1178
      %v1342 = vpop.f32.mrf.mxu0
      %v1343 = vadd.f32 %v1072, %v1342
      %v1344 = vpop.f32.mrf.mxu0
      %v1345 = vadd.f32 %v1072, %v1344
      %1346 = vmatmul.bf16.gmra.mxu0 %v1181
      %v1347 = vpop.f32.mrf.mxu0
      %v1348 = vadd.f32 %v1072, %v1347
      %v1349 = vpop.f32.mrf.mxu0
      %v1350 = vadd.f32 %v1072, %v1349
      %1351 = vdwg.mxu0
      %v1352 = vmax.f32 %v1193, 0.0
      %v1353 = vmax.f32 %v1195, 0.0
      %v1354 = vmax.f32 %v1198, 0.0
      %v1355 = vmax.f32 %v1200, 0.0
      %v1356 = vmax.f32 %v1203, 0.0
      %v1357 = vmax.f32 %v1205, 0.0
      %v1358 = vmax.f32 %v1208, 0.0
      %v1359 = vmax.f32 %v1210, 0.0
      %v1360 = vmax.f32 %v1213, 0.0
      %v1361 = vmax.f32 %v1215, 0.0
      %v1362 = vmax.f32 %v1218, 0.0
      %v1363 = vmax.f32 %v1220, 0.0
      %v1364 = vmax.f32 %v1223, 0.0
      %v1365 = vmax.f32 %v1225, 0.0
      %v1366 = vmax.f32 %v1228, 0.0
      %v1367 = vmax.f32 %v1230, 0.0
      %v1368 = vmax.f32 %v1233, 0.0
      %v1369 = vmax.f32 %v1235, 0.0
      %v1370 = vmax.f32 %v1238, 0.0
      %v1371 = vmax.f32 %v1240, 0.0
      %v1372 = vmax.f32 %v1243, 0.0
      %v1373 = vmax.f32 %v1245, 0.0
      %v1374 = vmax.f32 %v1248, 0.0
      %v1375 = vmax.f32 %v1250, 0.0
      %v1376 = vmax.f32 %v1253, 0.0
      %v1377 = vmax.f32 %v1255, 0.0
      %v1378 = vmax.f32 %v1258, 0.0
      %v1379 = vmax.f32 %v1260, 0.0
      %v1380 = vmax.f32 %v1263, 0.0
      %v1381 = vmax.f32 %v1265, 0.0
      %v1382 = vmax.f32 %v1268, 0.0
      %v1383 = vmax.f32 %v1270, 0.0
      %v1384 = vmax.f32 %v1273, 0.0
      %v1385 = vmax.f32 %v1275, 0.0
      %v1386 = vmax.f32 %v1278, 0.0
      %v1387 = vmax.f32 %v1280, 0.0
      %v1388 = vmax.f32 %v1283, 0.0
      %v1389 = vmax.f32 %v1285, 0.0
      %v1390 = vmax.f32 %v1288, 0.0
      %v1391 = vmax.f32 %v1290, 0.0
      %v1392 = vmax.f32 %v1293, 0.0
      %v1393 = vmax.f32 %v1295, 0.0
      %v1394 = vmax.f32 %v1298, 0.0
      %v1395 = vmax.f32 %v1300, 0.0
      %v1396 = vmax.f32 %v1303, 0.0
      %v1397 = vmax.f32 %v1305, 0.0
      %v1398 = vmax.f32 %v1308, 0.0
      %v1399 = vmax.f32 %v1310, 0.0
      %v1400 = vmax.f32 %v1313, 0.0
      %v1401 = vmax.f32 %v1315, 0.0
      %v1402 = vmax.f32 %v1318, 0.0
      %v1403 = vmax.f32 %v1320, 0.0
      %v1404 = vmax.f32 %v1323, 0.0
      %v1405 = vmax.f32 %v1325, 0.0
      %v1406 = vmax.f32 %v1328, 0.0
      %v1407 = vmax.f32 %v1330, 0.0
      %v1408 = vmax.f32 %v1333, 0.0
      %v1409 = vmax.f32 %v1335, 0.0
      %v1410 = vmax.f32 %v1338, 0.0
      %v1411 = vmax.f32 %v1340, 0.0
      %v1412 = vmax.f32 %v1343, 0.0
      %v1413 = vmax.f32 %v1345, 0.0
      %v1414 = vmax.f32 %v1348, 0.0
      %v1415 = vmax.f32 %v1350, 0.0
      %v1416 = vpack.c.bf16 %v1353, %v1352
      %v1417 = vpack.c.bf16 %v1355, %v1354
      %v1418 = vpack.c.bf16 %v1357, %v1356
      %v1419 = vpack.c.bf16 %v1359, %v1358
      %v1420 = vpack.c.bf16 %v1361, %v1360
      %v1421 = vpack.c.bf16 %v1363, %v1362
      %v1422 = vpack.c.bf16 %v1365, %v1364
      %v1423 = vpack.c.bf16 %v1367, %v1366
      %v1424 = vpack.c.bf16 %v1369, %v1368
      %v1425 = vpack.c.bf16 %v1371, %v1370
      %v1426 = vpack.c.bf16 %v1373, %v1372
      %v1427 = vpack.c.bf16 %v1375, %v1374
      %v1428 = vpack.c.bf16 %v1377, %v1376
      %v1429 = vpack.c.bf16 %v1379, %v1378
      %v1430 = vpack.c.bf16 %v1381, %v1380
      %v1431 = vpack.c.bf16 %v1383, %v1382
      %v1432 = vpack.c.bf16 %v1385, %v1384
      %v1433 = vpack.c.bf16 %v1387, %v1386
      %v1434 = vpack.c.bf16 %v1389, %v1388
      %v1435 = vpack.c.bf16 %v1391, %v1390
      %v1436 = vpack.c.bf16 %v1393, %v1392
      %v1437 = vpack.c.bf16 %v1395, %v1394
      %v1438 = vpack.c.bf16 %v1397, %v1396
      %v1439 = vpack.c.bf16 %v1399, %v1398
      %v1440 = vpack.c.bf16 %v1401, %v1400
      %v1441 = vpack.c.bf16 %v1403, %v1402
      %v1442 = vpack.c.bf16 %v1405, %v1404
      %v1443 = vpack.c.bf16 %v1407, %v1406
      %v1444 = vpack.c.bf16 %v1409, %v1408
      %v1445 = vpack.c.bf16 %v1411, %v1410
      %v1446 = vpack.c.bf16 %v1413, %v1412
      %v1447 = vpack.c.bf16 %v1415, %v1414
      %v1448 = vld [vmem:[%s6] sm:$0xf]
      %v1449 = vld [vmem:[%s6 + $0x4] sm:$0xf]
      %v1450 = vld [vmem:[%s6 + $0x8] sm:$0xf]
      %v1451 = vld [vmem:[%s6 + $0xc] sm:$0xf]
      %v1452 = vld [vmem:[%s7] sm:$0x1]
      %v1454 = vperm.slane %v1452, 0
      %v1460 = vunpack.c.l.b16 %v1448
      %v1461 = vunpack.c.l.b16 %v1449
      %v1462 = vunpack.c.l.b16 %v1450
      %v1463 = vunpack.c.l.b16 %v1451
      %v1464 = vpack.c.b16 %v1461, %v1460
      %v1465 = vpack.c.b16 %v1463, %v1462
      %v1469 = vsel %vm1086, %v1416, 0
      %v1472 = vsel %vm1086, %v1417, 0
      %v1475 = vsel %vm1086, %v1418, 0
      %v1478 = vsel %vm1086, %v1419, 0
      %v1481 = vsel %vm1086, %v1420, 0
      %v1484 = vsel %vm1086, %v1421, 0
      %v1487 = vsel %vm1086, %v1422, 0
      %v1490 = vsel %vm1086, %v1423, 0
      %v1493 = vsel %vm1086, %v1424, 0
      %v1496 = vsel %vm1086, %v1425, 0
      %v1499 = vsel %vm1086, %v1426, 0
      %v1502 = vsel %vm1086, %v1427, 0
      %v1505 = vsel %vm1086, %v1428, 0
      %v1508 = vsel %vm1086, %v1429, 0
      %v1511 = vsel %vm1086, %v1430, 0
      %v1514 = vsel %vm1086, %v1431, 0
      %v1517 = vsel %vm1086, %v1432, 0
      %v1520 = vsel %vm1086, %v1433, 0
      %v1523 = vsel %vm1086, %v1434, 0
      %v1526 = vsel %vm1086, %v1435, 0
      %v1529 = vsel %vm1086, %v1436, 0
      %v1532 = vsel %vm1086, %v1437, 0
      %v1535 = vsel %vm1086, %v1438, 0
      %v1538 = vsel %vm1086, %v1439, 0
      %v1541 = vsel %vm1086, %v1440, 0
      %v1544 = vsel %vm1086, %v1441, 0
      %v1547 = vsel %vm1086, %v1442, 0
      %v1550 = vsel %vm1086, %v1443, 0
      %v1553 = vsel %vm1086, %v1444, 0
      %v1556 = vsel %vm1086, %v1445, 0
      %v1559 = vsel %vm1086, %v1446, 0
      %v1562 = vsel %vm1086, %v1447, 0
      %1564 = vmatpush.bf16.msra.mxu0 0
      %1565 = vmatpush.bf16.msra.mxu0 0
      %1566 = vmatpush.bf16.msra.mxu0 0
      %1567 = vmatpush.bf16.msra.mxu0 0
      %1568 = vmatpush.bf16.msra.mxu0 0
      %1569 = vmatpush.bf16.msra.mxu0 0
      %1570 = vmatpush.bf16.msra.mxu0 %v1465
      %1571 = vmatpush.bf16.msra.mxu0 %v1464
      %1572 = vmatmul.bf16.gmra.mxu0 %v1469
      %v1573 = vpop.f32.mrf.mxu0
      %v1574 = vadd.f32 %v1454, %v1573
      %v1575 = vpop.f32.mrf.mxu0
      %v1576 = vadd.f32 %v1454, %v1575
      %1577 = vmatmul.bf16.gmra.mxu0 %v1472
      %v1578 = vpop.f32.mrf.mxu0
      %v1579 = vadd.f32 %v1454, %v1578
      %v1580 = vpop.f32.mrf.mxu0
      %v1581 = vadd.f32 %v1454, %v1580
      %1582 = vmatmul.bf16.gmra.mxu0 %v1475
      %v1583 = vpop.f32.mrf.mxu0
      %v1584 = vadd.f32 %v1454, %v1583
      %v1585 = vpop.f32.mrf.mxu0
      %v1586 = vadd.f32 %v1454, %v1585
      %1587 = vmatmul.bf16.gmra.mxu0 %v1478
      %v1588 = vpop.f32.mrf.mxu0
      %v1589 = vadd.f32 %v1454, %v1588
      %v1590 = vpop.f32.mrf.mxu0
      %v1591 = vadd.f32 %v1454, %v1590
      %1592 = vmatmul.bf16.gmra.mxu0 %v1481
      %v1593 = vpop.f32.mrf.mxu0
      %v1594 = vadd.f32 %v1454, %v1593
      %v1595 = vpop.f32.mrf.mxu0
      %v1596 = vadd.f32 %v1454, %v1595
      %1597 = vmatmul.bf16.gmra.mxu0 %v1484
      %v1598 = vpop.f32.mrf.mxu0
      %v1599 = vadd.f32 %v1454, %v1598
      %v1600 = vpop.f32.mrf.mxu0
      %v1601 = vadd.f32 %v1454, %v1600
      %1602 = vmatmul.bf16.gmra.mxu0 %v1487
      %v1603 = vpop.f32.mrf.mxu0
      %v1604 = vadd.f32 %v1454, %v1603
      %v1605 = vpop.f32.mrf.mxu0
      %v1606 = vadd.f32 %v1454, %v1605
      %1607 = vmatmul.bf16.gmra.mxu0 %v1490
      %v1608 = vpop.f32.mrf.mxu0
      %v1609 = vadd.f32 %v1454, %v1608
      %v1610 = vpop.f32.mrf.mxu0
      %v1611 = vadd.f32 %v1454, %v1610
      %1612 = vmatmul.bf16.gmra.mxu0 %v1493
      %v1613 = vpop.f32.mrf.mxu0
      %v1614 = vadd.f32 %v1454, %v1613
      %v1615 = vpop.f32.mrf.mxu0
      %v1616 = vadd.f32 %v1454, %v1615
      %1617 = vmatmul.bf16.gmra.mxu0 %v1496
      %v1618 = vpop.f32.mrf.mxu0
      %v1619 = vadd.f32 %v1454, %v1618
      %v1620 = vpop.f32.mrf.mxu0
      %v1621 = vadd.f32 %v1454, %v1620
      %1622 = vmatmul.bf16.gmra.mxu0 %v1499
      %v1623 = vpop.f32.mrf.mxu0
      %v1624 = vadd.f32 %v1454, %v1623
      %v1625 = vpop.f32.mrf.mxu0
      %v1626 = vadd.f32 %v1454, %v1625
      %1627 = vmatmul.bf16.gmra.mxu0 %v1502
      %v1628 = vpop.f32.mrf.mxu0
      %v1629 = vadd.f32 %v1454, %v1628
      %v1630 = vpop.f32.mrf.mxu0
      %v1631 = vadd.f32 %v1454, %v1630
      %1632 = vmatmul.bf16.gmra.mxu0 %v1505
      %v1633 = vpop.f32.mrf.mxu0
      %v1634 = vadd.f32 %v1454, %v1633
      %v1635 = vpop.f32.mrf.mxu0
      %v1636 = vadd.f32 %v1454, %v1635
      %1637 = vmatmul.bf16.gmra.mxu0 %v1508
      %v1638 = vpop.f32.mrf.mxu0
      %v1639 = vadd.f32 %v1454, %v1638
      %v1640 = vpop.f32.mrf.mxu0
      %v1641 = vadd.f32 %v1454, %v1640
      %1642 = vmatmul.bf16.gmra.mxu0 %v1511
      %v1643 = vpop.f32.mrf.mxu0
      %v1644 = vadd.f32 %v1454, %v1643
      %v1645 = vpop.f32.mrf.mxu0
      %v1646 = vadd.f32 %v1454, %v1645
      %1647 = vmatmul.bf16.gmra.mxu0 %v1514
      %v1648 = vpop.f32.mrf.mxu0
      %v1649 = vadd.f32 %v1454, %v1648
      %v1650 = vpop.f32.mrf.mxu0
      %v1651 = vadd.f32 %v1454, %v1650
      %1652 = vmatmul.bf16.gmra.mxu0 %v1517
      %v1653 = vpop.f32.mrf.mxu0
      %v1654 = vadd.f32 %v1454, %v1653
      %v1655 = vpop.f32.mrf.mxu0
      %v1656 = vadd.f32 %v1454, %v1655
      %1657 = vmatmul.bf16.gmra.mxu0 %v1520
      %v1658 = vpop.f32.mrf.mxu0
      %v1659 = vadd.f32 %v1454, %v1658
      %v1660 = vpop.f32.mrf.mxu0
      %v1661 = vadd.f32 %v1454, %v1660
      %1662 = vmatmul.bf16.gmra.mxu0 %v1523
      %v1663 = vpop.f32.mrf.mxu0
      %v1664 = vadd.f32 %v1454, %v1663
      %v1665 = vpop.f32.mrf.mxu0
      %v1666 = vadd.f32 %v1454, %v1665
      %1667 = vmatmul.bf16.gmra.mxu0 %v1526
      %v1668 = vpop.f32.mrf.mxu0
      %v1669 = vadd.f32 %v1454, %v1668
      %v1670 = vpop.f32.mrf.mxu0
      %v1671 = vadd.f32 %v1454, %v1670
      %1672 = vmatmul.bf16.gmra.mxu0 %v1529
      %v1673 = vpop.f32.mrf.mxu0
      %v1674 = vadd.f32 %v1454, %v1673
      %v1675 = vpop.f32.mrf.mxu0
      %v1676 = vadd.f32 %v1454, %v1675
      %1677 = vmatmul.bf16.gmra.mxu0 %v1532
      %v1678 = vpop.f32.mrf.mxu0
      %v1679 = vadd.f32 %v1454, %v1678
      %v1680 = vpop.f32.mrf.mxu0
      %v1681 = vadd.f32 %v1454, %v1680
      %1682 = vmatmul.bf16.gmra.mxu0 %v1535
      %v1683 = vpop.f32.mrf.mxu0
      %v1684 = vadd.f32 %v1454, %v1683
      %v1685 = vpop.f32.mrf.mxu0
      %v1686 = vadd.f32 %v1454, %v1685
      %1687 = vmatmul.bf16.gmra.mxu0 %v1538
      %v1688 = vpop.f32.mrf.mxu0
      %v1689 = vadd.f32 %v1454, %v1688
      %v1690 = vpop.f32.mrf.mxu0
      %v1691 = vadd.f32 %v1454, %v1690
      %1692 = vmatmul.bf16.gmra.mxu0 %v1541
      %v1693 = vpop.f32.mrf.mxu0
      %v1694 = vadd.f32 %v1454, %v1693
      %v1695 = vpop.f32.mrf.mxu0
      %v1696 = vadd.f32 %v1454, %v1695
      %1697 = vmatmul.bf16.gmra.mxu0 %v1544
      %v1698 = vpop.f32.mrf.mxu0
      %v1699 = vadd.f32 %v1454, %v1698
      %v1700 = vpop.f32.mrf.mxu0
      %v1701 = vadd.f32 %v1454, %v1700
      %1702 = vmatmul.bf16.gmra.mxu0 %v1547
      %v1703 = vpop.f32.mrf.mxu0
      %v1704 = vadd.f32 %v1454, %v1703
      %v1705 = vpop.f32.mrf.mxu0
      %v1706 = vadd.f32 %v1454, %v1705
      %1707 = vmatmul.bf16.gmra.mxu0 %v1550
      %v1708 = vpop.f32.mrf.mxu0
      %v1709 = vadd.f32 %v1454, %v1708
      %v1710 = vpop.f32.mrf.mxu0
      %v1711 = vadd.f32 %v1454, %v1710
      %1712 = vmatmul.bf16.gmra.mxu0 %v1553
      %v1713 = vpop.f32.mrf.mxu0
      %v1714 = vadd.f32 %v1454, %v1713
      %v1715 = vpop.f32.mrf.mxu0
      %v1716 = vadd.f32 %v1454, %v1715
      %1717 = vmatmul.bf16.gmra.mxu0 %v1556
      %v1718 = vpop.f32.mrf.mxu0
      %v1719 = vadd.f32 %v1454, %v1718
      %v1720 = vpop.f32.mrf.mxu0
      %v1721 = vadd.f32 %v1454, %v1720
      %1722 = vmatmul.bf16.gmra.mxu0 %v1559
      %v1723 = vpop.f32.mrf.mxu0
      %v1724 = vadd.f32 %v1454, %v1723
      %v1725 = vpop.f32.mrf.mxu0
      %v1726 = vadd.f32 %v1454, %v1725
      %1727 = vmatmul.bf16.gmra.mxu0 %v1562
      %v1728 = vpop.f32.mrf.mxu0
      %v1729 = vadd.f32 %v1454, %v1728
      %v1730 = vpop.f32.mrf.mxu0
      %v1731 = vadd.f32 %v1454, %v1730
      %1732 = vdwg.mxu0
      %v1733 = vld [vmem:[%s8] sm:$0x7]
      %v1734 = vld [vmem:[%s477] sm:$0x1]
      %v1736 = vperm.slane %v1734, 0
      %vm1738 = vcmask 23552
      %v1740 = vsel %vm1738, %v1574, 0
      %v1743 = vsel %vm1738, %v1576, 0
      %v1746 = vsel %vm1738, %v1579, 0
      %v1749 = vsel %vm1738, %v1581, 0
      %v1752 = vsel %vm1738, %v1584, 0
      %v1755 = vsel %vm1738, %v1586, 0
      %v1758 = vsel %vm1738, %v1589, 0
      %v1761 = vsel %vm1738, %v1591, 0
      %v1764 = vsel %vm1738, %v1594, 0
      %v1767 = vsel %vm1738, %v1596, 0
      %v1770 = vsel %vm1738, %v1599, 0
      %v1773 = vsel %vm1738, %v1601, 0
      %v1776 = vsel %vm1738, %v1604, 0
      %v1779 = vsel %vm1738, %v1606, 0
      %v1782 = vsel %vm1738, %v1609, 0
      %v1785 = vsel %vm1738, %v1611, 0
      %v1788 = vsel %vm1738, %v1614, 0
      %v1791 = vsel %vm1738, %v1616, 0
      %v1794 = vsel %vm1738, %v1619, 0
      %v1797 = vsel %vm1738, %v1621, 0
      %v1800 = vsel %vm1738, %v1624, 0
      %v1803 = vsel %vm1738, %v1626, 0
      %v1806 = vsel %vm1738, %v1629, 0
      %v1809 = vsel %vm1738, %v1631, 0
      %v1812 = vsel %vm1738, %v1634, 0
      %v1815 = vsel %vm1738, %v1636, 0
      %v1818 = vsel %vm1738, %v1639, 0
      %v1821 = vsel %vm1738, %v1641, 0
      %v1824 = vsel %vm1738, %v1644, 0
      %v1827 = vsel %vm1738, %v1646, 0
      %v1830 = vsel %vm1738, %v1649, 0
      %v1833 = vsel %vm1738, %v1651, 0
      %v1836 = vsel %vm1738, %v1654, 0
      %v1839 = vsel %vm1738, %v1656, 0
      %v1842 = vsel %vm1738, %v1659, 0
      %v1845 = vsel %vm1738, %v1661, 0
      %v1848 = vsel %vm1738, %v1664, 0
      %v1851 = vsel %vm1738, %v1666, 0
      %v1854 = vsel %vm1738, %v1669, 0
      %v1857 = vsel %vm1738, %v1671, 0
      %v1860 = vsel %vm1738, %v1674, 0
      %v1863 = vsel %vm1738, %v1676, 0
      %v1866 = vsel %vm1738, %v1679, 0
      %v1869 = vsel %vm1738, %v1681, 0
      %v1872 = vsel %vm1738, %v1684, 0
      %v1875 = vsel %vm1738, %v1686, 0
      %v1878 = vsel %vm1738, %v1689, 0
      %v1881 = vsel %vm1738, %v1691, 0
      %v1884 = vsel %vm1738, %v1694, 0
      %v1887 = vsel %vm1738, %v1696, 0
      %v1890 = vsel %vm1738, %v1699, 0
      %v1893 = vsel %vm1738, %v1701, 0
      %v1896 = vsel %vm1738, %v1704, 0
      %v1899 = vsel %vm1738, %v1706, 0
      %v1902 = vsel %vm1738, %v1709, 0
      %v1905 = vsel %vm1738, %v1711, 0
      %v1908 = vsel %vm1738, %v1714, 0
      %v1911 = vsel %vm1738, %v1716, 0
      %v1914 = vsel %vm1738, %v1719, 0
      %v1917 = vsel %vm1738, %v1721, 0
      %v1920 = vsel %vm1738, %v1724, 0
      %v1923 = vsel %vm1738, %v1726, 0
      %v1926 = vsel %vm1738, %v1729, 0
      %v1929 = vsel %vm1738, %v1731, 0
      %vm1931 = vcmask 1042432
      %v1933 = vsel %vm1931, %v1733, 0
      %1935 = vmatpush.msra.mxu0 0.0
      %1936 = vmatpush.msra.mxu0 0.0
      %1937 = vmatpush.msra.mxu0 0.0
      %1938 = vmatpush.msra.mxu0 0.0
      %1939 = vmatpush.msra.mxu0 0.0
      %1940 = vmatpush.msra.mxu0 0.0
      %1941 = vmatpush.msra.mxu0 0.0
      %1942 = vmatpush.msra.mxu0 0.0
      %1943 = vmatpush.msra.mxu0 0.0
      %1944 = vmatpush.msra.mxu0 0.0
      %1945 = vmatpush.msra.mxu0 0.0
      %1946 = vmatpush.msra.mxu0 0.0
      %1947 = vmatpush.msra.mxu0 0.0
      %1948 = vmatpush.msra.mxu0 0.0
      %1949 = vmatpush.msra.mxu0 0.0
      %1950 = vmatpush.msra.mxu0 %v1933
      %1951 = vmatmul.f32.gmra.mxu0 %v1740
      %v1952 = vpop.f32.mrf.mxu0
      %v1953 = vadd.f32 %v1736, %v1952
      %1954 = vmatmul.f32.gmra.mxu0 %v1743
      %v1955 = vpop.f32.mrf.mxu0
      %v1956 = vadd.f32 %v1736, %v1955
      %1957 = vmatmul.f32.gmra.mxu0 %v1746
      %v1958 = vpop.f32.mrf.mxu0
      %v1959 = vadd.f32 %v1736, %v1958
      %1960 = vmatmul.f32.gmra.mxu0 %v1749
      %v1961 = vpop.f32.mrf.mxu0
      %v1962 = vadd.f32 %v1736, %v1961
      %1963 = vmatmul.f32.gmra.mxu0 %v1752
      %v1964 = vpop.f32.mrf.mxu0
      %v1965 = vadd.f32 %v1736, %v1964
      %1966 = vmatmul.f32.gmra.mxu0 %v1755
      %v1967 = vpop.f32.mrf.mxu0
      %v1968 = vadd.f32 %v1736, %v1967
      %1969 = vmatmul.f32.gmra.mxu0 %v1758
      %v1970 = vpop.f32.mrf.mxu0
      %v1971 = vadd.f32 %v1736, %v1970
      %1972 = vmatmul.f32.gmra.mxu0 %v1761
      %v1973 = vpop.f32.mrf.mxu0
      %v1974 = vadd.f32 %v1736, %v1973
      %1975 = vmatmul.f32.gmra.mxu0 %v1764
      %v1976 = vpop.f32.mrf.mxu0
      %v1977 = vadd.f32 %v1736, %v1976
      %1978 = vmatmul.f32.gmra.mxu0 %v1767
      %v1979 = vpop.f32.mrf.mxu0
      %v1980 = vadd.f32 %v1736, %v1979
      %1981 = vmatmul.f32.gmra.mxu0 %v1770
      %v1982 = vpop.f32.mrf.mxu0
      %v1983 = vadd.f32 %v1736, %v1982
      %1984 = vmatmul.f32.gmra.mxu0 %v1773
      %v1985 = vpop.f32.mrf.mxu0
      %v1986 = vadd.f32 %v1736, %v1985
      %1987 = vmatmul.f32.gmra.mxu0 %v1776
      %v1988 = vpop.f32.mrf.mxu0
      %v1989 = vadd.f32 %v1736, %v1988
      %1990 = vmatmul.f32.gmra.mxu0 %v1779
      %v1991 = vpop.f32.mrf.mxu0
      %v1992 = vadd.f32 %v1736, %v1991
      %1993 = vmatmul.f32.gmra.mxu0 %v1782
      %v1994 = vpop.f32.mrf.mxu0
      %v1995 = vadd.f32 %v1736, %v1994
      %1996 = vmatmul.f32.gmra.mxu0 %v1785
      %v1997 = vpop.f32.mrf.mxu0
      %v1998 = vadd.f32 %v1736, %v1997
      %1999 = vmatmul.f32.gmra.mxu0 %v1788
      %v2000 = vpop.f32.mrf.mxu0
      %v2001 = vadd.f32 %v1736, %v2000
      %2002 = vmatmul.f32.gmra.mxu0 %v1791
      %v2003 = vpop.f32.mrf.mxu0
      %v2004 = vadd.f32 %v1736, %v2003
      %2005 = vmatmul.f32.gmra.mxu0 %v1794
      %v2006 = vpop.f32.mrf.mxu0
      %v2007 = vadd.f32 %v1736, %v2006
      %2008 = vmatmul.f32.gmra.mxu0 %v1797
      %v2009 = vpop.f32.mrf.mxu0
      %v2010 = vadd.f32 %v1736, %v2009
      %2011 = vmatmul.f32.gmra.mxu0 %v1800
      %v2012 = vpop.f32.mrf.mxu0
      %v2013 = vadd.f32 %v1736, %v2012
      %2014 = vmatmul.f32.gmra.mxu0 %v1803
      %v2015 = vpop.f32.mrf.mxu0
      %v2016 = vadd.f32 %v1736, %v2015
      %2017 = vmatmul.f32.gmra.mxu0 %v1806
      %v2018 = vpop.f32.mrf.mxu0
      %v2019 = vadd.f32 %v1736, %v2018
      %2020 = vmatmul.f32.gmra.mxu0 %v1809
      %v2021 = vpop.f32.mrf.mxu0
      %v2022 = vadd.f32 %v1736, %v2021
      %2023 = vmatmul.f32.gmra.mxu0 %v1812
      %v2024 = vpop.f32.mrf.mxu0
      %v2025 = vadd.f32 %v1736, %v2024
      %2026 = vmatmul.f32.gmra.mxu0 %v1815
      %v2027 = vpop.f32.mrf.mxu0
      %v2028 = vadd.f32 %v1736, %v2027
      %2029 = vmatmul.f32.gmra.mxu0 %v1818
      %v2030 = vpop.f32.mrf.mxu0
      %v2031 = vadd.f32 %v1736, %v2030
      %2032 = vmatmul.f32.gmra.mxu0 %v1821
      %v2033 = vpop.f32.mrf.mxu0
      %v2034 = vadd.f32 %v1736, %v2033
      %2035 = vmatmul.f32.gmra.mxu0 %v1824
      %v2036 = vpop.f32.mrf.mxu0
      %v2037 = vadd.f32 %v1736, %v2036
      %2038 = vmatmul.f32.gmra.mxu0 %v1827
      %v2039 = vpop.f32.mrf.mxu0
      %v2040 = vadd.f32 %v1736, %v2039
      %2041 = vmatmul.f32.gmra.mxu0 %v1830
      %v2042 = vpop.f32.mrf.mxu0
      %v2043 = vadd.f32 %v1736, %v2042
      %2044 = vmatmul.f32.gmra.mxu0 %v1833
      %v2045 = vpop.f32.mrf.mxu0
      %v2046 = vadd.f32 %v1736, %v2045
      %2047 = vmatmul.f32.gmra.mxu0 %v1836
      %v2048 = vpop.f32.mrf.mxu0
      %v2049 = vadd.f32 %v1736, %v2048
      %2050 = vmatmul.f32.gmra.mxu0 %v1839
      %v2051 = vpop.f32.mrf.mxu0
      %v2052 = vadd.f32 %v1736, %v2051
      %2053 = vmatmul.f32.gmra.mxu0 %v1842
      %v2054 = vpop.f32.mrf.mxu0
      %v2055 = vadd.f32 %v1736, %v2054
      %2056 = vmatmul.f32.gmra.mxu0 %v1845
      %v2057 = vpop.f32.mrf.mxu0
      %v2058 = vadd.f32 %v1736, %v2057
      %2059 = vmatmul.f32.gmra.mxu0 %v1848
      %v2060 = vpop.f32.mrf.mxu0
      %v2061 = vadd.f32 %v1736, %v2060
      %2062 = vmatmul.f32.gmra.mxu0 %v1851
      %v2063 = vpop.f32.mrf.mxu0
      %v2064 = vadd.f32 %v1736, %v2063
      %2065 = vmatmul.f32.gmra.mxu0 %v1854
      %v2066 = vpop.f32.mrf.mxu0
      %v2067 = vadd.f32 %v1736, %v2066
      %2068 = vmatmul.f32.gmra.mxu0 %v1857
      %v2069 = vpop.f32.mrf.mxu0
      %v2070 = vadd.f32 %v1736, %v2069
      %2071 = vmatmul.f32.gmra.mxu0 %v1860
      %v2072 = vpop.f32.mrf.mxu0
      %v2073 = vadd.f32 %v1736, %v2072
      %2074 = vmatmul.f32.gmra.mxu0 %v1863
      %v2075 = vpop.f32.mrf.mxu0
      %v2076 = vadd.f32 %v1736, %v2075
      %2077 = vmatmul.f32.gmra.mxu0 %v1866
      %v2078 = vpop.f32.mrf.mxu0
      %v2079 = vadd.f32 %v1736, %v2078
      %2080 = vmatmul.f32.gmra.mxu0 %v1869
      %v2081 = vpop.f32.mrf.mxu0
      %v2082 = vadd.f32 %v1736, %v2081
      %2083 = vmatmul.f32.gmra.mxu0 %v1872
      %v2084 = vpop.f32.mrf.mxu0
      %v2085 = vadd.f32 %v1736, %v2084
      %2086 = vmatmul.f32.gmra.mxu0 %v1875
      %v2087 = vpop.f32.mrf.mxu0
      %v2088 = vadd.f32 %v1736, %v2087
      %2089 = vmatmul.f32.gmra.mxu0 %v1878
      %v2090 = vpop.f32.mrf.mxu0
      %v2091 = vadd.f32 %v1736, %v2090
      %2092 = vmatmul.f32.gmra.mxu0 %v1881
      %v2093 = vpop.f32.mrf.mxu0
      %v2094 = vadd.f32 %v1736, %v2093
      %2095 = vmatmul.f32.gmra.mxu0 %v1884
      %v2096 = vpop.f32.mrf.mxu0
      %v2097 = vadd.f32 %v1736, %v2096
      %2098 = vmatmul.f32.gmra.mxu0 %v1887
      %v2099 = vpop.f32.mrf.mxu0
      %v2100 = vadd.f32 %v1736, %v2099
      %2101 = vmatmul.f32.gmra.mxu0 %v1890
      %v2102 = vpop.f32.mrf.mxu0
      %v2103 = vadd.f32 %v1736, %v2102
      %2104 = vmatmul.f32.gmra.mxu0 %v1893
      %v2105 = vpop.f32.mrf.mxu0
      %v2106 = vadd.f32 %v1736, %v2105
      %2107 = vmatmul.f32.gmra.mxu0 %v1896
      %v2108 = vpop.f32.mrf.mxu0
      %v2109 = vadd.f32 %v1736, %v2108
      %2110 = vmatmul.f32.gmra.mxu0 %v1899
      %v2111 = vpop.f32.mrf.mxu0
      %v2112 = vadd.f32 %v1736, %v2111
      %2113 = vmatmul.f32.gmra.mxu0 %v1902
      %v2114 = vpop.f32.mrf.mxu0
      %v2115 = vadd.f32 %v1736, %v2114
      %2116 = vmatmul.f32.gmra.mxu0 %v1905
      %v2117 = vpop.f32.mrf.mxu0
      %v2118 = vadd.f32 %v1736, %v2117
      %2119 = vmatmul.f32.gmra.mxu0 %v1908
      %v2120 = vpop.f32.mrf.mxu0
      %v2121 = vadd.f32 %v1736, %v2120
      %2122 = vmatmul.f32.gmra.mxu0 %v1911
      %v2123 = vpop.f32.mrf.mxu0
      %v2124 = vadd.f32 %v1736, %v2123
      %2125 = vmatmul.f32.gmra.mxu0 %v1914
      %v2126 = vpop.f32.mrf.mxu0
      %v2127 = vadd.f32 %v1736, %v2126
      %2128 = vmatmul.f32.gmra.mxu0 %v1917
      %v2129 = vpop.f32.mrf.mxu0
      %v2130 = vadd.f32 %v1736, %v2129
      %2131 = vmatmul.f32.gmra.mxu0 %v1920
      %v2132 = vpop.f32.mrf.mxu0
      %v2133 = vadd.f32 %v1736, %v2132
      %2134 = vmatmul.f32.gmra.mxu0 %v1923
      %v2135 = vpop.f32.mrf.mxu0
      %v2136 = vadd.f32 %v1736, %v2135
      %2137 = vmatmul.f32.gmra.mxu0 %v1926
      %v2138 = vpop.f32.mrf.mxu0
      %v2139 = vadd.f32 %v1736, %v2138
      %2140 = vmatmul.f32.gmra.mxu0 %v1929
      %v2141 = vpop.f32.mrf.mxu0
      %v2142 = vadd.f32 %v1736, %v2141
      %2143 = vdwg.mxu0
      %v2144 = vmax.f32 %v1953, 0.0
      %v2145 = vmax.f32 %v1956, 0.0
      %v2146 = vmax.f32 %v1959, 0.0
      %v2147 = vmax.f32 %v1962, 0.0
      %v2148 = vmax.f32 %v1965, 0.0
      %v2149 = vmax.f32 %v1968, 0.0
      %v2150 = vmax.f32 %v1971, 0.0
      %v2151 = vmax.f32 %v1974, 0.0
      %v2152 = vmax.f32 %v1977, 0.0
      %v2153 = vmax.f32 %v1980, 0.0
      %v2154 = vmax.f32 %v1983, 0.0
      %v2155 = vmax.f32 %v1986, 0.0
      %v2156 = vmax.f32 %v1989, 0.0
      %v2157 = vmax.f32 %v1992, 0.0
      %v2158 = vmax.f32 %v1995, 0.0
      %v2159 = vmax.f32 %v1998, 0.0
      %v2160 = vmax.f32 %v2001, 0.0
      %v2161 = vmax.f32 %v2004, 0.0
      %v2162 = vmax.f32 %v2007, 0.0
      %v2163 = vmax.f32 %v2010, 0.0
      %v2164 = vmax.f32 %v2013, 0.0
      %v2165 = vmax.f32 %v2016, 0.0
      %v2166 = vmax.f32 %v2019, 0.0
      %v2167 = vmax.f32 %v2022, 0.0
      %v2168 = vmax.f32 %v2025, 0.0
      %v2169 = vmax.f32 %v2028, 0.0
      %v2170 = vmax.f32 %v2031, 0.0
      %v2171 = vmax.f32 %v2034, 0.0
      %v2172 = vmax.f32 %v2037, 0.0
      %v2173 = vmax.f32 %v2040, 0.0
      %v2174 = vmax.f32 %v2043, 0.0
      %v2175 = vmax.f32 %v2046, 0.0
      %v2176 = vmax.f32 %v2049, 0.0
      %v2177 = vmax.f32 %v2052, 0.0
      %v2178 = vmax.f32 %v2055, 0.0
      %v2179 = vmax.f32 %v2058, 0.0
      %v2180 = vmax.f32 %v2061, 0.0
      %v2181 = vmax.f32 %v2064, 0.0
      %v2182 = vmax.f32 %v2067, 0.0
      %v2183 = vmax.f32 %v2070, 0.0
      %v2184 = vmax.f32 %v2073, 0.0
      %v2185 = vmax.f32 %v2076, 0.0
      %v2186 = vmax.f32 %v2079, 0.0
      %v2187 = vmax.f32 %v2082, 0.0
      %v2188 = vmax.f32 %v2085, 0.0
      %v2189 = vmax.f32 %v2088, 0.0
      %v2190 = vmax.f32 %v2091, 0.0
      %v2191 = vmax.f32 %v2094, 0.0
      %v2192 = vmax.f32 %v2097, 0.0
      %v2193 = vmax.f32 %v2100, 0.0
      %v2194 = vmax.f32 %v2103, 0.0
      %v2195 = vmax.f32 %v2106, 0.0
      %v2196 = vmax.f32 %v2109, 0.0
      %v2197 = vmax.f32 %v2112, 0.0
      %v2198 = vmax.f32 %v2115, 0.0
      %v2199 = vmax.f32 %v2118, 0.0
      %v2200 = vmax.f32 %v2121, 0.0
      %v2201 = vmax.f32 %v2124, 0.0
      %v2202 = vmax.f32 %v2127, 0.0
      %v2203 = vmax.f32 %v2130, 0.0
      %v2204 = vmax.f32 %v2133, 0.0
      %v2205 = vmax.f32 %v2136, 0.0
      %v2206 = vmax.f32 %v2139, 0.0
      %v2207 = vmax.f32 %v2142, 0.0
      %v2208 = vpack.c.bf16 %v2145, %v2144
      %v2209 = vpack.c.bf16 %v2147, %v2146
      %v2210 = vpack.c.bf16 %v2149, %v2148
      %v2211 = vpack.c.bf16 %v2151, %v2150
      %v2212 = vpack.c.bf16 %v2153, %v2152
      %v2213 = vpack.c.bf16 %v2155, %v2154
      %v2214 = vpack.c.bf16 %v2157, %v2156
      %v2215 = vpack.c.bf16 %v2159, %v2158
      %v2216 = vpack.c.bf16 %v2161, %v2160
      %v2217 = vpack.c.bf16 %v2163, %v2162
      %v2218 = vpack.c.bf16 %v2165, %v2164
      %v2219 = vpack.c.bf16 %v2167, %v2166
      %v2220 = vpack.c.bf16 %v2169, %v2168
      %v2221 = vpack.c.bf16 %v2171, %v2170
      %v2222 = vpack.c.bf16 %v2173, %v2172
      %v2223 = vpack.c.bf16 %v2175, %v2174
      %v2224 = vpack.c.bf16 %v2177, %v2176
      %v2225 = vpack.c.bf16 %v2179, %v2178
      %v2226 = vpack.c.bf16 %v2181, %v2180
      %v2227 = vpack.c.bf16 %v2183, %v2182
      %v2228 = vpack.c.bf16 %v2185, %v2184
      %v2229 = vpack.c.bf16 %v2187, %v2186
      %v2230 = vpack.c.bf16 %v2189, %v2188
      %v2231 = vpack.c.bf16 %v2191, %v2190
      %v2232 = vpack.c.bf16 %v2193, %v2192
      %v2233 = vpack.c.bf16 %v2195, %v2194
      %v2234 = vpack.c.bf16 %v2197, %v2196
      %v2235 = vpack.c.bf16 %v2199, %v2198
      %v2236 = vpack.c.bf16 %v2201, %v2200
      %v2237 = vpack.c.bf16 %v2203, %v2202
      %v2238 = vpack.c.bf16 %v2205, %v2204
      %v2239 = vpack.c.bf16 %v2207, %v2206
      %v2240 = vld [vmem:[%s9] sm:$0xf]
      %v2241 = vld [vmem:[%s9 + $0x4] sm:$0xf]
      %v2242 = vld [vmem:[%s9 + $0x8] sm:$0xf]
      %v2243 = vld [vmem:[%s9 + $0xc] sm:$0xf]
      %v2244 = vld [vmem:[%s10] sm:$0x1]
      %v2246 = vperm.slane %v2244, 0
      %v2252 = vunpack.c.l.b16 %v2240
      %v2253 = vunpack.c.l.b16 %v2241
      %v2254 = vunpack.c.l.b16 %v2242
      %v2255 = vunpack.c.l.b16 %v2243
      %v2256 = vpack.c.b16 %v2253, %v2252
      %v2257 = vpack.c.b16 %v2255, %v2254
      %v2261 = vsel %vm1086, %v2208, 0
      %v2264 = vsel %vm1086, %v2209, 0
      %v2267 = vsel %vm1086, %v2210, 0
      %v2270 = vsel %vm1086, %v2211, 0
      %v2273 = vsel %vm1086, %v2212, 0
      %v2276 = vsel %vm1086, %v2213, 0
      %v2279 = vsel %vm1086, %v2214, 0
      %v2282 = vsel %vm1086, %v2215, 0
      %v2285 = vsel %vm1086, %v2216, 0
      %v2288 = vsel %vm1086, %v2217, 0
      %v2291 = vsel %vm1086, %v2218, 0
      %v2294 = vsel %vm1086, %v2219, 0
      %v2297 = vsel %vm1086, %v2220, 0
      %v2300 = vsel %vm1086, %v2221, 0
      %v2303 = vsel %vm1086, %v2222, 0
      %v2306 = vsel %vm1086, %v2223, 0
      %v2309 = vsel %vm1086, %v2224, 0
      %v2312 = vsel %vm1086, %v2225, 0
      %v2315 = vsel %vm1086, %v2226, 0
      %v2318 = vsel %vm1086, %v2227, 0
      %v2321 = vsel %vm1086, %v2228, 0
      %v2324 = vsel %vm1086, %v2229, 0
      %v2327 = vsel %vm1086, %v2230, 0
      %v2330 = vsel %vm1086, %v2231, 0
      %v2333 = vsel %vm1086, %v2232, 0
      %v2336 = vsel %vm1086, %v2233, 0
      %v2339 = vsel %vm1086, %v2234, 0
      %v2342 = vsel %vm1086, %v2235, 0
      %v2345 = vsel %vm1086, %v2236, 0
      %v2348 = vsel %vm1086, %v2237, 0
      %v2351 = vsel %vm1086, %v2238, 0
      %v2354 = vsel %vm1086, %v2239, 0
      %2356 = vmatpush.bf16.msra.mxu0 0
      %2357 = vmatpush.bf16.msra.mxu0 0
      %2358 = vmatpush.bf16.msra.mxu0 0
      %2359 = vmatpush.bf16.msra.mxu0 0
      %2360 = vmatpush.bf16.msra.mxu0 0
      %2361 = vmatpush.bf16.msra.mxu0 0
      %2362 = vmatpush.bf16.msra.mxu0 %v2257
      %2363 = vmatpush.bf16.msra.mxu0 %v2256
      %2364 = vmatmul.bf16.gmra.mxu0 %v2261
      %v2365 = vpop.f32.mrf.mxu0
      %v2366 = vadd.f32 %v2246, %v2365
      %v2367 = vpop.f32.mrf.mxu0
      %v2368 = vadd.f32 %v2246, %v2367
      %2369 = vmatmul.bf16.gmra.mxu0 %v2264
      %v2370 = vpop.f32.mrf.mxu0
      %v2371 = vadd.f32 %v2246, %v2370
      %v2372 = vpop.f32.mrf.mxu0
      %v2373 = vadd.f32 %v2246, %v2372
      %2374 = vmatmul.bf16.gmra.mxu0 %v2267
      %v2375 = vpop.f32.mrf.mxu0
      %v2376 = vadd.f32 %v2246, %v2375
      %v2377 = vpop.f32.mrf.mxu0
      %v2378 = vadd.f32 %v2246, %v2377
      %2379 = vmatmul.bf16.gmra.mxu0 %v2270
      %v2380 = vpop.f32.mrf.mxu0
      %v2381 = vadd.f32 %v2246, %v2380
      %v2382 = vpop.f32.mrf.mxu0
      %v2383 = vadd.f32 %v2246, %v2382
      %2384 = vmatmul.bf16.gmra.mxu0 %v2273
      %v2385 = vpop.f32.mrf.mxu0
      %v2386 = vadd.f32 %v2246, %v2385
      %v2387 = vpop.f32.mrf.mxu0
      %v2388 = vadd.f32 %v2246, %v2387
      %2389 = vmatmul.bf16.gmra.mxu0 %v2276
      %v2390 = vpop.f32.mrf.mxu0
      %v2391 = vadd.f32 %v2246, %v2390
      %v2392 = vpop.f32.mrf.mxu0
      %v2393 = vadd.f32 %v2246, %v2392
      %2394 = vmatmul.bf16.gmra.mxu0 %v2279
      %v2395 = vpop.f32.mrf.mxu0
      %v2396 = vadd.f32 %v2246, %v2395
      %v2397 = vpop.f32.mrf.mxu0
      %v2398 = vadd.f32 %v2246, %v2397
      %2399 = vmatmul.bf16.gmra.mxu0 %v2282
      %v2400 = vpop.f32.mrf.mxu0
      %v2401 = vadd.f32 %v2246, %v2400
      %v2402 = vpop.f32.mrf.mxu0
      %v2403 = vadd.f32 %v2246, %v2402
      %2404 = vmatmul.bf16.gmra.mxu0 %v2285
      %v2405 = vpop.f32.mrf.mxu0
      %v2406 = vadd.f32 %v2246, %v2405
      %v2407 = vpop.f32.mrf.mxu0
      %v2408 = vadd.f32 %v2246, %v2407
      %2409 = vmatmul.bf16.gmra.mxu0 %v2288
      %v2410 = vpop.f32.mrf.mxu0
      %v2411 = vadd.f32 %v2246, %v2410
      %v2412 = vpop.f32.mrf.mxu0
      %v2413 = vadd.f32 %v2246, %v2412
      %2414 = vmatmul.bf16.gmra.mxu0 %v2291
      %v2415 = vpop.f32.mrf.mxu0
      %v2416 = vadd.f32 %v2246, %v2415
      %v2417 = vpop.f32.mrf.mxu0
      %v2418 = vadd.f32 %v2246, %v2417
      %2419 = vmatmul.bf16.gmra.mxu0 %v2294
      %v2420 = vpop.f32.mrf.mxu0
      %v2421 = vadd.f32 %v2246, %v2420
      %v2422 = vpop.f32.mrf.mxu0
      %v2423 = vadd.f32 %v2246, %v2422
      %2424 = vmatmul.bf16.gmra.mxu0 %v2297
      %v2425 = vpop.f32.mrf.mxu0
      %v2426 = vadd.f32 %v2246, %v2425
      %v2427 = vpop.f32.mrf.mxu0
      %v2428 = vadd.f32 %v2246, %v2427
      %2429 = vmatmul.bf16.gmra.mxu0 %v2300
      %v2430 = vpop.f32.mrf.mxu0
      %v2431 = vadd.f32 %v2246, %v2430
      %v2432 = vpop.f32.mrf.mxu0
      %v2433 = vadd.f32 %v2246, %v2432
      %2434 = vmatmul.bf16.gmra.mxu0 %v2303
      %v2435 = vpop.f32.mrf.mxu0
      %v2436 = vadd.f32 %v2246, %v2435
      %v2437 = vpop.f32.mrf.mxu0
      %v2438 = vadd.f32 %v2246, %v2437
      %2439 = vmatmul.bf16.gmra.mxu0 %v2306
      %v2440 = vpop.f32.mrf.mxu0
      %v2441 = vadd.f32 %v2246, %v2440
      %v2442 = vpop.f32.mrf.mxu0
      %v2443 = vadd.f32 %v2246, %v2442
      %2444 = vmatmul.bf16.gmra.mxu0 %v2309
      %v2445 = vpop.f32.mrf.mxu0
      %v2446 = vadd.f32 %v2246, %v2445
      %v2447 = vpop.f32.mrf.mxu0
      %v2448 = vadd.f32 %v2246, %v2447
      %2449 = vmatmul.bf16.gmra.mxu0 %v2312
      %v2450 = vpop.f32.mrf.mxu0
      %v2451 = vadd.f32 %v2246, %v2450
      %v2452 = vpop.f32.mrf.mxu0
      %v2453 = vadd.f32 %v2246, %v2452
      %2454 = vmatmul.bf16.gmra.mxu0 %v2315
      %v2455 = vpop.f32.mrf.mxu0
      %v2456 = vadd.f32 %v2246, %v2455
      %v2457 = vpop.f32.mrf.mxu0
      %v2458 = vadd.f32 %v2246, %v2457
      %2459 = vmatmul.bf16.gmra.mxu0 %v2318
      %v2460 = vpop.f32.mrf.mxu0
      %v2461 = vadd.f32 %v2246, %v2460
      %v2462 = vpop.f32.mrf.mxu0
      %v2463 = vadd.f32 %v2246, %v2462
      %2464 = vmatmul.bf16.gmra.mxu0 %v2321
      %v2465 = vpop.f32.mrf.mxu0
      %v2466 = vadd.f32 %v2246, %v2465
      %v2467 = vpop.f32.mrf.mxu0
      %v2468 = vadd.f32 %v2246, %v2467
      %2469 = vmatmul.bf16.gmra.mxu0 %v2324
      %v2470 = vpop.f32.mrf.mxu0
      %v2471 = vadd.f32 %v2246, %v2470
      %v2472 = vpop.f32.mrf.mxu0
      %v2473 = vadd.f32 %v2246, %v2472
      %2474 = vmatmul.bf16.gmra.mxu0 %v2327
      %v2475 = vpop.f32.mrf.mxu0
      %v2476 = vadd.f32 %v2246, %v2475
      %v2477 = vpop.f32.mrf.mxu0
      %v2478 = vadd.f32 %v2246, %v2477
      %2479 = vmatmul.bf16.gmra.mxu0 %v2330
      %v2480 = vpop.f32.mrf.mxu0
      %v2481 = vadd.f32 %v2246, %v2480
      %v2482 = vpop.f32.mrf.mxu0
      %v2483 = vadd.f32 %v2246, %v2482
      %2484 = vmatmul.bf16.gmra.mxu0 %v2333
      %v2485 = vpop.f32.mrf.mxu0
      %v2486 = vadd.f32 %v2246, %v2485
      %v2487 = vpop.f32.mrf.mxu0
      %v2488 = vadd.f32 %v2246, %v2487
      %2489 = vmatmul.bf16.gmra.mxu0 %v2336
      %v2490 = vpop.f32.mrf.mxu0
      %v2491 = vadd.f32 %v2246, %v2490
      %v2492 = vpop.f32.mrf.mxu0
      %v2493 = vadd.f32 %v2246, %v2492
      %2494 = vmatmul.bf16.gmra.mxu0 %v2339
      %v2495 = vpop.f32.mrf.mxu0
      %v2496 = vadd.f32 %v2246, %v2495
      %v2497 = vpop.f32.mrf.mxu0
      %v2498 = vadd.f32 %v2246, %v2497
      %2499 = vmatmul.bf16.gmra.mxu0 %v2342
      %v2500 = vpop.f32.mrf.mxu0
      %v2501 = vadd.f32 %v2246, %v2500
      %v2502 = vpop.f32.mrf.mxu0
      %v2503 = vadd.f32 %v2246, %v2502
      %2504 = vmatmul.bf16.gmra.mxu0 %v2345
      %v2505 = vpop.f32.mrf.mxu0
      %v2506 = vadd.f32 %v2246, %v2505
      %v2507 = vpop.f32.mrf.mxu0
      %v2508 = vadd.f32 %v2246, %v2507
      %2509 = vmatmul.bf16.gmra.mxu0 %v2348
      %v2510 = vpop.f32.mrf.mxu0
      %v2511 = vadd.f32 %v2246, %v2510
      %v2512 = vpop.f32.mrf.mxu0
      %v2513 = vadd.f32 %v2246, %v2512
      %2514 = vmatmul.bf16.gmra.mxu0 %v2351
      %v2515 = vpop.f32.mrf.mxu0
      %v2516 = vadd.f32 %v2246, %v2515
      %v2517 = vpop.f32.mrf.mxu0
      %v2518 = vadd.f32 %v2246, %v2517
      %2519 = vmatmul.bf16.gmra.mxu0 %v2354
      %v2520 = vpop.f32.mrf.mxu0
      %v2521 = vadd.f32 %v2246, %v2520
      %v2522 = vpop.f32.mrf.mxu0
      %v2523 = vadd.f32 %v2246, %v2522
      %2524 = vdwg.mxu0
      %v2525 = vmax.f32 %v2366, 0.0
      %v2526 = vmax.f32 %v2368, 0.0
      %v2527 = vmax.f32 %v2371, 0.0
      %v2528 = vmax.f32 %v2373, 0.0
      %v2529 = vmax.f32 %v2376, 0.0
      %v2530 = vmax.f32 %v2378, 0.0
      %v2531 = vmax.f32 %v2381, 0.0
      %v2532 = vmax.f32 %v2383, 0.0
      %v2533 = vmax.f32 %v2386, 0.0
      %v2534 = vmax.f32 %v2388, 0.0
      %v2535 = vmax.f32 %v2391, 0.0
      %v2536 = vmax.f32 %v2393, 0.0
      %v2537 = vmax.f32 %v2396, 0.0
      %v2538 = vmax.f32 %v2398, 0.0
      %v2539 = vmax.f32 %v2401, 0.0
      %v2540 = vmax.f32 %v2403, 0.0
      %v2541 = vmax.f32 %v2406, 0.0
      %v2542 = vmax.f32 %v2408, 0.0
      %v2543 = vmax.f32 %v2411, 0.0
      %v2544 = vmax.f32 %v2413, 0.0
      %v2545 = vmax.f32 %v2416, 0.0
      %v2546 = vmax.f32 %v2418, 0.0
      %v2547 = vmax.f32 %v2421, 0.0
      %v2548 = vmax.f32 %v2423, 0.0
      %v2549 = vmax.f32 %v2426, 0.0
      %v2550 = vmax.f32 %v2428, 0.0
      %v2551 = vmax.f32 %v2431, 0.0
      %v2552 = vmax.f32 %v2433, 0.0
      %v2553 = vmax.f32 %v2436, 0.0
      %v2554 = vmax.f32 %v2438, 0.0
      %v2555 = vmax.f32 %v2441, 0.0
      %v2556 = vmax.f32 %v2443, 0.0
      %v2557 = vmax.f32 %v2446, 0.0
      %v2558 = vmax.f32 %v2448, 0.0
      %v2559 = vmax.f32 %v2451, 0.0
      %v2560 = vmax.f32 %v2453, 0.0
      %v2561 = vmax.f32 %v2456, 0.0
      %v2562 = vmax.f32 %v2458, 0.0
      %v2563 = vmax.f32 %v2461, 0.0
      %v2564 = vmax.f32 %v2463, 0.0
      %v2565 = vmax.f32 %v2466, 0.0
      %v2566 = vmax.f32 %v2468, 0.0
      %v2567 = vmax.f32 %v2471, 0.0
      %v2568 = vmax.f32 %v2473, 0.0
      %v2569 = vmax.f32 %v2476, 0.0
      %v2570 = vmax.f32 %v2478, 0.0
      %v2571 = vmax.f32 %v2481, 0.0
      %v2572 = vmax.f32 %v2483, 0.0
      %v2573 = vmax.f32 %v2486, 0.0
      %v2574 = vmax.f32 %v2488, 0.0
      %v2575 = vmax.f32 %v2491, 0.0
      %v2576 = vmax.f32 %v2493, 0.0
      %v2577 = vmax.f32 %v2496, 0.0
      %v2578 = vmax.f32 %v2498, 0.0
      %v2579 = vmax.f32 %v2501, 0.0
      %v2580 = vmax.f32 %v2503, 0.0
      %v2581 = vmax.f32 %v2506, 0.0
      %v2582 = vmax.f32 %v2508, 0.0
      %v2583 = vmax.f32 %v2511, 0.0
      %v2584 = vmax.f32 %v2513, 0.0
      %v2585 = vmax.f32 %v2516, 0.0
      %v2586 = vmax.f32 %v2518, 0.0
      %v2587 = vmax.f32 %v2521, 0.0
      %v2588 = vmax.f32 %v2523, 0.0
      %v2589 = vpack.c.bf16 %v2526, %v2525
      %v2590 = vpack.c.bf16 %v2528, %v2527
      %v2591 = vpack.c.bf16 %v2530, %v2529
      %v2592 = vpack.c.bf16 %v2532, %v2531
      %v2593 = vpack.c.bf16 %v2534, %v2533
      %v2594 = vpack.c.bf16 %v2536, %v2535
      %v2595 = vpack.c.bf16 %v2538, %v2537
      %v2596 = vpack.c.bf16 %v2540, %v2539
      %v2597 = vpack.c.bf16 %v2542, %v2541
      %v2598 = vpack.c.bf16 %v2544, %v2543
      %v2599 = vpack.c.bf16 %v2546, %v2545
      %v2600 = vpack.c.bf16 %v2548, %v2547
      %v2601 = vpack.c.bf16 %v2550, %v2549
      %v2602 = vpack.c.bf16 %v2552, %v2551
      %v2603 = vpack.c.bf16 %v2554, %v2553
      %v2604 = vpack.c.bf16 %v2556, %v2555
      %v2605 = vpack.c.bf16 %v2558, %v2557
      %v2606 = vpack.c.bf16 %v2560, %v2559
      %v2607 = vpack.c.bf16 %v2562, %v2561
      %v2608 = vpack.c.bf16 %v2564, %v2563
      %v2609 = vpack.c.bf16 %v2566, %v2565
      %v2610 = vpack.c.bf16 %v2568, %v2567
      %v2611 = vpack.c.bf16 %v2570, %v2569
      %v2612 = vpack.c.bf16 %v2572, %v2571
      %v2613 = vpack.c.bf16 %v2574, %v2573
      %v2614 = vpack.c.bf16 %v2576, %v2575
      %v2615 = vpack.c.bf16 %v2578, %v2577
      %v2616 = vpack.c.bf16 %v2580, %v2579
      %v2617 = vpack.c.bf16 %v2582, %v2581
      %v2618 = vpack.c.bf16 %v2584, %v2583
      %v2619 = vpack.c.bf16 %v2586, %v2585
      %v2620 = vpack.c.bf16 %v2588, %v2587
      %v2621 = vld [vmem:[%s11] sm:$0xf]
      %v2622 = vld [vmem:[%s11 + $0x4] sm:$0xf]
      %v2623 = vld [vmem:[%s11 + $0x8] sm:$0xf]
      %v2624 = vld [vmem:[%s11 + $0xc] sm:$0xf]
      %v2625 = vld [vmem:[%s12] sm:$0x1]
      %v2627 = vperm.slane %v2625, 0
      %v2633 = vunpack.c.l.b16 %v2621
      %v2634 = vunpack.c.l.b16 %v2622
      %v2635 = vunpack.c.l.b16 %v2623
      %v2636 = vunpack.c.l.b16 %v2624
      %v2637 = vpack.c.b16 %v2634, %v2633
      %v2638 = vpack.c.b16 %v2636, %v2635
      %v2642 = vsel %vm1086, %v2589, 0
      %v2645 = vsel %vm1086, %v2590, 0
      %v2648 = vsel %vm1086, %v2591, 0
      %v2651 = vsel %vm1086, %v2592, 0
      %v2654 = vsel %vm1086, %v2593, 0
      %v2657 = vsel %vm1086, %v2594, 0
      %v2660 = vsel %vm1086, %v2595, 0
      %v2663 = vsel %vm1086, %v2596, 0
      %v2666 = vsel %vm1086, %v2597, 0
      %v2669 = vsel %vm1086, %v2598, 0
      %v2672 = vsel %vm1086, %v2599, 0
      %v2675 = vsel %vm1086, %v2600, 0
      %v2678 = vsel %vm1086, %v2601, 0
      %v2681 = vsel %vm1086, %v2602, 0
      %v2684 = vsel %vm1086, %v2603, 0
      %v2687 = vsel %vm1086, %v2604, 0
      %v2690 = vsel %vm1086, %v2605, 0
      %v2693 = vsel %vm1086, %v2606, 0
      %v2696 = vsel %vm1086, %v2607, 0
      %v2699 = vsel %vm1086, %v2608, 0
      %v2702 = vsel %vm1086, %v2609, 0
      %v2705 = vsel %vm1086, %v2610, 0
      %v2708 = vsel %vm1086, %v2611, 0
      %v2711 = vsel %vm1086, %v2612, 0
      %v2714 = vsel %vm1086, %v2613, 0
      %v2717 = vsel %vm1086, %v2614, 0
      %v2720 = vsel %vm1086, %v2615, 0
      %v2723 = vsel %vm1086, %v2616, 0
      %v2726 = vsel %vm1086, %v2617, 0
      %v2729 = vsel %vm1086, %v2618, 0
      %v2732 = vsel %vm1086, %v2619, 0
      %v2735 = vsel %vm1086, %v2620, 0
      %2737 = vmatpush.bf16.msra.mxu0 0
      %2738 = vmatpush.bf16.msra.mxu0 0
      %2739 = vmatpush.bf16.msra.mxu0 0
      %2740 = vmatpush.bf16.msra.mxu0 0
      %2741 = vmatpush.bf16.msra.mxu0 0
      %2742 = vmatpush.bf16.msra.mxu0 0
      %2743 = vmatpush.bf16.msra.mxu0 %v2638
      %2744 = vmatpush.bf16.msra.mxu0 %v2637
      %2745 = vmatmul.bf16.gmra.mxu0 %v2642
      %v2746 = vpop.f32.mrf.mxu0
      %v2747 = vadd.f32 %v2627, %v2746
      %v2748 = vpop.f32.mrf.mxu0
      %v2749 = vadd.f32 %v2627, %v2748
      %2750 = vmatmul.bf16.gmra.mxu0 %v2645
      %v2751 = vpop.f32.mrf.mxu0
      %v2752 = vadd.f32 %v2627, %v2751
      %v2753 = vpop.f32.mrf.mxu0
      %v2754 = vadd.f32 %v2627, %v2753
      %2755 = vmatmul.bf16.gmra.mxu0 %v2648
      %v2756 = vpop.f32.mrf.mxu0
      %v2757 = vadd.f32 %v2627, %v2756
      %v2758 = vpop.f32.mrf.mxu0
      %v2759 = vadd.f32 %v2627, %v2758
      %2760 = vmatmul.bf16.gmra.mxu0 %v2651
      %v2761 = vpop.f32.mrf.mxu0
      %v2762 = vadd.f32 %v2627, %v2761
      %v2763 = vpop.f32.mrf.mxu0
      %v2764 = vadd.f32 %v2627, %v2763
      %2765 = vmatmul.bf16.gmra.mxu0 %v2654
      %v2766 = vpop.f32.mrf.mxu0
      %v2767 = vadd.f32 %v2627, %v2766
      %v2768 = vpop.f32.mrf.mxu0
      %v2769 = vadd.f32 %v2627, %v2768
      %2770 = vmatmul.bf16.gmra.mxu0 %v2657
      %v2771 = vpop.f32.mrf.mxu0
      %v2772 = vadd.f32 %v2627, %v2771
      %v2773 = vpop.f32.mrf.mxu0
      %v2774 = vadd.f32 %v2627, %v2773
      %2775 = vmatmul.bf16.gmra.mxu0 %v2660
      %v2776 = vpop.f32.mrf.mxu0
      %v2777 = vadd.f32 %v2627, %v2776
      %v2778 = vpop.f32.mrf.mxu0
      %v2779 = vadd.f32 %v2627, %v2778
      %2780 = vmatmul.bf16.gmra.mxu0 %v2663
      %v2781 = vpop.f32.mrf.mxu0
      %v2782 = vadd.f32 %v2627, %v2781
      %v2783 = vpop.f32.mrf.mxu0
      %v2784 = vadd.f32 %v2627, %v2783
      %2785 = vmatmul.bf16.gmra.mxu0 %v2666
      %v2786 = vpop.f32.mrf.mxu0
      %v2787 = vadd.f32 %v2627, %v2786
      %v2788 = vpop.f32.mrf.mxu0
      %v2789 = vadd.f32 %v2627, %v2788
      %2790 = vmatmul.bf16.gmra.mxu0 %v2669
      %v2791 = vpop.f32.mrf.mxu0
      %v2792 = vadd.f32 %v2627, %v2791
      %v2793 = vpop.f32.mrf.mxu0
      %v2794 = vadd.f32 %v2627, %v2793
      %2795 = vmatmul.bf16.gmra.mxu0 %v2672
      %v2796 = vpop.f32.mrf.mxu0
      %v2797 = vadd.f32 %v2627, %v2796
      %v2798 = vpop.f32.mrf.mxu0
      %v2799 = vadd.f32 %v2627, %v2798
      %2800 = vmatmul.bf16.gmra.mxu0 %v2675
      %v2801 = vpop.f32.mrf.mxu0
      %v2802 = vadd.f32 %v2627, %v2801
      %v2803 = vpop.f32.mrf.mxu0
      %v2804 = vadd.f32 %v2627, %v2803
      %2805 = vmatmul.bf16.gmra.mxu0 %v2678
      %v2806 = vpop.f32.mrf.mxu0
      %v2807 = vadd.f32 %v2627, %v2806
      %v2808 = vpop.f32.mrf.mxu0
      %v2809 = vadd.f32 %v2627, %v2808
      %2810 = vmatmul.bf16.gmra.mxu0 %v2681
      %v2811 = vpop.f32.mrf.mxu0
      %v2812 = vadd.f32 %v2627, %v2811
      %v2813 = vpop.f32.mrf.mxu0
      %v2814 = vadd.f32 %v2627, %v2813
      %2815 = vmatmul.bf16.gmra.mxu0 %v2684
      %v2816 = vpop.f32.mrf.mxu0
      %v2817 = vadd.f32 %v2627, %v2816
      %v2818 = vpop.f32.mrf.mxu0
      %v2819 = vadd.f32 %v2627, %v2818
      %2820 = vmatmul.bf16.gmra.mxu0 %v2687
      %v2821 = vpop.f32.mrf.mxu0
      %v2822 = vadd.f32 %v2627, %v2821
      %v2823 = vpop.f32.mrf.mxu0
      %v2824 = vadd.f32 %v2627, %v2823
      %2825 = vmatmul.bf16.gmra.mxu0 %v2690
      %v2826 = vpop.f32.mrf.mxu0
      %v2827 = vadd.f32 %v2627, %v2826
      %v2828 = vpop.f32.mrf.mxu0
      %v2829 = vadd.f32 %v2627, %v2828
      %2830 = vmatmul.bf16.gmra.mxu0 %v2693
      %v2831 = vpop.f32.mrf.mxu0
      %v2832 = vadd.f32 %v2627, %v2831
      %v2833 = vpop.f32.mrf.mxu0
      %v2834 = vadd.f32 %v2627, %v2833
      %2835 = vmatmul.bf16.gmra.mxu0 %v2696
      %v2836 = vpop.f32.mrf.mxu0
      %v2837 = vadd.f32 %v2627, %v2836
      %v2838 = vpop.f32.mrf.mxu0
      %v2839 = vadd.f32 %v2627, %v2838
      %2840 = vmatmul.bf16.gmra.mxu0 %v2699
      %v2841 = vpop.f32.mrf.mxu0
      %v2842 = vadd.f32 %v2627, %v2841
      %v2843 = vpop.f32.mrf.mxu0
      %v2844 = vadd.f32 %v2627, %v2843
      %2845 = vmatmul.bf16.gmra.mxu0 %v2702
      %v2846 = vpop.f32.mrf.mxu0
      %v2847 = vadd.f32 %v2627, %v2846
      %v2848 = vpop.f32.mrf.mxu0
      %v2849 = vadd.f32 %v2627, %v2848
      %2850 = vmatmul.bf16.gmra.mxu0 %v2705
      %v2851 = vpop.f32.mrf.mxu0
      %v2852 = vadd.f32 %v2627, %v2851
      %v2853 = vpop.f32.mrf.mxu0
      %v2854 = vadd.f32 %v2627, %v2853
      %2855 = vmatmul.bf16.gmra.mxu0 %v2708
      %v2856 = vpop.f32.mrf.mxu0
      %v2857 = vadd.f32 %v2627, %v2856
      %v2858 = vpop.f32.mrf.mxu0
      %v2859 = vadd.f32 %v2627, %v2858
      %2860 = vmatmul.bf16.gmra.mxu0 %v2711
      %v2861 = vpop.f32.mrf.mxu0
      %v2862 = vadd.f32 %v2627, %v2861
      %v2863 = vpop.f32.mrf.mxu0
      %v2864 = vadd.f32 %v2627, %v2863
      %2865 = vmatmul.bf16.gmra.mxu0 %v2714
      %v2866 = vpop.f32.mrf.mxu0
      %v2867 = vadd.f32 %v2627, %v2866
      %v2868 = vpop.f32.mrf.mxu0
      %v2869 = vadd.f32 %v2627, %v2868
      %2870 = vmatmul.bf16.gmra.mxu0 %v2717
      %v2871 = vpop.f32.mrf.mxu0
      %v2872 = vadd.f32 %v2627, %v2871
      %v2873 = vpop.f32.mrf.mxu0
      %v2874 = vadd.f32 %v2627, %v2873
      %2875 = vmatmul.bf16.gmra.mxu0 %v2720
      %v2876 = vpop.f32.mrf.mxu0
      %v2877 = vadd.f32 %v2627, %v2876
      %v2878 = vpop.f32.mrf.mxu0
      %v2879 = vadd.f32 %v2627, %v2878
      %2880 = vmatmul.bf16.gmra.mxu0 %v2723
      %v2881 = vpop.f32.mrf.mxu0
      %v2882 = vadd.f32 %v2627, %v2881
      %v2883 = vpop.f32.mrf.mxu0
      %v2884 = vadd.f32 %v2627, %v2883
      %2885 = vmatmul.bf16.gmra.mxu0 %v2726
      %v2886 = vpop.f32.mrf.mxu0
      %v2887 = vadd.f32 %v2627, %v2886
      %v2888 = vpop.f32.mrf.mxu0
      %v2889 = vadd.f32 %v2627, %v2888
      %2890 = vmatmul.bf16.gmra.mxu0 %v2729
      %v2891 = vpop.f32.mrf.mxu0
      %v2892 = vadd.f32 %v2627, %v2891
      %v2893 = vpop.f32.mrf.mxu0
      %v2894 = vadd.f32 %v2627, %v2893
      %2895 = vmatmul.bf16.gmra.mxu0 %v2732
      %v2896 = vpop.f32.mrf.mxu0
      %v2897 = vadd.f32 %v2627, %v2896
      %v2898 = vpop.f32.mrf.mxu0
      %v2899 = vadd.f32 %v2627, %v2898
      %2900 = vmatmul.bf16.gmra.mxu0 %v2735
      %v2901 = vpop.f32.mrf.mxu0
      %v2902 = vadd.f32 %v2627, %v2901
      %v2903 = vpop.f32.mrf.mxu0
      %v2904 = vadd.f32 %v2627, %v2903
      %2905 = vdwg.mxu0
      %2906 = vst.msk [vmem:[%s492] sm:$0xff] %vm1738, %v2747
      %2907 = vst.msk [vmem:[%s492 + $0x8] sm:$0xff] %vm1738, %v2749
      %2908 = vst.msk [vmem:[%s492 + $0x10] sm:$0xff] %vm1738, %v2752
      %2909 = vst.msk [vmem:[%s492 + $0x18] sm:$0xff] %vm1738, %v2754
      %2910 = vst.msk [vmem:[%s492 + $0x20] sm:$0xff] %vm1738, %v2757
      %2911 = vst.msk [vmem:[%s492 + $0x28] sm:$0xff] %vm1738, %v2759
      %2912 = vst.msk [vmem:[%s492 + $0x30] sm:$0xff] %vm1738, %v2762
      %2913 = vst.msk [vmem:[%s492 + $0x38] sm:$0xff] %vm1738, %v2764
      %2914 = vst.msk [vmem:[%s492 + $0x40] sm:$0xff] %vm1738, %v2767
      %2915 = vst.msk [vmem:[%s492 + $0x48] sm:$0xff] %vm1738, %v2769
      %2916 = vst.msk [vmem:[%s492 + $0x50] sm:$0xff] %vm1738, %v2772
      %2917 = vst.msk [vmem:[%s492 + $0x58] sm:$0xff] %vm1738, %v2774
      %2918 = vst.msk [vmem:[%s492 + $0x60] sm:$0xff] %vm1738, %v2777
      %2919 = vst.msk [vmem:[%s492 + $0x68] sm:$0xff] %vm1738, %v2779
      %2920 = vst.msk [vmem:[%s492 + $0x70] sm:$0xff] %vm1738, %v2782
      %2921 = vst.msk [vmem:[%s492 + $0x78] sm:$0xff] %vm1738, %v2784
      %2922 = vst.msk [vmem:[%s492 + $0x80] sm:$0xff] %vm1738, %v2787
      %2923 = vst.msk [vmem:[%s492 + $0x88] sm:$0xff] %vm1738, %v2789
      %2924 = vst.msk [vmem:[%s492 + $0x90] sm:$0xff] %vm1738, %v2792
      %2925 = vst.msk [vmem:[%s492 + $0x98] sm:$0xff] %vm1738, %v2794
      %2926 = vst.msk [vmem:[%s492 + $0xa0] sm:$0xff] %vm1738, %v2797
      %2927 = vst.msk [vmem:[%s492 + $0xa8] sm:$0xff] %vm1738, %v2799
      %2928 = vst.msk [vmem:[%s492 + $0xb0] sm:$0xff] %vm1738, %v2802
      %2929 = vst.msk [vmem:[%s492 + $0xb8] sm:$0xff] %vm1738, %v2804
      %2930 = vst.msk [vmem:[%s492 + $0xc0] sm:$0xff] %vm1738, %v2807
      %2931 = vst.msk [vmem:[%s492 + $0xc8] sm:$0xff] %vm1738, %v2809
      %2932 = vst.msk [vmem:[%s492 + $0xd0] sm:$0xff] %vm1738, %v2812
      %2933 = vst.msk [vmem:[%s492 + $0xd8] sm:$0xff] %vm1738, %v2814
      %2934 = vst.msk [vmem:[%s492 + $0xe0] sm:$0xff] %vm1738, %v2817
      %2935 = vst.msk [vmem:[%s492 + $0xe8] sm:$0xff] %vm1738, %v2819
      %2936 = vst.msk [vmem:[%s492 + $0xf0] sm:$0xff] %vm1738, %v2822
      %2937 = vst.msk [vmem:[%s492 + $0xf8] sm:$0xff] %vm1738, %v2824
      %2938 = vst.msk [vmem:[%s492 + $0x100] sm:$0xff] %vm1738, %v2827
      %2939 = vst.msk [vmem:[%s492 + $0x108] sm:$0xff] %vm1738, %v2829
      %2940 = vst.msk [vmem:[%s492 + $0x110] sm:$0xff] %vm1738, %v2832
      %2941 = vst.msk [vmem:[%s492 + $0x118] sm:$0xff] %vm1738, %v2834
      %2942 = vst.msk [vmem:[%s492 + $0x120] sm:$0xff] %vm1738, %v2837
      %2943 = vst.msk [vmem:[%s492 + $0x128] sm:$0xff] %vm1738, %v2839
      %2944 = vst.msk [vmem:[%s492 + $0x130] sm:$0xff] %vm1738, %v2842
      %2945 = vst.msk [vmem:[%s492 + $0x138] sm:$0xff] %vm1738, %v2844
      %2946 = vst.msk [vmem:[%s492 + $0x140] sm:$0xff] %vm1738, %v2847
      %2947 = vst.msk [vmem:[%s492 + $0x148] sm:$0xff] %vm1738, %v2849
      %2948 = vst.msk [vmem:[%s492 + $0x150] sm:$0xff] %vm1738, %v2852
      %2949 = vst.msk [vmem:[%s492 + $0x158] sm:$0xff] %vm1738, %v2854
      %2950 = vst.msk [vmem:[%s492 + $0x160] sm:$0xff] %vm1738, %v2857
      %2951 = vst.msk [vmem:[%s492 + $0x168] sm:$0xff] %vm1738, %v2859
      %2952 = vst.msk [vmem:[%s492 + $0x170] sm:$0xff] %vm1738, %v2862
      %2953 = vst.msk [vmem:[%s492 + $0x178] sm:$0xff] %vm1738, %v2864
      %2954 = vst.msk [vmem:[%s492 + $0x180] sm:$0xff] %vm1738, %v2867
      %2955 = vst.msk [vmem:[%s492 + $0x188] sm:$0xff] %vm1738, %v2869
      %2956 = vst.msk [vmem:[%s492 + $0x190] sm:$0xff] %vm1738, %v2872
      %2957 = vst.msk [vmem:[%s492 + $0x198] sm:$0xff] %vm1738, %v2874
      %2958 = vst.msk [vmem:[%s492 + $0x1a0] sm:$0xff] %vm1738, %v2877
      %2959 = vst.msk [vmem:[%s492 + $0x1a8] sm:$0xff] %vm1738, %v2879
      %2960 = vst.msk [vmem:[%s492 + $0x1b0] sm:$0xff] %vm1738, %v2882
      %2961 = vst.msk [vmem:[%s492 + $0x1b8] sm:$0xff] %vm1738, %v2884
      %2962 = vst.msk [vmem:[%s492 + $0x1c0] sm:$0xff] %vm1738, %v2887
      %2963 = vst.msk [vmem:[%s492 + $0x1c8] sm:$0xff] %vm1738, %v2889
      %2964 = vst.msk [vmem:[%s492 + $0x1d0] sm:$0xff] %vm1738, %v2892
      %2965 = vst.msk [vmem:[%s492 + $0x1d8] sm:$0xff] %vm1738, %v2894
      %2966 = vst.msk [vmem:[%s492 + $0x1e0] sm:$0xff] %vm1738, %v2897
      %2967 = vst.msk [vmem:[%s492 + $0x1e8] sm:$0xff] %vm1738, %v2899
      %2968 = vst.msk [vmem:[%s492 + $0x1f0] sm:$0xff] %vm1738, %v2902
      %2969 = vst.msk [vmem:[%s492 + $0x1f8] sm:$0xff] %vm1738, %v2904
      %s2970 = smul.u32 64, %s29
      %p2971 = scmp.lt.s32.totalorder %s28, 1
      %s2972 = scalar_select %p2971, %s28, 1
      %p2973 = scmp.lt.s32.totalorder %s2970, 255
      %s2974 = scalar_select %p2973, %s2970, 255
      %s2975 = smul.addr %s2972, 256
      %s2976 = sadd.s32 %s2974, %s2975
      %s2977 = smul.addr %s2976, 8
      %s2978 = scalar_lea.vmem %s13, %s2977
      // Predicated region
      $region73: #{reconstruction_net_forward.9} parent=71 // pred_check
        %p2979 = pneg %p344
      $region74: #{reconstruction_net_forward.9} parent=71 // pred_check_branch
        %2981 = sbr.rel (%p2979) target = $region76
      $region75: #{reconstruction_net_forward.9} parent=71 // pred_region
        %s2982 = smul.u32 64, %s29
      $region76: #{reconstruction_net_forward.9} parent=71 // pred_fallthru
        _
    $region72: #{reconstruction_net_forward.9} parent=5 // pred_fallthru
      _
    %p2983 = scmp.le.s32.totalorder 2, %s19
    // Predicated region
    $region77: #{reconstruction_net_forward.9} parent=5 // pred_check
      %p2984 = pneg %p2983
    $region78: #{reconstruction_net_forward.9} parent=5 // pred_check_branch
      %2986 = sbr.rel (%p2984) target = $region80
    $region79: #{reconstruction_net_forward.9} parent=5 // pred_region
      %s2987 = ssub.s32 %s19, 2
      // Predicated region
      $region81: #{reconstruction_net_forward.9} parent=79 // pred_check
        %p2988 = pneg %p350
      $region82: #{reconstruction_net_forward.9} parent=79 // pred_check_branch
        %2990 = sbr.rel (%p2988) target = $region84
      $region83: #{reconstruction_net_forward.9} parent=79 // pred_region
        %s2991 = smul.u32 64, %s31
        %p2992 = scmp.lt.s32.totalorder %s30, 1
        %s2993 = scalar_select %p2992, %s30, 1
        %p2994 = scmp.lt.s32.totalorder %s2991, 255
        %s2995 = scalar_select %p2994, %s2991, 255
        %s2996 = smul.addr %s2993, 256
        %s2997 = sadd.s32 %s2995, %s2996
        %s2998 = smul.addr %s2997, 8
        %s2999 = scalar_lea.vmem %s13, %s2998
      $region84: #{reconstruction_net_forward.9} parent=79 // pred_fallthru
        _
    $region80: #{reconstruction_net_forward.9} parent=5 // pred_fallthru
      _
  $region6: #{reconstruction_net_forward.9} parent=0 // loop_footer
    %s23 = sadd.s32 1, %s19
  $region7: #{reconstruction_net_forward.9} parent=0 // loop_footer_branch
    %18 = sbr.rel target = $region3
  $region8: #{reconstruction_net_forward.9} parent=0 // loop_exit
    _

</llo_original>
